<compile_context>
chip_gen: v7x
topology: tpu7x:2x2x1
jax: 0.10.0
libtpu: 0.0.40
codegen_flags: <defaults>
</compile_context>

<pallas_src>
import functools

import jax
import jax.numpy as jnp
from jax import lax
from jax.experimental import pallas as pl
from jax.experimental.pallas import tpu as pltpu

EPS = 1e-5
HID = 32          # LSTM hidden size (from the module)
LIN_OUT = 128     # linear layer output size (from the module)
K = 5             # conv kernel size
STRIDE = 2        # conv stride
KK = K * K
OUT_TILE = 128    # per-(kh,kw) lane padding of conv2/conv3 selector outputs
C1, C2, C3 = 16, 32, 32


def conv2d_size_out(size, kernel_size=K, stride=STRIDE):
    return (size - (kernel_size - 1) - 1) // stride + 1


# -----------------------------------------------------------------------------
# Composed 0/1 patch selector, built once at init.
#   S (in_width, 25*OUT_TILE): column kk*OUT_TILE + (oh*wo + ow), kk = kh*K + kw,
#   has a single 1 at row (oh*stride + kh)*w_in + (ow*stride + kw).
#   Pad columns (per-tap lanes >= ho*wo) and pad rows (>= h_in*w_in) are all zero,
#   so padded activation lanes / padded output lanes stay exactly zero.
# -----------------------------------------------------------------------------
def _patch_selector(h_in, w_in, in_width, ho, wo, dtype,
                    k=K, stride=STRIDE, out_tile=OUT_TILE):
    assert ho * wo <= out_tile
    khr = jnp.arange(k)
    kwr = jnp.arange(k)
    oh = jnp.arange(ho)
    ow = jnp.arange(wo)
    src = ((oh[None, None, :, None] * stride + khr[:, None, None, None]) * w_in
           + (ow[None, None, None, :] * stride + kwr[None, :, None, None]))   # (k,k,ho,wo)
    src = src.reshape(k * k, ho * wo)                                          # (25, ho*wo)
    rows = jnp.arange(in_width)[:, None, None]                                 # (in_width,1,1)
    sel = (rows == src[None]).astype(dtype)                                    # (in_width,25,ho*wo)
    sel = jnp.pad(sel, ((0, 0), (0, 0), (0, out_tile - ho * wo)))
    return sel.reshape(in_width, k * k * out_tile)


# -----------------------------------------------------------------------------
# Single fused kernel: conv1/bn1/relu -> conv2/bn2/relu -> conv3/bn3/relu ->
# flatten -> linear/relu -> LSTM step (h0=c0=0) -> head.  Everything in VMEM.
# -----------------------------------------------------------------------------
def dqn_kernel(p1_ref, w1_ref, g1_ref, b1_ref,
               s2_ref, w2_ref, g2_ref, b2_ref,
               s3_ref, w3_ref, g3_ref, b3_ref,
               wlt_ref, blin_ref, wlstm_ref, blstm_ref,
               whead_ref, bhead_ref,
               o_ref, sc2_ref, sc3_ref, *, valid2, valid3):

    def bn_relu(y, g_ref, be_ref, valid):
        # training-mode BatchNorm, one-pass stats; conv bias omitted (cancelled by the
        # batch-mean subtraction).  Pad lanes of y are exactly zero, so plain lane sums
        # are correct; divide by the true count and re-zero the pads afterwards.
        width = y.shape[1]
        inv_n = 1.0 / valid
        s1 = jnp.sum(y, axis=1, keepdims=True)
        s2 = jnp.sum(y * y, axis=1, keepdims=True)
        mean = s1 * inv_n
        var = s2 * inv_n - mean * mean
        scale = lax.rsqrt(var + EPS) * g_ref[...]
        out = jnp.maximum((y - mean) * scale + be_ref[...], 0.0)
        if valid < width:
            lane = lax.broadcasted_iota(jnp.int32, out.shape, 1)
            out = jnp.where(lane < valid, out, 0.0)
        return out

    def conv_fused(act, s_ref, sc_ref, w_ref):
        # (1) one composed-selector matmul: all 25 taps, lane-concatenated & padded;
        # (2) 25 vreg-aligned copies restack taps on the sublane axis;
        # (3) one deep (Cout, 25*Cin) @ (25*Cin, 128) weight matmul.
        cin = act.shape[0]
        taps = jnp.dot(act.astype(jnp.bfloat16), s_ref[...],
                       preferred_element_type=jnp.float32).astype(jnp.bfloat16)
        for kk in range(KK):
            sc_ref[kk * cin:(kk + 1) * cin, :] = \
                taps[:, kk * OUT_TILE:(kk + 1) * OUT_TILE]
        return jnp.dot(w_ref[...], sc_ref[...],
                       preferred_element_type=jnp.float32)           # (Cout, OUT_TILE)

    # conv1 (+BN+ReLU): im2col rows were built in the XLA wrapper -> one 25-deep matmul.
    a1 = bn_relu(jnp.dot(w1_ref[...], p1_ref[...],
                         preferred_element_type=jnp.float32),
                 g1_ref, b1_ref, p1_ref.shape[1])                     # (16, H1*W1)
    # conv2 (+BN+ReLU): (32, 128) with valid2 real lanes.
    a2 = bn_relu(conv_fused(a1, s2_ref, sc2_ref, w2_ref), g2_ref, b2_ref, valid2)
    # conv3 (+BN+ReLU): (32, 128) with valid3 real lanes (flattened NCHW for N == 1).
    a3 = bn_relu(conv_fused(a2, s3_ref, sc3_ref, w3_ref), g3_ref, b3_ref, valid3)

    # flatten (NCHW order c*p3 + p) + Linear + ReLU, lane-dense: the 128-wide
    # contraction is valid3 broadcast multiply-adds (VPU) + one sublane reduce (XLU).
    g_acc = a3[:, 0:1] * wlt_ref[0]
    for p in range(1, valid3):
        g_acc = g_acc + a3[:, p:p + 1] * wlt_ref[p]
    lin = jnp.maximum(jnp.sum(g_acc, axis=0, keepdims=True) + blin_ref[...], 0.0)  # (1,128)

    # single LSTM step with h0 = c0 = 0 (PyTorch default when no state is passed):
    # one fused gate matmul over [i; g; o] in row layout; forget gate dropped (f*c0 == 0).
    gates = jnp.dot(lin, wlstm_ref[...],
                    preferred_element_type=jnp.float32) + blstm_ref[...]            # (1, 96)
    i_g = jax.nn.sigmoid(gates[:, 0:HID])
    g_g = jnp.tanh(gates[:, HID:2 * HID])
    o_g = jax.nn.sigmoid(gates[:, 2 * HID:3 * HID])
    h1 = o_g * jnp.tanh(i_g * g_g)                                                   # (1, 32)

    o_ref[...] = jnp.dot(h1, whead_ref[...],
                         preferred_element_type=jnp.float32) + bhead_ref[...]


# -----------------------------------------------------------------------------
# Parameter init + one-time packing (all transposes / reshapes happen here).
# -----------------------------------------------------------------------------
def init_params(key, h, w, outputs):
    h1, w1 = conv2d_size_out(h), conv2d_size_out(w)
    h2, w2 = conv2d_size_out(h1), conv2d_size_out(w1)
    h3, w3 = conv2d_size_out(h2), conv2d_size_out(w2)
    p3 = h3 * w3
    lin_in = p3 * C3
    assert h2 * w2 <= OUT_TILE and p3 <= OUT_TILE

    ks = jax.random.split(key, 20)
    rnd = lambda k_, shape, s: s * jax.random.normal(k_, shape, dtype=jnp.float32)

    raw = {
        "conv1_w": rnd(ks[0], (C1, 1, K, K), 0.2),    "conv1_b": rnd(ks[1], (C1,), 0.1),
        "conv2_w": rnd(ks[2], (C2, C1, K, K), 0.05),  "conv2_b": rnd(ks[3], (C2,), 0.1),
        "conv3_w": rnd(ks[4], (C3, C2, K, K), 0.05),  "conv3_b": rnd(ks[5], (C3,), 0.1),
        "bn1_g": 1.0 + rnd(ks[6], (C1,), 0.1),  "bn1_b": rnd(ks[7], (C1,), 0.1),
        "bn2_g": 1.0 + rnd(ks[8], (C2,), 0.1),  "bn2_b": rnd(ks[9], (C2,), 0.1),
        "bn3_g": 1.0 + rnd(ks[10], (C3,), 0.1), "bn3_b": rnd(ks[11], (C3,), 0.1),
        "lin_w": rnd(ks[12], (LIN_OUT, lin_in), 0.05), "lin_b": rnd(ks[13], (LIN_OUT,), 0.1),
        "lstm_wih": rnd(ks[14], (4 * HID, LIN_OUT), 0.05),
        "lstm_whh": rnd(ks[15], (4 * HID, HID), 0.05),   # unused at t=0 since h0 == 0
        "lstm_bih": rnd(ks[16], (4 * HID,), 0.1),
        "lstm_bhh": rnd(ks[17], (4 * HID,), 0.1),
        # TODO(synk): the module declares self.head = nn.Linear(128, outputs), which is
        # shape-incompatible with the 32-dim LSTM output it is applied to; implemented
        # with in_features=32 so the forward actually runs.
        "head_w": rnd(ks[18], (outputs, HID), 0.1),
        "head_b": rnd(ks[19], (outputs,), 0.1),
    }

    bias_gate = raw["lstm_bih"] + raw["lstm_bhh"]
    # keep only [i; g; o] rows (PyTorch order i,f,g,o) -- forget gate multiplies c0 == 0.
    w_igo = jnp.concatenate([raw["lstm_wih"][0:HID], raw["lstm_wih"][2 * HID:4 * HID]], axis=0)
    b_igo = jnp.concatenate([bias_gate[0:HID], bias_gate[2 * HID:4 * HID]])

    packed = {
        # conv1 weight (Cout, Cin*K*K) matching the wrapper-built patch rows (kh,kw).
        "w1": raw["conv1_w"].reshape(C1, KK),
        "g1": raw["bn1_g"].reshape(C1, 1), "b1": raw["bn1_b"].reshape(C1, 1),
        # composed bf16 0/1 selectors, all 25 taps lane-concatenated, padded to 128.
        "s2": _patch_selector(h1, w1, h1 * w1, h2, w2, jnp.bfloat16),
        "s3": _patch_selector(h2, w2, OUT_TILE, h3, w3, jnp.bfloat16),
        # fused conv weights (Cout, 25*Cin); contraction index = kk*Cin + cin.
        "w2": raw["conv2_w"].transpose(0, 2, 3, 1).reshape(C2, KK * C1).astype(jnp.bfloat16),
        "w3": raw["conv3_w"].transpose(0, 2, 3, 1).reshape(C3, KK * C2).astype(jnp.bfloat16),
        "g2": raw["bn2_g"].reshape(C2, 1), "b2": raw["bn2_b"].reshape(C2, 1),
        "g3": raw["bn3_g"].reshape(C3, 1), "b3": raw["bn3_b"].reshape(C3, 1),
        # linear weight as (p3, 32, 128) slabs: wlt[p, c, j] = lin_w[j, c*p3 + p].
        "wlt": raw["lin_w"].reshape(LIN_OUT, C3, p3).transpose(2, 1, 0),
        "blin": raw["lin_b"].reshape(1, LIN_OUT),
        # LSTM [i; g; o] gates pre-transposed for the (1,128) @ (128,96) row matmul.
        "wlstm": w_igo.T, "blstm": b_igo.reshape(1, 3 * HID),
        "whead": raw["head_w"].T, "bhead": raw["head_b"].reshape(1, outputs),
    }
    # NOTE: conv biases intentionally not packed -- training-mode BN subtracts the batch
    # mean, which cancels a per-channel bias exactly.
    return raw, packed, lin_in


# -----------------------------------------------------------------------------
# Forward: tiny XLA prologue (25 static strided slices for conv1 im2col) + one
# grid-less pallas_call with everything VMEM-resident.
# -----------------------------------------------------------------------------
@jax.jit
def dqn_forward(x, packed):
    if x.shape[0] != 1 or x.shape[1] != 1:
        raise ValueError("module forward requires batch 1, single input channel")
    h, w = x.shape[2], x.shape[3]
    h1, w1 = conv2d_size_out(h), conv2d_size_out(w)
    h2, w2 = conv2d_size_out(h1), conv2d_size_out(w1)
    h3, w3 = conv2d_size_out(h2), conv2d_size_out(w2)

    img = x[0, 0]
    rows = [img[kh:kh + (h1 - 1) * STRIDE + 1:STRIDE,
                kw:kw + (w1 - 1) * STRIDE + 1:STRIDE].reshape(1, h1 * w1)
            for kh in range(K) for kw in range(K)]
    patches1 = jnp.concatenate(rows, axis=0)                       # (25, h1*w1)

    outputs = packed["bhead"].shape[1]
    args = (patches1, packed["w1"], packed["g1"], packed["b1"],
            packed["s2"], packed["w2"], packed["g2"], packed["b2"],
            packed["s3"], packed["w3"], packed["g3"], packed["b3"],
            packed["wlt"], packed["blin"], packed["wlstm"], packed["blstm"],
            packed["whead"], packed["bhead"])

    kernel = functools.partial(dqn_kernel, valid2=h2 * w2, valid3=h3 * w3)
    # TODO(synk): for batched evaluation (e.g. to use v7x's second TensorCore), add a
    # leading batch grid axis with dimension_semantics=("parallel",).
    return pl.pallas_call(
        kernel,
        out_shape=jax.ShapeDtypeStruct((1, outputs), jnp.float32),
        in_specs=[pl.BlockSpec(memory_space=pltpu.MemorySpace.VMEM)] * len(args),
        out_specs=pl.BlockSpec(memory_space=pltpu.MemorySpace.VMEM),
        scratch_shapes=[pltpu.VMEM((KK * C1, OUT_TILE), jnp.bfloat16),   # conv2 taps
                        pltpu.VMEM((KK * C2, OUT_TILE), jnp.bfloat16)],  # conv3 taps
    )(*args)                                                        # (1, outputs), as torch


# -----------------------------------------------------------------------------
# Pure-JAX reference (independent path: lax.conv, full LSTM gates, explicit biases).
# -----------------------------------------------------------------------------
def reference_forward(x, raw):
    hp = lax.Precision.HIGHEST

    def conv(y, w_, b_):
        out = lax.conv_general_dilated(y, w_, (STRIDE, STRIDE), "VALID",
                                       dimension_numbers=("NCHW", "OIHW", "NCHW"),
                                       precision=hp)
        return out + b_.reshape(1, -1, 1, 1)

    def bn(y, g_, b_):
        mean = jnp.mean(y, axis=(0, 2, 3), keepdims=True)
        var = jnp.mean((y - mean) ** 2, axis=(0, 2, 3), keepdims=True)
        return (y - mean) / jnp.sqrt(var + EPS) * g_.reshape(1, -1, 1, 1) + b_.reshape(1, -1, 1, 1)

    y = jax.nn.relu(bn(conv(x, raw["conv1_w"], raw["conv1_b"]), raw["bn1_g"], raw["bn1_b"]))
    y = jax.nn.relu(bn(conv(y, raw["conv2_w"], raw["conv2_b"]), raw["bn2_g"], raw["bn2_b"]))
    y = jax.nn.relu(bn(conv(y, raw["conv3_w"], raw["conv3_b"]), raw["bn3_g"], raw["bn3_b"]))
    flat = y.reshape(y.shape[0], -1)
    lin = jax.nn.relu(jnp.dot(flat, raw["lin_w"].T, precision=hp) + raw["lin_b"])
    gates = jnp.dot(lin, raw["lstm_wih"].T, precision=hp) + raw["lstm_bih"] + raw["lstm_bhh"]
    i = jax.nn.sigmoid(gates[:, 0:HID])
    f = jax.nn.sigmoid(gates[:, HID:2 * HID])
    g = jnp.tanh(gates[:, 2 * HID:3 * HID])
    o = jax.nn.sigmoid(gates[:, 3 * HID:4 * HID])
    c1 = f * jnp.zeros((1, HID), jnp.float32) + i * g
    h1 = o * jnp.tanh(c1)
    return jnp.dot(h1, raw["head_w"].T, precision=hp) + raw["head_b"]


if __name__ == "__main__":
    H = W = 40          # 40 -> 18 -> 7 -> 2 ; linear_input_size = 2*2*32 = 128
    OUTPUTS = 4
    key = jax.random.PRNGKey(0)
    kx, kp = jax.random.split(key)

    raw_params, packed_params, lin_in = init_params(kp, H, W, OUTPUTS)
    assert lin_in == LIN_OUT, "forward's view(1, 1, 128) requires linear_input_size == 128"

    x = jax.random.normal(kx, (1, 1, H, W), dtype=jnp.float32)   # NCHW, batch must be 1
    out = jax.block_until_ready(dqn_forward(x, packed_params))
    ref = jax.block_until_ready(reference_forward(x, raw_params))

    assert out.shape == (1, OUTPUTS) and bool(jnp.all(jnp.isfinite(out)))
    assert bool(jnp.allclose(out, ref, rtol=5e-2, atol=5e-2)), (out, ref)
    print("KERNEL_OK")
</pallas_src>

<mosaic_0001>
module attributes {stable_mosaic.version = 11 : i64} {
  func.func @dqn_kernel(%arg0: memref<25x324xf32, #tpu.memory_space<vmem>>, %arg1: memref<16x25xf32, #tpu.memory_space<vmem>>, %arg2: memref<16x1xf32, #tpu.memory_space<vmem>>, %arg3: memref<16x1xf32, #tpu.memory_space<vmem>>, %arg4: memref<324x3200xbf16, #tpu.memory_space<vmem>>, %arg5: memref<32x400xbf16, #tpu.memory_space<vmem>>, %arg6: memref<32x1xf32, #tpu.memory_space<vmem>>, %arg7: memref<32x1xf32, #tpu.memory_space<vmem>>, %arg8: memref<128x3200xbf16, #tpu.memory_space<vmem>>, %arg9: memref<32x800xbf16, #tpu.memory_space<vmem>>, %arg10: memref<32x1xf32, #tpu.memory_space<vmem>>, %arg11: memref<32x1xf32, #tpu.memory_space<vmem>>, %arg12: memref<4x32x128xf32, #tpu.memory_space<vmem>>, %arg13: memref<1x128xf32, #tpu.memory_space<vmem>>, %arg14: memref<128x96xf32, #tpu.memory_space<vmem>>, %arg15: memref<1x96xf32, #tpu.memory_space<vmem>>, %arg16: memref<32x4xf32, #tpu.memory_space<vmem>>, %arg17: memref<1x4xf32, #tpu.memory_space<vmem>>, %arg18: memref<1x4xf32, #tpu.memory_space<vmem>>, %arg19: memref<400x128xbf16, #tpu.memory_space<vmem>>, %arg20: memref<800x128xbf16, #tpu.memory_space<vmem>>) attributes {dimension_semantics = [], scalar_prefetch = 0 : i64, scratch_operands = 2 : i64, tpu.core_type = #tpu.core_type<tc>} {
    %c0 = arith.constant 0 : index
    %c0_0 = arith.constant 0 : index
    %0 = vector.load %arg1[%c0, %c0_0] : memref<16x25xf32, #tpu.memory_space<vmem>>, vector<16x25xf32>
    %c0_1 = arith.constant 0 : index
    %c0_2 = arith.constant 0 : index
    %1 = vector.load %arg0[%c0_1, %c0_2] : memref<25x324xf32, #tpu.memory_space<vmem>>, vector<25x324xf32>
    %cst = arith.constant dense<0.000000e+00> : vector<16x324xf32>
    %2 = tpu.matmul %0, %1, %cst {dimension_numbers = #tpu.dot_dimension_numbers<[1], [0], [0], [1], [0, 0, 1, 1], [], []>} : vector<16x25xf32>, vector<25x324xf32>, vector<16x324xf32> -> vector<16x324xf32>
    %cst_3 = arith.constant dense<0.000000e+00> : vector<16xf32>
    %3 = vector.multi_reduction <add>, %2, %cst_3 [1] : vector<16x324xf32> to vector<16xf32>
    %4 = vector.shape_cast %3 : vector<16xf32> to vector<16x1xf32>
    %5 = arith.mulf %2, %2 : vector<16x324xf32>
    %cst_4 = arith.constant dense<0.000000e+00> : vector<16xf32>
    %6 = vector.multi_reduction <add>, %5, %cst_4 [1] : vector<16x324xf32> to vector<16xf32>
    %7 = vector.shape_cast %6 : vector<16xf32> to vector<16x1xf32>
    %cst_5 = arith.constant 0.00308641978 : f32
    %8 = vector.broadcast %cst_5 : f32 to vector<16x1xf32>
    %9 = arith.mulf %4, %8 : vector<16x1xf32>
    %cst_6 = arith.constant 0.00308641978 : f32
    %10 = vector.broadcast %cst_6 : f32 to vector<16x1xf32>
    %11 = arith.mulf %7, %10 : vector<16x1xf32>
    %12 = arith.mulf %9, %9 : vector<16x1xf32>
    %13 = arith.subf %11, %12 : vector<16x1xf32>
    %cst_7 = arith.constant 9.99999974E-6 : f32
    %14 = vector.broadcast %cst_7 : f32 to vector<16x1xf32>
    %15 = arith.addf %13, %14 : vector<16x1xf32>
    %16 = math.rsqrt %15 : vector<16x1xf32>
    %c0_8 = arith.constant 0 : index
    %c0_9 = arith.constant 0 : index
    %17 = vector.load %arg2[%c0_8, %c0_9] : memref<16x1xf32, #tpu.memory_space<vmem>>, vector<16x1xf32>
    %18 = arith.mulf %16, %17 : vector<16x1xf32>
    %19 = vector.broadcast %9 : vector<16x1xf32> to vector<16x324xf32>
    %20 = arith.subf %2, %19 : vector<16x324xf32>
    %21 = vector.broadcast %18 : vector<16x1xf32> to vector<16x324xf32>
    %22 = arith.mulf %20, %21 : vector<16x324xf32>
    %c0_10 = arith.constant 0 : index
    %c0_11 = arith.constant 0 : index
    %23 = vector.load %arg3[%c0_10, %c0_11] : memref<16x1xf32, #tpu.memory_space<vmem>>, vector<16x1xf32>
    %24 = vector.broadcast %23 : vector<16x1xf32> to vector<16x324xf32>
    %25 = arith.addf %22, %24 : vector<16x324xf32>
    %cst_12 = arith.constant 0.000000e+00 : f32
    %26 = vector.broadcast %cst_12 : f32 to vector<16x324xf32>
    %27 = arith.maximumf %25, %26 : vector<16x324xf32>
    %28 = arith.truncf %27 : vector<16x324xf32> to vector<16x324xbf16>
    %c0_13 = arith.constant 0 : index
    %c0_14 = arith.constant 0 : index
    %29 = vector.load %arg4[%c0_13, %c0_14] : memref<324x3200xbf16, #tpu.memory_space<vmem>>, vector<324x3200xbf16>
    %cst_15 = arith.constant dense<0.000000e+00> : vector<16x3200xf32>
    %30 = tpu.matmul %28, %29, %cst_15 {dimension_numbers = #tpu.dot_dimension_numbers<[1], [0], [0], [1], [0, 0, 1, 1], [], []>} : vector<16x324xbf16>, vector<324x3200xbf16>, vector<16x3200xf32> -> vector<16x3200xf32>
    %31 = arith.truncf %30 : vector<16x3200xf32> to vector<16x3200xbf16>
    %32 = vector.extract_strided_slice %31 {offsets = [0, 0], sizes = [16, 128], strides = [1, 1]} : vector<16x3200xbf16> to vector<16x128xbf16>
    %c0_16 = arith.constant 0 : index
    %c0_17 = arith.constant 0 : index
    %33 = vector.load %arg19[%c0_16, %c0_17] : memref<400x128xbf16, #tpu.memory_space<vmem>>, vector<16x128xbf16>
    tpu.vector_store %arg19[%c0_16, %c0_17], %32 {strides = array<i32>} : memref<400x128xbf16, #tpu.memory_space<vmem>>, vector<16x128xbf16>,
    %34 = vector.extract_strided_slice %31 {offsets = [0, 128], sizes = [16, 128], strides = [1, 1]} : vector<16x3200xbf16> to vector<16x128xbf16>
    %c16 = arith.constant 16 : index
    %c0_18 = arith.constant 0 : index
    %35 = vector.load %arg19[%c16, %c0_18] : memref<400x128xbf16, #tpu.memory_space<vmem>>, vector<16x128xbf16>
    tpu.vector_store %arg19[%c16, %c0_18], %34 {strides = array<i32>} : memref<400x128xbf16, #tpu.memory_space<vmem>>, vector<16x128xbf16>,
    %36 = vector.extract_strided_slice %31 {offsets = [0, 256], sizes = [16, 128], strides = [1, 1]} : vector<16x3200xbf16> to vector<16x128xbf16>
    %c32 = arith.constant 32 : index
    %c0_19 = arith.constant 0 : index
    %37 = vector.load %arg19[%c32, %c0_19] : memref<400x128xbf16, #tpu.memory_space<vmem>>, vector<16x128xbf16>
    tpu.vector_store %arg19[%c32, %c0_19], %36 {strides = array<i32>} : memref<400x128xbf16, #tpu.memory_space<vmem>>, vector<16x128xbf16>,
    %38 = vector.extract_strided_slice %31 {offsets = [0, 384], sizes = [16, 128], strides = [1, 1]} : vector<16x3200xbf16> to vector<16x128xbf16>
    %c48 = arith.constant 48 : index
    %c0_20 = arith.constant 0 : index
    %39 = vector.load %arg19[%c48, %c0_20] : memref<400x128xbf16, #tpu.memory_space<vmem>>, vector<16x128xbf16>
    tpu.vector_store %arg19[%c48, %c0_20], %38 {strides = array<i32>} : memref<400x128xbf16, #tpu.memory_space<vmem>>, vector<16x128xbf16>,
    %40 = vector.extract_strided_slice %31 {offsets = [0, 512], sizes = [16, 128], strides = [1, 1]} : vector<16x3200xbf16> to vector<16x128xbf16>
    %c64 = arith.constant 64 : index
    %c0_21 = arith.constant 0 : index
    %41 = vector.load %arg19[%c64, %c0_21] : memref<400x128xbf16, #tpu.memory_space<vmem>>, vector<16x128xbf16>
    tpu.vector_store %arg19[%c64, %c0_21], %40 {strides = array<i32>} : memref<400x128xbf16, #tpu.memory_space<vmem>>, vector<16x128xbf16>,
    %42 = vector.extract_strided_slice %31 {offsets = [0, 640], sizes = [16, 128], strides = [1, 1]} : vector<16x3200xbf16> to vector<16x128xbf16>
    %c80 = arith.constant 80 : index
    %c0_22 = arith.constant 0 : index
    %43 = vector.load %arg19[%c80, %c0_22] : memref<400x128xbf16, #tpu.memory_space<vmem>>, vector<16x128xbf16>
    tpu.vector_store %arg19[%c80, %c0_22], %42 {strides = array<i32>} : memref<400x128xbf16, #tpu.memory_space<vmem>>, vector<16x128xbf16>,
    %44 = vector.extract_strided_slice %31 {offsets = [0, 768], sizes = [16, 128], strides = [1, 1]} : vector<16x3200xbf16> to vector<16x128xbf16>
    %c96 = arith.constant 96 : index
    %c0_23 = arith.constant 0 : index
    %45 = vector.load %arg19[%c96, %c0_23] : memref<400x128xbf16, #tpu.memory_space<vmem>>, vector<16x128xbf16>
    tpu.vector_store %arg19[%c96, %c0_23], %44 {strides = array<i32>} : memref<400x128xbf16, #tpu.memory_space<vmem>>, vector<16x128xbf16>,
    %46 = vector.extract_strided_slice %31 {offsets = [0, 896], sizes = [16, 128], strides = [1, 1]} : vector<16x3200xbf16> to vector<16x128xbf16>
    %c112 = arith.constant 112 : index
    %c0_24 = arith.constant 0 : index
    %47 = vector.load %arg19[%c112, %c0_24] : memref<400x128xbf16, #tpu.memory_space<vmem>>, vector<16x128xbf16>
    tpu.vector_store %arg19[%c112, %c0_24], %46 {strides = array<i32>} : memref<400x128xbf16, #tpu.memory_space<vmem>>, vector<16x128xbf16>,
    %48 = vector.extract_strided_slice %31 {offsets = [0, 1024], sizes = [16, 128], strides = [1, 1]} : vector<16x3200xbf16> to vector<16x128xbf16>
    %c128 = arith.constant 128 : index
    %c0_25 = arith.constant 0 : index
    %49 = vector.load %arg19[%c128, %c0_25] : memref<400x128xbf16, #tpu.memory_space<vmem>>, vector<16x128xbf16>
    tpu.vector_store %arg19[%c128, %c0_25], %48 {strides = array<i32>} : memref<400x128xbf16, #tpu.memory_space<vmem>>, vector<16x128xbf16>,
    %50 = vector.extract_strided_slice %31 {offsets = [0, 1152], sizes = [16, 128], strides = [1, 1]} : vector<16x3200xbf16> to vector<16x128xbf16>
    %c144 = arith.constant 144 : index
    %c0_26 = arith.constant 0 : index
    %51 = vector.load %arg19[%c144, %c0_26] : memref<400x128xbf16, #tpu.memory_space<vmem>>, vector<16x128xbf16>
    tpu.vector_store %arg19[%c144, %c0_26], %50 {strides = array<i32>} : memref<400x128xbf16, #tpu.memory_space<vmem>>, vector<16x128xbf16>,
    %52 = vector.extract_strided_slice %31 {offsets = [0, 1280], sizes = [16, 128], strides = [1, 1]} : vector<16x3200xbf16> to vector<16x128xbf16>
    %c160 = arith.constant 160 : index
    %c0_27 = arith.constant 0 : index
    %53 = vector.load %arg19[%c160, %c0_27] : memref<400x128xbf16, #tpu.memory_space<vmem>>, vector<16x128xbf16>
    tpu.vector_store %arg19[%c160, %c0_27], %52 {strides = array<i32>} : memref<400x128xbf16, #tpu.memory_space<vmem>>, vector<16x128xbf16>,
    %54 = vector.extract_strided_slice %31 {offsets = [0, 1408], sizes = [16, 128], strides = [1, 1]} : vector<16x3200xbf16> to vector<16x128xbf16>
    %c176 = arith.constant 176 : index
    %c0_28 = arith.constant 0 : index
    %55 = vector.load %arg19[%c176, %c0_28] : memref<400x128xbf16, #tpu.memory_space<vmem>>, vector<16x128xbf16>
    tpu.vector_store %arg19[%c176, %c0_28], %54 {strides = array<i32>} : memref<400x128xbf16, #tpu.memory_space<vmem>>, vector<16x128xbf16>,
    %56 = vector.extract_strided_slice %31 {offsets = [0, 1536], sizes = [16, 128], strides = [1, 1]} : vector<16x3200xbf16> to vector<16x128xbf16>
    %c192 = arith.constant 192 : index
    %c0_29 = arith.constant 0 : index
    %57 = vector.load %arg19[%c192, %c0_29] : memref<400x128xbf16, #tpu.memory_space<vmem>>, vector<16x128xbf16>
    tpu.vector_store %arg19[%c192, %c0_29], %56 {strides = array<i32>} : memref<400x128xbf16, #tpu.memory_space<vmem>>, vector<16x128xbf16>,
    %58 = vector.extract_strided_slice %31 {offsets = [0, 1664], sizes = [16, 128], strides = [1, 1]} : vector<16x3200xbf16> to vector<16x128xbf16>
    %c208 = arith.constant 208 : index
    %c0_30 = arith.constant 0 : index
    %59 = vector.load %arg19[%c208, %c0_30] : memref<400x128xbf16, #tpu.memory_space<vmem>>, vector<16x128xbf16>
    tpu.vector_store %arg19[%c208, %c0_30], %58 {strides = array<i32>} : memref<400x128xbf16, #tpu.memory_space<vmem>>, vector<16x128xbf16>,
    %60 = vector.extract_strided_slice %31 {offsets = [0, 1792], sizes = [16, 128], strides = [1, 1]} : vector<16x3200xbf16> to vector<16x128xbf16>
    %c224 = arith.constant 224 : index
    %c0_31 = arith.constant 0 : index
    %61 = vector.load %arg19[%c224, %c0_31] : memref<400x128xbf16, #tpu.memory_space<vmem>>, vector<16x128xbf16>
    tpu.vector_store %arg19[%c224, %c0_31], %60 {strides = array<i32>} : memref<400x128xbf16, #tpu.memory_space<vmem>>, vector<16x128xbf16>,
    %62 = vector.extract_strided_slice %31 {offsets = [0, 1920], sizes = [16, 128], strides = [1, 1]} : vector<16x3200xbf16> to vector<16x128xbf16>
    %c240 = arith.constant 240 : index
    %c0_32 = arith.constant 0 : index
    %63 = vector.load %arg19[%c240, %c0_32] : memref<400x128xbf16, #tpu.memory_space<vmem>>, vector<16x128xbf16>
    tpu.vector_store %arg19[%c240, %c0_32], %62 {strides = array<i32>} : memref<400x128xbf16, #tpu.memory_space<vmem>>, vector<16x128xbf16>,
    %64 = vector.extract_strided_slice %31 {offsets = [0, 2048], sizes = [16, 128], strides = [1, 1]} : vector<16x3200xbf16> to vector<16x128xbf16>
    %c256 = arith.constant 256 : index
    %c0_33 = arith.constant 0 : index
    %65 = vector.load %arg19[%c256, %c0_33] : memref<400x128xbf16, #tpu.memory_space<vmem>>, vector<16x128xbf16>
    tpu.vector_store %arg19[%c256, %c0_33], %64 {strides = array<i32>} : memref<400x128xbf16, #tpu.memory_space<vmem>>, vector<16x128xbf16>,
    %66 = vector.extract_strided_slice %31 {offsets = [0, 2176], sizes = [16, 128], strides = [1, 1]} : vector<16x3200xbf16> to vector<16x128xbf16>
    %c272 = arith.constant 272 : index
    %c0_34 = arith.constant 0 : index
    %67 = vector.load %arg19[%c272, %c0_34] : memref<400x128xbf16, #tpu.memory_space<vmem>>, vector<16x128xbf16>
    tpu.vector_store %arg19[%c272, %c0_34], %66 {strides = array<i32>} : memref<400x128xbf16, #tpu.memory_space<vmem>>, vector<16x128xbf16>,
    %68 = vector.extract_strided_slice %31 {offsets = [0, 2304], sizes = [16, 128], strides = [1, 1]} : vector<16x3200xbf16> to vector<16x128xbf16>
    %c288 = arith.constant 288 : index
    %c0_35 = arith.constant 0 : index
    %69 = vector.load %arg19[%c288, %c0_35] : memref<400x128xbf16, #tpu.memory_space<vmem>>, vector<16x128xbf16>
    tpu.vector_store %arg19[%c288, %c0_35], %68 {strides = array<i32>} : memref<400x128xbf16, #tpu.memory_space<vmem>>, vector<16x128xbf16>,
    %70 = vector.extract_strided_slice %31 {offsets = [0, 2432], sizes = [16, 128], strides = [1, 1]} : vector<16x3200xbf16> to vector<16x128xbf16>
    %c304 = arith.constant 304 : index
    %c0_36 = arith.constant 0 : index
    %71 = vector.load %arg19[%c304, %c0_36] : memref<400x128xbf16, #tpu.memory_space<vmem>>, vector<16x128xbf16>
    tpu.vector_store %arg19[%c304, %c0_36], %70 {strides = array<i32>} : memref<400x128xbf16, #tpu.memory_space<vmem>>, vector<16x128xbf16>,
    %72 = vector.extract_strided_slice %31 {offsets = [0, 2560], sizes = [16, 128], strides = [1, 1]} : vector<16x3200xbf16> to vector<16x128xbf16>
    %c320 = arith.constant 320 : index
    %c0_37 = arith.constant 0 : index
    %73 = vector.load %arg19[%c320, %c0_37] : memref<400x128xbf16, #tpu.memory_space<vmem>>, vector<16x128xbf16>
    tpu.vector_store %arg19[%c320, %c0_37], %72 {strides = array<i32>} : memref<400x128xbf16, #tpu.memory_space<vmem>>, vector<16x128xbf16>,
    %74 = vector.extract_strided_slice %31 {offsets = [0, 2688], sizes = [16, 128], strides = [1, 1]} : vector<16x3200xbf16> to vector<16x128xbf16>
    %c336 = arith.constant 336 : index
    %c0_38 = arith.constant 0 : index
    %75 = vector.load %arg19[%c336, %c0_38] : memref<400x128xbf16, #tpu.memory_space<vmem>>, vector<16x128xbf16>
    tpu.vector_store %arg19[%c336, %c0_38], %74 {strides = array<i32>} : memref<400x128xbf16, #tpu.memory_space<vmem>>, vector<16x128xbf16>,
    %76 = vector.extract_strided_slice %31 {offsets = [0, 2816], sizes = [16, 128], strides = [1, 1]} : vector<16x3200xbf16> to vector<16x128xbf16>
    %c352 = arith.constant 352 : index
    %c0_39 = arith.constant 0 : index
    %77 = vector.load %arg19[%c352, %c0_39] : memref<400x128xbf16, #tpu.memory_space<vmem>>, vector<16x128xbf16>
    tpu.vector_store %arg19[%c352, %c0_39], %76 {strides = array<i32>} : memref<400x128xbf16, #tpu.memory_space<vmem>>, vector<16x128xbf16>,
    %78 = vector.extract_strided_slice %31 {offsets = [0, 2944], sizes = [16, 128], strides = [1, 1]} : vector<16x3200xbf16> to vector<16x128xbf16>
    %c368 = arith.constant 368 : index
    %c0_40 = arith.constant 0 : index
    %79 = vector.load %arg19[%c368, %c0_40] : memref<400x128xbf16, #tpu.memory_space<vmem>>, vector<16x128xbf16>
    tpu.vector_store %arg19[%c368, %c0_40], %78 {strides = array<i32>} : memref<400x128xbf16, #tpu.memory_space<vmem>>, vector<16x128xbf16>,
    %80 = vector.extract_strided_slice %31 {offsets = [0, 3072], sizes = [16, 128], strides = [1, 1]} : vector<16x3200xbf16> to vector<16x128xbf16>
    %c384 = arith.constant 384 : index
    %c0_41 = arith.constant 0 : index
    %81 = vector.load %arg19[%c384, %c0_41] : memref<400x128xbf16, #tpu.memory_space<vmem>>, vector<16x128xbf16>
    tpu.vector_store %arg19[%c384, %c0_41], %80 {strides = array<i32>} : memref<400x128xbf16, #tpu.memory_space<vmem>>, vector<16x128xbf16>,
    %c0_42 = arith.constant 0 : index
    %c0_43 = arith.constant 0 : index
    %82 = vector.load %arg5[%c0_42, %c0_43] : memref<32x400xbf16, #tpu.memory_space<vmem>>, vector<32x400xbf16>
    %c0_44 = arith.constant 0 : index
    %c0_45 = arith.constant 0 : index
    %83 = vector.load %arg19[%c0_44, %c0_45] : memref<400x128xbf16, #tpu.memory_space<vmem>>, vector<400x128xbf16>
    %cst_46 = arith.constant dense<0.000000e+00> : vector<32x128xf32>
    %84 = tpu.matmul %82, %83, %cst_46 {dimension_numbers = #tpu.dot_dimension_numbers<[1], [0], [0], [1], [0, 0, 1, 1], [], []>} : vector<32x400xbf16>, vector<400x128xbf16>, vector<32x128xf32> -> vector<32x128xf32>
    %cst_47 = arith.constant dense<0.000000e+00> : vector<32xf32>
    %85 = vector.multi_reduction <add>, %84, %cst_47 [1] : vector<32x128xf32> to vector<32xf32>
    %86 = vector.shape_cast %85 : vector<32xf32> to vector<32x1xf32>
    %87 = arith.mulf %84, %84 : vector<32x128xf32>
    %cst_48 = arith.constant dense<0.000000e+00> : vector<32xf32>
    %88 = vector.multi_reduction <add>, %87, %cst_48 [1] : vector<32x128xf32> to vector<32xf32>
    %89 = vector.shape_cast %88 : vector<32xf32> to vector<32x1xf32>
    %cst_49 = arith.constant 0.0204081628 : f32
    %90 = vector.broadcast %cst_49 : f32 to vector<32x1xf32>
    %91 = arith.mulf %86, %90 : vector<32x1xf32>
    %cst_50 = arith.constant 0.0204081628 : f32
    %92 = vector.broadcast %cst_50 : f32 to vector<32x1xf32>
    %93 = arith.mulf %89, %92 : vector<32x1xf32>
    %94 = arith.mulf %91, %91 : vector<32x1xf32>
    %95 = arith.subf %93, %94 : vector<32x1xf32>
    %cst_51 = arith.constant 9.99999974E-6 : f32
    %96 = vector.broadcast %cst_51 : f32 to vector<32x1xf32>
    %97 = arith.addf %95, %96 : vector<32x1xf32>
    %98 = math.rsqrt %97 : vector<32x1xf32>
    %c0_52 = arith.constant 0 : index
    %c0_53 = arith.constant 0 : index
    %99 = vector.load %arg6[%c0_52, %c0_53] : memref<32x1xf32, #tpu.memory_space<vmem>>, vector<32x1xf32>
    %100 = arith.mulf %98, %99 : vector<32x1xf32>
    %101 = vector.broadcast %91 : vector<32x1xf32> to vector<32x128xf32>
    %102 = arith.subf %84, %101 : vector<32x128xf32>
    %103 = vector.broadcast %100 : vector<32x1xf32> to vector<32x128xf32>
    %104 = arith.mulf %102, %103 : vector<32x128xf32>
    %c0_54 = arith.constant 0 : index
    %c0_55 = arith.constant 0 : index
    %105 = vector.load %arg7[%c0_54, %c0_55] : memref<32x1xf32, #tpu.memory_space<vmem>>, vector<32x1xf32>
    %106 = vector.broadcast %105 : vector<32x1xf32> to vector<32x128xf32>
    %107 = arith.addf %104, %106 : vector<32x128xf32>
    %cst_56 = arith.constant 0.000000e+00 : f32
    %108 = vector.broadcast %cst_56 : f32 to vector<32x128xf32>
    %109 = arith.maximumf %107, %108 : vector<32x128xf32>
    %110 = tpu.iota {dimensions = array<i32: 1>} : vector<32x128xi32>
    %c49_i32 = arith.constant 49 : i32
    %111 = vector.broadcast %c49_i32 : i32 to vector<32x128xi32>
    %112 = arith.cmpi slt, %110, %111 : vector<32x128xi32>
    %cst_57 = arith.constant 0.000000e+00 : f32
    %113 = vector.broadcast %cst_57 : f32 to vector<32x128xf32>
    %114 = arith.select %112, %109, %113 : vector<32x128xi1>, vector<32x128xf32>
    %115 = arith.truncf %114 : vector<32x128xf32> to vector<32x128xbf16>
    %c0_58 = arith.constant 0 : index
    %c0_59 = arith.constant 0 : index
    %116 = vector.load %arg8[%c0_58, %c0_59] : memref<128x3200xbf16, #tpu.memory_space<vmem>>, vector<128x3200xbf16>
    %cst_60 = arith.constant dense<0.000000e+00> : vector<32x3200xf32>
    %117 = tpu.matmul %115, %116, %cst_60 {dimension_numbers = #tpu.dot_dimension_numbers<[1], [0], [0], [1], [0, 0, 1, 1], [], []>} : vector<32x128xbf16>, vector<128x3200xbf16>, vector<32x3200xf32> -> vector<32x3200xf32>
    %118 = arith.truncf %117 : vector<32x3200xf32> to vector<32x3200xbf16>
    %119 = vector.extract_strided_slice %118 {offsets = [0, 0], sizes = [32, 128], strides = [1, 1]} : vector<32x3200xbf16> to vector<32x128xbf16>
    %c0_61 = arith.constant 0 : index
    %c0_62 = arith.constant 0 : index
    %120 = vector.load %arg20[%c0_61, %c0_62] : memref<800x128xbf16, #tpu.memory_space<vmem>>, vector<32x128xbf16>
    tpu.vector_store %arg20[%c0_61, %c0_62], %119 {strides = array<i32>} : memref<800x128xbf16, #tpu.memory_space<vmem>>, vector<32x128xbf16>,
    %121 = vector.extract_strided_slice %118 {offsets = [0, 128], sizes = [32, 128], strides = [1, 1]} : vector<32x3200xbf16> to vector<32x128xbf16>
    %c32_63 = arith.constant 32 : index
    %c0_64 = arith.constant 0 : index
    %122 = vector.load %arg20[%c32_63, %c0_64] : memref<800x128xbf16, #tpu.memory_space<vmem>>, vector<32x128xbf16>
    tpu.vector_store %arg20[%c32_63, %c0_64], %121 {strides = array<i32>} : memref<800x128xbf16, #tpu.memory_space<vmem>>, vector<32x128xbf16>,
    %123 = vector.extract_strided_slice %118 {offsets = [0, 256], sizes = [32, 128], strides = [1, 1]} : vector<32x3200xbf16> to vector<32x128xbf16>
    %c64_65 = arith.constant 64 : index
    %c0_66 = arith.constant 0 : index
    %124 = vector.load %arg20[%c64_65, %c0_66] : memref<800x128xbf16, #tpu.memory_space<vmem>>, vector<32x128xbf16>
    tpu.vector_store %arg20[%c64_65, %c0_66], %123 {strides = array<i32>} : memref<800x128xbf16, #tpu.memory_space<vmem>>, vector<32x128xbf16>,
    %125 = vector.extract_strided_slice %118 {offsets = [0, 384], sizes = [32, 128], strides = [1, 1]} : vector<32x3200xbf16> to vector<32x128xbf16>
    %c96_67 = arith.constant 96 : index
    %c0_68 = arith.constant 0 : index
    %126 = vector.load %arg20[%c96_67, %c0_68] : memref<800x128xbf16, #tpu.memory_space<vmem>>, vector<32x128xbf16>
    tpu.vector_store %arg20[%c96_67, %c0_68], %125 {strides = array<i32>} : memref<800x128xbf16, #tpu.memory_space<vmem>>, vector<32x128xbf16>,
    %127 = vector.extract_strided_slice %118 {offsets = [0, 512], sizes = [32, 128], strides = [1, 1]} : vector<32x3200xbf16> to vector<32x128xbf16>
    %c128_69 = arith.constant 128 : index
    %c0_70 = arith.constant 0 : index
    %128 = vector.load %arg20[%c128_69, %c0_70] : memref<800x128xbf16, #tpu.memory_space<vmem>>, vector<32x128xbf16>
    tpu.vector_store %arg20[%c128_69, %c0_70], %127 {strides = array<i32>} : memref<800x128xbf16, #tpu.memory_space<vmem>>, vector<32x128xbf16>,
    %129 = vector.extract_strided_slice %118 {offsets = [0, 640], sizes = [32, 128], strides = [1, 1]} : vector<32x3200xbf16> to vector<32x128xbf16>
    %c160_71 = arith.constant 160 : index
    %c0_72 = arith.constant 0 : index
    %130 = vector.load %arg20[%c160_71, %c0_72] : memref<800x128xbf16, #tpu.memory_space<vmem>>, vector<32x128xbf16>
    tpu.vector_store %arg20[%c160_71, %c0_72], %129 {strides = array<i32>} : memref<800x128xbf16, #tpu.memory_space<vmem>>, vector<32x128xbf16>,
    %131 = vector.extract_strided_slice %118 {offsets = [0, 768], sizes = [32, 128], strides = [1, 1]} : vector<32x3200xbf16> to vector<32x128xbf16>
    %c192_73 = arith.constant 192 : index
    %c0_74 = arith.constant 0 : index
    %132 = vector.load %arg20[%c192_73, %c0_74] : memref<800x128xbf16, #tpu.memory_space<vmem>>, vector<32x128xbf16>
    tpu.vector_store %arg20[%c192_73, %c0_74], %131 {strides = array<i32>} : memref<800x128xbf16, #tpu.memory_space<vmem>>, vector<32x128xbf16>,
    %133 = vector.extract_strided_slice %118 {offsets = [0, 896], sizes = [32, 128], strides = [1, 1]} : vector<32x3200xbf16> to vector<32x128xbf16>
    %c224_75 = arith.constant 224 : index
    %c0_76 = arith.constant 0 : index
    %134 = vector.load %arg20[%c224_75, %c0_76] : memref<800x128xbf16, #tpu.memory_space<vmem>>, vector<32x128xbf16>
    tpu.vector_store %arg20[%c224_75, %c0_76], %133 {strides = array<i32>} : memref<800x128xbf16, #tpu.memory_space<vmem>>, vector<32x128xbf16>,
    %135 = vector.extract_strided_slice %118 {offsets = [0, 1024], sizes = [32, 128], strides = [1, 1]} : vector<32x3200xbf16> to vector<32x128xbf16>
    %c256_77 = arith.constant 256 : index
    %c0_78 = arith.constant 0 : index
    %136 = vector.load %arg20[%c256_77, %c0_78] : memref<800x128xbf16, #tpu.memory_space<vmem>>, vector<32x128xbf16>
    tpu.vector_store %arg20[%c256_77, %c0_78], %135 {strides = array<i32>} : memref<800x128xbf16, #tpu.memory_space<vmem>>, vector<32x128xbf16>,
    %137 = vector.extract_strided_slice %118 {offsets = [0, 1152], sizes = [32, 128], strides = [1, 1]} : vector<32x3200xbf16> to vector<32x128xbf16>
    %c288_79 = arith.constant 288 : index
    %c0_80 = arith.constant 0 : index
    %138 = vector.load %arg20[%c288_79, %c0_80] : memref<800x128xbf16, #tpu.memory_space<vmem>>, vector<32x128xbf16>
    tpu.vector_store %arg20[%c288_79, %c0_80], %137 {strides = array<i32>} : memref<800x128xbf16, #tpu.memory_space<vmem>>, vector<32x128xbf16>,
    %139 = vector.extract_strided_slice %118 {offsets = [0, 1280], sizes = [32, 128], strides = [1, 1]} : vector<32x3200xbf16> to vector<32x128xbf16>
    %c320_81 = arith.constant 320 : index
    %c0_82 = arith.constant 0 : index
    %140 = vector.load %arg20[%c320_81, %c0_82] : memref<800x128xbf16, #tpu.memory_space<vmem>>, vector<32x128xbf16>
    tpu.vector_store %arg20[%c320_81, %c0_82], %139 {strides = array<i32>} : memref<800x128xbf16, #tpu.memory_space<vmem>>, vector<32x128xbf16>,
    %141 = vector.extract_strided_slice %118 {offsets = [0, 1408], sizes = [32, 128], strides = [1, 1]} : vector<32x3200xbf16> to vector<32x128xbf16>
    %c352_83 = arith.constant 352 : index
    %c0_84 = arith.constant 0 : index
    %142 = vector.load %arg20[%c352_83, %c0_84] : memref<800x128xbf16, #tpu.memory_space<vmem>>, vector<32x128xbf16>
    tpu.vector_store %arg20[%c352_83, %c0_84], %141 {strides = array<i32>} : memref<800x128xbf16, #tpu.memory_space<vmem>>, vector<32x128xbf16>,
    %143 = vector.extract_strided_slice %118 {offsets = [0, 1536], sizes = [32, 128], strides = [1, 1]} : vector<32x3200xbf16> to vector<32x128xbf16>
    %c384_85 = arith.constant 384 : index
    %c0_86 = arith.constant 0 : index
    %144 = vector.load %arg20[%c384_85, %c0_86] : memref<800x128xbf16, #tpu.memory_space<vmem>>, vector<32x128xbf16>
    tpu.vector_store %arg20[%c384_85, %c0_86], %143 {strides = array<i32>} : memref<800x128xbf16, #tpu.memory_space<vmem>>, vector<32x128xbf16>,
    %145 = vector.extract_strided_slice %118 {offsets = [0, 1664], sizes = [32, 128], strides = [1, 1]} : vector<32x3200xbf16> to vector<32x128xbf16>
    %c416 = arith.constant 416 : index
    %c0_87 = arith.constant 0 : index
    %146 = vector.load %arg20[%c416, %c0_87] : memref<800x128xbf16, #tpu.memory_space<vmem>>, vector<32x128xbf16>
    tpu.vector_store %arg20[%c416, %c0_87], %145 {strides = array<i32>} : memref<800x128xbf16, #tpu.memory_space<vmem>>, vector<32x128xbf16>,
    %147 = vector.extract_strided_slice %118 {offsets = [0, 1792], sizes = [32, 128], strides = [1, 1]} : vector<32x3200xbf16> to vector<32x128xbf16>
    %c448 = arith.constant 448 : index
    %c0_88 = arith.constant 0 : index
    %148 = vector.load %arg20[%c448, %c0_88] : memref<800x128xbf16, #tpu.memory_space<vmem>>, vector<32x128xbf16>
    tpu.vector_store %arg20[%c448, %c0_88], %147 {strides = array<i32>} : memref<800x128xbf16, #tpu.memory_space<vmem>>, vector<32x128xbf16>,
    %149 = vector.extract_strided_slice %118 {offsets = [0, 1920], sizes = [32, 128], strides = [1, 1]} : vector<32x3200xbf16> to vector<32x128xbf16>
    %c480 = arith.constant 480 : index
    %c0_89 = arith.constant 0 : index
    %150 = vector.load %arg20[%c480, %c0_89] : memref<800x128xbf16, #tpu.memory_space<vmem>>, vector<32x128xbf16>
    tpu.vector_store %arg20[%c480, %c0_89], %149 {strides = array<i32>} : memref<800x128xbf16, #tpu.memory_space<vmem>>, vector<32x128xbf16>,
    %151 = vector.extract_strided_slice %118 {offsets = [0, 2048], sizes = [32, 128], strides = [1, 1]} : vector<32x3200xbf16> to vector<32x128xbf16>
    %c512 = arith.constant 512 : index
    %c0_90 = arith.constant 0 : index
    %152 = vector.load %arg20[%c512, %c0_90] : memref<800x128xbf16, #tpu.memory_space<vmem>>, vector<32x128xbf16>
    tpu.vector_store %arg20[%c512, %c0_90], %151 {strides = array<i32>} : memref<800x128xbf16, #tpu.memory_space<vmem>>, vector<32x128xbf16>,
    %153 = vector.extract_strided_slice %118 {offsets = [0, 2176], sizes = [32, 128], strides = [1, 1]} : vector<32x3200xbf16> to vector<32x128xbf16>
    %c544 = arith.constant 544 : index
    %c0_91 = arith.constant 0 : index
    %154 = vector.load %arg20[%c544, %c0_91] : memref<800x128xbf16, #tpu.memory_space<vmem>>, vector<32x128xbf16>
    tpu.vector_store %arg20[%c544, %c0_91], %153 {strides = array<i32>} : memref<800x128xbf16, #tpu.memory_space<vmem>>, vector<32x128xbf16>,
    %155 = vector.extract_strided_slice %118 {offsets = [0, 2304], sizes = [32, 128], strides = [1, 1]} : vector<32x3200xbf16> to vector<32x128xbf16>
    %c576 = arith.constant 576 : index
    %c0_92 = arith.constant 0 : index
    %156 = vector.load %arg20[%c576, %c0_92] : memref<800x128xbf16, #tpu.memory_space<vmem>>, vector<32x128xbf16>
    tpu.vector_store %arg20[%c576, %c0_92], %155 {strides = array<i32>} : memref<800x128xbf16, #tpu.memory_space<vmem>>, vector<32x128xbf16>,
    %157 = vector.extract_strided_slice %118 {offsets = [0, 2432], sizes = [32, 128], strides = [1, 1]} : vector<32x3200xbf16> to vector<32x128xbf16>
    %c608 = arith.constant 608 : index
    %c0_93 = arith.constant 0 : index
    %158 = vector.load %arg20[%c608, %c0_93] : memref<800x128xbf16, #tpu.memory_space<vmem>>, vector<32x128xbf16>
    tpu.vector_store %arg20[%c608, %c0_93], %157 {strides = array<i32>} : memref<800x128xbf16, #tpu.memory_space<vmem>>, vector<32x128xbf16>,
    %159 = vector.extract_strided_slice %118 {offsets = [0, 2560], sizes = [32, 128], strides = [1, 1]} : vector<32x3200xbf16> to vector<32x128xbf16>
    %c640 = arith.constant 640 : index
    %c0_94 = arith.constant 0 : index
    %160 = vector.load %arg20[%c640, %c0_94] : memref<800x128xbf16, #tpu.memory_space<vmem>>, vector<32x128xbf16>
    tpu.vector_store %arg20[%c640, %c0_94], %159 {strides = array<i32>} : memref<800x128xbf16, #tpu.memory_space<vmem>>, vector<32x128xbf16>,
    %161 = vector.extract_strided_slice %118 {offsets = [0, 2688], sizes = [32, 128], strides = [1, 1]} : vector<32x3200xbf16> to vector<32x128xbf16>
    %c672 = arith.constant 672 : index
    %c0_95 = arith.constant 0 : index
    %162 = vector.load %arg20[%c672, %c0_95] : memref<800x128xbf16, #tpu.memory_space<vmem>>, vector<32x128xbf16>
    tpu.vector_store %arg20[%c672, %c0_95], %161 {strides = array<i32>} : memref<800x128xbf16, #tpu.memory_space<vmem>>, vector<32x128xbf16>,
    %163 = vector.extract_strided_slice %118 {offsets = [0, 2816], sizes = [32, 128], strides = [1, 1]} : vector<32x3200xbf16> to vector<32x128xbf16>
    %c704 = arith.constant 704 : index
    %c0_96 = arith.constant 0 : index
    %164 = vector.load %arg20[%c704, %c0_96] : memref<800x128xbf16, #tpu.memory_space<vmem>>, vector<32x128xbf16>
    tpu.vector_store %arg20[%c704, %c0_96], %163 {strides = array<i32>} : memref<800x128xbf16, #tpu.memory_space<vmem>>, vector<32x128xbf16>,
    %165 = vector.extract_strided_slice %118 {offsets = [0, 2944], sizes = [32, 128], strides = [1, 1]} : vector<32x3200xbf16> to vector<32x128xbf16>
    %c736 = arith.constant 736 : index
    %c0_97 = arith.constant 0 : index
    %166 = vector.load %arg20[%c736, %c0_97] : memref<800x128xbf16, #tpu.memory_space<vmem>>, vector<32x128xbf16>
    tpu.vector_store %arg20[%c736, %c0_97], %165 {strides = array<i32>} : memref<800x128xbf16, #tpu.memory_space<vmem>>, vector<32x128xbf16>,
    %167 = vector.extract_strided_slice %118 {offsets = [0, 3072], sizes = [32, 128], strides = [1, 1]} : vector<32x3200xbf16> to vector<32x128xbf16>
    %c768 = arith.constant 768 : index
    %c0_98 = arith.constant 0 : index
    %168 = vector.load %arg20[%c768, %c0_98] : memref<800x128xbf16, #tpu.memory_space<vmem>>, vector<32x128xbf16>
    tpu.vector_store %arg20[%c768, %c0_98], %167 {strides = array<i32>} : memref<800x128xbf16, #tpu.memory_space<vmem>>, vector<32x128xbf16>,
    %c0_99 = arith.constant 0 : index
    %c0_100 = arith.constant 0 : index
    %169 = vector.load %arg9[%c0_99, %c0_100] : memref<32x800xbf16, #tpu.memory_space<vmem>>, vector<32x800xbf16>
    %c0_101 = arith.constant 0 : index
    %c0_102 = arith.constant 0 : index
    %170 = vector.load %arg20[%c0_101, %c0_102] : memref<800x128xbf16, #tpu.memory_space<vmem>>, vector<800x128xbf16>
    %cst_103 = arith.constant dense<0.000000e+00> : vector<32x128xf32>
    %171 = tpu.matmul %169, %170, %cst_103 {dimension_numbers = #tpu.dot_dimension_numbers<[1], [0], [0], [1], [0, 0, 1, 1], [], []>} : vector<32x800xbf16>, vector<800x128xbf16>, vector<32x128xf32> -> vector<32x128xf32>
    %cst_104 = arith.constant dense<0.000000e+00> : vector<32xf32>
    %172 = vector.multi_reduction <add>, %171, %cst_104 [1] : vector<32x128xf32> to vector<32xf32>
    %173 = vector.shape_cast %172 : vector<32xf32> to vector<32x1xf32>
    %174 = arith.mulf %171, %171 : vector<32x128xf32>
    %cst_105 = arith.constant dense<0.000000e+00> : vector<32xf32>
    %175 = vector.multi_reduction <add>, %174, %cst_105 [1] : vector<32x128xf32> to vector<32xf32>
    %176 = vector.shape_cast %175 : vector<32xf32> to vector<32x1xf32>
    %cst_106 = arith.constant 2.500000e-01 : f32
    %177 = vector.broadcast %cst_106 : f32 to vector<32x1xf32>
    %178 = arith.mulf %173, %177 : vector<32x1xf32>
    %cst_107 = arith.constant 2.500000e-01 : f32
    %179 = vector.broadcast %cst_107 : f32 to vector<32x1xf32>
    %180 = arith.mulf %176, %179 : vector<32x1xf32>
    %181 = arith.mulf %178, %178 : vector<32x1xf32>
    %182 = arith.subf %180, %181 : vector<32x1xf32>
    %cst_108 = arith.constant 9.99999974E-6 : f32
    %183 = vector.broadcast %cst_108 : f32 to vector<32x1xf32>
    %184 = arith.addf %182, %183 : vector<32x1xf32>
    %185 = math.rsqrt %184 : vector<32x1xf32>
    %c0_109 = arith.constant 0 : index
    %c0_110 = arith.constant 0 : index
    %186 = vector.load %arg10[%c0_109, %c0_110] : memref<32x1xf32, #tpu.memory_space<vmem>>, vector<32x1xf32>
    %187 = arith.mulf %185, %186 : vector<32x1xf32>
    %188 = vector.broadcast %178 : vector<32x1xf32> to vector<32x128xf32>
    %189 = arith.subf %171, %188 : vector<32x128xf32>
    %190 = vector.broadcast %187 : vector<32x1xf32> to vector<32x128xf32>
    %191 = arith.mulf %189, %190 : vector<32x128xf32>
    %c0_111 = arith.constant 0 : index
    %c0_112 = arith.constant 0 : index
    %192 = vector.load %arg11[%c0_111, %c0_112] : memref<32x1xf32, #tpu.memory_space<vmem>>, vector<32x1xf32>
    %193 = vector.broadcast %192 : vector<32x1xf32> to vector<32x128xf32>
    %194 = arith.addf %191, %193 : vector<32x128xf32>
    %cst_113 = arith.constant 0.000000e+00 : f32
    %195 = vector.broadcast %cst_113 : f32 to vector<32x128xf32>
    %196 = arith.maximumf %194, %195 : vector<32x128xf32>
    %197 = tpu.iota {dimensions = array<i32: 1>} : vector<32x128xi32>
    %c4_i32 = arith.constant 4 : i32
    %198 = vector.broadcast %c4_i32 : i32 to vector<32x128xi32>
    %199 = arith.cmpi slt, %197, %198 : vector<32x128xi32>
    %cst_114 = arith.constant 0.000000e+00 : f32
    %200 = vector.broadcast %cst_114 : f32 to vector<32x128xf32>
    %201 = arith.select %199, %196, %200 : vector<32x128xi1>, vector<32x128xf32>
    %202 = vector.extract_strided_slice %201 {offsets = [0, 0], sizes = [32, 1], strides = [1, 1]} : vector<32x128xf32> to vector<32x1xf32>
    %c0_115 = arith.constant 0 : index
    %c0_116 = arith.constant 0 : index
    %c0_117 = arith.constant 0 : index
    %203 = vector.load %arg12[%c0_115, %c0_116, %c0_117] : memref<4x32x128xf32, #tpu.memory_space<vmem>>, vector<1x32x128xf32>
    %204 = vector.shape_cast %203 : vector<1x32x128xf32> to vector<32x128xf32>
    %205 = vector.broadcast %202 : vector<32x1xf32> to vector<32x128xf32>
    %206 = arith.mulf %205, %204 : vector<32x128xf32>
    %207 = vector.extract_strided_slice %201 {offsets = [0, 1], sizes = [32, 1], strides = [1, 1]} : vector<32x128xf32> to vector<32x1xf32>
    %c1 = arith.constant 1 : index
    %c0_118 = arith.constant 0 : index
    %c0_119 = arith.constant 0 : index
    %208 = vector.load %arg12[%c1, %c0_118, %c0_119] : memref<4x32x128xf32, #tpu.memory_space<vmem>>, vector<1x32x128xf32>
    %209 = vector.shape_cast %208 : vector<1x32x128xf32> to vector<32x128xf32>
    %210 = vector.broadcast %207 : vector<32x1xf32> to vector<32x128xf32>
    %211 = arith.mulf %210, %209 : vector<32x128xf32>
    %212 = arith.addf %206, %211 : vector<32x128xf32>
    %213 = vector.extract_strided_slice %201 {offsets = [0, 2], sizes = [32, 1], strides = [1, 1]} : vector<32x128xf32> to vector<32x1xf32>
    %c2 = arith.constant 2 : index
    %c0_120 = arith.constant 0 : index
    %c0_121 = arith.constant 0 : index
    %214 = vector.load %arg12[%c2, %c0_120, %c0_121] : memref<4x32x128xf32, #tpu.memory_space<vmem>>, vector<1x32x128xf32>
    %215 = vector.shape_cast %214 : vector<1x32x128xf32> to vector<32x128xf32>
    %216 = vector.broadcast %213 : vector<32x1xf32> to vector<32x128xf32>
    %217 = arith.mulf %216, %215 : vector<32x128xf32>
    %218 = arith.addf %212, %217 : vector<32x128xf32>
    %219 = vector.extract_strided_slice %201 {offsets = [0, 3], sizes = [32, 1], strides = [1, 1]} : vector<32x128xf32> to vector<32x1xf32>
    %c3 = arith.constant 3 : index
    %c0_122 = arith.constant 0 : index
    %c0_123 = arith.constant 0 : index
    %220 = vector.load %arg12[%c3, %c0_122, %c0_123] : memref<4x32x128xf32, #tpu.memory_space<vmem>>, vector<1x32x128xf32>
    %221 = vector.shape_cast %220 : vector<1x32x128xf32> to vector<32x128xf32>
    %222 = vector.broadcast %219 : vector<32x1xf32> to vector<32x128xf32>
    %223 = arith.mulf %222, %221 : vector<32x128xf32>
    %224 = arith.addf %218, %223 : vector<32x128xf32>
    %cst_124 = arith.constant dense<0.000000e+00> : vector<128xf32>
    %225 = vector.multi_reduction <add>, %224, %cst_124 [0] : vector<32x128xf32> to vector<128xf32>
    %226 = vector.shape_cast %225 : vector<128xf32> to vector<1x128xf32>
    %c0_125 = arith.constant 0 : index
    %c0_126 = arith.constant 0 : index
    %227 = vector.load %arg13[%c0_125, %c0_126] : memref<1x128xf32, #tpu.memory_space<vmem>>, vector<1x128xf32>
    %228 = arith.addf %226, %227 : vector<1x128xf32>
    %cst_127 = arith.constant 0.000000e+00 : f32
    %229 = vector.broadcast %cst_127 : f32 to vector<1x128xf32>
    %230 = arith.maximumf %228, %229 : vector<1x128xf32>
    %c0_128 = arith.constant 0 : index
    %c0_129 = arith.constant 0 : index
    %231 = vector.load %arg14[%c0_128, %c0_129] : memref<128x96xf32, #tpu.memory_space<vmem>>, vector<128x96xf32>
    %cst_130 = arith.constant dense<0.000000e+00> : vector<1x96xf32>
    %232 = tpu.matmul %230, %231, %cst_130 {dimension_numbers = #tpu.dot_dimension_numbers<[1], [0], [0], [1], [0, 0, 1, 1], [], []>} : vector<1x128xf32>, vector<128x96xf32>, vector<1x96xf32> -> vector<1x96xf32>
    %c0_131 = arith.constant 0 : index
    %c0_132 = arith.constant 0 : index
    %233 = vector.load %arg15[%c0_131, %c0_132] : memref<1x96xf32, #tpu.memory_space<vmem>>, vector<1x96xf32>
    %234 = arith.addf %232, %233 : vector<1x96xf32>
    %235 = vector.extract_strided_slice %234 {offsets = [0, 0], sizes = [1, 32], strides = [1, 1]} : vector<1x96xf32> to vector<1x32xf32>
    %236 = arith.negf %235 : vector<1x32xf32>
    %237 = math.exp %236 : vector<1x32xf32>
    %cst_133 = arith.constant 1.000000e+00 : f32
    %238 = vector.broadcast %cst_133 : f32 to vector<1x32xf32>
    %239 = arith.addf %238, %237 : vector<1x32xf32>
    %240 = arith.divf %238, %239 : vector<1x32xf32>
    %241 = vector.extract_strided_slice %234 {offsets = [0, 32], sizes = [1, 32], strides = [1, 1]} : vector<1x96xf32> to vector<1x32xf32>
    %242 = math.tanh %241 : vector<1x32xf32>
    %243 = vector.extract_strided_slice %234 {offsets = [0, 64], sizes = [1, 32], strides = [1, 1]} : vector<1x96xf32> to vector<1x32xf32>
    %244 = arith.negf %243 : vector<1x32xf32>
    %245 = math.exp %244 : vector<1x32xf32>
    %cst_134 = arith.constant 1.000000e+00 : f32
    %246 = vector.broadcast %cst_134 : f32 to vector<1x32xf32>
    %247 = arith.addf %246, %245 : vector<1x32xf32>
    %248 = arith.divf %246, %247 : vector<1x32xf32>
    %249 = arith.mulf %240, %242 : vector<1x32xf32>
    %250 = math.tanh %249 : vector<1x32xf32>
    %251 = arith.mulf %248, %250 : vector<1x32xf32>
    %c0_135 = arith.constant 0 : index
    %c0_136 = arith.constant 0 : index
    %252 = vector.load %arg16[%c0_135, %c0_136] : memref<32x4xf32, #tpu.memory_space<vmem>>, vector<32x4xf32>
    %cst_137 = arith.constant dense<0.000000e+00> : vector<1x4xf32>
    %253 = tpu.matmul %251, %252, %cst_137 {dimension_numbers = #tpu.dot_dimension_numbers<[1], [0], [0], [1], [0, 0, 1, 1], [], []>} : vector<1x32xf32>, vector<32x4xf32>, vector<1x4xf32> -> vector<1x4xf32>
    %c0_138 = arith.constant 0 : index
    %c0_139 = arith.constant 0 : index
    %254 = vector.load %arg17[%c0_138, %c0_139] : memref<1x4xf32, #tpu.memory_space<vmem>>, vector<1x4xf32>
    %255 = arith.addf %253, %254 : vector<1x4xf32>
    %c0_140 = arith.constant 0 : index
    %c0_141 = arith.constant 0 : index
    %256 = vector.load %arg18[%c0_140, %c0_141] : memref<1x4xf32, #tpu.memory_space<vmem>>, vector<1x4xf32>
    tpu.vector_store %arg18[%c0_140, %c0_141], %255 {strides = array<i32>} : memref<1x4xf32, #tpu.memory_space<vmem>>, vector<1x4xf32>,
    return
  }
}

</mosaic_0001>

<llo_original>
// kernel: dqn_forward.1
$region0: #{dqn_forward.1}
  #allocation0 [shape = 'u32[]', space=smem, size = 0x4, offset = 0x4, fixed_abs, tag = 'smem constant byte address 0x4 - core index']
  #allocation1 [shape = 'u32[144,128]{1,0:T(1,128)}', space=vmem, size = 0x12000, scoped, tag = 'internal scratch']
  #allocation2 [shape = 'bf16[400,128]{1,0:T(16,128)(2,1)}', space=vmem, size = 0x19000, scoped, tag = 'scratch operand']
  #allocation3 [shape = 'bf16[800,128]{1,0:T(16,128)(2,1)}', space=vmem, size = 0x32000, scoped, tag = 'scratch operand']
  %s0 = inlined_call_operand.vmem [shape: f32[25,324], index: 0, kind: input, shape index: {}]
  %s1 = inlined_call_operand.hbm [shape: f32[16,25], index: 1, kind: input, shape index: {}]
  %s2 = inlined_call_operand.vmem [shape: f32[16,1], index: 2, kind: input, shape index: {}]
  %s3 = inlined_call_operand.vmem [shape: f32[16,1], index: 3, kind: input, shape index: {}]
  %s4 = inlined_call_operand.hbm [shape: bf16[324,3200], index: 4, kind: input, shape index: {}]
  %s5 = inlined_call_operand.hbm [shape: bf16[32,400], index: 5, kind: input, shape index: {}]
  %s6 = inlined_call_operand.vmem [shape: f32[32,1], index: 6, kind: input, shape index: {}]
  %s7 = inlined_call_operand.vmem [shape: f32[32,1], index: 7, kind: input, shape index: {}]
  %s8 = inlined_call_operand.hbm [shape: bf16[128,3200], index: 8, kind: input, shape index: {}]
  %s9 = inlined_call_operand.hbm [shape: bf16[32,800], index: 9, kind: input, shape index: {}]
  %s10 = inlined_call_operand.vmem [shape: f32[32,1], index: 10, kind: input, shape index: {}]
  %s11 = inlined_call_operand.vmem [shape: f32[32,1], index: 11, kind: input, shape index: {}]
  %s12 = inlined_call_operand.hbm [shape: f32[4,32,128], index: 12, kind: input, shape index: {}]
  %s13 = inlined_call_operand.hbm [shape: f32[1,128], index: 13, kind: input, shape index: {}]
  %s14 = inlined_call_operand.vmem [shape: f32[128,96], index: 14, kind: input, shape index: {}]
  %s15 = inlined_call_operand.hbm [shape: f32[1,96], index: 15, kind: input, shape index: {}]
  %s16 = inlined_call_operand.vmem [shape: f32[32,4], index: 16, kind: input, shape index: {}]
  %s17 = inlined_call_operand.hbm [shape: f32[1,4], index: 17, kind: input, shape index: {}]
  %s18 = inlined_call_operand.hbm [shape: f32[1,4], index: 18, kind: output, shape index: {}]
  %s19 = sld [smem:[#allocation0]]
  $region118: #{dqn_forward.1} parent=0
    _
  %s21 = ssub.s32 1, %s19
  %s22 = scalar_select 0, %s21, %s19
  $region1: #{dqn_forward.1} parent=0
    #allocation4 [shape = 'u8[8192]{0}', space=vmem, size = 0x2000, scoped, tag = 'input window, operand 1, single buffered']
    #allocation5 [shape = 's32[1]{0}', space=sflag, size = 0x4, scoped, tag = 'scoped memory for dqn_forward.1']
    #allocation6 [shape = 's32[1]{0}', space=sflag, size = 0x4, scoped, tag = 'scoped memory for dqn_forward.1']
    #allocation7 [shape = 'u8[2099200]{0}', space=vmem, size = 0x200800, scoped, tag = 'input window, operand 4, single buffered']
    #allocation8 [shape = 's32[1]{0}', space=sflag, size = 0x4, scoped, tag = 'scoped memory for dqn_forward.1']
    #allocation9 [shape = 'u8[32768]{0}', space=vmem, size = 0x8000, scoped, tag = 'input window, operand 5, single buffered']
    #allocation10 [shape = 'u8[819200]{0}', space=vmem, size = 0xc8000, scoped, tag = 'input window, operand 8, single buffered']
    #allocation11 [shape = 's32[1]{0}', space=sflag, size = 0x4, scoped, tag = 'scoped memory for dqn_forward.1']
    #allocation12 [shape = 'u8[57344]{0}', space=vmem, size = 0xe000, scoped, tag = 'input window, operand 9, single buffered']
    #allocation13 [shape = 'u8[65536]{0}', space=vmem, size = 0x10000, scoped, tag = 'input window, operand 12, single buffered']
    #allocation14 [shape = 's32[1]{0}', space=sflag, size = 0x4, scoped, tag = 'scoped memory for dqn_forward.1']
    #allocation15 [shape = 'u8[512]{0}', space=vmem, size = 0x400, scoped, tag = 'input window, operand 13, single buffered']
    #allocation16 [shape = 'u8[512]{0}', space=vmem, size = 0x400, scoped, tag = 'input window, operand 15, single buffered']
    #allocation17 [shape = 's32[1]{0}', space=sflag, size = 0x4, scoped, tag = 'scoped memory for dqn_forward.1']
    #allocation18 [shape = 'u8[512]{0}', space=vmem, size = 0x400, scoped, tag = 'input window, operand 17, single buffered']
    #allocation19 [shape = 'u8[512]{0}', space=vmem, size = 0x400, scoped, tag = 'output window, operand 0, single buffered']
    %23 = vsyncpa [#allocation5], 0
    %24 = vsyncpa [#allocation8], 0
    %25 = vsyncpa [#allocation11], 0
    %26 = vsyncpa [#allocation14], 0
    %27 = vsyncpa [#allocation17], 0
    %28 = vsyncpa [#allocation6], 0
    // Predicated region
    $region2: #{dqn_forward.1} parent=1 // pred_check
      _
    $region3: #{dqn_forward.1} parent=1 // pred_check_branch
      %30 = sbr.rel (0) target = $region5
    $region4: #{dqn_forward.1} parent=1 // pred_region
      _
    $region5: #{dqn_forward.1} parent=1 // pred_fallthru
      _
    // Predicated region
    $region6: #{dqn_forward.1} parent=1 // pred_check
      _
    $region7: #{dqn_forward.1} parent=1 // pred_check_branch
      %32 = sbr.rel (0) target = $region9
    $region8: #{dqn_forward.1} parent=1 // pred_region
      %s34 = ssub.s32 256, 256
      %35 = vsyncadd [#allocation5], %s34
      %s36 = sshll.u32 [#allocation4], 4
      %s37 = int_to_ptr.vmem [resolvable:$true] %s36
      %42 = dma.hbm_to_vmem [thread:$0]  %s1, 256, %s37, [#allocation5], 128, 128, 8
    $region9: #{dqn_forward.1} parent=1 // pred_fallthru
      _
    // Predicated region
    $region10: #{dqn_forward.1} parent=1 // pred_check
      _
    $region11: #{dqn_forward.1} parent=1 // pred_check_branch
      %44 = sbr.rel (0) target = $region13
    $region12: #{dqn_forward.1} parent=1 // pred_region
      _
    $region13: #{dqn_forward.1} parent=1 // pred_fallthru
      _
    // Predicated region
    $region14: #{dqn_forward.1} parent=1 // pred_check
      _
    $region15: #{dqn_forward.1} parent=1 // pred_check_branch
      %46 = sbr.rel (0) target = $region17
    $region16: #{dqn_forward.1} parent=1 // pred_region
      _
    $region17: #{dqn_forward.1} parent=1 // pred_fallthru
      _
    // Predicated region
    $region18: #{dqn_forward.1} parent=1 // pred_check
      _
    $region19: #{dqn_forward.1} parent=1 // pred_check_branch
      %48 = sbr.rel (0) target = $region21
    $region20: #{dqn_forward.1} parent=1 // pred_region
      %s50 = ssub.s32 65600, 65600
      %51 = vsyncadd [#allocation8], %s50
      %s52 = sshll.u32 [#allocation7], 4
      %s53 = int_to_ptr.vmem [resolvable:$true] %s52
      %58 = dma.hbm_to_vmem [thread:$0]  %s4, 65600, %s53, [#allocation8], 1600, 1600, 100
    $region21: #{dqn_forward.1} parent=1 // pred_fallthru
      _
    // Predicated region
    $region22: #{dqn_forward.1} parent=1 // pred_check
      _
    $region23: #{dqn_forward.1} parent=1 // pred_check_branch
      %60 = sbr.rel (0) target = $region25
    $region24: #{dqn_forward.1} parent=1 // pred_region
      %s62 = ssub.s32 1024, 1024
      %63 = vsyncadd [#allocation8], %s62
      %s64 = sshll.u32 [#allocation9], 4
      %s65 = int_to_ptr.vmem [resolvable:$true] %s64
      %70 = dma.hbm_to_vmem [thread:$0]  %s5, 1024, %s65, [#allocation8], 256, 256, 16
    $region25: #{dqn_forward.1} parent=1 // pred_fallthru
      _
    // Predicated region
    $region26: #{dqn_forward.1} parent=1 // pred_check
      _
    $region27: #{dqn_forward.1} parent=1 // pred_check_branch
      %72 = sbr.rel (0) target = $region29
    $region28: #{dqn_forward.1} parent=1 // pred_region
      _
    $region29: #{dqn_forward.1} parent=1 // pred_fallthru
      _
    // Predicated region
    $region30: #{dqn_forward.1} parent=1 // pred_check
      _
    $region31: #{dqn_forward.1} parent=1 // pred_check_branch
      %74 = sbr.rel (0) target = $region33
    $region32: #{dqn_forward.1} parent=1 // pred_region
      _
    $region33: #{dqn_forward.1} parent=1 // pred_fallthru
      _
    // Predicated region
    $region34: #{dqn_forward.1} parent=1 // pred_check
      _
    $region35: #{dqn_forward.1} parent=1 // pred_check_branch
      %76 = sbr.rel (0) target = $region37
    $region36: #{dqn_forward.1} parent=1 // pred_region
      %s78 = ssub.s32 25600, 25600
      %79 = vsyncadd [#allocation11], %s78
      %s80 = sshll.u32 [#allocation10], 4
      %s81 = int_to_ptr.vmem [resolvable:$true] %s80
      %86 = dma.hbm_to_vmem [thread:$0]  %s8, 25600, %s81, [#allocation11], 1600, 1600, 100
    $region37: #{dqn_forward.1} parent=1 // pred_fallthru
      _
    // Predicated region
    $region38: #{dqn_forward.1} parent=1 // pred_check
      _
    $region39: #{dqn_forward.1} parent=1 // pred_check_branch
      %88 = sbr.rel (0) target = $region41
    $region40: #{dqn_forward.1} parent=1 // pred_region
      %s90 = ssub.s32 1792, 1792
      %91 = vsyncadd [#allocation11], %s90
      %s92 = sshll.u32 [#allocation12], 4
      %s93 = int_to_ptr.vmem [resolvable:$true] %s92
      %98 = dma.hbm_to_vmem [thread:$0]  %s9, 1792, %s93, [#allocation11], 448, 448, 28
    $region41: #{dqn_forward.1} parent=1 // pred_fallthru
      _
    // Predicated region
    $region42: #{dqn_forward.1} parent=1 // pred_check
      _
    $region43: #{dqn_forward.1} parent=1 // pred_check_branch
      %100 = sbr.rel (0) target = $region45
    $region44: #{dqn_forward.1} parent=1 // pred_region
      _
    $region45: #{dqn_forward.1} parent=1 // pred_fallthru
      _
    // Predicated region
    $region46: #{dqn_forward.1} parent=1 // pred_check
      _
    $region47: #{dqn_forward.1} parent=1 // pred_check_branch
      %102 = sbr.rel (0) target = $region49
    $region48: #{dqn_forward.1} parent=1 // pred_region
      _
    $region49: #{dqn_forward.1} parent=1 // pred_fallthru
      _
    // Predicated region
    $region50: #{dqn_forward.1} parent=1 // pred_check
      _
    $region51: #{dqn_forward.1} parent=1 // pred_check_branch
      %104 = sbr.rel (0) target = $region53
    $region52: #{dqn_forward.1} parent=1 // pred_region
      %s106 = ssub.s32 2048, 2048
      %107 = vsyncadd [#allocation14], %s106
      %s108 = sshll.u32 [#allocation13], 4
      %s109 = int_to_ptr.vmem [resolvable:$true] %s108
      %114 = dma.hbm_to_vmem [thread:$0]  %s12, 2048, %s109, [#allocation14], 128, 128, 8
    $region53: #{dqn_forward.1} parent=1 // pred_fallthru
      _
    // Predicated region
    $region54: #{dqn_forward.1} parent=1 // pred_check
      _
    $region55: #{dqn_forward.1} parent=1 // pred_check_branch
      %116 = sbr.rel (0) target = $region57
    $region56: #{dqn_forward.1} parent=1 // pred_region
      %s118 = ssub.s32 16, 16
      %119 = vsyncadd [#allocation14], %s118
      %s121 = sshll.u32 [#allocation15], 4
      %s122 = int_to_ptr.vmem [resolvable:$true] %s121
      %124 = dma.hbm_to_vmem [thread:$0]  %s13, 16, %s122, [#allocation14]
    $region57: #{dqn_forward.1} parent=1 // pred_fallthru
      _
    // Predicated region
    $region58: #{dqn_forward.1} parent=1 // pred_check
      _
    $region59: #{dqn_forward.1} parent=1 // pred_check_branch
      %126 = sbr.rel (0) target = $region61
    $region60: #{dqn_forward.1} parent=1 // pred_region
      _
    $region61: #{dqn_forward.1} parent=1 // pred_fallthru
      _
    // Predicated region
    $region62: #{dqn_forward.1} parent=1 // pred_check
      _
    $region63: #{dqn_forward.1} parent=1 // pred_check_branch
      %128 = sbr.rel (0) target = $region65
    $region64: #{dqn_forward.1} parent=1 // pred_region
      %s130 = ssub.s32 16, 16
      %131 = vsyncadd [#allocation17], %s130
      %s133 = sshll.u32 [#allocation16], 4
      %s134 = int_to_ptr.vmem [resolvable:$true] %s133
      %136 = dma.hbm_to_vmem [thread:$0]  %s15, 16, %s134, [#allocation17]
    $region65: #{dqn_forward.1} parent=1 // pred_fallthru
      _
    // Predicated region
    $region66: #{dqn_forward.1} parent=1 // pred_check
      _
    $region67: #{dqn_forward.1} parent=1 // pred_check_branch
      %138 = sbr.rel (0) target = $region69
    $region68: #{dqn_forward.1} parent=1 // pred_region
      _
    $region69: #{dqn_forward.1} parent=1 // pred_fallthru
      _
    // Predicated region
    $region70: #{dqn_forward.1} parent=1 // pred_check
      _
    $region71: #{dqn_forward.1} parent=1 // pred_check_branch
      %140 = sbr.rel (0) target = $region73
    $region72: #{dqn_forward.1} parent=1 // pred_region
      %s142 = ssub.s32 16, 16
      %143 = vsyncadd [#allocation17], %s142
      %s145 = sshll.u32 [#allocation18], 4
      %s146 = int_to_ptr.vmem [resolvable:$true] %s145
      %148 = dma.hbm_to_vmem [thread:$0]  %s17, 16, %s146, [#allocation17]
    $region73: #{dqn_forward.1} parent=1 // pred_fallthru
      _
    // Predicated region
    $region74: #{dqn_forward.1} parent=1 // pred_check
      _
    $region75: #{dqn_forward.1} parent=1 // pred_check_branch
      %150 = sbr.rel (0) target = $region77
    $region76: #{dqn_forward.1} parent=1 // pred_region
      %151 = dma.done [#allocation5], 256
    $region77: #{dqn_forward.1} parent=1 // pred_fallthru
      _
    // Predicated region
    $region78: #{dqn_forward.1} parent=1 // pred_check
      _
    $region79: #{dqn_forward.1} parent=1 // pred_check_branch
      %153 = sbr.rel (0) target = $region81
    $region80: #{dqn_forward.1} parent=1 // pred_region
      %154 = dma.done [#allocation8], 65600
    $region81: #{dqn_forward.1} parent=1 // pred_fallthru
      _
    // Predicated region
    $region82: #{dqn_forward.1} parent=1 // pred_check
      _
    $region83: #{dqn_forward.1} parent=1 // pred_check_branch
      %156 = sbr.rel (0) target = $region85
    $region84: #{dqn_forward.1} parent=1 // pred_region
      %157 = dma.done [#allocation8], 1024
    $region85: #{dqn_forward.1} parent=1 // pred_fallthru
      _
    // Predicated region
    $region86: #{dqn_forward.1} parent=1 // pred_check
      _
    $region87: #{dqn_forward.1} parent=1 // pred_check_branch
      %159 = sbr.rel (0) target = $region89
    $region88: #{dqn_forward.1} parent=1 // pred_region
      %160 = dma.done [#allocation11], 25600
    $region89: #{dqn_forward.1} parent=1 // pred_fallthru
      _
    // Predicated region
    $region90: #{dqn_forward.1} parent=1 // pred_check
      _
    $region91: #{dqn_forward.1} parent=1 // pred_check_branch
      %162 = sbr.rel (0) target = $region93
    $region92: #{dqn_forward.1} parent=1 // pred_region
      %163 = dma.done [#allocation11], 1792
    $region93: #{dqn_forward.1} parent=1 // pred_fallthru
      _
    // Predicated region
    $region94: #{dqn_forward.1} parent=1 // pred_check
      _
    $region95: #{dqn_forward.1} parent=1 // pred_check_branch
      %165 = sbr.rel (0) target = $region97
    $region96: #{dqn_forward.1} parent=1 // pred_region
      %166 = dma.done [#allocation14], 2048
    $region97: #{dqn_forward.1} parent=1 // pred_fallthru
      _
    // Predicated region
    $region98: #{dqn_forward.1} parent=1 // pred_check
      _
    $region99: #{dqn_forward.1} parent=1 // pred_check_branch
      %168 = sbr.rel (0) target = $region101
    $region100: #{dqn_forward.1} parent=1 // pred_region
      %169 = dma.done [#allocation14], 16
    $region101: #{dqn_forward.1} parent=1 // pred_fallthru
      _
    // Predicated region
    $region102: #{dqn_forward.1} parent=1 // pred_check
      _
    $region103: #{dqn_forward.1} parent=1 // pred_check_branch
      %171 = sbr.rel (0) target = $region105
    $region104: #{dqn_forward.1} parent=1 // pred_region
      %172 = dma.done [#allocation17], 16
    $region105: #{dqn_forward.1} parent=1 // pred_fallthru
      _
    // Predicated region
    $region106: #{dqn_forward.1} parent=1 // pred_check
      _
    $region107: #{dqn_forward.1} parent=1 // pred_check_branch
      %174 = sbr.rel (0) target = $region109
    $region108: #{dqn_forward.1} parent=1 // pred_region
      %175 = dma.done [#allocation17], 16
    $region109: #{dqn_forward.1} parent=1 // pred_fallthru
      _
    %v177 = vld [vmem:[#allocation4] sm:$0xff]
    %v178 = vld [vmem:[#allocation4 + $0x8] sm:$0xff]
    %v179 = vld [vmem:[%s0] sm:$0xff]
    %v180 = vld [vmem:[%s0 + $0x8] sm:$0xff]
    %v181 = vld [vmem:[%s0 + $0x10] sm:$0xff]
    %v182 = vld [vmem:[%s0 + $0x18] sm:$0xff]
    %v183 = vld [vmem:[%s0 + $0x20] sm:$0xff]
    %v184 = vld [vmem:[%s0 + $0x28] sm:$0xff]
    %v185 = vld [vmem:[%s0 + $0x30] sm:$0xff]
    %v186 = vld [vmem:[%s0 + $0x38] sm:$0xff]
    %v187 = vld [vmem:[%s0 + $0x40] sm:$0xff]
    %v188 = vld [vmem:[%s0 + $0x48] sm:$0x1]
    %v189 = vld [vmem:[%s0 + $0x50] sm:$0x1]
    %v190 = vld [vmem:[%s0 + $0x58] sm:$0x1]
    %vm191 = vcmask 203776
    %v193 = vsel %vm191, %v177, 0
    %v196 = vsel %vm191, %v178, 0
    %vm198 = vcmask 1040384
    %v200 = vsel %vm198, %v188, 0
    %v203 = vsel %vm198, %v189, 0
    %v206 = vsel %vm198, %v190, 0
    %208 = vmatprep.subr.mxu0 %v180
    %209 = vmatpush1.msra.mxu0 %v179
    %210 = vmatprep.subr.mxu0 %v183
    %211 = vmatpush1.msra.mxu0 %v182
    %212 = vmatprep.subr.mxu0 %v186
    %213 = vmatpush1.msra.mxu0 %v185
    %214 = vmatprep.subr.mxu0 %v203
    %215 = vmatpush1.msra.mxu0 %v200
    %216 = vmatprep.subr.mxu0 0.0
    %217 = vmatpush1.msra.mxu0 0.0
    %218 = vmatprep.subr.mxu0 0.0
    %219 = vmatpush1.msra.mxu0 0.0
    %220 = vmatprep.subr.mxu0 0.0
    %221 = vmatpush1.msra.mxu0 0.0
    %222 = vmatprep.subr.mxu0 0.0
    %223 = vmatpush1.msra.mxu0 0.0
    %224 = vmatprep.subr.mxu0 0.0
    %225 = vmatpush1.msra.mxu0 0.0
    %226 = vmatprep.subr.mxu0 0.0
    %227 = vmatpush1.msra.mxu0 0.0
    %228 = vmatprep.subr.mxu0 0.0
    %229 = vmatpush1.msra.mxu0 0.0
    %230 = vmatprep.subr.mxu0 0.0
    %231 = vmatpush1.msra.mxu0 0.0
    %232 = vmatprep.subr.mxu0 0.0
    %233 = vmatpush1.msra.mxu0 0.0
    %234 = vmatprep.subr.mxu0 0.0
    %235 = vmatpush1.msra.mxu0 0.0
    %236 = vmatprep.subr.mxu0 0.0
    %237 = vmatpush1.msra.mxu0 0.0
    %238 = vmatprep.subr.mxu0 0.0
    %239 = vmatpush1.msra.mxu0 0.0
    %240 = vmatprep.subr.mxu0 0.0
    %241 = vmatpush1.msra.mxu0 0.0
    %242 = vmatprep.subr.mxu0 0.0
    %243 = vmatpush1.msra.mxu0 0.0
    %244 = vmatprep.subr.mxu0 0.0
    %245 = vmatpush1.msra.mxu0 0.0
    %246 = vmatprep.subr.mxu0 0.0
    %247 = vmatpush1.msra.mxu0 0.0
    %248 = vmatprep.subr.mxu0 0.0
    %249 = vmatpush1.msra.mxu0 0.0
    %250 = vmatprep.subr.mxu0 0.0
    %251 = vmatpush1.msra.mxu0 0.0
    %252 = vmatprep.subr.mxu0 0.0
    %253 = vmatpush1.msra.mxu0 0.0
    %254 = vmatprep.subr.mxu0 0.0
    %255 = vmatpush1.msra.mxu0 0.0
    %256 = vmatprep.subr.mxu0 0.0
    %257 = vmatpush1.msra.mxu0 0.0
    %258 = vmatprep.subr.mxu0 0.0
    %259 = vmatpush1.msra.mxu0 0.0
    %260 = vmatprep.subr.mxu0 0.0
    %261 = vmatpush1.msra.mxu0 0.0
    %262 = vmatprep.subr.mxu0 0.0
    %263 = vmatpush1.msra.mxu0 0.0
    %264 = vmatprep.subr.mxu0 0.0
    %265 = vmatpush1.msra.mxu0 0.0
    %266 = vmatprep.subr.mxu0 0.0
    %267 = vmatpush1.msra.mxu0 0.0
    %268 = vmatprep.subr.mxu0 0.0
    %269 = vmatpush1.msra.mxu0 0.0
    %270 = vmatprep.subr.mxu0 0.0
    %271 = vmatpush1.msra.mxu0 0.0
    %272 = vmatprep.mubr.f32.mxu0 0.0
    %273 = vmatmul.mubr.f32.gmra.mrb[0].mxu0 %v193
    %v274 = vpop.f32.mrb[0].mxu0
    %v275 = vadd.f32 0.0, %v274
    %v276 = vpop.f32.mrb[0].mxu0
    %v277 = vadd.f32 0.0, %v276
    %278 = vmatprep.mubr.f32.mxu0 0.0
    %279 = vmatmul.mubr.f32.gmra.mrb[0].mxu0 %v196
    %v280 = vpop.f32.mrb[0].mxu0
    %v281 = vadd.f32 0.0, %v280
    %v282 = vpop.f32.mrb[0].mxu0
    %v283 = vadd.f32 0.0, %v282
    %284 = vdwg.mxu0
    %285 = vmatprep.subr.mxu0 0.0
    %286 = vmatpush1.msra.mxu0 %v181
    %287 = vmatprep.subr.mxu0 0.0
    %288 = vmatpush1.msra.mxu0 %v184
    %289 = vmatprep.subr.mxu0 0.0
    %290 = vmatpush1.msra.mxu0 %v187
    %291 = vmatprep.subr.mxu0 0.0
    %292 = vmatpush1.msra.mxu0 %v206
    %293 = vmatprep.subr.mxu0 0.0
    %294 = vmatpush1.msra.mxu0 0.0
    %295 = vmatprep.subr.mxu0 0.0
    %296 = vmatpush1.msra.mxu0 0.0
    %297 = vmatprep.subr.mxu0 0.0
    %298 = vmatpush1.msra.mxu0 0.0
    %299 = vmatprep.subr.mxu0 0.0
    %300 = vmatpush1.msra.mxu0 0.0
    %301 = vmatprep.subr.mxu0 0.0
    %302 = vmatpush1.msra.mxu0 0.0
    %303 = vmatprep.subr.mxu0 0.0
    %304 = vmatpush1.msra.mxu0 0.0
    %305 = vmatprep.subr.mxu0 0.0
    %306 = vmatpush1.msra.mxu0 0.0
    %307 = vmatprep.subr.mxu0 0.0
    %308 = vmatpush1.msra.mxu0 0.0
    %309 = vmatprep.subr.mxu0 0.0
    %310 = vmatpush1.msra.mxu0 0.0
    %311 = vmatprep.subr.mxu0 0.0
    %312 = vmatpush1.msra.mxu0 0.0
    %313 = vmatprep.subr.mxu0 0.0
    %314 = vmatpush1.msra.mxu0 0.0
    %315 = vmatprep.subr.mxu0 0.0
    %316 = vmatpush1.msra.mxu0 0.0
    %317 = vmatprep.subr.mxu0 0.0
    %318 = vmatpush1.msra.mxu0 0.0
    %319 = vmatprep.subr.mxu0 0.0
    %320 = vmatpush1.msra.mxu0 0.0
    %321 = vmatprep.subr.mxu0 0.0
    %322 = vmatpush1.msra.mxu0 0.0
    %323 = vmatprep.subr.mxu0 0.0
    %324 = vmatpush1.msra.mxu0 0.0
    %325 = vmatprep.subr.mxu0 0.0
    %326 = vmatpush1.msra.mxu0 0.0
    %327 = vmatprep.subr.mxu0 0.0
    %328 = vmatpush1.msra.mxu0 0.0
    %329 = vmatprep.subr.mxu0 0.0
    %330 = vmatpush1.msra.mxu0 0.0
    %331 = vmatprep.subr.mxu0 0.0
    %332 = vmatpush1.msra.mxu0 0.0
    %333 = vmatprep.subr.mxu0 0.0
    %334 = vmatpush1.msra.mxu0 0.0
    %335 = vmatprep.subr.mxu0 0.0
    %336 = vmatpush1.msra.mxu0 0.0
    %337 = vmatprep.subr.mxu0 0.0
    %338 = vmatpush1.msra.mxu0 0.0
    %339 = vmatprep.subr.mxu0 0.0
    %340 = vmatpush1.msra.mxu0 0.0
    %341 = vmatprep.subr.mxu0 0.0
    %342 = vmatpush1.msra.mxu0 0.0
    %343 = vmatprep.subr.mxu0 0.0
    %344 = vmatpush1.msra.mxu0 0.0
    %345 = vmatprep.subr.mxu0 0.0
    %346 = vmatpush1.msra.mxu0 0.0
    %347 = vmatprep.subr.mxu0 0.0
    %348 = vmatpush1.msra.mxu0 0.0
    %349 = vmatprep.mubr.f32.mxu0 0.0
    %350 = vmatmul.mubr.f32.gmra.mrb[0].mxu0 %v193
    %v351 = vpop.f32.mrb[0].mxu0
    %v352 = vadd.f32 0.0, %v351
    %v353 = vpop.f32.mrb[0].mxu0
    %354 = vmatprep.mubr.f32.mxu0 0.0
    %355 = vmatmul.mubr.f32.gmra.mrb[0].mxu0 %v196
    %v356 = vpop.f32.mrb[0].mxu0
    %v357 = vadd.f32 0.0, %v356
    %v358 = vpop.f32.mrb[0].mxu0
    %359 = vdwg.mxu0
    %v360 = vadd.f32 %v275, %v277
    %vm361 = vcmask 556032
    %v362 = vsel %vm361, %v352, 0.0
    %v363 = vadd.f32 %v360, %v362
    %364 = vadd.xlane.f32.xlu0 %v363
    %v365 = vpop.xlane.xlu0 %364
    %v366 = vadd.f32 %v281, %v283
    %v367 = vsel %vm361, %v357, 0.0
    %v368 = vadd.f32 %v366, %v367
    %369 = vadd.xlane.f32.xlu0 %v368
    %v370 = vpop.xlane.xlu0 %369
    %v371 = vmul.f32 %v275, %v275
    %v372 = vmul.f32 %v277, %v277
    %v373 = vmul.f32 %v352, %v352
    %v374 = vmul.f32 %v281, %v281
    %v375 = vmul.f32 %v283, %v283
    %v376 = vmul.f32 %v357, %v357
    %v377 = vadd.f32 %v371, %v372
    %v378 = vsel %vm361, %v373, 0.0
    %v379 = vadd.f32 %v377, %v378
    %380 = vadd.xlane.f32.xlu0 %v379
    %v381 = vpop.xlane.xlu0 %380
    %v382 = vadd.f32 %v374, %v375
    %v383 = vsel %vm361, %v376, 0.0
    %v384 = vadd.f32 %v382, %v383
    %385 = vadd.xlane.f32.xlu0 %v384
    %v386 = vpop.xlane.xlu0 %385
    %v387 = vmul.f32 %v365, 0.0030864198
    %v388 = vmul.f32 %v370, 0.0030864198
    %v389 = vmul.f32 %v381, 0.0030864198
    %v390 = vmul.f32 %v386, 0.0030864198
    %v391 = vmul.f32 %v387, %v387
    %v392 = vmul.f32 %v388, %v388
    %v393 = vsub.f32 %v389, %v391
    %v394 = vsub.f32 %v390, %v392
    %v395 = vadd.f32 %v393, 1e-05
    %v396 = vadd.f32 %v394, 1e-05
    %v397 = vrsqrt.pop %v395
    %v398 = vrsqrt.pop %v396
    %v399 = vld [vmem:[%s2] sm:$0xff]
    %v400 = vld [vmem:[%s2 + $0x8] sm:$0xff]
    %v401 = vmul.f32 %v397, %v399
    %v402 = vmul.f32 %v398, %v400
    %v403 = vsub.f32 %v275, %v387
    %v404 = vsub.f32 %v277, %v387
    %v405 = vsub.f32 %v352, %v387
    %v406 = vsub.f32 %v281, %v388
    %v407 = vsub.f32 %v283, %v388
    %v408 = vsub.f32 %v357, %v388
    %410 = vset.pattern.permute.xlu0 0
    %411 = vperm.xlu0 %410, %v401
    %v412 = vpop.permute.xlu0 %411
    %415 = vset.pattern.permute.xlu0 0
    %416 = vperm.xlu0 %415, %v402
    %v417 = vpop.permute.xlu0 %416
    %v419 = vmul.f32 %v403, %v412
    %v420 = vmul.f32 %v404, %v412
    %v421 = vmul.f32 %v405, %v412
    %v422 = vmul.f32 %v406, %v417
    %v423 = vmul.f32 %v407, %v417
    %v424 = vmul.f32 %v408, %v417
    %v425 = vld [vmem:[%s3] sm:$0xff]
    %v426 = vld [vmem:[%s3 + $0x8] sm:$0xff]
    %428 = vset.pattern.permute.xlu0 0
    %429 = vperm.xlu0 %428, %v425
    %v430 = vpop.permute.xlu0 %429
    %433 = vset.pattern.permute.xlu0 0
    %434 = vperm.xlu0 %433, %v426
    %v435 = vpop.permute.xlu0 %434
    %v437 = vadd.f32 %v419, %v430
    %v438 = vadd.f32 %v420, %v430
    %v439 = vadd.f32 %v421, %v430
    %v440 = vadd.f32 %v422, %v435
    %v441 = vadd.f32 %v423, %v435
    %v442 = vadd.f32 %v424, %v435
    %v443 = vmax.f32 %v437, 0.0
    %v444 = vmax.f32 %v438, 0.0
    %v445 = vmax.f32 %v439, 0.0
    %v446 = vmax.f32 %v440, 0.0
    %v447 = vmax.f32 %v441, 0.0
    %v448 = vmax.f32 %v442, 0.0
    %v449 = vpack.c.bf16 %v446, %v443
    %v450 = vpack.c.bf16 %v447, %v444
    %v451 = vpack.c.bf16 %v448, %v445
    %v452 = vld [vmem:[#allocation7] sm:$0xff]
    %v453 = vld [vmem:[#allocation7 + $0x8] sm:$0xff]
    %v454 = vld [vmem:[#allocation7 + $0x10] sm:$0xff]
    %v455 = vld [vmem:[#allocation7 + $0x18] sm:$0xff]
    %v456 = vld [vmem:[#allocation7 + $0x20] sm:$0xff]
    %v457 = vld [vmem:[#allocation7 + $0x28] sm:$0xff]
    %v458 = vld [vmem:[#allocation7 + $0x30] sm:$0xff]
    %v459 = vld [vmem:[#allocation7 + $0x38] sm:$0xff]
    %v460 = vld [vmem:[#allocation7 + $0x40] sm:$0xff]
    %v461 = vld [vmem:[#allocation7 + $0x48] sm:$0xff]
    %v462 = vld [vmem:[#allocation7 + $0x50] sm:$0xff]
    %v463 = vld [vmem:[#allocation7 + $0x58] sm:$0xff]
    %v464 = vld [vmem:[#allocation7 + $0x60] sm:$0xf]
    %v465 = vld [vmem:[#allocation7 + $0x64] sm:$0xff]
    %v466 = vld [vmem:[#allocation7 + $0x6c] sm:$0xff]
    %v467 = vld [vmem:[#allocation7 + $0x74] sm:$0xff]
    %v468 = vld [vmem:[#allocation7 + $0x7c] sm:$0xff]
    %v469 = vld [vmem:[#allocation7 + $0x84] sm:$0xff]
    %v470 = vld [vmem:[#allocation7 + $0x8c] sm:$0xff]
    %v471 = vld [vmem:[#allocation7 + $0x94] sm:$0xff]
    %v472 = vld [vmem:[#allocation7 + $0x9c] sm:$0xff]
    %v473 = vld [vmem:[#allocation7 + $0xa4] sm:$0xff]
    %v474 = vld [vmem:[#allocation7 + $0xac] sm:$0xff]
    %v475 = vld [vmem:[#allocation7 + $0xb4] sm:$0xff]
    %v476 = vld [vmem:[#allocation7 + $0xbc] sm:$0xff]
    %v477 = vld [vmem:[#allocation7 + $0xc4] sm:$0xf]
    %v478 = vld [vmem:[#allocation7 + $0xc8] sm:$0xff]
    %v479 = vld [vmem:[#allocation7 + $0xd0] sm:$0xff]
    %v480 = vld [vmem:[#allocation7 + $0xd8] sm:$0xff]
    %v481 = vld [vmem:[#allocation7 + $0xe0] sm:$0xff]
    %v482 = vld [vmem:[#allocation7 + $0xe8] sm:$0xff]
    %v483 = vld [vmem:[#allocation7 + $0xf0] sm:$0xff]
    %v484 = vld [vmem:[#allocation7 + $0xf8] sm:$0xff]
    %v485 = vld [vmem:[#allocation7 + $0x100] sm:$0xff]
    %v486 = vld [vmem:[#allocation7 + $0x108] sm:$0xff]
    %v487 = vld [vmem:[#allocation7 + $0x110] sm:$0xff]
    %v488 = vld [vmem:[#allocation7 + $0x118] sm:$0xff]
    %v489 = vld [vmem:[#allocation7 + $0x120] sm:$0xff]
    %v490 = vld [vmem:[#allocation7 + $0x128] sm:$0xf]
    %v491 = vld [vmem:[#allocation7 + $0x12c] sm:$0xff]
    %v492 = vld [vmem:[#allocation7 + $0x134] sm:$0xff]
    %v493 = vld [vmem:[#allocation7 + $0x13c] sm:$0xff]
    %v494 = vld [vmem:[#allocation7 + $0x144] sm:$0xff]
    %v495 = vld [vmem:[#allocation7 + $0x14c] sm:$0xff]
    %v496 = vld [vmem:[#allocation7 + $0x154] sm:$0xff]
    %v497 = vld [vmem:[#allocation7 + $0x15c] sm:$0xff]
    %v498 = vld [vmem:[#allocation7 + $0x164] sm:$0xff]
    %v499 = vld [vmem:[#allocation7 + $0x16c] sm:$0xff]
    %v500 = vld [vmem:[#allocation7 + $0x174] sm:$0xff]
    %v501 = vld [vmem:[#allocation7 + $0x17c] sm:$0xff]
    %v502 = vld [vmem:[#allocation7 + $0x184] sm:$0xff]
    %v503 = vld [vmem:[#allocation7 + $0x18c] sm:$0xf]
    %v504 = vld [vmem:[#allocation7 + $0x190] sm:$0xff]
    %v505 = vld [vmem:[#allocation7 + $0x198] sm:$0xff]
    %v506 = vld [vmem:[#allocation7 + $0x1a0] sm:$0xff]
    %v507 = vld [vmem:[#allocation7 + $0x1a8] sm:$0xff]
    %v508 = vld [vmem:[#allocation7 + $0x1b0] sm:$0xff]
    %v509 = vld [vmem:[#allocation7 + $0x1b8] sm:$0xff]
    %v510 = vld [vmem:[#allocation7 + $0x1c0] sm:$0xff]
    %v511 = vld [vmem:[#allocation7 + $0x1c8] sm:$0xff]
    %v512 = vld [vmem:[#allocation7 + $0x1d0] sm:$0xff]
    %v513 = vld [vmem:[#allocation7 + $0x1d8] sm:$0xff]
    %v514 = vld [vmem:[#allocation7 + $0x1e0] sm:$0xff]
    %v515 = vld [vmem:[#allocation7 + $0x1e8] sm:$0xff]
    %v516 = vld [vmem:[#allocation7 + $0x1f0] sm:$0xf]
    %v517 = vld [vmem:[#allocation7 + $0x1f4] sm:$0xff]
    %v518 = vld [vmem:[#allocation7 + $0x1fc] sm:$0xff]
    %v519 = vld [vmem:[#allocation7 + $0x204] sm:$0xff]
    %v520 = vld [vmem:[#allocation7 + $0x20c] sm:$0xff]
    %v521 = vld [vmem:[#allocation7 + $0x214] sm:$0xff]
    %v522 = vld [vmem:[#allocation7 + $0x21c] sm:$0xff]
    %v523 = vld [vmem:[#allocation7 + $0x224] sm:$0xff]
    %v524 = vld [vmem:[#allocation7 + $0x22c] sm:$0xff]
    %v525 = vld [vmem:[#allocation7 + $0x234] sm:$0xff]
    %v526 = vld [vmem:[#allocation7 + $0x23c] sm:$0xff]
    %v527 = vld [vmem:[#allocation7 + $0x244] sm:$0xff]
    %v528 = vld [vmem:[#allocation7 + $0x24c] sm:$0xff]
    %v529 = vld [vmem:[#allocation7 + $0x254] sm:$0xf]
    %v530 = vld [vmem:[#allocation7 + $0x258] sm:$0xff]
    %v531 = vld [vmem:[#allocation7 + $0x260] sm:$0xff]
    %v532 = vld [vmem:[#allocation7 + $0x268] sm:$0xff]
    %v533 = vld [vmem:[#allocation7 + $0x270] sm:$0xff]
    %v534 = vld [vmem:[#allocation7 + $0x278] sm:$0xff]
    %v535 = vld [vmem:[#allocation7 + $0x280] sm:$0xff]
    %v536 = vld [vmem:[#allocation7 + $0x288] sm:$0xff]
    %v537 = vld [vmem:[#allocation7 + $0x290] sm:$0xff]
    %v538 = vld [vmem:[#allocation7 + $0x298] sm:$0xff]
    %v539 = vld [vmem:[#allocation7 + $0x2a0] sm:$0xff]
    %v540 = vld [vmem:[#allocation7 + $0x2a8] sm:$0xff]
    %v541 = vld [vmem:[#allocation7 + $0x2b0] sm:$0xff]
    %v542 = vld [vmem:[#allocation7 + $0x2b8] sm:$0xf]
    %v543 = vld [vmem:[#allocation7 + $0x2bc] sm:$0xff]
    %v544 = vld [vmem:[#allocation7 + $0x2c4] sm:$0xff]
    %v545 = vld [vmem:[#allocation7 + $0x2cc] sm:$0xff]
    %v546 = vld [vmem:[#allocation7 + $0x2d4] sm:$0xff]
    %v547 = vld [vmem:[#allocation7 + $0x2dc] sm:$0xff]
    %v548 = vld [vmem:[#allocation7 + $0x2e4] sm:$0xff]
    %v549 = vld [vmem:[#allocation7 + $0x2ec] sm:$0xff]
    %v550 = vld [vmem:[#allocation7 + $0x2f4] sm:$0xff]
    %v551 = vld [vmem:[#allocation7 + $0x2fc] sm:$0xff]
    %v552 = vld [vmem:[#allocation7 + $0x304] sm:$0xff]
    %v553 = vld [vmem:[#allocation7 + $0x30c] sm:$0xff]
    %v554 = vld [vmem:[#allocation7 + $0x314] sm:$0xff]
    %v555 = vld [vmem:[#allocation7 + $0x31c] sm:$0xf]
    %v556 = vld [vmem:[#allocation7 + $0x320] sm:$0xff]
    %v557 = vld [vmem:[#allocation7 + $0x328] sm:$0xff]
    %v558 = vld [vmem:[#allocation7 + $0x330] sm:$0xff]
    %v559 = vld [vmem:[#allocation7 + $0x338] sm:$0xff]
    %v560 = vld [vmem:[#allocation7 + $0x340] sm:$0xff]
    %v561 = vld [vmem:[#allocation7 + $0x348] sm:$0xff]
    %v562 = vld [vmem:[#allocation7 + $0x350] sm:$0xff]
    %v563 = vld [vmem:[#allocation7 + $0x358] sm:$0xff]
    %v564 = vld [vmem:[#allocation7 + $0x360] sm:$0xff]
    %v565 = vld [vmem:[#allocation7 + $0x368] sm:$0xff]
    %v566 = vld [vmem:[#allocation7 + $0x370] sm:$0xff]
    %v567 = vld [vmem:[#allocation7 + $0x378] sm:$0xff]
    %v568 = vld [vmem:[#allocation7 + $0x380] sm:$0xf]
    %v569 = vld [vmem:[#allocation7 + $0x384] sm:$0xff]
    %v570 = vld [vmem:[#allocation7 + $0x38c] sm:$0xff]
    %v571 = vld [vmem:[#allocation7 + $0x394] sm:$0xff]
    %v572 = vld [vmem:[#allocation7 + $0x39c] sm:$0xff]
    %v573 = vld [vmem:[#allocation7 + $0x3a4] sm:$0xff]
    %v574 = vld [vmem:[#allocation7 + $0x3ac] sm:$0xff]
    %v575 = vld [vmem:[#allocation7 + $0x3b4] sm:$0xff]
    %v576 = vld [vmem:[#allocation7 + $0x3bc] sm:$0xff]
    %v577 = vld [vmem:[#allocation7 + $0x3c4] sm:$0xff]
    %v578 = vld [vmem:[#allocation7 + $0x3cc] sm:$0xff]
    %v579 = vld [vmem:[#allocation7 + $0x3d4] sm:$0xff]
    %v580 = vld [vmem:[#allocation7 + $0x3dc] sm:$0xff]
    %v581 = vld [vmem:[#allocation7 + $0x3e4] sm:$0xf]
    %v582 = vld [vmem:[#allocation7 + $0x3e8] sm:$0xff]
    %v583 = vld [vmem:[#allocation7 + $0x3f0] sm:$0xff]
    %v584 = vld [vmem:[#allocation7 + $0x3f8] sm:$0xff]
    %v585 = vld [vmem:[#allocation7 + $0x400] sm:$0xff]
    %v586 = vld [vmem:[#allocation7 + $0x408] sm:$0xff]
    %v587 = vld [vmem:[#allocation7 + $0x410] sm:$0xff]
    %v588 = vld [vmem:[#allocation7 + $0x418] sm:$0xff]
    %v589 = vld [vmem:[#allocation7 + $0x420] sm:$0xff]
    %v590 = vld [vmem:[#allocation7 + $0x428] sm:$0xff]
    %v591 = vld [vmem:[#allocation7 + $0x430] sm:$0xff]
    %v592 = vld [vmem:[#allocation7 + $0x438] sm:$0xff]
    %v593 = vld [vmem:[#allocation7 + $0x440] sm:$0xff]
    %v594 = vld [vmem:[#allocation7 + $0x448] sm:$0xf]
    %v595 = vld [vmem:[#allocation7 + $0x44c] sm:$0xff]
    %v596 = vld [vmem:[#allocation7 + $0x454] sm:$0xff]
    %v597 = vld [vmem:[#allocation7 + $0x45c] sm:$0xff]
    %v598 = vld [vmem:[#allocation7 + $0x464] sm:$0xff]
    %v599 = vld [vmem:[#allocation7 + $0x46c] sm:$0xff]
    %v600 = vld [vmem:[#allocation7 + $0x474] sm:$0xff]
    %v601 = vld [vmem:[#allocation7 + $0x47c] sm:$0xff]
    %v602 = vld [vmem:[#allocation7 + $0x484] sm:$0xff]
    %v603 = vld [vmem:[#allocation7 + $0x48c] sm:$0xff]
    %v604 = vld [vmem:[#allocation7 + $0x494] sm:$0xff]
    %v605 = vld [vmem:[#allocation7 + $0x49c] sm:$0xff]
    %v606 = vld [vmem:[#allocation7 + $0x4a4] sm:$0xff]
    %v607 = vld [vmem:[#allocation7 + $0x4ac] sm:$0xf]
    %v608 = vld [vmem:[#allocation7 + $0x4b0] sm:$0xff]
    %v609 = vld [vmem:[#allocation7 + $0x4b8] sm:$0xff]
    %v610 = vld [vmem:[#allocation7 + $0x4c0] sm:$0xff]
    %v611 = vld [vmem:[#allocation7 + $0x4c8] sm:$0xff]
    %v612 = vld [vmem:[#allocation7 + $0x4d0] sm:$0xff]
    %v613 = vld [vmem:[#allocation7 + $0x4d8] sm:$0xff]
    %v614 = vld [vmem:[#allocation7 + $0x4e0] sm:$0xff]
    %v615 = vld [vmem:[#allocation7 + $0x4e8] sm:$0xff]
    %v616 = vld [vmem:[#allocation7 + $0x4f0] sm:$0xff]
    %v617 = vld [vmem:[#allocation7 + $0x4f8] sm:$0xff]
    %v618 = vld [vmem:[#allocation7 + $0x500] sm:$0xff]
    %v619 = vld [vmem:[#allocation7 + $0x508] sm:$0xff]
    %v620 = vld [vmem:[#allocation7 + $0x510] sm:$0xf]
    %v621 = vld [vmem:[#allocation7 + $0x514] sm:$0xff]
    %v622 = vld [vmem:[#allocation7 + $0x51c] sm:$0xff]
    %v623 = vld [vmem:[#allocation7 + $0x524] sm:$0xff]
    %v624 = vld [vmem:[#allocation7 + $0x52c] sm:$0xff]
    %v625 = vld [vmem:[#allocation7 + $0x534] sm:$0xff]
    %v626 = vld [vmem:[#allocation7 + $0x53c] sm:$0xff]
    %v627 = vld [vmem:[#allocation7 + $0x544] sm:$0xff]
    %v628 = vld [vmem:[#allocation7 + $0x54c] sm:$0xff]
    %v629 = vld [vmem:[#allocation7 + $0x554] sm:$0xff]
    %v630 = vld [vmem:[#allocation7 + $0x55c] sm:$0xff]
    %v631 = vld [vmem:[#allocation7 + $0x564] sm:$0xff]
    %v632 = vld [vmem:[#allocation7 + $0x56c] sm:$0xff]
    %v633 = vld [vmem:[#allocation7 + $0x574] sm:$0xf]
    %v634 = vld [vmem:[#allocation7 + $0x578] sm:$0xff]
    %v635 = vld [vmem:[#allocation7 + $0x580] sm:$0xff]
    %v636 = vld [vmem:[#allocation7 + $0x588] sm:$0xff]
    %v637 = vld [vmem:[#allocation7 + $0x590] sm:$0xff]
    %v638 = vld [vmem:[#allocation7 + $0x598] sm:$0xff]
    %v639 = vld [vmem:[#allocation7 + $0x5a0] sm:$0xff]
    %v640 = vld [vmem:[#allocation7 + $0x5a8] sm:$0xff]
    %v641 = vld [vmem:[#allocation7 + $0x5b0] sm:$0xff]
    %v642 = vld [vmem:[#allocation7 + $0x5b8] sm:$0xff]
    %v643 = vld [vmem:[#allocation7 + $0x5c0] sm:$0xff]
    %v644 = vld [vmem:[#allocation7 + $0x5c8] sm:$0xff]
    %v645 = vld [vmem:[#allocation7 + $0x5d0] sm:$0xff]
    %v646 = vld [vmem:[#allocation7 + $0x5d8] sm:$0xf]
    %v647 = vld [vmem:[#allocation7 + $0x5dc] sm:$0xff]
    %v648 = vld [vmem:[#allocation7 + $0x5e4] sm:$0xff]
    %v649 = vld [vmem:[#allocation7 + $0x5ec] sm:$0xff]
    %v650 = vld [vmem:[#allocation7 + $0x5f4] sm:$0xff]
    %v651 = vld [vmem:[#allocation7 + $0x5fc] sm:$0xff]
    %v652 = vld [vmem:[#allocation7 + $0x604] sm:$0xff]
    %v653 = vld [vmem:[#allocation7 + $0x60c] sm:$0xff]
    %v654 = vld [vmem:[#allocation7 + $0x614] sm:$0xff]
    %v655 = vld [vmem:[#allocation7 + $0x61c] sm:$0xff]
    %v656 = vld [vmem:[#allocation7 + $0x624] sm:$0xff]
    %v657 = vld [vmem:[#allocation7 + $0x62c] sm:$0xff]
    %v658 = vld [vmem:[#allocation7 + $0x634] sm:$0xff]
    %v659 = vld [vmem:[#allocation7 + $0x63c] sm:$0xf]
    %v660 = vld [vmem:[#allocation7 + $0x640] sm:$0xff]
    %v661 = vld [vmem:[#allocation7 + $0x648] sm:$0xff]
    %v662 = vld [vmem:[#allocation7 + $0x650] sm:$0xff]
    %v663 = vld [vmem:[#allocation7 + $0x658] sm:$0xff]
    %v664 = vld [vmem:[#allocation7 + $0x660] sm:$0xff]
    %v665 = vld [vmem:[#allocation7 + $0x668] sm:$0xff]
    %v666 = vld [vmem:[#allocation7 + $0x670] sm:$0xff]
    %v667 = vld [vmem:[#allocation7 + $0x678] sm:$0xff]
    %v668 = vld [vmem:[#allocation7 + $0x680] sm:$0xff]
    %v669 = vld [vmem:[#allocation7 + $0x688] sm:$0xff]
    %v670 = vld [vmem:[#allocation7 + $0x690] sm:$0xff]
    %v671 = vld [vmem:[#allocation7 + $0x698] sm:$0xff]
    %v672 = vld [vmem:[#allocation7 + $0x6a0] sm:$0xf]
    %v673 = vld [vmem:[#allocation7 + $0x6a4] sm:$0xff]
    %v674 = vld [vmem:[#allocation7 + $0x6ac] sm:$0xff]
    %v675 = vld [vmem:[#allocation7 + $0x6b4] sm:$0xff]
    %v676 = vld [vmem:[#allocation7 + $0x6bc] sm:$0xff]
    %v677 = vld [vmem:[#allocation7 + $0x6c4] sm:$0xff]
    %v678 = vld [vmem:[#allocation7 + $0x6cc] sm:$0xff]
    %v679 = vld [vmem:[#allocation7 + $0x6d4] sm:$0xff]
    %v680 = vld [vmem:[#allocation7 + $0x6dc] sm:$0xff]
    %v681 = vld [vmem:[#allocation7 + $0x6e4] sm:$0xff]
    %v682 = vld [vmem:[#allocation7 + $0x6ec] sm:$0xff]
    %v683 = vld [vmem:[#allocation7 + $0x6f4] sm:$0xff]
    %v684 = vld [vmem:[#allocation7 + $0x6fc] sm:$0xff]
    %v685 = vld [vmem:[#allocation7 + $0x704] sm:$0xf]
    %v686 = vld [vmem:[#allocation7 + $0x708] sm:$0xff]
    %v687 = vld [vmem:[#allocation7 + $0x710] sm:$0xff]
    %v688 = vld [vmem:[#allocation7 + $0x718] sm:$0xff]
    %v689 = vld [vmem:[#allocation7 + $0x720] sm:$0xff]
    %v690 = vld [vmem:[#allocation7 + $0x728] sm:$0xff]
    %v691 = vld [vmem:[#allocation7 + $0x730] sm:$0xff]
    %v692 = vld [vmem:[#allocation7 + $0x738] sm:$0xff]
    %v693 = vld [vmem:[#allocation7 + $0x740] sm:$0xff]
    %v694 = vld [vmem:[#allocation7 + $0x748] sm:$0xff]
    %v695 = vld [vmem:[#allocation7 + $0x750] sm:$0xff]
    %v696 = vld [vmem:[#allocation7 + $0x758] sm:$0xff]
    %v697 = vld [vmem:[#allocation7 + $0x760] sm:$0xff]
    %v698 = vld [vmem:[#allocation7 + $0x768] sm:$0xf]
    %v699 = vld [vmem:[#allocation7 + $0x76c] sm:$0xff]
    %v700 = vld [vmem:[#allocation7 + $0x774] sm:$0xff]
    %v701 = vld [vmem:[#allocation7 + $0x77c] sm:$0xff]
    %v702 = vld [vmem:[#allocation7 + $0x784] sm:$0xff]
    %v703 = vld [vmem:[#allocation7 + $0x78c] sm:$0xff]
    %v704 = vld [vmem:[#allocation7 + $0x794] sm:$0xff]
    %v705 = vld [vmem:[#allocation7 + $0x79c] sm:$0xff]
    %v706 = vld [vmem:[#allocation7 + $0x7a4] sm:$0xff]
    %v707 = vld [vmem:[#allocation7 + $0x7ac] sm:$0xff]
    %v708 = vld [vmem:[#allocation7 + $0x7b4] sm:$0xff]
    %v709 = vld [vmem:[#allocation7 + $0x7bc] sm:$0xff]
    %v710 = vld [vmem:[#allocation7 + $0x7c4] sm:$0xff]
    %v711 = vld [vmem:[#allocation7 + $0x7cc] sm:$0xf]
    %v712 = vld [vmem:[#allocation7 + $0x7d0] sm:$0xff]
    %v713 = vld [vmem:[#allocation7 + $0x7d8] sm:$0xff]
    %v714 = vld [vmem:[#allocation7 + $0x7e0] sm:$0xff]
    %v715 = vld [vmem:[#allocation7 + $0x7e8] sm:$0xff]
    %v716 = vld [vmem:[#allocation7 + $0x7f0] sm:$0xff]
    %v717 = vld [vmem:[#allocation7 + $0x7f8] sm:$0xff]
    %v718 = vld [vmem:[#allocation7 + $0x800] sm:$0xff]
    %v719 = vld [vmem:[#allocation7 + $0x808] sm:$0xff]
    %v720 = vld [vmem:[#allocation7 + $0x810] sm:$0xff]
    %v721 = vld [vmem:[#allocation7 + $0x818] sm:$0xff]
    %v722 = vld [vmem:[#allocation7 + $0x820] sm:$0xff]
    %v723 = vld [vmem:[#allocation7 + $0x828] sm:$0xff]
    %v724 = vld [vmem:[#allocation7 + $0x830] sm:$0xf]
    %v725 = vld [vmem:[#allocation7 + $0x834] sm:$0xff]
    %v726 = vld [vmem:[#allocation7 + $0x83c] sm:$0xff]
    %v727 = vld [vmem:[#allocation7 + $0x844] sm:$0xff]
    %v728 = vld [vmem:[#allocation7 + $0x84c] sm:$0xff]
    %v729 = vld [vmem:[#allocation7 + $0x854] sm:$0xff]
    %v730 = vld [vmem:[#allocation7 + $0x85c] sm:$0xff]
    %v731 = vld [vmem:[#allocation7 + $0x864] sm:$0xff]
    %v732 = vld [vmem:[#allocation7 + $0x86c] sm:$0xff]
    %v733 = vld [vmem:[#allocation7 + $0x874] sm:$0xff]
    %v734 = vld [vmem:[#allocation7 + $0x87c] sm:$0xff]
    %v735 = vld [vmem:[#allocation7 + $0x884] sm:$0xff]
    %v736 = vld [vmem:[#allocation7 + $0x88c] sm:$0xff]
    %v737 = vld [vmem:[#allocation7 + $0x894] sm:$0xf]
    %v738 = vld [vmem:[#allocation7 + $0x898] sm:$0xff]
    %v739 = vld [vmem:[#allocation7 + $0x8a0] sm:$0xff]
    %v740 = vld [vmem:[#allocation7 + $0x8a8] sm:$0xff]
    %v741 = vld [vmem:[#allocation7 + $0x8b0] sm:$0xff]
    %v742 = vld [vmem:[#allocation7 + $0x8b8] sm:$0xff]
    %v743 = vld [vmem:[#allocation7 + $0x8c0] sm:$0xff]
    %v744 = vld [vmem:[#allocation7 + $0x8c8] sm:$0xff]
    %v745 = vld [vmem:[#allocation7 + $0x8d0] sm:$0xff]
    %v746 = vld [vmem:[#allocation7 + $0x8d8] sm:$0xff]
    %v747 = vld [vmem:[#allocation7 + $0x8e0] sm:$0xff]
    %v748 = vld [vmem:[#allocation7 + $0x8e8] sm:$0xff]
    %v749 = vld [vmem:[#allocation7 + $0x8f0] sm:$0xff]
    %v750 = vld [vmem:[#allocation7 + $0x8f8] sm:$0xf]
    %v751 = vld [vmem:[#allocation7 + $0x8fc] sm:$0xff]
    %v752 = vld [vmem:[#allocation7 + $0x904] sm:$0xff]
    %v753 = vld [vmem:[#allocation7 + $0x90c] sm:$0xff]
    %v754 = vld [vmem:[#allocation7 + $0x914] sm:$0xff]
    %v755 = vld [vmem:[#allocation7 + $0x91c] sm:$0xff]
    %v756 = vld [vmem:[#allocation7 + $0x924] sm:$0xff]
    %v757 = vld [vmem:[#allocation7 + $0x92c] sm:$0xff]
    %v758 = vld [vmem:[#allocation7 + $0x934] sm:$0xff]
    %v759 = vld [vmem:[#allocation7 + $0x93c] sm:$0xff]
    %v760 = vld [vmem:[#allocation7 + $0x944] sm:$0xff]
    %v761 = vld [vmem:[#allocation7 + $0x94c] sm:$0xff]
    %v762 = vld [vmem:[#allocation7 + $0x954] sm:$0xff]
    %v763 = vld [vmem:[#allocation7 + $0x95c] sm:$0xf]
    %v764 = vld [vmem:[#allocation7 + $0x960] sm:$0xff]
    %v765 = vld [vmem:[#allocation7 + $0x968] sm:$0xff]
    %v766 = vld [vmem:[#allocation7 + $0x970] sm:$0xff]
    %v767 = vld [vmem:[#allocation7 + $0x978] sm:$0xff]
    %v768 = vld [vmem:[#allocation7 + $0x980] sm:$0xff]
    %v769 = vld [vmem:[#allocation7 + $0x988] sm:$0xff]
    %v770 = vld [vmem:[#allocation7 + $0x990] sm:$0xff]
    %v771 = vld [vmem:[#allocation7 + $0x998] sm:$0xff]
    %v772 = vld [vmem:[#allocation7 + $0x9a0] sm:$0xff]
    %v773 = vld [vmem:[#allocation7 + $0x9a8] sm:$0xff]
    %v774 = vld [vmem:[#allocation7 + $0x9b0] sm:$0xff]
    %v775 = vld [vmem:[#allocation7 + $0x9b8] sm:$0xff]
    %v776 = vld [vmem:[#allocation7 + $0x9c0] sm:$0xf]
    %v777 = vld [vmem:[#allocation7 + $0x9c4] sm:$0xff]
    %v778 = vld [vmem:[#allocation7 + $0x9cc] sm:$0xff]
    %v779 = vld [vmem:[#allocation7 + $0x9d4] sm:$0xff]
    %v780 = vld [vmem:[#allocation7 + $0x9dc] sm:$0xff]
    %v781 = vld [vmem:[#allocation7 + $0x9e4] sm:$0xff]
    %v782 = vld [vmem:[#allocation7 + $0x9ec] sm:$0xff]
    %v783 = vld [vmem:[#allocation7 + $0x9f4] sm:$0xff]
    %v784 = vld [vmem:[#allocation7 + $0x9fc] sm:$0xff]
    %v785 = vld [vmem:[#allocation7 + $0xa04] sm:$0xff]
    %v786 = vld [vmem:[#allocation7 + $0xa0c] sm:$0xff]
    %v787 = vld [vmem:[#allocation7 + $0xa14] sm:$0xff]
    %v788 = vld [vmem:[#allocation7 + $0xa1c] sm:$0xff]
    %v789 = vld [vmem:[#allocation7 + $0xa24] sm:$0xf]
    %v790 = vld [vmem:[#allocation7 + $0xa28] sm:$0xff]
    %v791 = vld [vmem:[#allocation7 + $0xa30] sm:$0xff]
    %v792 = vld [vmem:[#allocation7 + $0xa38] sm:$0xff]
    %v793 = vld [vmem:[#allocation7 + $0xa40] sm:$0xff]
    %v794 = vld [vmem:[#allocation7 + $0xa48] sm:$0xff]
    %v795 = vld [vmem:[#allocation7 + $0xa50] sm:$0xff]
    %v796 = vld [vmem:[#allocation7 + $0xa58] sm:$0xff]
    %v797 = vld [vmem:[#allocation7 + $0xa60] sm:$0xff]
    %v798 = vld [vmem:[#allocation7 + $0xa68] sm:$0xff]
    %v799 = vld [vmem:[#allocation7 + $0xa70] sm:$0xff]
    %v800 = vld [vmem:[#allocation7 + $0xa78] sm:$0xff]
    %v801 = vld [vmem:[#allocation7 + $0xa80] sm:$0xff]
    %v802 = vld [vmem:[#allocation7 + $0xa88] sm:$0xf]
    %v803 = vld [vmem:[#allocation7 + $0xa8c] sm:$0xff]
    %v804 = vld [vmem:[#allocation7 + $0xa94] sm:$0xff]
    %v805 = vld [vmem:[#allocation7 + $0xa9c] sm:$0xff]
    %v806 = vld [vmem:[#allocation7 + $0xaa4] sm:$0xff]
    %v807 = vld [vmem:[#allocation7 + $0xaac] sm:$0xff]
    %v808 = vld [vmem:[#allocation7 + $0xab4] sm:$0xff]
    %v809 = vld [vmem:[#allocation7 + $0xabc] sm:$0xff]
    %v810 = vld [vmem:[#allocation7 + $0xac4] sm:$0xff]
    %v811 = vld [vmem:[#allocation7 + $0xacc] sm:$0xff]
    %v812 = vld [vmem:[#allocation7 + $0xad4] sm:$0xff]
    %v813 = vld [vmem:[#allocation7 + $0xadc] sm:$0xff]
    %v814 = vld [vmem:[#allocation7 + $0xae4] sm:$0xff]
    %v815 = vld [vmem:[#allocation7 + $0xaec] sm:$0xf]
    %v816 = vld [vmem:[#allocation7 + $0xaf0] sm:$0xff]
    %v817 = vld [vmem:[#allocation7 + $0xaf8] sm:$0xff]
    %v818 = vld [vmem:[#allocation7 + $0xb00] sm:$0xff]
    %v819 = vld [vmem:[#allocation7 + $0xb08] sm:$0xff]
    %v820 = vld [vmem:[#allocation7 + $0xb10] sm:$0xff]
    %v821 = vld [vmem:[#allocation7 + $0xb18] sm:$0xff]
    %v822 = vld [vmem:[#allocation7 + $0xb20] sm:$0xff]
    %v823 = vld [vmem:[#allocation7 + $0xb28] sm:$0xff]
    %v824 = vld [vmem:[#allocation7 + $0xb30] sm:$0xff]
    %v825 = vld [vmem:[#allocation7 + $0xb38] sm:$0xff]
    %v826 = vld [vmem:[#allocation7 + $0xb40] sm:$0xff]
    %v827 = vld [vmem:[#allocation7 + $0xb48] sm:$0xff]
    %v828 = vld [vmem:[#allocation7 + $0xb50] sm:$0xf]
    %v829 = vld [vmem:[#allocation7 + $0xb54] sm:$0xff]
    %v830 = vld [vmem:[#allocation7 + $0xb5c] sm:$0xff]
    %v831 = vld [vmem:[#allocation7 + $0xb64] sm:$0xff]
    %v832 = vld [vmem:[#allocation7 + $0xb6c] sm:$0xff]
    %v833 = vld [vmem:[#allocation7 + $0xb74] sm:$0xff]
    %v834 = vld [vmem:[#allocation7 + $0xb7c] sm:$0xff]
    %v835 = vld [vmem:[#allocation7 + $0xb84] sm:$0xff]
    %v836 = vld [vmem:[#allocation7 + $0xb8c] sm:$0xff]
    %v837 = vld [vmem:[#allocation7 + $0xb94] sm:$0xff]
    %v838 = vld [vmem:[#allocation7 + $0xb9c] sm:$0xff]
    %v839 = vld [vmem:[#allocation7 + $0xba4] sm:$0xff]
    %v840 = vld [vmem:[#allocation7 + $0xbac] sm:$0xff]
    %v841 = vld [vmem:[#allocation7 + $0xbb4] sm:$0xf]
    %v842 = vld [vmem:[#allocation7 + $0xbb8] sm:$0xff]
    %v843 = vld [vmem:[#allocation7 + $0xbc0] sm:$0xff]
    %v844 = vld [vmem:[#allocation7 + $0xbc8] sm:$0xff]
    %v845 = vld [vmem:[#allocation7 + $0xbd0] sm:$0xff]
    %v846 = vld [vmem:[#allocation7 + $0xbd8] sm:$0xff]
    %v847 = vld [vmem:[#allocation7 + $0xbe0] sm:$0xff]
    %v848 = vld [vmem:[#allocation7 + $0xbe8] sm:$0xff]
    %v849 = vld [vmem:[#allocation7 + $0xbf0] sm:$0xff]
    %v850 = vld [vmem:[#allocation7 + $0xbf8] sm:$0xff]
    %v851 = vld [vmem:[#allocation7 + $0xc00] sm:$0xff]
    %v852 = vld [vmem:[#allocation7 + $0xc08] sm:$0xff]
    %v853 = vld [vmem:[#allocation7 + $0xc10] sm:$0xff]
    %v854 = vld [vmem:[#allocation7 + $0xc18] sm:$0xf]
    %v855 = vld [vmem:[#allocation7 + $0xc1c] sm:$0xff]
    %v856 = vld [vmem:[#allocation7 + $0xc24] sm:$0xff]
    %v857 = vld [vmem:[#allocation7 + $0xc2c] sm:$0xff]
    %v858 = vld [vmem:[#allocation7 + $0xc34] sm:$0xff]
    %v859 = vld [vmem:[#allocation7 + $0xc3c] sm:$0xff]
    %v860 = vld [vmem:[#allocation7 + $0xc44] sm:$0xff]
    %v861 = vld [vmem:[#allocation7 + $0xc4c] sm:$0xff]
    %v862 = vld [vmem:[#allocation7 + $0xc54] sm:$0xff]
    %v863 = vld [vmem:[#allocation7 + $0xc5c] sm:$0xff]
    %v864 = vld [vmem:[#allocation7 + $0xc64] sm:$0xff]
    %v865 = vld [vmem:[#allocation7 + $0xc6c] sm:$0xff]
    %v866 = vld [vmem:[#allocation7 + $0xc74] sm:$0xff]
    %v867 = vld [vmem:[#allocation7 + $0xc7c] sm:$0xf]
    %v868 = vld [vmem:[#allocation7 + $0xc80] sm:$0xff]
    %v869 = vld [vmem:[#allocation7 + $0xc88] sm:$0xff]
    %v870 = vld [vmem:[#allocation7 + $0xc90] sm:$0xff]
    %v871 = vld [vmem:[#allocation7 + $0xc98] sm:$0xff]
    %v872 = vld [vmem:[#allocation7 + $0xca0] sm:$0xff]
    %v873 = vld [vmem:[#allocation7 + $0xca8] sm:$0xff]
    %v874 = vld [vmem:[#allocation7 + $0xcb0] sm:$0xff]
    %v875 = vld [vmem:[#allocation7 + $0xcb8] sm:$0xff]
    %v876 = vld [vmem:[#allocation7 + $0xcc0] sm:$0xff]
    %v877 = vld [vmem:[#allocation7 + $0xcc8] sm:$0xff]
    %v878 = vld [vmem:[#allocation7 + $0xcd0] sm:$0xff]
    %v879 = vld [vmem:[#allocation7 + $0xcd8] sm:$0xff]
    %v880 = vld [vmem:[#allocation7 + $0xce0] sm:$0xf]
    %v881 = vld [vmem:[#allocation7 + $0xce4] sm:$0xff]
    %v882 = vld [vmem:[#allocation7 + $0xcec] sm:$0xff]
    %v883 = vld [vmem:[#allocation7 + $0xcf4] sm:$0xff]
    %v884 = vld [vmem:[#allocation7 + $0xcfc] sm:$0xff]
    %v885 = vld [vmem:[#allocation7 + $0xd04] sm:$0xff]
    %v886 = vld [vmem:[#allocation7 + $0xd0c] sm:$0xff]
    %v887 = vld [vmem:[#allocation7 + $0xd14] sm:$0xff]
    %v888 = vld [vmem:[#allocation7 + $0xd1c] sm:$0xff]
    %v889 = vld [vmem:[#allocation7 + $0xd24] sm:$0xff]
    %v890 = vld [vmem:[#allocation7 + $0xd2c] sm:$0xff]
    %v891 = vld [vmem:[#allocation7 + $0xd34] sm:$0xff]
    %v892 = vld [vmem:[#allocation7 + $0xd3c] sm:$0xff]
    %v893 = vld [vmem:[#allocation7 + $0xd44] sm:$0xf]
    %v894 = vld [vmem:[#allocation7 + $0xd48] sm:$0xff]
    %v895 = vld [vmem:[#allocation7 + $0xd50] sm:$0xff]
    %v896 = vld [vmem:[#allocation7 + $0xd58] sm:$0xff]
    %v897 = vld [vmem:[#allocation7 + $0xd60] sm:$0xff]
    %v898 = vld [vmem:[#allocation7 + $0xd68] sm:$0xff]
    %v899 = vld [vmem:[#allocation7 + $0xd70] sm:$0xff]
    %v900 = vld [vmem:[#allocation7 + $0xd78] sm:$0xff]
    %v901 = vld [vmem:[#allocation7 + $0xd80] sm:$0xff]
    %v902 = vld [vmem:[#allocation7 + $0xd88] sm:$0xff]
    %v903 = vld [vmem:[#allocation7 + $0xd90] sm:$0xff]
    %v904 = vld [vmem:[#allocation7 + $0xd98] sm:$0xff]
    %v905 = vld [vmem:[#allocation7 + $0xda0] sm:$0xff]
    %v906 = vld [vmem:[#allocation7 + $0xda8] sm:$0xf]
    %v907 = vld [vmem:[#allocation7 + $0xdac] sm:$0xff]
    %v908 = vld [vmem:[#allocation7 + $0xdb4] sm:$0xff]
    %v909 = vld [vmem:[#allocation7 + $0xdbc] sm:$0xff]
    %v910 = vld [vmem:[#allocation7 + $0xdc4] sm:$0xff]
    %v911 = vld [vmem:[#allocation7 + $0xdcc] sm:$0xff]
    %v912 = vld [vmem:[#allocation7 + $0xdd4] sm:$0xff]
    %v913 = vld [vmem:[#allocation7 + $0xddc] sm:$0xff]
    %v914 = vld [vmem:[#allocation7 + $0xde4] sm:$0xff]
    %v915 = vld [vmem:[#allocation7 + $0xdec] sm:$0xff]
    %v916 = vld [vmem:[#allocation7 + $0xdf4] sm:$0xff]
    %v917 = vld [vmem:[#allocation7 + $0xdfc] sm:$0xff]
    %v918 = vld [vmem:[#allocation7 + $0xe04] sm:$0xff]
    %v919 = vld [vmem:[#allocation7 + $0xe0c] sm:$0xf]
    %v920 = vld [vmem:[#allocation7 + $0xe10] sm:$0xff]
    %v921 = vld [vmem:[#allocation7 + $0xe18] sm:$0xff]
    %v922 = vld [vmem:[#allocation7 + $0xe20] sm:$0xff]
    %v923 = vld [vmem:[#allocation7 + $0xe28] sm:$0xff]
    %v924 = vld [vmem:[#allocation7 + $0xe30] sm:$0xff]
    %v925 = vld [vmem:[#allocation7 + $0xe38] sm:$0xff]
    %v926 = vld [vmem:[#allocation7 + $0xe40] sm:$0xff]
    %v927 = vld [vmem:[#allocation7 + $0xe48] sm:$0xff]
    %v928 = vld [vmem:[#allocation7 + $0xe50] sm:$0xff]
    %v929 = vld [vmem:[#allocation7 + $0xe58] sm:$0xff]
    %v930 = vld [vmem:[#allocation7 + $0xe60] sm:$0xff]
    %v931 = vld [vmem:[#allocation7 + $0xe68] sm:$0xff]
    %v932 = vld [vmem:[#allocation7 + $0xe70] sm:$0xf]
    %v933 = vld [vmem:[#allocation7 + $0xe74] sm:$0xff]
    %v934 = vld [vmem:[#allocation7 + $0xe7c] sm:$0xff]
    %v935 = vld [vmem:[#allocation7 + $0xe84] sm:$0xff]
    %v936 = vld [vmem:[#allocation7 + $0xe8c] sm:$0xff]
    %v937 = vld [vmem:[#allocation7 + $0xe94] sm:$0xff]
    %v938 = vld [vmem:[#allocation7 + $0xe9c] sm:$0xff]
    %v939 = vld [vmem:[#allocation7 + $0xea4] sm:$0xff]
    %v940 = vld [vmem:[#allocation7 + $0xeac] sm:$0xff]
    %v941 = vld [vmem:[#allocation7 + $0xeb4] sm:$0xff]
    %v942 = vld [vmem:[#allocation7 + $0xebc] sm:$0xff]
    %v943 = vld [vmem:[#allocation7 + $0xec4] sm:$0xff]
    %v944 = vld [vmem:[#allocation7 + $0xecc] sm:$0xff]
    %v945 = vld [vmem:[#allocation7 + $0xed4] sm:$0xf]
    %v946 = vld [vmem:[#allocation7 + $0xed8] sm:$0xff]
    %v947 = vld [vmem:[#allocation7 + $0xee0] sm:$0xff]
    %v948 = vld [vmem:[#allocation7 + $0xee8] sm:$0xff]
    %v949 = vld [vmem:[#allocation7 + $0xef0] sm:$0xff]
    %v950 = vld [vmem:[#allocation7 + $0xef8] sm:$0xff]
    %v951 = vld [vmem:[#allocation7 + $0xf00] sm:$0xff]
    %v952 = vld [vmem:[#allocation7 + $0xf08] sm:$0xff]
    %v953 = vld [vmem:[#allocation7 + $0xf10] sm:$0xff]
    %v954 = vld [vmem:[#allocation7 + $0xf18] sm:$0xff]
    %v955 = vld [vmem:[#allocation7 + $0xf20] sm:$0xff]
    %v956 = vld [vmem:[#allocation7 + $0xf28] sm:$0xff]
    %v957 = vld [vmem:[#allocation7 + $0xf30] sm:$0xff]
    %v958 = vld [vmem:[#allocation7 + $0xf38] sm:$0xf]
    %v959 = vld [vmem:[#allocation7 + $0xf3c] sm:$0xff]
    %v960 = vld [vmem:[#allocation7 + $0xf44] sm:$0xff]
    %v961 = vld [vmem:[#allocation7 + $0xf4c] sm:$0xff]
    %v962 = vld [vmem:[#allocation7 + $0xf54] sm:$0xff]
    %v963 = vld [vmem:[#allocation7 + $0xf5c] sm:$0xff]
    %v964 = vld [vmem:[#allocation7 + $0xf64] sm:$0xff]
    %v965 = vld [vmem:[#allocation7 + $0xf6c] sm:$0xff]
    %v966 = vld [vmem:[#allocation7 + $0xf74] sm:$0xff]
    %v967 = vld [vmem:[#allocation7 + $0xf7c] sm:$0xff]
    %v968 = vld [vmem:[#allocation7 + $0xf84] sm:$0xff]
    %v969 = vld [vmem:[#allocation7 + $0xf8c] sm:$0xff]
    %v970 = vld [vmem:[#allocation7 + $0xf94] sm:$0xff]
    %v971 = vld [vmem:[#allocation7 + $0xf9c] sm:$0xf]
    %v972 = vld [vmem:[#allocation7 + $0xfa0] sm:$0x33]
    %v973 = vld [vmem:[#allocation7 + $0xfa8] sm:$0x33]
    %v974 = vld [vmem:[#allocation7 + $0xfb0] sm:$0x33]
    %v975 = vld [vmem:[#allocation7 + $0xfb8] sm:$0x33]
    %v976 = vld [vmem:[#allocation7 + $0xfc0] sm:$0x33]
    %v977 = vld [vmem:[#allocation7 + $0xfc8] sm:$0x33]
    %v978 = vld [vmem:[#allocation7 + $0xfd0] sm:$0x33]
    %v979 = vld [vmem:[#allocation7 + $0xfd8] sm:$0x33]
    %v980 = vld [vmem:[#allocation7 + $0xfe0] sm:$0x33]
    %v981 = vld [vmem:[#allocation7 + $0xfe8] sm:$0x33]
    %v982 = vld [vmem:[#allocation7 + $0xff0] sm:$0x33]
    %v983 = vld [vmem:[#allocation7 + $0xff8] sm:$0x33]
    %v984 = vld [vmem:[#allocation7 + $0x1000] sm:$0x3]
    %v1518 = vunpack.c.l.b16 %v452
    %v1519 = vunpack.c.h.b16 %v452
    %v1520 = vunpack.c.l.b16 %v453
    %v1521 = vunpack.c.h.b16 %v453
    %v1522 = vunpack.c.l.b16 %v454
    %v1523 = vunpack.c.h.b16 %v454
    %v1524 = vunpack.c.l.b16 %v455
    %v1525 = vunpack.c.h.b16 %v455
    %v1526 = vunpack.c.l.b16 %v456
    %v1527 = vunpack.c.h.b16 %v456
    %v1528 = vunpack.c.l.b16 %v457
    %v1529 = vunpack.c.h.b16 %v457
    %v1530 = vunpack.c.l.b16 %v458
    %v1531 = vunpack.c.h.b16 %v458
    %v1532 = vunpack.c.l.b16 %v459
    %v1533 = vunpack.c.h.b16 %v459
    %v1534 = vunpack.c.l.b16 %v460
    %v1535 = vunpack.c.h.b16 %v460
    %v1536 = vunpack.c.l.b16 %v461
    %v1537 = vunpack.c.h.b16 %v461
    %v1538 = vunpack.c.l.b16 %v462
    %v1539 = vunpack.c.h.b16 %v462
    %v1540 = vunpack.c.l.b16 %v463
    %v1541 = vunpack.c.h.b16 %v463
    %v1542 = vunpack.c.l.b16 %v464
    %v1543 = vunpack.c.l.b16 %v465
    %v1544 = vunpack.c.h.b16 %v465
    %v1545 = vunpack.c.l.b16 %v466
    %v1546 = vunpack.c.h.b16 %v466
    %v1547 = vunpack.c.l.b16 %v467
    %v1548 = vunpack.c.h.b16 %v467
    %v1549 = vunpack.c.l.b16 %v468
    %v1550 = vunpack.c.h.b16 %v468
    %v1551 = vunpack.c.l.b16 %v469
    %v1552 = vunpack.c.h.b16 %v469
    %v1553 = vunpack.c.l.b16 %v470
    %v1554 = vunpack.c.h.b16 %v470
    %v1555 = vunpack.c.l.b16 %v471
    %v1556 = vunpack.c.h.b16 %v471
    %v1557 = vunpack.c.l.b16 %v472
    %v1558 = vunpack.c.h.b16 %v472
    %v1559 = vunpack.c.l.b16 %v473
    %v1560 = vunpack.c.h.b16 %v473
    %v1561 = vunpack.c.l.b16 %v474
    %v1562 = vunpack.c.h.b16 %v474
    %v1563 = vunpack.c.l.b16 %v475
    %v1564 = vunpack.c.h.b16 %v475
    %v1565 = vunpack.c.l.b16 %v476
    %v1566 = vunpack.c.h.b16 %v476
    %v1567 = vunpack.c.l.b16 %v477
    %v1568 = vunpack.c.l.b16 %v478
    %v1569 = vunpack.c.h.b16 %v478
    %v1570 = vunpack.c.l.b16 %v479
    %v1571 = vunpack.c.h.b16 %v479
    %v1572 = vunpack.c.l.b16 %v480
    %v1573 = vunpack.c.h.b16 %v480
    %v1574 = vunpack.c.l.b16 %v481
    %v1575 = vunpack.c.h.b16 %v481
    %v1576 = vunpack.c.l.b16 %v482
    %v1577 = vunpack.c.h.b16 %v482
    %v1578 = vunpack.c.l.b16 %v483
    %v1579 = vunpack.c.h.b16 %v483
    %v1580 = vunpack.c.l.b16 %v484
    %v1581 = vunpack.c.h.b16 %v484
    %v1582 = vunpack.c.l.b16 %v485
    %v1583 = vunpack.c.h.b16 %v485
    %v1584 = vunpack.c.l.b16 %v486
    %v1585 = vunpack.c.h.b16 %v486
    %v1586 = vunpack.c.l.b16 %v487
    %v1587 = vunpack.c.h.b16 %v487
    %v1588 = vunpack.c.l.b16 %v488
    %v1589 = vunpack.c.h.b16 %v488
    %v1590 = vunpack.c.l.b16 %v489
    %v1591 = vunpack.c.h.b16 %v489
    %v1592 = vunpack.c.l.b16 %v490
    %v1593 = vunpack.c.l.b16 %v491
    %v1594 = vunpack.c.h.b16 %v491
    %v1595 = vunpack.c.l.b16 %v492
    %v1596 = vunpack.c.h.b16 %v492
    %v1597 = vunpack.c.l.b16 %v493
    %v1598 = vunpack.c.h.b16 %v493
    %v1599 = vunpack.c.l.b16 %v494
    %v1600 = vunpack.c.h.b16 %v494
    %v1601 = vunpack.c.l.b16 %v495
    %v1602 = vunpack.c.h.b16 %v495
    %v1603 = vunpack.c.l.b16 %v496
    %v1604 = vunpack.c.h.b16 %v496
    %v1605 = vunpack.c.l.b16 %v497
    %v1606 = vunpack.c.h.b16 %v497
    %v1607 = vunpack.c.l.b16 %v498
    %v1608 = vunpack.c.h.b16 %v498
    %v1609 = vunpack.c.l.b16 %v499
    %v1610 = vunpack.c.h.b16 %v499
    %v1611 = vunpack.c.l.b16 %v500
    %v1612 = vunpack.c.h.b16 %v500
    %v1613 = vunpack.c.l.b16 %v501
    %v1614 = vunpack.c.h.b16 %v501
    %v1615 = vunpack.c.l.b16 %v502
    %v1616 = vunpack.c.h.b16 %v502
    %v1617 = vunpack.c.l.b16 %v503
    %v1618 = vunpack.c.l.b16 %v504
    %v1619 = vunpack.c.h.b16 %v504
    %v1620 = vunpack.c.l.b16 %v505
    %v1621 = vunpack.c.h.b16 %v505
    %v1622 = vunpack.c.l.b16 %v506
    %v1623 = vunpack.c.h.b16 %v506
    %v1624 = vunpack.c.l.b16 %v507
    %v1625 = vunpack.c.h.b16 %v507
    %v1626 = vunpack.c.l.b16 %v508
    %v1627 = vunpack.c.h.b16 %v508
    %v1628 = vunpack.c.l.b16 %v509
    %v1629 = vunpack.c.h.b16 %v509
    %v1630 = vunpack.c.l.b16 %v510
    %v1631 = vunpack.c.h.b16 %v510
    %v1632 = vunpack.c.l.b16 %v511
    %v1633 = vunpack.c.h.b16 %v511
    %v1634 = vunpack.c.l.b16 %v512
    %v1635 = vunpack.c.h.b16 %v512
    %v1636 = vunpack.c.l.b16 %v513
    %v1637 = vunpack.c.h.b16 %v513
    %v1638 = vunpack.c.l.b16 %v514
    %v1639 = vunpack.c.h.b16 %v514
    %v1640 = vunpack.c.l.b16 %v515
    %v1641 = vunpack.c.h.b16 %v515
    %v1642 = vunpack.c.l.b16 %v516
    %v1643 = vunpack.c.l.b16 %v517
    %v1644 = vunpack.c.h.b16 %v517
    %v1645 = vunpack.c.l.b16 %v518
    %v1646 = vunpack.c.h.b16 %v518
    %v1647 = vunpack.c.l.b16 %v519
    %v1648 = vunpack.c.h.b16 %v519
    %v1649 = vunpack.c.l.b16 %v520
    %v1650 = vunpack.c.h.b16 %v520
    %v1651 = vunpack.c.l.b16 %v521
    %v1652 = vunpack.c.h.b16 %v521
    %v1653 = vunpack.c.l.b16 %v522
    %v1654 = vunpack.c.h.b16 %v522
    %v1655 = vunpack.c.l.b16 %v523
    %v1656 = vunpack.c.h.b16 %v523
    %v1657 = vunpack.c.l.b16 %v524
    %v1658 = vunpack.c.h.b16 %v524
    %v1659 = vunpack.c.l.b16 %v525
    %v1660 = vunpack.c.h.b16 %v525
    %v1661 = vunpack.c.l.b16 %v526
    %v1662 = vunpack.c.h.b16 %v526
    %v1663 = vunpack.c.l.b16 %v527
    %v1664 = vunpack.c.h.b16 %v527
    %v1665 = vunpack.c.l.b16 %v528
    %v1666 = vunpack.c.h.b16 %v528
    %v1667 = vunpack.c.l.b16 %v529
    %v1668 = vunpack.c.l.b16 %v530
    %v1669 = vunpack.c.h.b16 %v530
    %v1670 = vunpack.c.l.b16 %v531
    %v1671 = vunpack.c.h.b16 %v531
    %v1672 = vunpack.c.l.b16 %v532
    %v1673 = vunpack.c.h.b16 %v532
    %v1674 = vunpack.c.l.b16 %v533
    %v1675 = vunpack.c.h.b16 %v533
    %v1676 = vunpack.c.l.b16 %v534
    %v1677 = vunpack.c.h.b16 %v534
    %v1678 = vunpack.c.l.b16 %v535
    %v1679 = vunpack.c.h.b16 %v535
    %v1680 = vunpack.c.l.b16 %v536
    %v1681 = vunpack.c.h.b16 %v536
    %v1682 = vunpack.c.l.b16 %v537
    %v1683 = vunpack.c.h.b16 %v537
    %v1684 = vunpack.c.l.b16 %v538
    %v1685 = vunpack.c.h.b16 %v538
    %v1686 = vunpack.c.l.b16 %v539
    %v1687 = vunpack.c.h.b16 %v539
    %v1688 = vunpack.c.l.b16 %v540
    %v1689 = vunpack.c.h.b16 %v540
    %v1690 = vunpack.c.l.b16 %v541
    %v1691 = vunpack.c.h.b16 %v541
    %v1692 = vunpack.c.l.b16 %v542
    %v1693 = vunpack.c.l.b16 %v543
    %v1694 = vunpack.c.h.b16 %v543
    %v1695 = vunpack.c.l.b16 %v544
    %v1696 = vunpack.c.h.b16 %v544
    %v1697 = vunpack.c.l.b16 %v545
    %v1698 = vunpack.c.h.b16 %v545
    %v1699 = vunpack.c.l.b16 %v546
    %v1700 = vunpack.c.h.b16 %v546
    %v1701 = vunpack.c.l.b16 %v547
    %v1702 = vunpack.c.h.b16 %v547
    %v1703 = vunpack.c.l.b16 %v548
    %v1704 = vunpack.c.h.b16 %v548
    %v1705 = vunpack.c.l.b16 %v549
    %v1706 = vunpack.c.h.b16 %v549
    %v1707 = vunpack.c.l.b16 %v550
    %v1708 = vunpack.c.h.b16 %v550
    %v1709 = vunpack.c.l.b16 %v551
    %v1710 = vunpack.c.h.b16 %v551
    %v1711 = vunpack.c.l.b16 %v552
    %v1712 = vunpack.c.h.b16 %v552
    %v1713 = vunpack.c.l.b16 %v553
    %v1714 = vunpack.c.h.b16 %v553
    %v1715 = vunpack.c.l.b16 %v554
    %v1716 = vunpack.c.h.b16 %v554
    %v1717 = vunpack.c.l.b16 %v555
    %v1718 = vunpack.c.l.b16 %v556
    %v1719 = vunpack.c.h.b16 %v556
    %v1720 = vunpack.c.l.b16 %v557
    %v1721 = vunpack.c.h.b16 %v557
    %v1722 = vunpack.c.l.b16 %v558
    %v1723 = vunpack.c.h.b16 %v558
    %v1724 = vunpack.c.l.b16 %v559
    %v1725 = vunpack.c.h.b16 %v559
    %v1726 = vunpack.c.l.b16 %v560
    %v1727 = vunpack.c.h.b16 %v560
    %v1728 = vunpack.c.l.b16 %v561
    %v1729 = vunpack.c.h.b16 %v561
    %v1730 = vunpack.c.l.b16 %v562
    %v1731 = vunpack.c.h.b16 %v562
    %v1732 = vunpack.c.l.b16 %v563
    %v1733 = vunpack.c.h.b16 %v563
    %v1734 = vunpack.c.l.b16 %v564
    %v1735 = vunpack.c.h.b16 %v564
    %v1736 = vunpack.c.l.b16 %v565
    %v1737 = vunpack.c.h.b16 %v565
    %v1738 = vunpack.c.l.b16 %v566
    %v1739 = vunpack.c.h.b16 %v566
    %v1740 = vunpack.c.l.b16 %v567
    %v1741 = vunpack.c.h.b16 %v567
    %v1742 = vunpack.c.l.b16 %v568
    %v1743 = vunpack.c.l.b16 %v569
    %v1744 = vunpack.c.h.b16 %v569
    %v1745 = vunpack.c.l.b16 %v570
    %v1746 = vunpack.c.h.b16 %v570
    %v1747 = vunpack.c.l.b16 %v571
    %v1748 = vunpack.c.h.b16 %v571
    %v1749 = vunpack.c.l.b16 %v572
    %v1750 = vunpack.c.h.b16 %v572
    %v1751 = vunpack.c.l.b16 %v573
    %v1752 = vunpack.c.h.b16 %v573
    %v1753 = vunpack.c.l.b16 %v574
    %v1754 = vunpack.c.h.b16 %v574
    %v1755 = vunpack.c.l.b16 %v575
    %v1756 = vunpack.c.h.b16 %v575
    %v1757 = vunpack.c.l.b16 %v576
    %v1758 = vunpack.c.h.b16 %v576
    %v1759 = vunpack.c.l.b16 %v577
    %v1760 = vunpack.c.h.b16 %v577
    %v1761 = vunpack.c.l.b16 %v578
    %v1762 = vunpack.c.h.b16 %v578
    %v1763 = vunpack.c.l.b16 %v579
    %v1764 = vunpack.c.h.b16 %v579
    %v1765 = vunpack.c.l.b16 %v580
    %v1766 = vunpack.c.h.b16 %v580
    %v1767 = vunpack.c.l.b16 %v581
    %v1768 = vunpack.c.l.b16 %v582
    %v1769 = vunpack.c.h.b16 %v582
    %v1770 = vunpack.c.l.b16 %v583
    %v1771 = vunpack.c.h.b16 %v583
    %v1772 = vunpack.c.l.b16 %v584
    %v1773 = vunpack.c.h.b16 %v584
    %v1774 = vunpack.c.l.b16 %v585
    %v1775 = vunpack.c.h.b16 %v585
    %v1776 = vunpack.c.l.b16 %v586
    %v1777 = vunpack.c.h.b16 %v586
    %v1778 = vunpack.c.l.b16 %v587
    %v1779 = vunpack.c.h.b16 %v587
    %v1780 = vunpack.c.l.b16 %v588
    %v1781 = vunpack.c.h.b16 %v588
    %v1782 = vunpack.c.l.b16 %v589
    %v1783 = vunpack.c.h.b16 %v589
    %v1784 = vunpack.c.l.b16 %v590
    %v1785 = vunpack.c.h.b16 %v590
    %v1786 = vunpack.c.l.b16 %v591
    %v1787 = vunpack.c.h.b16 %v591
    %v1788 = vunpack.c.l.b16 %v592
    %v1789 = vunpack.c.h.b16 %v592
    %v1790 = vunpack.c.l.b16 %v593
    %v1791 = vunpack.c.h.b16 %v593
    %v1792 = vunpack.c.l.b16 %v594
    %v1793 = vunpack.c.l.b16 %v595
    %v1794 = vunpack.c.h.b16 %v595
    %v1795 = vunpack.c.l.b16 %v596
    %v1796 = vunpack.c.h.b16 %v596
    %v1797 = vunpack.c.l.b16 %v597
    %v1798 = vunpack.c.h.b16 %v597
    %v1799 = vunpack.c.l.b16 %v598
    %v1800 = vunpack.c.h.b16 %v598
    %v1801 = vunpack.c.l.b16 %v599
    %v1802 = vunpack.c.h.b16 %v599
    %v1803 = vunpack.c.l.b16 %v600
    %v1804 = vunpack.c.h.b16 %v600
    %v1805 = vunpack.c.l.b16 %v601
    %v1806 = vunpack.c.h.b16 %v601
    %v1807 = vunpack.c.l.b16 %v602
    %v1808 = vunpack.c.h.b16 %v602
    %v1809 = vunpack.c.l.b16 %v603
    %v1810 = vunpack.c.h.b16 %v603
    %v1811 = vunpack.c.l.b16 %v604
    %v1812 = vunpack.c.h.b16 %v604
    %v1813 = vunpack.c.l.b16 %v605
    %v1814 = vunpack.c.h.b16 %v605
    %v1815 = vunpack.c.l.b16 %v606
    %v1816 = vunpack.c.h.b16 %v606
    %v1817 = vunpack.c.l.b16 %v607
    %v1818 = vunpack.c.l.b16 %v608
    %v1819 = vunpack.c.h.b16 %v608
    %v1820 = vunpack.c.l.b16 %v609
    %v1821 = vunpack.c.h.b16 %v609
    %v1822 = vunpack.c.l.b16 %v610
    %v1823 = vunpack.c.h.b16 %v610
    %v1824 = vunpack.c.l.b16 %v611
    %v1825 = vunpack.c.h.b16 %v611
    %v1826 = vunpack.c.l.b16 %v612
    %v1827 = vunpack.c.h.b16 %v612
    %v1828 = vunpack.c.l.b16 %v613
    %v1829 = vunpack.c.h.b16 %v613
    %v1830 = vunpack.c.l.b16 %v614
    %v1831 = vunpack.c.h.b16 %v614
    %v1832 = vunpack.c.l.b16 %v615
    %v1833 = vunpack.c.h.b16 %v615
    %v1834 = vunpack.c.l.b16 %v616
    %v1835 = vunpack.c.h.b16 %v616
    %v1836 = vunpack.c.l.b16 %v617
    %v1837 = vunpack.c.h.b16 %v617
    %v1838 = vunpack.c.l.b16 %v618
    %v1839 = vunpack.c.h.b16 %v618
    %v1840 = vunpack.c.l.b16 %v619
    %v1841 = vunpack.c.h.b16 %v619
    %v1842 = vunpack.c.l.b16 %v620
    %v1843 = vunpack.c.l.b16 %v621
    %v1844 = vunpack.c.h.b16 %v621
    %v1845 = vunpack.c.l.b16 %v622
    %v1846 = vunpack.c.h.b16 %v622
    %v1847 = vunpack.c.l.b16 %v623
    %v1848 = vunpack.c.h.b16 %v623
    %v1849 = vunpack.c.l.b16 %v624
    %v1850 = vunpack.c.h.b16 %v624
    %v1851 = vunpack.c.l.b16 %v625
    %v1852 = vunpack.c.h.b16 %v625
    %v1853 = vunpack.c.l.b16 %v626
    %v1854 = vunpack.c.h.b16 %v626
    %v1855 = vunpack.c.l.b16 %v627
    %v1856 = vunpack.c.h.b16 %v627
    %v1857 = vunpack.c.l.b16 %v628
    %v1858 = vunpack.c.h.b16 %v628
    %v1859 = vunpack.c.l.b16 %v629
    %v1860 = vunpack.c.h.b16 %v629
    %v1861 = vunpack.c.l.b16 %v630
    %v1862 = vunpack.c.h.b16 %v630
    %v1863 = vunpack.c.l.b16 %v631
    %v1864 = vunpack.c.h.b16 %v631
    %v1865 = vunpack.c.l.b16 %v632
    %v1866 = vunpack.c.h.b16 %v632
    %v1867 = vunpack.c.l.b16 %v633
    %v1868 = vunpack.c.l.b16 %v634
    %v1869 = vunpack.c.h.b16 %v634
    %v1870 = vunpack.c.l.b16 %v635
    %v1871 = vunpack.c.h.b16 %v635
    %v1872 = vunpack.c.l.b16 %v636
    %v1873 = vunpack.c.h.b16 %v636
    %v1874 = vunpack.c.l.b16 %v637
    %v1875 = vunpack.c.h.b16 %v637
    %v1876 = vunpack.c.l.b16 %v638
    %v1877 = vunpack.c.h.b16 %v638
    %v1878 = vunpack.c.l.b16 %v639
    %v1879 = vunpack.c.h.b16 %v639
    %v1880 = vunpack.c.l.b16 %v640
    %v1881 = vunpack.c.h.b16 %v640
    %v1882 = vunpack.c.l.b16 %v641
    %v1883 = vunpack.c.h.b16 %v641
    %v1884 = vunpack.c.l.b16 %v642
    %v1885 = vunpack.c.h.b16 %v642
    %v1886 = vunpack.c.l.b16 %v643
    %v1887 = vunpack.c.h.b16 %v643
    %v1888 = vunpack.c.l.b16 %v644
    %v1889 = vunpack.c.h.b16 %v644
    %v1890 = vunpack.c.l.b16 %v645
    %v1891 = vunpack.c.h.b16 %v645
    %v1892 = vunpack.c.l.b16 %v646
    %v1893 = vunpack.c.l.b16 %v647
    %v1894 = vunpack.c.h.b16 %v647
    %v1895 = vunpack.c.l.b16 %v648
    %v1896 = vunpack.c.h.b16 %v648
    %v1897 = vunpack.c.l.b16 %v649
    %v1898 = vunpack.c.h.b16 %v649
    %v1899 = vunpack.c.l.b16 %v650
    %v1900 = vunpack.c.h.b16 %v650
    %v1901 = vunpack.c.l.b16 %v651
    %v1902 = vunpack.c.h.b16 %v651
    %v1903 = vunpack.c.l.b16 %v652
    %v1904 = vunpack.c.h.b16 %v652
    %v1905 = vunpack.c.l.b16 %v653
    %v1906 = vunpack.c.h.b16 %v653
    %v1907 = vunpack.c.l.b16 %v654
    %v1908 = vunpack.c.h.b16 %v654
    %v1909 = vunpack.c.l.b16 %v655
    %v1910 = vunpack.c.h.b16 %v655
    %v1911 = vunpack.c.l.b16 %v656
    %v1912 = vunpack.c.h.b16 %v656
    %v1913 = vunpack.c.l.b16 %v657
    %v1914 = vunpack.c.h.b16 %v657
    %v1915 = vunpack.c.l.b16 %v658
    %v1916 = vunpack.c.h.b16 %v658
    %v1917 = vunpack.c.l.b16 %v659
    %v1918 = vunpack.c.l.b16 %v660
    %v1919 = vunpack.c.h.b16 %v660
    %v1920 = vunpack.c.l.b16 %v661
    %v1921 = vunpack.c.h.b16 %v661
    %v1922 = vunpack.c.l.b16 %v662
    %v1923 = vunpack.c.h.b16 %v662
    %v1924 = vunpack.c.l.b16 %v663
    %v1925 = vunpack.c.h.b16 %v663
    %v1926 = vunpack.c.l.b16 %v664
    %v1927 = vunpack.c.h.b16 %v664
    %v1928 = vunpack.c.l.b16 %v665
    %v1929 = vunpack.c.h.b16 %v665
    %v1930 = vunpack.c.l.b16 %v666
    %v1931 = vunpack.c.h.b16 %v666
    %v1932 = vunpack.c.l.b16 %v667
    %v1933 = vunpack.c.h.b16 %v667
    %v1934 = vunpack.c.l.b16 %v668
    %v1935 = vunpack.c.h.b16 %v668
    %v1936 = vunpack.c.l.b16 %v669
    %v1937 = vunpack.c.h.b16 %v669
    %v1938 = vunpack.c.l.b16 %v670
    %v1939 = vunpack.c.h.b16 %v670
    %v1940 = vunpack.c.l.b16 %v671
    %v1941 = vunpack.c.h.b16 %v671
    %v1942 = vunpack.c.l.b16 %v672
    %v1943 = vunpack.c.l.b16 %v673
    %v1944 = vunpack.c.h.b16 %v673
    %v1945 = vunpack.c.l.b16 %v674
    %v1946 = vunpack.c.h.b16 %v674
    %v1947 = vunpack.c.l.b16 %v675
    %v1948 = vunpack.c.h.b16 %v675
    %v1949 = vunpack.c.l.b16 %v676
    %v1950 = vunpack.c.h.b16 %v676
    %v1951 = vunpack.c.l.b16 %v677
    %v1952 = vunpack.c.h.b16 %v677
    %v1953 = vunpack.c.l.b16 %v678
    %v1954 = vunpack.c.h.b16 %v678
    %v1955 = vunpack.c.l.b16 %v679
    %v1956 = vunpack.c.h.b16 %v679
    %v1957 = vunpack.c.l.b16 %v680
    %v1958 = vunpack.c.h.b16 %v680
    %v1959 = vunpack.c.l.b16 %v681
    %v1960 = vunpack.c.h.b16 %v681
    %v1961 = vunpack.c.l.b16 %v682
    %v1962 = vunpack.c.h.b16 %v682
    %v1963 = vunpack.c.l.b16 %v683
    %v1964 = vunpack.c.h.b16 %v683
    %v1965 = vunpack.c.l.b16 %v684
    %v1966 = vunpack.c.h.b16 %v684
    %v1967 = vunpack.c.l.b16 %v685
    %v1968 = vunpack.c.l.b16 %v686
    %v1969 = vunpack.c.h.b16 %v686
    %v1970 = vunpack.c.l.b16 %v687
    %v1971 = vunpack.c.h.b16 %v687
    %v1972 = vunpack.c.l.b16 %v688
    %v1973 = vunpack.c.h.b16 %v688
    %v1974 = vunpack.c.l.b16 %v689
    %v1975 = vunpack.c.h.b16 %v689
    %v1976 = vunpack.c.l.b16 %v690
    %v1977 = vunpack.c.h.b16 %v690
    %v1978 = vunpack.c.l.b16 %v691
    %v1979 = vunpack.c.h.b16 %v691
    %v1980 = vunpack.c.l.b16 %v692
    %v1981 = vunpack.c.h.b16 %v692
    %v1982 = vunpack.c.l.b16 %v693
    %v1983 = vunpack.c.h.b16 %v693
    %v1984 = vunpack.c.l.b16 %v694
    %v1985 = vunpack.c.h.b16 %v694
    %v1986 = vunpack.c.l.b16 %v695
    %v1987 = vunpack.c.h.b16 %v695
    %v1988 = vunpack.c.l.b16 %v696
    %v1989 = vunpack.c.h.b16 %v696
    %v1990 = vunpack.c.l.b16 %v697
    %v1991 = vunpack.c.h.b16 %v697
    %v1992 = vunpack.c.l.b16 %v698
    %v1993 = vunpack.c.l.b16 %v699
    %v1994 = vunpack.c.h.b16 %v699
    %v1995 = vunpack.c.l.b16 %v700
    %v1996 = vunpack.c.h.b16 %v700
    %v1997 = vunpack.c.l.b16 %v701
    %v1998 = vunpack.c.h.b16 %v701
    %v1999 = vunpack.c.l.b16 %v702
    %v2000 = vunpack.c.h.b16 %v702
    %v2001 = vunpack.c.l.b16 %v703
    %v2002 = vunpack.c.h.b16 %v703
    %v2003 = vunpack.c.l.b16 %v704
    %v2004 = vunpack.c.h.b16 %v704
    %v2005 = vunpack.c.l.b16 %v705
    %v2006 = vunpack.c.h.b16 %v705
    %v2007 = vunpack.c.l.b16 %v706
    %v2008 = vunpack.c.h.b16 %v706
    %v2009 = vunpack.c.l.b16 %v707
    %v2010 = vunpack.c.h.b16 %v707
    %v2011 = vunpack.c.l.b16 %v708
    %v2012 = vunpack.c.h.b16 %v708
    %v2013 = vunpack.c.l.b16 %v709
    %v2014 = vunpack.c.h.b16 %v709
    %v2015 = vunpack.c.l.b16 %v710
    %v2016 = vunpack.c.h.b16 %v710
    %v2017 = vunpack.c.l.b16 %v711
    %v2018 = vunpack.c.l.b16 %v712
    %v2019 = vunpack.c.h.b16 %v712
    %v2020 = vunpack.c.l.b16 %v713
    %v2021 = vunpack.c.h.b16 %v713
    %v2022 = vunpack.c.l.b16 %v714
    %v2023 = vunpack.c.h.b16 %v714
    %v2024 = vunpack.c.l.b16 %v715
    %v2025 = vunpack.c.h.b16 %v715
    %v2026 = vunpack.c.l.b16 %v716
    %v2027 = vunpack.c.h.b16 %v716
    %v2028 = vunpack.c.l.b16 %v717
    %v2029 = vunpack.c.h.b16 %v717
    %v2030 = vunpack.c.l.b16 %v718
    %v2031 = vunpack.c.h.b16 %v718
    %v2032 = vunpack.c.l.b16 %v719
    %v2033 = vunpack.c.h.b16 %v719
    %v2034 = vunpack.c.l.b16 %v720
    %v2035 = vunpack.c.h.b16 %v720
    %v2036 = vunpack.c.l.b16 %v721
    %v2037 = vunpack.c.h.b16 %v721
    %v2038 = vunpack.c.l.b16 %v722
    %v2039 = vunpack.c.h.b16 %v722
    %v2040 = vunpack.c.l.b16 %v723
    %v2041 = vunpack.c.h.b16 %v723
    %v2042 = vunpack.c.l.b16 %v724
    %v2043 = vunpack.c.l.b16 %v725
    %v2044 = vunpack.c.h.b16 %v725
    %v2045 = vunpack.c.l.b16 %v726
    %v2046 = vunpack.c.h.b16 %v726
    %v2047 = vunpack.c.l.b16 %v727
    %v2048 = vunpack.c.h.b16 %v727
    %v2049 = vunpack.c.l.b16 %v728
    %v2050 = vunpack.c.h.b16 %v728
    %v2051 = vunpack.c.l.b16 %v729
    %v2052 = vunpack.c.h.b16 %v729
    %v2053 = vunpack.c.l.b16 %v730
    %v2054 = vunpack.c.h.b16 %v730
    %v2055 = vunpack.c.l.b16 %v731
    %v2056 = vunpack.c.h.b16 %v731
    %v2057 = vunpack.c.l.b16 %v732
    %v2058 = vunpack.c.h.b16 %v732
    %v2059 = vunpack.c.l.b16 %v733
    %v2060 = vunpack.c.h.b16 %v733
    %v2061 = vunpack.c.l.b16 %v734
    %v2062 = vunpack.c.h.b16 %v734
    %v2063 = vunpack.c.l.b16 %v735
    %v2064 = vunpack.c.h.b16 %v735
    %v2065 = vunpack.c.l.b16 %v736
    %v2066 = vunpack.c.h.b16 %v736
    %v2067 = vunpack.c.l.b16 %v737
    %v2068 = vunpack.c.l.b16 %v738
    %v2069 = vunpack.c.h.b16 %v738
    %v2070 = vunpack.c.l.b16 %v739
    %v2071 = vunpack.c.h.b16 %v739
    %v2072 = vunpack.c.l.b16 %v740
    %v2073 = vunpack.c.h.b16 %v740
    %v2074 = vunpack.c.l.b16 %v741
    %v2075 = vunpack.c.h.b16 %v741
    %v2076 = vunpack.c.l.b16 %v742
    %v2077 = vunpack.c.h.b16 %v742
    %v2078 = vunpack.c.l.b16 %v743
    %v2079 = vunpack.c.h.b16 %v743
    %v2080 = vunpack.c.l.b16 %v744
    %v2081 = vunpack.c.h.b16 %v744
    %v2082 = vunpack.c.l.b16 %v745
    %v2083 = vunpack.c.h.b16 %v745
    %v2084 = vunpack.c.l.b16 %v746
    %v2085 = vunpack.c.h.b16 %v746
    %v2086 = vunpack.c.l.b16 %v747
    %v2087 = vunpack.c.h.b16 %v747
    %v2088 = vunpack.c.l.b16 %v748
    %v2089 = vunpack.c.h.b16 %v748
    %v2090 = vunpack.c.l.b16 %v749
    %v2091 = vunpack.c.h.b16 %v749
    %v2092 = vunpack.c.l.b16 %v750
    %v2093 = vunpack.c.l.b16 %v751
    %v2094 = vunpack.c.h.b16 %v751
    %v2095 = vunpack.c.l.b16 %v752
    %v2096 = vunpack.c.h.b16 %v752
    %v2097 = vunpack.c.l.b16 %v753
    %v2098 = vunpack.c.h.b16 %v753
    %v2099 = vunpack.c.l.b16 %v754
    %v2100 = vunpack.c.h.b16 %v754
    %v2101 = vunpack.c.l.b16 %v755
    %v2102 = vunpack.c.h.b16 %v755
    %v2103 = vunpack.c.l.b16 %v756
    %v2104 = vunpack.c.h.b16 %v756
    %v2105 = vunpack.c.l.b16 %v757
    %v2106 = vunpack.c.h.b16 %v757
    %v2107 = vunpack.c.l.b16 %v758
    %v2108 = vunpack.c.h.b16 %v758
    %v2109 = vunpack.c.l.b16 %v759
    %v2110 = vunpack.c.h.b16 %v759
    %v2111 = vunpack.c.l.b16 %v760
    %v2112 = vunpack.c.h.b16 %v760
    %v2113 = vunpack.c.l.b16 %v761
    %v2114 = vunpack.c.h.b16 %v761
    %v2115 = vunpack.c.l.b16 %v762
    %v2116 = vunpack.c.h.b16 %v762
    %v2117 = vunpack.c.l.b16 %v763
    %v2118 = vunpack.c.l.b16 %v764
    %v2119 = vunpack.c.h.b16 %v764
    %v2120 = vunpack.c.l.b16 %v765
    %v2121 = vunpack.c.h.b16 %v765
    %v2122 = vunpack.c.l.b16 %v766
    %v2123 = vunpack.c.h.b16 %v766
    %v2124 = vunpack.c.l.b16 %v767
    %v2125 = vunpack.c.h.b16 %v767
    %v2126 = vunpack.c.l.b16 %v768
    %v2127 = vunpack.c.h.b16 %v768
    %v2128 = vunpack.c.l.b16 %v769
    %v2129 = vunpack.c.h.b16 %v769
    %v2130 = vunpack.c.l.b16 %v770
    %v2131 = vunpack.c.h.b16 %v770
    %v2132 = vunpack.c.l.b16 %v771
    %v2133 = vunpack.c.h.b16 %v771
    %v2134 = vunpack.c.l.b16 %v772
    %v2135 = vunpack.c.h.b16 %v772
    %v2136 = vunpack.c.l.b16 %v773
    %v2137 = vunpack.c.h.b16 %v773
    %v2138 = vunpack.c.l.b16 %v774
    %v2139 = vunpack.c.h.b16 %v774
    %v2140 = vunpack.c.l.b16 %v775
    %v2141 = vunpack.c.h.b16 %v775
    %v2142 = vunpack.c.l.b16 %v776
    %v2143 = vunpack.c.l.b16 %v777
    %v2144 = vunpack.c.h.b16 %v777
    %v2145 = vunpack.c.l.b16 %v778
    %v2146 = vunpack.c.h.b16 %v778
    %v2147 = vunpack.c.l.b16 %v779
    %v2148 = vunpack.c.h.b16 %v779
    %v2149 = vunpack.c.l.b16 %v780
    %v2150 = vunpack.c.h.b16 %v780
    %v2151 = vunpack.c.l.b16 %v781
    %v2152 = vunpack.c.h.b16 %v781
    %v2153 = vunpack.c.l.b16 %v782
    %v2154 = vunpack.c.h.b16 %v782
    %v2155 = vunpack.c.l.b16 %v783
    %v2156 = vunpack.c.h.b16 %v783
    %v2157 = vunpack.c.l.b16 %v784
    %v2158 = vunpack.c.h.b16 %v784
    %v2159 = vunpack.c.l.b16 %v785
    %v2160 = vunpack.c.h.b16 %v785
    %v2161 = vunpack.c.l.b16 %v786
    %v2162 = vunpack.c.h.b16 %v786
    %v2163 = vunpack.c.l.b16 %v787
    %v2164 = vunpack.c.h.b16 %v787
    %v2165 = vunpack.c.l.b16 %v788
    %v2166 = vunpack.c.h.b16 %v788
    %v2167 = vunpack.c.l.b16 %v789
    %v2168 = vunpack.c.l.b16 %v790
    %v2169 = vunpack.c.h.b16 %v790
    %v2170 = vunpack.c.l.b16 %v791
    %v2171 = vunpack.c.h.b16 %v791
    %v2172 = vunpack.c.l.b16 %v792
    %v2173 = vunpack.c.h.b16 %v792
    %v2174 = vunpack.c.l.b16 %v793
    %v2175 = vunpack.c.h.b16 %v793
    %v2176 = vunpack.c.l.b16 %v794
    %v2177 = vunpack.c.h.b16 %v794
    %v2178 = vunpack.c.l.b16 %v795
    %v2179 = vunpack.c.h.b16 %v795
    %v2180 = vunpack.c.l.b16 %v796
    %v2181 = vunpack.c.h.b16 %v796
    %v2182 = vunpack.c.l.b16 %v797
    %v2183 = vunpack.c.h.b16 %v797
    %v2184 = vunpack.c.l.b16 %v798
    %v2185 = vunpack.c.h.b16 %v798
    %v2186 = vunpack.c.l.b16 %v799
    %v2187 = vunpack.c.h.b16 %v799
    %v2188 = vunpack.c.l.b16 %v800
    %v2189 = vunpack.c.h.b16 %v800
    %v2190 = vunpack.c.l.b16 %v801
    %v2191 = vunpack.c.h.b16 %v801
    %v2192 = vunpack.c.l.b16 %v802
    %v2193 = vunpack.c.l.b16 %v803
    %v2194 = vunpack.c.h.b16 %v803
    %v2195 = vunpack.c.l.b16 %v804
    %v2196 = vunpack.c.h.b16 %v804
    %v2197 = vunpack.c.l.b16 %v805
    %v2198 = vunpack.c.h.b16 %v805
    %v2199 = vunpack.c.l.b16 %v806
    %v2200 = vunpack.c.h.b16 %v806
    %v2201 = vunpack.c.l.b16 %v807
    %v2202 = vunpack.c.h.b16 %v807
    %v2203 = vunpack.c.l.b16 %v808
    %v2204 = vunpack.c.h.b16 %v808
    %v2205 = vunpack.c.l.b16 %v809
    %v2206 = vunpack.c.h.b16 %v809
    %v2207 = vunpack.c.l.b16 %v810
    %v2208 = vunpack.c.h.b16 %v810
    %v2209 = vunpack.c.l.b16 %v811
    %v2210 = vunpack.c.h.b16 %v811
    %v2211 = vunpack.c.l.b16 %v812
    %v2212 = vunpack.c.h.b16 %v812
    %v2213 = vunpack.c.l.b16 %v813
    %v2214 = vunpack.c.h.b16 %v813
    %v2215 = vunpack.c.l.b16 %v814
    %v2216 = vunpack.c.h.b16 %v814
    %v2217 = vunpack.c.l.b16 %v815
    %v2218 = vunpack.c.l.b16 %v816
    %v2219 = vunpack.c.h.b16 %v816
    %v2220 = vunpack.c.l.b16 %v817
    %v2221 = vunpack.c.h.b16 %v817
    %v2222 = vunpack.c.l.b16 %v818
    %v2223 = vunpack.c.h.b16 %v818
    %v2224 = vunpack.c.l.b16 %v819
    %v2225 = vunpack.c.h.b16 %v819
    %v2226 = vunpack.c.l.b16 %v820
    %v2227 = vunpack.c.h.b16 %v820
    %v2228 = vunpack.c.l.b16 %v821
    %v2229 = vunpack.c.h.b16 %v821
    %v2230 = vunpack.c.l.b16 %v822
    %v2231 = vunpack.c.h.b16 %v822
    %v2232 = vunpack.c.l.b16 %v823
    %v2233 = vunpack.c.h.b16 %v823
    %v2234 = vunpack.c.l.b16 %v824
    %v2235 = vunpack.c.h.b16 %v824
    %v2236 = vunpack.c.l.b16 %v825
    %v2237 = vunpack.c.h.b16 %v825
    %v2238 = vunpack.c.l.b16 %v826
    %v2239 = vunpack.c.h.b16 %v826
    %v2240 = vunpack.c.l.b16 %v827
    %v2241 = vunpack.c.h.b16 %v827
    %v2242 = vunpack.c.l.b16 %v828
    %v2243 = vunpack.c.l.b16 %v829
    %v2244 = vunpack.c.h.b16 %v829
    %v2245 = vunpack.c.l.b16 %v830
    %v2246 = vunpack.c.h.b16 %v830
    %v2247 = vunpack.c.l.b16 %v831
    %v2248 = vunpack.c.h.b16 %v831
    %v2249 = vunpack.c.l.b16 %v832
    %v2250 = vunpack.c.h.b16 %v832
    %v2251 = vunpack.c.l.b16 %v833
    %v2252 = vunpack.c.h.b16 %v833
    %v2253 = vunpack.c.l.b16 %v834
    %v2254 = vunpack.c.h.b16 %v834
    %v2255 = vunpack.c.l.b16 %v835
    %v2256 = vunpack.c.h.b16 %v835
    %v2257 = vunpack.c.l.b16 %v836
    %v2258 = vunpack.c.h.b16 %v836
    %v2259 = vunpack.c.l.b16 %v837
    %v2260 = vunpack.c.h.b16 %v837
    %v2261 = vunpack.c.l.b16 %v838
    %v2262 = vunpack.c.h.b16 %v838
    %v2263 = vunpack.c.l.b16 %v839
    %v2264 = vunpack.c.h.b16 %v839
    %v2265 = vunpack.c.l.b16 %v840
    %v2266 = vunpack.c.h.b16 %v840
    %v2267 = vunpack.c.l.b16 %v841
    %v2268 = vunpack.c.l.b16 %v842
    %v2269 = vunpack.c.h.b16 %v842
    %v2270 = vunpack.c.l.b16 %v843
    %v2271 = vunpack.c.h.b16 %v843
    %v2272 = vunpack.c.l.b16 %v844
    %v2273 = vunpack.c.h.b16 %v844
    %v2274 = vunpack.c.l.b16 %v845
    %v2275 = vunpack.c.h.b16 %v845
    %v2276 = vunpack.c.l.b16 %v846
    %v2277 = vunpack.c.h.b16 %v846
    %v2278 = vunpack.c.l.b16 %v847
    %v2279 = vunpack.c.h.b16 %v847
    %v2280 = vunpack.c.l.b16 %v848
    %v2281 = vunpack.c.h.b16 %v848
    %v2282 = vunpack.c.l.b16 %v849
    %v2283 = vunpack.c.h.b16 %v849
    %v2284 = vunpack.c.l.b16 %v850
    %v2285 = vunpack.c.h.b16 %v850
    %v2286 = vunpack.c.l.b16 %v851
    %v2287 = vunpack.c.h.b16 %v851
    %v2288 = vunpack.c.l.b16 %v852
    %v2289 = vunpack.c.h.b16 %v852
    %v2290 = vunpack.c.l.b16 %v853
    %v2291 = vunpack.c.h.b16 %v853
    %v2292 = vunpack.c.l.b16 %v854
    %v2293 = vunpack.c.l.b16 %v855
    %v2294 = vunpack.c.h.b16 %v855
    %v2295 = vunpack.c.l.b16 %v856
    %v2296 = vunpack.c.h.b16 %v856
    %v2297 = vunpack.c.l.b16 %v857
    %v2298 = vunpack.c.h.b16 %v857
    %v2299 = vunpack.c.l.b16 %v858
    %v2300 = vunpack.c.h.b16 %v858
    %v2301 = vunpack.c.l.b16 %v859
    %v2302 = vunpack.c.h.b16 %v859
    %v2303 = vunpack.c.l.b16 %v860
    %v2304 = vunpack.c.h.b16 %v860
    %v2305 = vunpack.c.l.b16 %v861
    %v2306 = vunpack.c.h.b16 %v861
    %v2307 = vunpack.c.l.b16 %v862
    %v2308 = vunpack.c.h.b16 %v862
    %v2309 = vunpack.c.l.b16 %v863
    %v2310 = vunpack.c.h.b16 %v863
    %v2311 = vunpack.c.l.b16 %v864
    %v2312 = vunpack.c.h.b16 %v864
    %v2313 = vunpack.c.l.b16 %v865
    %v2314 = vunpack.c.h.b16 %v865
    %v2315 = vunpack.c.l.b16 %v866
    %v2316 = vunpack.c.h.b16 %v866
    %v2317 = vunpack.c.l.b16 %v867
    %v2318 = vunpack.c.l.b16 %v868
    %v2319 = vunpack.c.h.b16 %v868
    %v2320 = vunpack.c.l.b16 %v869
    %v2321 = vunpack.c.h.b16 %v869
    %v2322 = vunpack.c.l.b16 %v870
    %v2323 = vunpack.c.h.b16 %v870
    %v2324 = vunpack.c.l.b16 %v871
    %v2325 = vunpack.c.h.b16 %v871
    %v2326 = vunpack.c.l.b16 %v872
    %v2327 = vunpack.c.h.b16 %v872
    %v2328 = vunpack.c.l.b16 %v873
    %v2329 = vunpack.c.h.b16 %v873
    %v2330 = vunpack.c.l.b16 %v874
    %v2331 = vunpack.c.h.b16 %v874
    %v2332 = vunpack.c.l.b16 %v875
    %v2333 = vunpack.c.h.b16 %v875
    %v2334 = vunpack.c.l.b16 %v876
    %v2335 = vunpack.c.h.b16 %v876
    %v2336 = vunpack.c.l.b16 %v877
    %v2337 = vunpack.c.h.b16 %v877
    %v2338 = vunpack.c.l.b16 %v878
    %v2339 = vunpack.c.h.b16 %v878
    %v2340 = vunpack.c.l.b16 %v879
    %v2341 = vunpack.c.h.b16 %v879
    %v2342 = vunpack.c.l.b16 %v880
    %v2343 = vunpack.c.l.b16 %v881
    %v2344 = vunpack.c.h.b16 %v881
    %v2345 = vunpack.c.l.b16 %v882
    %v2346 = vunpack.c.h.b16 %v882
    %v2347 = vunpack.c.l.b16 %v883
    %v2348 = vunpack.c.h.b16 %v883
    %v2349 = vunpack.c.l.b16 %v884
    %v2350 = vunpack.c.h.b16 %v884
    %v2351 = vunpack.c.l.b16 %v885
    %v2352 = vunpack.c.h.b16 %v885
    %v2353 = vunpack.c.l.b16 %v886
    %v2354 = vunpack.c.h.b16 %v886
    %v2355 = vunpack.c.l.b16 %v887
    %v2356 = vunpack.c.h.b16 %v887
    %v2357 = vunpack.c.l.b16 %v888
    %v2358 = vunpack.c.h.b16 %v888
    %v2359 = vunpack.c.l.b16 %v889
    %v2360 = vunpack.c.h.b16 %v889
    %v2361 = vunpack.c.l.b16 %v890
    %v2362 = vunpack.c.h.b16 %v890
    %v2363 = vunpack.c.l.b16 %v891
    %v2364 = vunpack.c.h.b16 %v891
    %v2365 = vunpack.c.l.b16 %v892
    %v2366 = vunpack.c.h.b16 %v892
    %v2367 = vunpack.c.l.b16 %v893
    %v2368 = vunpack.c.l.b16 %v894
    %v2369 = vunpack.c.h.b16 %v894
    %v2370 = vunpack.c.l.b16 %v895
    %v2371 = vunpack.c.h.b16 %v895
    %v2372 = vunpack.c.l.b16 %v896
    %v2373 = vunpack.c.h.b16 %v896
    %v2374 = vunpack.c.l.b16 %v897
    %v2375 = vunpack.c.h.b16 %v897
    %v2376 = vunpack.c.l.b16 %v898
    %v2377 = vunpack.c.h.b16 %v898
    %v2378 = vunpack.c.l.b16 %v899
    %v2379 = vunpack.c.h.b16 %v899
    %v2380 = vunpack.c.l.b16 %v900
    %v2381 = vunpack.c.h.b16 %v900
    %v2382 = vunpack.c.l.b16 %v901
    %v2383 = vunpack.c.h.b16 %v901
    %v2384 = vunpack.c.l.b16 %v902
    %v2385 = vunpack.c.h.b16 %v902
    %v2386 = vunpack.c.l.b16 %v903
    %v2387 = vunpack.c.h.b16 %v903
    %v2388 = vunpack.c.l.b16 %v904
    %v2389 = vunpack.c.h.b16 %v904
    %v2390 = vunpack.c.l.b16 %v905
    %v2391 = vunpack.c.h.b16 %v905
    %v2392 = vunpack.c.l.b16 %v906
    %v2393 = vunpack.c.l.b16 %v907
    %v2394 = vunpack.c.h.b16 %v907
    %v2395 = vunpack.c.l.b16 %v908
    %v2396 = vunpack.c.h.b16 %v908
    %v2397 = vunpack.c.l.b16 %v909
    %v2398 = vunpack.c.h.b16 %v909
    %v2399 = vunpack.c.l.b16 %v910
    %v2400 = vunpack.c.h.b16 %v910
    %v2401 = vunpack.c.l.b16 %v911
    %v2402 = vunpack.c.h.b16 %v911
    %v2403 = vunpack.c.l.b16 %v912
    %v2404 = vunpack.c.h.b16 %v912
    %v2405 = vunpack.c.l.b16 %v913
    %v2406 = vunpack.c.h.b16 %v913
    %v2407 = vunpack.c.l.b16 %v914
    %v2408 = vunpack.c.h.b16 %v914
    %v2409 = vunpack.c.l.b16 %v915
    %v2410 = vunpack.c.h.b16 %v915
    %v2411 = vunpack.c.l.b16 %v916
    %v2412 = vunpack.c.h.b16 %v916
    %v2413 = vunpack.c.l.b16 %v917
    %v2414 = vunpack.c.h.b16 %v917
    %v2415 = vunpack.c.l.b16 %v918
    %v2416 = vunpack.c.h.b16 %v918
    %v2417 = vunpack.c.l.b16 %v919
    %v2418 = vunpack.c.l.b16 %v920
    %v2419 = vunpack.c.h.b16 %v920
    %v2420 = vunpack.c.l.b16 %v921
    %v2421 = vunpack.c.h.b16 %v921
    %v2422 = vunpack.c.l.b16 %v922
    %v2423 = vunpack.c.h.b16 %v922
    %v2424 = vunpack.c.l.b16 %v923
    %v2425 = vunpack.c.h.b16 %v923
    %v2426 = vunpack.c.l.b16 %v924
    %v2427 = vunpack.c.h.b16 %v924
    %v2428 = vunpack.c.l.b16 %v925
    %v2429 = vunpack.c.h.b16 %v925
    %v2430 = vunpack.c.l.b16 %v926
    %v2431 = vunpack.c.h.b16 %v926
    %v2432 = vunpack.c.l.b16 %v927
    %v2433 = vunpack.c.h.b16 %v927
    %v2434 = vunpack.c.l.b16 %v928
    %v2435 = vunpack.c.h.b16 %v928
    %v2436 = vunpack.c.l.b16 %v929
    %v2437 = vunpack.c.h.b16 %v929
    %v2438 = vunpack.c.l.b16 %v930
    %v2439 = vunpack.c.h.b16 %v930
    %v2440 = vunpack.c.l.b16 %v931
    %v2441 = vunpack.c.h.b16 %v931
    %v2442 = vunpack.c.l.b16 %v932
    %v2443 = vunpack.c.l.b16 %v933
    %v2444 = vunpack.c.h.b16 %v933
    %v2445 = vunpack.c.l.b16 %v934
    %v2446 = vunpack.c.h.b16 %v934
    %v2447 = vunpack.c.l.b16 %v935
    %v2448 = vunpack.c.h.b16 %v935
    %v2449 = vunpack.c.l.b16 %v936
    %v2450 = vunpack.c.h.b16 %v936
    %v2451 = vunpack.c.l.b16 %v937
    %v2452 = vunpack.c.h.b16 %v937
    %v2453 = vunpack.c.l.b16 %v938
    %v2454 = vunpack.c.h.b16 %v938
    %v2455 = vunpack.c.l.b16 %v939
    %v2456 = vunpack.c.h.b16 %v939
    %v2457 = vunpack.c.l.b16 %v940
    %v2458 = vunpack.c.h.b16 %v940
    %v2459 = vunpack.c.l.b16 %v941
    %v2460 = vunpack.c.h.b16 %v941
    %v2461 = vunpack.c.l.b16 %v942
    %v2462 = vunpack.c.h.b16 %v942
    %v2463 = vunpack.c.l.b16 %v943
    %v2464 = vunpack.c.h.b16 %v943
    %v2465 = vunpack.c.l.b16 %v944
    %v2466 = vunpack.c.h.b16 %v944
    %v2467 = vunpack.c.l.b16 %v945
    %v2468 = vunpack.c.l.b16 %v946
    %v2469 = vunpack.c.h.b16 %v946
    %v2470 = vunpack.c.l.b16 %v947
    %v2471 = vunpack.c.h.b16 %v947
    %v2472 = vunpack.c.l.b16 %v948
    %v2473 = vunpack.c.h.b16 %v948
    %v2474 = vunpack.c.l.b16 %v949
    %v2475 = vunpack.c.h.b16 %v949
    %v2476 = vunpack.c.l.b16 %v950
    %v2477 = vunpack.c.h.b16 %v950
    %v2478 = vunpack.c.l.b16 %v951
    %v2479 = vunpack.c.h.b16 %v951
    %v2480 = vunpack.c.l.b16 %v952
    %v2481 = vunpack.c.h.b16 %v952
    %v2482 = vunpack.c.l.b16 %v953
    %v2483 = vunpack.c.h.b16 %v953
    %v2484 = vunpack.c.l.b16 %v954
    %v2485 = vunpack.c.h.b16 %v954
    %v2486 = vunpack.c.l.b16 %v955
    %v2487 = vunpack.c.h.b16 %v955
    %v2488 = vunpack.c.l.b16 %v956
    %v2489 = vunpack.c.h.b16 %v956
    %v2490 = vunpack.c.l.b16 %v957
    %v2491 = vunpack.c.h.b16 %v957
    %v2492 = vunpack.c.l.b16 %v958
    %v2493 = vunpack.c.l.b16 %v959
    %v2494 = vunpack.c.h.b16 %v959
    %v2495 = vunpack.c.l.b16 %v960
    %v2496 = vunpack.c.h.b16 %v960
    %v2497 = vunpack.c.l.b16 %v961
    %v2498 = vunpack.c.h.b16 %v961
    %v2499 = vunpack.c.l.b16 %v962
    %v2500 = vunpack.c.h.b16 %v962
    %v2501 = vunpack.c.l.b16 %v963
    %v2502 = vunpack.c.h.b16 %v963
    %v2503 = vunpack.c.l.b16 %v964
    %v2504 = vunpack.c.h.b16 %v964
    %v2505 = vunpack.c.l.b16 %v965
    %v2506 = vunpack.c.h.b16 %v965
    %v2507 = vunpack.c.l.b16 %v966
    %v2508 = vunpack.c.h.b16 %v966
    %v2509 = vunpack.c.l.b16 %v967
    %v2510 = vunpack.c.h.b16 %v967
    %v2511 = vunpack.c.l.b16 %v968
    %v2512 = vunpack.c.h.b16 %v968
    %v2513 = vunpack.c.l.b16 %v969
    %v2514 = vunpack.c.h.b16 %v969
    %v2515 = vunpack.c.l.b16 %v970
    %v2516 = vunpack.c.h.b16 %v970
    %v2517 = vunpack.c.l.b16 %v971
    %v2518 = vunpack.c.l.b16 %v972
    %v2519 = vunpack.c.h.b16 %v972
    %v2520 = vunpack.c.l.b16 %v973
    %v2521 = vunpack.c.h.b16 %v973
    %v2522 = vunpack.c.l.b16 %v974
    %v2523 = vunpack.c.h.b16 %v974
    %v2524 = vunpack.c.l.b16 %v975
    %v2525 = vunpack.c.h.b16 %v975
    %v2526 = vunpack.c.l.b16 %v976
    %v2527 = vunpack.c.h.b16 %v976
    %v2528 = vunpack.c.l.b16 %v977
    %v2529 = vunpack.c.h.b16 %v977
    %v2530 = vunpack.c.l.b16 %v978
    %v2531 = vunpack.c.h.b16 %v978
    %v2532 = vunpack.c.l.b16 %v979
    %v2533 = vunpack.c.h.b16 %v979
    %v2534 = vunpack.c.l.b16 %v980
    %v2535 = vunpack.c.h.b16 %v980
    %v2536 = vunpack.c.l.b16 %v981
    %v2537 = vunpack.c.h.b16 %v981
    %v2538 = vunpack.c.l.b16 %v982
    %v2539 = vunpack.c.h.b16 %v982
    %v2540 = vunpack.c.l.b16 %v983
    %v2541 = vunpack.c.h.b16 %v983
    %v2542 = vunpack.c.l.b16 %v984
    %v2543 = vpack.c.b16 %v1543, %v1518
    %v2544 = vpack.c.b16 %v1544, %v1519
    %v2545 = vpack.c.b16 %v1545, %v1520
    %v2546 = vpack.c.b16 %v1546, %v1521
    %v2547 = vpack.c.b16 %v1547, %v1522
    %v2548 = vpack.c.b16 %v1548, %v1523
    %v2549 = vpack.c.b16 %v1549, %v1524
    %v2550 = vpack.c.b16 %v1550, %v1525
    %v2551 = vpack.c.b16 %v1551, %v1526
    %v2552 = vpack.c.b16 %v1552, %v1527
    %v2553 = vpack.c.b16 %v1553, %v1528
    %v2554 = vpack.c.b16 %v1554, %v1529
    %v2555 = vpack.c.b16 %v1555, %v1530
    %v2556 = vpack.c.b16 %v1556, %v1531
    %v2557 = vpack.c.b16 %v1557, %v1532
    %v2558 = vpack.c.b16 %v1558, %v1533
    %v2559 = vpack.c.b16 %v1559, %v1534
    %v2560 = vpack.c.b16 %v1560, %v1535
    %v2561 = vpack.c.b16 %v1561, %v1536
    %v2562 = vpack.c.b16 %v1562, %v1537
    %v2563 = vpack.c.b16 %v1563, %v1538
    %v2564 = vpack.c.b16 %v1564, %v1539
    %v2565 = vpack.c.b16 %v1565, %v1540
    %v2566 = vpack.c.b16 %v1566, %v1541
    %v2567 = vpack.c.b16 %v1567, %v1542
    %v2568 = vpack.c.b16 %v1593, %v1568
    %v2569 = vpack.c.b16 %v1594, %v1569
    %v2570 = vpack.c.b16 %v1595, %v1570
    %v2571 = vpack.c.b16 %v1596, %v1571
    %v2572 = vpack.c.b16 %v1597, %v1572
    %v2573 = vpack.c.b16 %v1598, %v1573
    %v2574 = vpack.c.b16 %v1599, %v1574
    %v2575 = vpack.c.b16 %v1600, %v1575
    %v2576 = vpack.c.b16 %v1601, %v1576
    %v2577 = vpack.c.b16 %v1602, %v1577
    %v2578 = vpack.c.b16 %v1603, %v1578
    %v2579 = vpack.c.b16 %v1604, %v1579
    %v2580 = vpack.c.b16 %v1605, %v1580
    %v2581 = vpack.c.b16 %v1606, %v1581
    %v2582 = vpack.c.b16 %v1607, %v1582
    %v2583 = vpack.c.b16 %v1608, %v1583
    %v2584 = vpack.c.b16 %v1609, %v1584
    %v2585 = vpack.c.b16 %v1610, %v1585
    %v2586 = vpack.c.b16 %v1611, %v1586
    %v2587 = vpack.c.b16 %v1612, %v1587
    %v2588 = vpack.c.b16 %v1613, %v1588
    %v2589 = vpack.c.b16 %v1614, %v1589
    %v2590 = vpack.c.b16 %v1615, %v1590
    %v2591 = vpack.c.b16 %v1616, %v1591
    %v2592 = vpack.c.b16 %v1617, %v1592
    %v2593 = vpack.c.b16 %v1643, %v1618
    %v2594 = vpack.c.b16 %v1644, %v1619
    %v2595 = vpack.c.b16 %v1645, %v1620
    %v2596 = vpack.c.b16 %v1646, %v1621
    %v2597 = vpack.c.b16 %v1647, %v1622
    %v2598 = vpack.c.b16 %v1648, %v1623
    %v2599 = vpack.c.b16 %v1649, %v1624
    %v2600 = vpack.c.b16 %v1650, %v1625
    %v2601 = vpack.c.b16 %v1651, %v1626
    %v2602 = vpack.c.b16 %v1652, %v1627
    %v2603 = vpack.c.b16 %v1653, %v1628
    %v2604 = vpack.c.b16 %v1654, %v1629
    %v2605 = vpack.c.b16 %v1655, %v1630
    %v2606 = vpack.c.b16 %v1656, %v1631
    %v2607 = vpack.c.b16 %v1657, %v1632
    %v2608 = vpack.c.b16 %v1658, %v1633
    %v2609 = vpack.c.b16 %v1659, %v1634
    %v2610 = vpack.c.b16 %v1660, %v1635
    %v2611 = vpack.c.b16 %v1661, %v1636
    %v2612 = vpack.c.b16 %v1662, %v1637
    %v2613 = vpack.c.b16 %v1663, %v1638
    %v2614 = vpack.c.b16 %v1664, %v1639
    %v2615 = vpack.c.b16 %v1665, %v1640
    %v2616 = vpack.c.b16 %v1666, %v1641
    %v2617 = vpack.c.b16 %v1667, %v1642
    %v2618 = vpack.c.b16 %v1693, %v1668
    %v2619 = vpack.c.b16 %v1694, %v1669
    %v2620 = vpack.c.b16 %v1695, %v1670
    %v2621 = vpack.c.b16 %v1696, %v1671
    %v2622 = vpack.c.b16 %v1697, %v1672
    %v2623 = vpack.c.b16 %v1698, %v1673
    %v2624 = vpack.c.b16 %v1699, %v1674
    %v2625 = vpack.c.b16 %v1700, %v1675
    %v2626 = vpack.c.b16 %v1701, %v1676
    %v2627 = vpack.c.b16 %v1702, %v1677
    %v2628 = vpack.c.b16 %v1703, %v1678
    %v2629 = vpack.c.b16 %v1704, %v1679
    %v2630 = vpack.c.b16 %v1705, %v1680
    %v2631 = vpack.c.b16 %v1706, %v1681
    %v2632 = vpack.c.b16 %v1707, %v1682
    %v2633 = vpack.c.b16 %v1708, %v1683
    %v2634 = vpack.c.b16 %v1709, %v1684
    %v2635 = vpack.c.b16 %v1710, %v1685
    %v2636 = vpack.c.b16 %v1711, %v1686
    %v2637 = vpack.c.b16 %v1712, %v1687
    %v2638 = vpack.c.b16 %v1713, %v1688
    %v2639 = vpack.c.b16 %v1714, %v1689
    %v2640 = vpack.c.b16 %v1715, %v1690
    %v2641 = vpack.c.b16 %v1716, %v1691
    %v2642 = vpack.c.b16 %v1717, %v1692
    %v2643 = vpack.c.b16 %v1743, %v1718
    %v2644 = vpack.c.b16 %v1744, %v1719
    %v2645 = vpack.c.b16 %v1745, %v1720
    %v2646 = vpack.c.b16 %v1746, %v1721
    %v2647 = vpack.c.b16 %v1747, %v1722
    %v2648 = vpack.c.b16 %v1748, %v1723
    %v2649 = vpack.c.b16 %v1749, %v1724
    %v2650 = vpack.c.b16 %v1750, %v1725
    %v2651 = vpack.c.b16 %v1751, %v1726
    %v2652 = vpack.c.b16 %v1752, %v1727
    %v2653 = vpack.c.b16 %v1753, %v1728
    %v2654 = vpack.c.b16 %v1754, %v1729
    %v2655 = vpack.c.b16 %v1755, %v1730
    %v2656 = vpack.c.b16 %v1756, %v1731
    %v2657 = vpack.c.b16 %v1757, %v1732
    %v2658 = vpack.c.b16 %v1758, %v1733
    %v2659 = vpack.c.b16 %v1759, %v1734
    %v2660 = vpack.c.b16 %v1760, %v1735
    %v2661 = vpack.c.b16 %v1761, %v1736
    %v2662 = vpack.c.b16 %v1762, %v1737
    %v2663 = vpack.c.b16 %v1763, %v1738
    %v2664 = vpack.c.b16 %v1764, %v1739
    %v2665 = vpack.c.b16 %v1765, %v1740
    %v2666 = vpack.c.b16 %v1766, %v1741
    %v2667 = vpack.c.b16 %v1767, %v1742
    %v2668 = vpack.c.b16 %v1793, %v1768
    %v2669 = vpack.c.b16 %v1794, %v1769
    %v2670 = vpack.c.b16 %v1795, %v1770
    %v2671 = vpack.c.b16 %v1796, %v1771
    %v2672 = vpack.c.b16 %v1797, %v1772
    %v2673 = vpack.c.b16 %v1798, %v1773
    %v2674 = vpack.c.b16 %v1799, %v1774
    %v2675 = vpack.c.b16 %v1800, %v1775
    %v2676 = vpack.c.b16 %v1801, %v1776
    %v2677 = vpack.c.b16 %v1802, %v1777
    %v2678 = vpack.c.b16 %v1803, %v1778
    %v2679 = vpack.c.b16 %v1804, %v1779
    %v2680 = vpack.c.b16 %v1805, %v1780
    %v2681 = vpack.c.b16 %v1806, %v1781
    %v2682 = vpack.c.b16 %v1807, %v1782
    %v2683 = vpack.c.b16 %v1808, %v1783
    %v2684 = vpack.c.b16 %v1809, %v1784
    %v2685 = vpack.c.b16 %v1810, %v1785
    %v2686 = vpack.c.b16 %v1811, %v1786
    %v2687 = vpack.c.b16 %v1812, %v1787
    %v2688 = vpack.c.b16 %v1813, %v1788
    %v2689 = vpack.c.b16 %v1814, %v1789
    %v2690 = vpack.c.b16 %v1815, %v1790
    %v2691 = vpack.c.b16 %v1816, %v1791
    %v2692 = vpack.c.b16 %v1817, %v1792
    %v2693 = vpack.c.b16 %v1843, %v1818
    %v2694 = vpack.c.b16 %v1844, %v1819
    %v2695 = vpack.c.b16 %v1845, %v1820
    %v2696 = vpack.c.b16 %v1846, %v1821
    %v2697 = vpack.c.b16 %v1847, %v1822
    %v2698 = vpack.c.b16 %v1848, %v1823
    %v2699 = vpack.c.b16 %v1849, %v1824
    %v2700 = vpack.c.b16 %v1850, %v1825
    %v2701 = vpack.c.b16 %v1851, %v1826
    %v2702 = vpack.c.b16 %v1852, %v1827
    %v2703 = vpack.c.b16 %v1853, %v1828
    %v2704 = vpack.c.b16 %v1854, %v1829
    %v2705 = vpack.c.b16 %v1855, %v1830
    %v2706 = vpack.c.b16 %v1856, %v1831
    %v2707 = vpack.c.b16 %v1857, %v1832
    %v2708 = vpack.c.b16 %v1858, %v1833
    %v2709 = vpack.c.b16 %v1859, %v1834
    %v2710 = vpack.c.b16 %v1860, %v1835
    %v2711 = vpack.c.b16 %v1861, %v1836
    %v2712 = vpack.c.b16 %v1862, %v1837
    %v2713 = vpack.c.b16 %v1863, %v1838
    %v2714 = vpack.c.b16 %v1864, %v1839
    %v2715 = vpack.c.b16 %v1865, %v1840
    %v2716 = vpack.c.b16 %v1866, %v1841
    %v2717 = vpack.c.b16 %v1867, %v1842
    %v2718 = vpack.c.b16 %v1893, %v1868
    %v2719 = vpack.c.b16 %v1894, %v1869
    %v2720 = vpack.c.b16 %v1895, %v1870
    %v2721 = vpack.c.b16 %v1896, %v1871
    %v2722 = vpack.c.b16 %v1897, %v1872
    %v2723 = vpack.c.b16 %v1898, %v1873
    %v2724 = vpack.c.b16 %v1899, %v1874
    %v2725 = vpack.c.b16 %v1900, %v1875
    %v2726 = vpack.c.b16 %v1901, %v1876
    %v2727 = vpack.c.b16 %v1902, %v1877
    %v2728 = vpack.c.b16 %v1903, %v1878
    %v2729 = vpack.c.b16 %v1904, %v1879
    %v2730 = vpack.c.b16 %v1905, %v1880
    %v2731 = vpack.c.b16 %v1906, %v1881
    %v2732 = vpack.c.b16 %v1907, %v1882
    %v2733 = vpack.c.b16 %v1908, %v1883
    %v2734 = vpack.c.b16 %v1909, %v1884
    %v2735 = vpack.c.b16 %v1910, %v1885
    %v2736 = vpack.c.b16 %v1911, %v1886
    %v2737 = vpack.c.b16 %v1912, %v1887
    %v2738 = vpack.c.b16 %v1913, %v1888
    %v2739 = vpack.c.b16 %v1914, %v1889
    %v2740 = vpack.c.b16 %v1915, %v1890
    %v2741 = vpack.c.b16 %v1916, %v1891
    %v2742 = vpack.c.b16 %v1917, %v1892
    %v2743 = vpack.c.b16 %v1943, %v1918
    %v2744 = vpack.c.b16 %v1944, %v1919
    %v2745 = vpack.c.b16 %v1945, %v1920
    %v2746 = vpack.c.b16 %v1946, %v1921
    %v2747 = vpack.c.b16 %v1947, %v1922
    %v2748 = vpack.c.b16 %v1948, %v1923
    %v2749 = vpack.c.b16 %v1949, %v1924
    %v2750 = vpack.c.b16 %v1950, %v1925
    %v2751 = vpack.c.b16 %v1951, %v1926
    %v2752 = vpack.c.b16 %v1952, %v1927
    %v2753 = vpack.c.b16 %v1953, %v1928
    %v2754 = vpack.c.b16 %v1954, %v1929
    %v2755 = vpack.c.b16 %v1955, %v1930
    %v2756 = vpack.c.b16 %v1956, %v1931
    %v2757 = vpack.c.b16 %v1957, %v1932
    %v2758 = vpack.c.b16 %v1958, %v1933
    %v2759 = vpack.c.b16 %v1959, %v1934
    %v2760 = vpack.c.b16 %v1960, %v1935
    %v2761 = vpack.c.b16 %v1961, %v1936
    %v2762 = vpack.c.b16 %v1962, %v1937
    %v2763 = vpack.c.b16 %v1963, %v1938
    %v2764 = vpack.c.b16 %v1964, %v1939
    %v2765 = vpack.c.b16 %v1965, %v1940
    %v2766 = vpack.c.b16 %v1966, %v1941
    %v2767 = vpack.c.b16 %v1967, %v1942
    %v2768 = vpack.c.b16 %v1993, %v1968
    %v2769 = vpack.c.b16 %v1994, %v1969
    %v2770 = vpack.c.b16 %v1995, %v1970
    %v2771 = vpack.c.b16 %v1996, %v1971
    %v2772 = vpack.c.b16 %v1997, %v1972
    %v2773 = vpack.c.b16 %v1998, %v1973
    %v2774 = vpack.c.b16 %v1999, %v1974
    %v2775 = vpack.c.b16 %v2000, %v1975
    %v2776 = vpack.c.b16 %v2001, %v1976
    %v2777 = vpack.c.b16 %v2002, %v1977
    %v2778 = vpack.c.b16 %v2003, %v1978
    %v2779 = vpack.c.b16 %v2004, %v1979
    %v2780 = vpack.c.b16 %v2005, %v1980
    %v2781 = vpack.c.b16 %v2006, %v1981
    %v2782 = vpack.c.b16 %v2007, %v1982
    %v2783 = vpack.c.b16 %v2008, %v1983
    %v2784 = vpack.c.b16 %v2009, %v1984
    %v2785 = vpack.c.b16 %v2010, %v1985
    %v2786 = vpack.c.b16 %v2011, %v1986
    %v2787 = vpack.c.b16 %v2012, %v1987
    %v2788 = vpack.c.b16 %v2013, %v1988
    %v2789 = vpack.c.b16 %v2014, %v1989
    %v2790 = vpack.c.b16 %v2015, %v1990
    %v2791 = vpack.c.b16 %v2016, %v1991
    %v2792 = vpack.c.b16 %v2017, %v1992
    %v2793 = vpack.c.b16 %v2043, %v2018
    %v2794 = vpack.c.b16 %v2044, %v2019
    %v2795 = vpack.c.b16 %v2045, %v2020
    %v2796 = vpack.c.b16 %v2046, %v2021
    %v2797 = vpack.c.b16 %v2047, %v2022
    %v2798 = vpack.c.b16 %v2048, %v2023
    %v2799 = vpack.c.b16 %v2049, %v2024
    %v2800 = vpack.c.b16 %v2050, %v2025
    %v2801 = vpack.c.b16 %v2051, %v2026
    %v2802 = vpack.c.b16 %v2052, %v2027
    %v2803 = vpack.c.b16 %v2053, %v2028
    %v2804 = vpack.c.b16 %v2054, %v2029
    %v2805 = vpack.c.b16 %v2055, %v2030
    %v2806 = vpack.c.b16 %v2056, %v2031
    %v2807 = vpack.c.b16 %v2057, %v2032
    %v2808 = vpack.c.b16 %v2058, %v2033
    %v2809 = vpack.c.b16 %v2059, %v2034
    %v2810 = vpack.c.b16 %v2060, %v2035
    %v2811 = vpack.c.b16 %v2061, %v2036
    %v2812 = vpack.c.b16 %v2062, %v2037
    %v2813 = vpack.c.b16 %v2063, %v2038
    %v2814 = vpack.c.b16 %v2064, %v2039
    %v2815 = vpack.c.b16 %v2065, %v2040
    %v2816 = vpack.c.b16 %v2066, %v2041
    %v2817 = vpack.c.b16 %v2067, %v2042
    %v2818 = vpack.c.b16 %v2093, %v2068
    %v2819 = vpack.c.b16 %v2094, %v2069
    %v2820 = vpack.c.b16 %v2095, %v2070
    %v2821 = vpack.c.b16 %v2096, %v2071
    %v2822 = vpack.c.b16 %v2097, %v2072
    %v2823 = vpack.c.b16 %v2098, %v2073
    %v2824 = vpack.c.b16 %v2099, %v2074
    %v2825 = vpack.c.b16 %v2100, %v2075
    %v2826 = vpack.c.b16 %v2101, %v2076
    %v2827 = vpack.c.b16 %v2102, %v2077
    %v2828 = vpack.c.b16 %v2103, %v2078
    %v2829 = vpack.c.b16 %v2104, %v2079
    %v2830 = vpack.c.b16 %v2105, %v2080
    %v2831 = vpack.c.b16 %v2106, %v2081
    %v2832 = vpack.c.b16 %v2107, %v2082
    %v2833 = vpack.c.b16 %v2108, %v2083
    %v2834 = vpack.c.b16 %v2109, %v2084
    %v2835 = vpack.c.b16 %v2110, %v2085
    %v2836 = vpack.c.b16 %v2111, %v2086
    %v2837 = vpack.c.b16 %v2112, %v2087
    %v2838 = vpack.c.b16 %v2113, %v2088
    %v2839 = vpack.c.b16 %v2114, %v2089
    %v2840 = vpack.c.b16 %v2115, %v2090
    %v2841 = vpack.c.b16 %v2116, %v2091
    %v2842 = vpack.c.b16 %v2117, %v2092
    %v2843 = vpack.c.b16 %v2143, %v2118
    %v2844 = vpack.c.b16 %v2144, %v2119
    %v2845 = vpack.c.b16 %v2145, %v2120
    %v2846 = vpack.c.b16 %v2146, %v2121
    %v2847 = vpack.c.b16 %v2147, %v2122
    %v2848 = vpack.c.b16 %v2148, %v2123
    %v2849 = vpack.c.b16 %v2149, %v2124
    %v2850 = vpack.c.b16 %v2150, %v2125
    %v2851 = vpack.c.b16 %v2151, %v2126
    %v2852 = vpack.c.b16 %v2152, %v2127
    %v2853 = vpack.c.b16 %v2153, %v2128
    %v2854 = vpack.c.b16 %v2154, %v2129
    %v2855 = vpack.c.b16 %v2155, %v2130
    %v2856 = vpack.c.b16 %v2156, %v2131
    %v2857 = vpack.c.b16 %v2157, %v2132
    %v2858 = vpack.c.b16 %v2158, %v2133
    %v2859 = vpack.c.b16 %v2159, %v2134
    %v2860 = vpack.c.b16 %v2160, %v2135
    %v2861 = vpack.c.b16 %v2161, %v2136
    %v2862 = vpack.c.b16 %v2162, %v2137
    %v2863 = vpack.c.b16 %v2163, %v2138
    %v2864 = vpack.c.b16 %v2164, %v2139
    %v2865 = vpack.c.b16 %v2165, %v2140
    %v2866 = vpack.c.b16 %v2166, %v2141
    %v2867 = vpack.c.b16 %v2167, %v2142
    %v2868 = vpack.c.b16 %v2193, %v2168
    %v2869 = vpack.c.b16 %v2194, %v2169
    %v2870 = vpack.c.b16 %v2195, %v2170
    %v2871 = vpack.c.b16 %v2196, %v2171
    %v2872 = vpack.c.b16 %v2197, %v2172
    %v2873 = vpack.c.b16 %v2198, %v2173
    %v2874 = vpack.c.b16 %v2199, %v2174
    %v2875 = vpack.c.b16 %v2200, %v2175
    %v2876 = vpack.c.b16 %v2201, %v2176
    %v2877 = vpack.c.b16 %v2202, %v2177
    %v2878 = vpack.c.b16 %v2203, %v2178
    %v2879 = vpack.c.b16 %v2204, %v2179
    %v2880 = vpack.c.b16 %v2205, %v2180
    %v2881 = vpack.c.b16 %v2206, %v2181
    %v2882 = vpack.c.b16 %v2207, %v2182
    %v2883 = vpack.c.b16 %v2208, %v2183
    %v2884 = vpack.c.b16 %v2209, %v2184
    %v2885 = vpack.c.b16 %v2210, %v2185
    %v2886 = vpack.c.b16 %v2211, %v2186
    %v2887 = vpack.c.b16 %v2212, %v2187
    %v2888 = vpack.c.b16 %v2213, %v2188
    %v2889 = vpack.c.b16 %v2214, %v2189
    %v2890 = vpack.c.b16 %v2215, %v2190
    %v2891 = vpack.c.b16 %v2216, %v2191
    %v2892 = vpack.c.b16 %v2217, %v2192
    %v2893 = vpack.c.b16 %v2243, %v2218
    %v2894 = vpack.c.b16 %v2244, %v2219
    %v2895 = vpack.c.b16 %v2245, %v2220
    %v2896 = vpack.c.b16 %v2246, %v2221
    %v2897 = vpack.c.b16 %v2247, %v2222
    %v2898 = vpack.c.b16 %v2248, %v2223
    %v2899 = vpack.c.b16 %v2249, %v2224
    %v2900 = vpack.c.b16 %v2250, %v2225
    %v2901 = vpack.c.b16 %v2251, %v2226
    %v2902 = vpack.c.b16 %v2252, %v2227
    %v2903 = vpack.c.b16 %v2253, %v2228
    %v2904 = vpack.c.b16 %v2254, %v2229
    %v2905 = vpack.c.b16 %v2255, %v2230
    %v2906 = vpack.c.b16 %v2256, %v2231
    %v2907 = vpack.c.b16 %v2257, %v2232
    %v2908 = vpack.c.b16 %v2258, %v2233
    %v2909 = vpack.c.b16 %v2259, %v2234
    %v2910 = vpack.c.b16 %v2260, %v2235
    %v2911 = vpack.c.b16 %v2261, %v2236
    %v2912 = vpack.c.b16 %v2262, %v2237
    %v2913 = vpack.c.b16 %v2263, %v2238
    %v2914 = vpack.c.b16 %v2264, %v2239
    %v2915 = vpack.c.b16 %v2265, %v2240
    %v2916 = vpack.c.b16 %v2266, %v2241
    %v2917 = vpack.c.b16 %v2267, %v2242
    %v2918 = vpack.c.b16 %v2293, %v2268
    %v2919 = vpack.c.b16 %v2294, %v2269
    %v2920 = vpack.c.b16 %v2295, %v2270
    %v2921 = vpack.c.b16 %v2296, %v2271
    %v2922 = vpack.c.b16 %v2297, %v2272
    %v2923 = vpack.c.b16 %v2298, %v2273
    %v2924 = vpack.c.b16 %v2299, %v2274
    %v2925 = vpack.c.b16 %v2300, %v2275
    %v2926 = vpack.c.b16 %v2301, %v2276
    %v2927 = vpack.c.b16 %v2302, %v2277
    %v2928 = vpack.c.b16 %v2303, %v2278
    %v2929 = vpack.c.b16 %v2304, %v2279
    %v2930 = vpack.c.b16 %v2305, %v2280
    %v2931 = vpack.c.b16 %v2306, %v2281
    %v2932 = vpack.c.b16 %v2307, %v2282
    %v2933 = vpack.c.b16 %v2308, %v2283
    %v2934 = vpack.c.b16 %v2309, %v2284
    %v2935 = vpack.c.b16 %v2310, %v2285
    %v2936 = vpack.c.b16 %v2311, %v2286
    %v2937 = vpack.c.b16 %v2312, %v2287
    %v2938 = vpack.c.b16 %v2313, %v2288
    %v2939 = vpack.c.b16 %v2314, %v2289
    %v2940 = vpack.c.b16 %v2315, %v2290
    %v2941 = vpack.c.b16 %v2316, %v2291
    %v2942 = vpack.c.b16 %v2317, %v2292
    %v2943 = vpack.c.b16 %v2343, %v2318
    %v2944 = vpack.c.b16 %v2344, %v2319
    %v2945 = vpack.c.b16 %v2345, %v2320
    %v2946 = vpack.c.b16 %v2346, %v2321
    %v2947 = vpack.c.b16 %v2347, %v2322
    %v2948 = vpack.c.b16 %v2348, %v2323
    %v2949 = vpack.c.b16 %v2349, %v2324
    %v2950 = vpack.c.b16 %v2350, %v2325
    %v2951 = vpack.c.b16 %v2351, %v2326
    %v2952 = vpack.c.b16 %v2352, %v2327
    %v2953 = vpack.c.b16 %v2353, %v2328
    %v2954 = vpack.c.b16 %v2354, %v2329
    %v2955 = vpack.c.b16 %v2355, %v2330
    %v2956 = vpack.c.b16 %v2356, %v2331
    %v2957 = vpack.c.b16 %v2357, %v2332
    %v2958 = vpack.c.b16 %v2358, %v2333
    %v2959 = vpack.c.b16 %v2359, %v2334
    %v2960 = vpack.c.b16 %v2360, %v2335
    %v2961 = vpack.c.b16 %v2361, %v2336
    %v2962 = vpack.c.b16 %v2362, %v2337
    %v2963 = vpack.c.b16 %v2363, %v2338
    %v2964 = vpack.c.b16 %v2364, %v2339
    %v2965 = vpack.c.b16 %v2365, %v2340
    %v2966 = vpack.c.b16 %v2366, %v2341
    %v2967 = vpack.c.b16 %v2367, %v2342
    %v2968 = vpack.c.b16 %v2393, %v2368
    %v2969 = vpack.c.b16 %v2394, %v2369
    %v2970 = vpack.c.b16 %v2395, %v2370
    %v2971 = vpack.c.b16 %v2396, %v2371
    %v2972 = vpack.c.b16 %v2397, %v2372
    %v2973 = vpack.c.b16 %v2398, %v2373
    %v2974 = vpack.c.b16 %v2399, %v2374
    %v2975 = vpack.c.b16 %v2400, %v2375
    %v2976 = vpack.c.b16 %v2401, %v2376
    %v2977 = vpack.c.b16 %v2402, %v2377
    %v2978 = vpack.c.b16 %v2403, %v2378
    %v2979 = vpack.c.b16 %v2404, %v2379
    %v2980 = vpack.c.b16 %v2405, %v2380
    %v2981 = vpack.c.b16 %v2406, %v2381
    %v2982 = vpack.c.b16 %v2407, %v2382
    %v2983 = vpack.c.b16 %v2408, %v2383
    %v2984 = vpack.c.b16 %v2409, %v2384
    %v2985 = vpack.c.b16 %v2410, %v2385
    %v2986 = vpack.c.b16 %v2411, %v2386
    %v2987 = vpack.c.b16 %v2412, %v2387
    %v2988 = vpack.c.b16 %v2413, %v2388
    %v2989 = vpack.c.b16 %v2414, %v2389
    %v2990 = vpack.c.b16 %v2415, %v2390
    %v2991 = vpack.c.b16 %v2416, %v2391
    %v2992 = vpack.c.b16 %v2417, %v2392
    %v2993 = vpack.c.b16 %v2443, %v2418
    %v2994 = vpack.c.b16 %v2444, %v2419
    %v2995 = vpack.c.b16 %v2445, %v2420
    %v2996 = vpack.c.b16 %v2446, %v2421
    %v2997 = vpack.c.b16 %v2447, %v2422
    %v2998 = vpack.c.b16 %v2448, %v2423
    %v2999 = vpack.c.b16 %v2449, %v2424
    %v3000 = vpack.c.b16 %v2450, %v2425
    %v3001 = vpack.c.b16 %v2451, %v2426
    %v3002 = vpack.c.b16 %v2452, %v2427
    %v3003 = vpack.c.b16 %v2453, %v2428
    %v3004 = vpack.c.b16 %v2454, %v2429
    %v3005 = vpack.c.b16 %v2455, %v2430
    %v3006 = vpack.c.b16 %v2456, %v2431
    %v3007 = vpack.c.b16 %v2457, %v2432
    %v3008 = vpack.c.b16 %v2458, %v2433
    %v3009 = vpack.c.b16 %v2459, %v2434
    %v3010 = vpack.c.b16 %v2460, %v2435
    %v3011 = vpack.c.b16 %v2461, %v2436
    %v3012 = vpack.c.b16 %v2462, %v2437
    %v3013 = vpack.c.b16 %v2463, %v2438
    %v3014 = vpack.c.b16 %v2464, %v2439
    %v3015 = vpack.c.b16 %v2465, %v2440
    %v3016 = vpack.c.b16 %v2466, %v2441
    %v3017 = vpack.c.b16 %v2467, %v2442
    %v3018 = vpack.c.b16 %v2493, %v2468
    %v3019 = vpack.c.b16 %v2494, %v2469
    %v3020 = vpack.c.b16 %v2495, %v2470
    %v3021 = vpack.c.b16 %v2496, %v2471
    %v3022 = vpack.c.b16 %v2497, %v2472
    %v3023 = vpack.c.b16 %v2498, %v2473
    %v3024 = vpack.c.b16 %v2499, %v2474
    %v3025 = vpack.c.b16 %v2500, %v2475
    %v3026 = vpack.c.b16 %v2501, %v2476
    %v3027 = vpack.c.b16 %v2502, %v2477
    %v3028 = vpack.c.b16 %v2503, %v2478
    %v3029 = vpack.c.b16 %v2504, %v2479
    %v3030 = vpack.c.b16 %v2505, %v2480
    %v3031 = vpack.c.b16 %v2506, %v2481
    %v3032 = vpack.c.b16 %v2507, %v2482
    %v3033 = vpack.c.b16 %v2508, %v2483
    %v3034 = vpack.c.b16 %v2509, %v2484
    %v3035 = vpack.c.b16 %v2510, %v2485
    %v3036 = vpack.c.b16 %v2511, %v2486
    %v3037 = vpack.c.b16 %v2512, %v2487
    %v3038 = vpack.c.b16 %v2513, %v2488
    %v3039 = vpack.c.b16 %v2514, %v2489
    %v3040 = vpack.c.b16 %v2515, %v2490
    %v3041 = vpack.c.b16 %v2516, %v2491
    %v3042 = vpack.c.b16 %v2517, %v2492
    %v3043 = vpack.c.b16 %v2518, %v2518
    %v3044 = vpack.c.b16 %v2519, %v2519
    %v3045 = vpack.c.b16 %v2520, %v2520
    %v3046 = vpack.c.b16 %v2521, %v2521
    %v3047 = vpack.c.b16 %v2522, %v2522
    %v3048 = vpack.c.b16 %v2523, %v2523
    %v3049 = vpack.c.b16 %v2524, %v2524
    %v3050 = vpack.c.b16 %v2525, %v2525
    %v3051 = vpack.c.b16 %v2526, %v2526
    %v3052 = vpack.c.b16 %v2527, %v2527
    %v3053 = vpack.c.b16 %v2528, %v2528
    %v3054 = vpack.c.b16 %v2529, %v2529
    %v3055 = vpack.c.b16 %v2530, %v2530
    %v3056 = vpack.c.b16 %v2531, %v2531
    %v3057 = vpack.c.b16 %v2532, %v2532
    %v3058 = vpack.c.b16 %v2533, %v2533
    %v3059 = vpack.c.b16 %v2534, %v2534
    %v3060 = vpack.c.b16 %v2535, %v2535
    %v3061 = vpack.c.b16 %v2536, %v2536
    %v3062 = vpack.c.b16 %v2537, %v2537
    %v3063 = vpack.c.b16 %v2538, %v2538
    %v3064 = vpack.c.b16 %v2539, %v2539
    %v3065 = vpack.c.b16 %v2540, %v2540
    %v3066 = vpack.c.b16 %v2541, %v2541
    %v3067 = vpack.c.b16 %v2542, %v2542
    %v3569 = vsel %vm361, %v451, 0
    %vm3571 = vcmask 1041408
    %v3573 = vsel %vm3571, %v3043, 0
    %v3576 = vsel %vm3571, %v3044, 0
    %v3579 = vsel %vm3571, %v3045, 0
    %v3582 = vsel %vm3571, %v3046, 0
    %v3585 = vsel %vm3571, %v3047, 0
    %v3588 = vsel %vm3571, %v3048, 0
    %v3591 = vsel %vm3571, %v3049, 0
    %v3594 = vsel %vm3571, %v3050, 0
    %v3597 = vsel %vm3571, %v3051, 0
    %v3600 = vsel %vm3571, %v3052, 0
    %v3603 = vsel %vm3571, %v3053, 0
    %v3606 = vsel %vm3571, %v3054, 0
    %v3609 = vsel %vm3571, %v3055, 0
    %v3612 = vsel %vm3571, %v3056, 0
    %v3615 = vsel %vm3571, %v3057, 0
    %v3618 = vsel %vm3571, %v3058, 0
    %v3621 = vsel %vm3571, %v3059, 0
    %v3624 = vsel %vm3571, %v3060, 0
    %v3627 = vsel %vm3571, %v3061, 0
    %v3630 = vsel %vm3571, %v3062, 0
    %v3633 = vsel %vm3571, %v3063, 0
    %v3636 = vsel %vm3571, %v3064, 0
    %v3639 = vsel %vm3571, %v3065, 0
    %v3642 = vsel %vm3571, %v3066, 0
    %v3645 = vsel %vm3571, %v3067, 0
    %3647 = vmatprep.subr.bf16.mxu0 %v2544
    %3648 = vmatpush1.bf16.msra.mxu0 %v2543
    %3649 = vmatprep.subr.bf16.mxu0 %v2569
    %3650 = vmatpush1.bf16.msra.mxu0 %v2568
    %3651 = vmatprep.subr.bf16.mxu0 %v2594
    %3652 = vmatpush1.bf16.msra.mxu0 %v2593
    %3653 = vmatprep.subr.bf16.mxu0 %v2619
    %3654 = vmatpush1.bf16.msra.mxu0 %v2618
    %3655 = vmatprep.subr.bf16.mxu0 %v2644
    %3656 = vmatpush1.bf16.msra.mxu0 %v2643
    %3657 = vmatprep.subr.bf16.mxu0 %v2669
    %3658 = vmatpush1.bf16.msra.mxu0 %v2668
    %3659 = vmatprep.subr.bf16.mxu0 %v2694
    %3660 = vmatpush1.bf16.msra.mxu0 %v2693
    %3661 = vmatprep.subr.bf16.mxu0 %v2719
    %3662 = vmatpush1.bf16.msra.mxu0 %v2718
    %3663 = vmatprep.subr.bf16.mxu0 %v2744
    %3664 = vmatpush1.bf16.msra.mxu0 %v2743
    %3665 = vmatprep.subr.bf16.mxu0 %v2769
    %3666 = vmatpush1.bf16.msra.mxu0 %v2768
    %3667 = vmatprep.subr.bf16.mxu0 %v2794
    %3668 = vmatpush1.bf16.msra.mxu0 %v2793
    %3669 = vmatprep.subr.bf16.mxu0 %v2819
    %3670 = vmatpush1.bf16.msra.mxu0 %v2818
    %3671 = vmatprep.subr.bf16.mxu0 %v2844
    %3672 = vmatpush1.bf16.msra.mxu0 %v2843
    %3673 = vmatprep.subr.bf16.mxu0 %v2869
    %3674 = vmatpush1.bf16.msra.mxu0 %v2868
    %3675 = vmatprep.subr.bf16.mxu0 %v2894
    %3676 = vmatpush1.bf16.msra.mxu0 %v2893
    %3677 = vmatprep.subr.bf16.mxu0 %v2919
    %3678 = vmatpush1.bf16.msra.mxu0 %v2918
    %3679 = vmatprep.mubr.bf16.mxu0 %v450
    %3680 = vmatmul.mubr.bf16.gmra.mrb[0].mxu0 %v449
    %v3681 = vpop.f32.mrb[0].mxu0
    %v3682 = vadd.f32 0.0, %v3681
    %v3683 = vpop.f32.mrb[0].mxu0
    %v3684 = vadd.f32 0.0, %v3683
    %v3685 = vpop.f32.mrb[0].mxu0
    %v3686 = vadd.f32 0.0, %v3685
    %v3687 = vpop.f32.mrb[0].mxu0
    %v3688 = vadd.f32 0.0, %v3687
    %3689 = vdwg.mxu0
    %3690 = vmatprep.subr.bf16.mxu0 %v2944
    %3691 = vmatpush1.bf16.msra.mxu0 %v2943
    %3692 = vmatprep.subr.bf16.mxu0 %v2969
    %3693 = vmatpush1.bf16.msra.mxu0 %v2968
    %3694 = vmatprep.subr.bf16.mxu0 %v2994
    %3695 = vmatpush1.bf16.msra.mxu0 %v2993
    %3696 = vmatprep.subr.bf16.mxu0 %v3019
    %3697 = vmatpush1.bf16.msra.mxu0 %v3018
    %3698 = vmatprep.subr.bf16.mxu0 %v3576
    %3699 = vmatpush1.bf16.msra.mxu0 %v3573
    %3700 = vmatprep.subr.bf16.mxu0 0
    %3701 = vmatpush1.bf16.msra.mxu0 0
    %3702 = vmatprep.subr.bf16.mxu0 0
    %3703 = vmatpush1.bf16.msra.mxu0 0
    %3704 = vmatprep.subr.bf16.mxu0 0
    %3705 = vmatpush1.bf16.msra.mxu0 0
    %3706 = vmatprep.subr.bf16.mxu0 0
    %3707 = vmatpush1.bf16.msra.mxu0 0
    %3708 = vmatprep.subr.bf16.mxu0 0
    %3709 = vmatpush1.bf16.msra.mxu0 0
    %3710 = vmatprep.subr.bf16.mxu0 0
    %3711 = vmatpush1.bf16.msra.mxu0 0
    %3712 = vmatprep.subr.bf16.mxu0 0
    %3713 = vmatpush1.bf16.msra.mxu0 0
    %3714 = vmatprep.subr.bf16.mxu0 0
    %3715 = vmatpush1.bf16.msra.mxu0 0
    %3716 = vmatprep.subr.bf16.mxu0 0
    %3717 = vmatpush1.bf16.msra.mxu0 0
    %3718 = vmatprep.subr.bf16.mxu0 0
    %3719 = vmatpush1.bf16.msra.mxu0 0
    %3720 = vmatprep.subr.bf16.mxu0 0
    %3721 = vmatpush1.bf16.msra.mxu0 0
    %3722 = vmatprep.mubr.bf16.mxu0 0
    %3723 = vmatmul.mubr.bf16.gmra.mrb[0].mxu0 %v3569
    %v3724 = vpop.f32.mrb[0].mxu0
    %v3725 = vadd.f32 %v3682, %v3724
    %v3726 = vpop.f32.mrb[0].mxu0
    %v3727 = vadd.f32 %v3684, %v3726
    %v3728 = vpop.f32.mrb[0].mxu0
    %v3729 = vadd.f32 %v3686, %v3728
    %v3730 = vpop.f32.mrb[0].mxu0
    %v3731 = vadd.f32 %v3688, %v3730
    %3732 = vdwg.mxu0
    %3733 = vmatprep.subr.bf16.mxu0 %v2546
    %3734 = vmatpush1.bf16.msra.mxu0 %v2545
    %3735 = vmatprep.subr.bf16.mxu0 %v2571
    %3736 = vmatpush1.bf16.msra.mxu0 %v2570
    %3737 = vmatprep.subr.bf16.mxu0 %v2596
    %3738 = vmatpush1.bf16.msra.mxu0 %v2595
    %3739 = vmatprep.subr.bf16.mxu0 %v2621
    %3740 = vmatpush1.bf16.msra.mxu0 %v2620
    %3741 = vmatprep.subr.bf16.mxu0 %v2646
    %3742 = vmatpush1.bf16.msra.mxu0 %v2645
    %3743 = vmatprep.subr.bf16.mxu0 %v2671
    %3744 = vmatpush1.bf16.msra.mxu0 %v2670
    %3745 = vmatprep.subr.bf16.mxu0 %v2696
    %3746 = vmatpush1.bf16.msra.mxu0 %v2695
    %3747 = vmatprep.subr.bf16.mxu0 %v2721
    %3748 = vmatpush1.bf16.msra.mxu0 %v2720
    %3749 = vmatprep.subr.bf16.mxu0 %v2746
    %3750 = vmatpush1.bf16.msra.mxu0 %v2745
    %3751 = vmatprep.subr.bf16.mxu0 %v2771
    %3752 = vmatpush1.bf16.msra.mxu0 %v2770
    %3753 = vmatprep.subr.bf16.mxu0 %v2796
    %3754 = vmatpush1.bf16.msra.mxu0 %v2795
    %3755 = vmatprep.subr.bf16.mxu0 %v2821
    %3756 = vmatpush1.bf16.msra.mxu0 %v2820
    %3757 = vmatprep.subr.bf16.mxu0 %v2846
    %3758 = vmatpush1.bf16.msra.mxu0 %v2845
    %3759 = vmatprep.subr.bf16.mxu0 %v2871
    %3760 = vmatpush1.bf16.msra.mxu0 %v2870
    %3761 = vmatprep.subr.bf16.mxu0 %v2896
    %3762 = vmatpush1.bf16.msra.mxu0 %v2895
    %3763 = vmatprep.subr.bf16.mxu0 %v2921
    %3764 = vmatpush1.bf16.msra.mxu0 %v2920
    %3765 = vmatprep.mubr.bf16.mxu0 %v450
    %3766 = vmatmul.mubr.bf16.gmra.mrb[0].mxu0 %v449
    %v3767 = vpop.f32.mrb[0].mxu0
    %v3768 = vadd.f32 0.0, %v3767
    %v3769 = vpop.f32.mrb[0].mxu0
    %v3770 = vadd.f32 0.0, %v3769
    %v3771 = vpop.f32.mrb[0].mxu0
    %v3772 = vadd.f32 0.0, %v3771
    %v3773 = vpop.f32.mrb[0].mxu0
    %v3774 = vadd.f32 0.0, %v3773
    %3775 = vdwg.mxu0
    %3776 = vmatprep.subr.bf16.mxu0 %v2946
    %3777 = vmatpush1.bf16.msra.mxu0 %v2945
    %3778 = vmatprep.subr.bf16.mxu0 %v2971
    %3779 = vmatpush1.bf16.msra.mxu0 %v2970
    %3780 = vmatprep.subr.bf16.mxu0 %v2996
    %3781 = vmatpush1.bf16.msra.mxu0 %v2995
    %3782 = vmatprep.subr.bf16.mxu0 %v3021
    %3783 = vmatpush1.bf16.msra.mxu0 %v3020
    %3784 = vmatprep.subr.bf16.mxu0 %v3582
    %3785 = vmatpush1.bf16.msra.mxu0 %v3579
    %3786 = vmatprep.subr.bf16.mxu0 0
    %3787 = vmatpush1.bf16.msra.mxu0 0
    %3788 = vmatprep.subr.bf16.mxu0 0
    %3789 = vmatpush1.bf16.msra.mxu0 0
    %3790 = vmatprep.subr.bf16.mxu0 0
    %3791 = vmatpush1.bf16.msra.mxu0 0
    %3792 = vmatprep.subr.bf16.mxu0 0
    %3793 = vmatpush1.bf16.msra.mxu0 0
    %3794 = vmatprep.subr.bf16.mxu0 0
    %3795 = vmatpush1.bf16.msra.mxu0 0
    %3796 = vmatprep.subr.bf16.mxu0 0
    %3797 = vmatpush1.bf16.msra.mxu0 0
    %3798 = vmatprep.subr.bf16.mxu0 0
    %3799 = vmatpush1.bf16.msra.mxu0 0
    %3800 = vmatprep.subr.bf16.mxu0 0
    %3801 = vmatpush1.bf16.msra.mxu0 0
    %3802 = vmatprep.subr.bf16.mxu0 0
    %3803 = vmatpush1.bf16.msra.mxu0 0
    %3804 = vmatprep.subr.bf16.mxu0 0
    %3805 = vmatpush1.bf16.msra.mxu0 0
    %3806 = vmatprep.subr.bf16.mxu0 0
    %3807 = vmatpush1.bf16.msra.mxu0 0
    %3808 = vmatprep.mubr.bf16.mxu0 0
    %3809 = vmatmul.mubr.bf16.gmra.mrb[0].mxu0 %v3569
    %v3810 = vpop.f32.mrb[0].mxu0
    %v3811 = vadd.f32 %v3768, %v3810
    %v3812 = vpop.f32.mrb[0].mxu0
    %v3813 = vadd.f32 %v3770, %v3812
    %v3814 = vpop.f32.mrb[0].mxu0
    %v3815 = vadd.f32 %v3772, %v3814
    %v3816 = vpop.f32.mrb[0].mxu0
    %v3817 = vadd.f32 %v3774, %v3816
    %3818 = vdwg.mxu0
    %3819 = vmatprep.subr.bf16.mxu0 %v2548
    %3820 = vmatpush1.bf16.msra.mxu0 %v2547
    %3821 = vmatprep.subr.bf16.mxu0 %v2573
    %3822 = vmatpush1.bf16.msra.mxu0 %v2572
    %3823 = vmatprep.subr.bf16.mxu0 %v2598
    %3824 = vmatpush1.bf16.msra.mxu0 %v2597
    %3825 = vmatprep.subr.bf16.mxu0 %v2623
    %3826 = vmatpush1.bf16.msra.mxu0 %v2622
    %3827 = vmatprep.subr.bf16.mxu0 %v2648
    %3828 = vmatpush1.bf16.msra.mxu0 %v2647
    %3829 = vmatprep.subr.bf16.mxu0 %v2673
    %3830 = vmatpush1.bf16.msra.mxu0 %v2672
    %3831 = vmatprep.subr.bf16.mxu0 %v2698
    %3832 = vmatpush1.bf16.msra.mxu0 %v2697
    %3833 = vmatprep.subr.bf16.mxu0 %v2723
    %3834 = vmatpush1.bf16.msra.mxu0 %v2722
    %3835 = vmatprep.subr.bf16.mxu0 %v2748
    %3836 = vmatpush1.bf16.msra.mxu0 %v2747
    %3837 = vmatprep.subr.bf16.mxu0 %v2773
    %3838 = vmatpush1.bf16.msra.mxu0 %v2772
    %3839 = vmatprep.subr.bf16.mxu0 %v2798
    %3840 = vmatpush1.bf16.msra.mxu0 %v2797
    %3841 = vmatprep.subr.bf16.mxu0 %v2823
    %3842 = vmatpush1.bf16.msra.mxu0 %v2822
    %3843 = vmatprep.subr.bf16.mxu0 %v2848
    %3844 = vmatpush1.bf16.msra.mxu0 %v2847
    %3845 = vmatprep.subr.bf16.mxu0 %v2873
    %3846 = vmatpush1.bf16.msra.mxu0 %v2872
    %3847 = vmatprep.subr.bf16.mxu0 %v2898
    %3848 = vmatpush1.bf16.msra.mxu0 %v2897
    %3849 = vmatprep.subr.bf16.mxu0 %v2923
    %3850 = vmatpush1.bf16.msra.mxu0 %v2922
    %3851 = vmatprep.mubr.bf16.mxu0 %v450
    %3852 = vmatmul.mubr.bf16.gmra.mrb[0].mxu0 %v449
    %v3853 = vpop.f32.mrb[0].mxu0
    %v3854 = vadd.f32 0.0, %v3853
    %v3855 = vpop.f32.mrb[0].mxu0
    %v3856 = vadd.f32 0.0, %v3855
    %v3857 = vpop.f32.mrb[0].mxu0
    %v3858 = vadd.f32 0.0, %v3857
    %v3859 = vpop.f32.mrb[0].mxu0
    %v3860 = vadd.f32 0.0, %v3859
    %3861 = vdwg.mxu0
    %3862 = vmatprep.subr.bf16.mxu0 %v2948
    %3863 = vmatpush1.bf16.msra.mxu0 %v2947
    %3864 = vmatprep.subr.bf16.mxu0 %v2973
    %3865 = vmatpush1.bf16.msra.mxu0 %v2972
    %3866 = vmatprep.subr.bf16.mxu0 %v2998
    %3867 = vmatpush1.bf16.msra.mxu0 %v2997
    %3868 = vmatprep.subr.bf16.mxu0 %v3023
    %3869 = vmatpush1.bf16.msra.mxu0 %v3022
    %3870 = vmatprep.subr.bf16.mxu0 %v3588
    %3871 = vmatpush1.bf16.msra.mxu0 %v3585
    %3872 = vmatprep.subr.bf16.mxu0 0
    %3873 = vmatpush1.bf16.msra.mxu0 0
    %3874 = vmatprep.subr.bf16.mxu0 0
    %3875 = vmatpush1.bf16.msra.mxu0 0
    %3876 = vmatprep.subr.bf16.mxu0 0
    %3877 = vmatpush1.bf16.msra.mxu0 0
    %3878 = vmatprep.subr.bf16.mxu0 0
    %3879 = vmatpush1.bf16.msra.mxu0 0
    %3880 = vmatprep.subr.bf16.mxu0 0
    %3881 = vmatpush1.bf16.msra.mxu0 0
    %3882 = vmatprep.subr.bf16.mxu0 0
    %3883 = vmatpush1.bf16.msra.mxu0 0
    %3884 = vmatprep.subr.bf16.mxu0 0
    %3885 = vmatpush1.bf16.msra.mxu0 0
    %3886 = vmatprep.subr.bf16.mxu0 0
    %3887 = vmatpush1.bf16.msra.mxu0 0
    %3888 = vmatprep.subr.bf16.mxu0 0
    %3889 = vmatpush1.bf16.msra.mxu0 0
    %3890 = vmatprep.subr.bf16.mxu0 0
    %3891 = vmatpush1.bf16.msra.mxu0 0
    %3892 = vmatprep.subr.bf16.mxu0 0
    %3893 = vmatpush1.bf16.msra.mxu0 0
    %3894 = vmatprep.mubr.bf16.mxu0 0
    %3895 = vmatmul.mubr.bf16.gmra.mrb[0].mxu0 %v3569
    %v3896 = vpop.f32.mrb[0].mxu0
    %v3897 = vadd.f32 %v3854, %v3896
    %v3898 = vpop.f32.mrb[0].mxu0
    %v3899 = vadd.f32 %v3856, %v3898
    %v3900 = vpop.f32.mrb[0].mxu0
    %v3901 = vadd.f32 %v3858, %v3900
    %v3902 = vpop.f32.mrb[0].mxu0
    %v3903 = vadd.f32 %v3860, %v3902
    %3904 = vdwg.mxu0
    %3905 = vmatprep.subr.bf16.mxu0 %v2550
    %3906 = vmatpush1.bf16.msra.mxu0 %v2549
    %3907 = vmatprep.subr.bf16.mxu0 %v2575
    %3908 = vmatpush1.bf16.msra.mxu0 %v2574
    %3909 = vmatprep.subr.bf16.mxu0 %v2600
    %3910 = vmatpush1.bf16.msra.mxu0 %v2599
    %3911 = vmatprep.subr.bf16.mxu0 %v2625
    %3912 = vmatpush1.bf16.msra.mxu0 %v2624
    %3913 = vmatprep.subr.bf16.mxu0 %v2650
    %3914 = vmatpush1.bf16.msra.mxu0 %v2649
    %3915 = vmatprep.subr.bf16.mxu0 %v2675
    %3916 = vmatpush1.bf16.msra.mxu0 %v2674
    %3917 = vmatprep.subr.bf16.mxu0 %v2700
    %3918 = vmatpush1.bf16.msra.mxu0 %v2699
    %3919 = vmatprep.subr.bf16.mxu0 %v2725
    %3920 = vmatpush1.bf16.msra.mxu0 %v2724
    %3921 = vmatprep.subr.bf16.mxu0 %v2750
    %3922 = vmatpush1.bf16.msra.mxu0 %v2749
    %3923 = vmatprep.subr.bf16.mxu0 %v2775
    %3924 = vmatpush1.bf16.msra.mxu0 %v2774
    %3925 = vmatprep.subr.bf16.mxu0 %v2800
    %3926 = vmatpush1.bf16.msra.mxu0 %v2799
    %3927 = vmatprep.subr.bf16.mxu0 %v2825
    %3928 = vmatpush1.bf16.msra.mxu0 %v2824
    %3929 = vmatprep.subr.bf16.mxu0 %v2850
    %3930 = vmatpush1.bf16.msra.mxu0 %v2849
    %3931 = vmatprep.subr.bf16.mxu0 %v2875
    %3932 = vmatpush1.bf16.msra.mxu0 %v2874
    %3933 = vmatprep.subr.bf16.mxu0 %v2900
    %3934 = vmatpush1.bf16.msra.mxu0 %v2899
    %3935 = vmatprep.subr.bf16.mxu0 %v2925
    %3936 = vmatpush1.bf16.msra.mxu0 %v2924
    %3937 = vmatprep.mubr.bf16.mxu0 %v450
    %3938 = vmatmul.mubr.bf16.gmra.mrb[0].mxu0 %v449
    %v3939 = vpop.f32.mrb[0].mxu0
    %v3940 = vadd.f32 0.0, %v3939
    %v3941 = vpop.f32.mrb[0].mxu0
    %v3942 = vadd.f32 0.0, %v3941
    %v3943 = vpop.f32.mrb[0].mxu0
    %v3944 = vadd.f32 0.0, %v3943
    %v3945 = vpop.f32.mrb[0].mxu0
    %v3946 = vadd.f32 0.0, %v3945
    %3947 = vdwg.mxu0
    %3948 = vmatprep.subr.bf16.mxu0 %v2950
    %3949 = vmatpush1.bf16.msra.mxu0 %v2949
    %3950 = vmatprep.subr.bf16.mxu0 %v2975
    %3951 = vmatpush1.bf16.msra.mxu0 %v2974
    %3952 = vmatprep.subr.bf16.mxu0 %v3000
    %3953 = vmatpush1.bf16.msra.mxu0 %v2999
    %3954 = vmatprep.subr.bf16.mxu0 %v3025
    %3955 = vmatpush1.bf16.msra.mxu0 %v3024
    %3956 = vmatprep.subr.bf16.mxu0 %v3594
    %3957 = vmatpush1.bf16.msra.mxu0 %v3591
    %3958 = vmatprep.subr.bf16.mxu0 0
    %3959 = vmatpush1.bf16.msra.mxu0 0
    %3960 = vmatprep.subr.bf16.mxu0 0
    %3961 = vmatpush1.bf16.msra.mxu0 0
    %3962 = vmatprep.subr.bf16.mxu0 0
    %3963 = vmatpush1.bf16.msra.mxu0 0
    %3964 = vmatprep.subr.bf16.mxu0 0
    %3965 = vmatpush1.bf16.msra.mxu0 0
    %3966 = vmatprep.subr.bf16.mxu0 0
    %3967 = vmatpush1.bf16.msra.mxu0 0
    %3968 = vmatprep.subr.bf16.mxu0 0
    %3969 = vmatpush1.bf16.msra.mxu0 0
    %3970 = vmatprep.subr.bf16.mxu0 0
    %3971 = vmatpush1.bf16.msra.mxu0 0
    %3972 = vmatprep.subr.bf16.mxu0 0
    %3973 = vmatpush1.bf16.msra.mxu0 0
    %3974 = vmatprep.subr.bf16.mxu0 0
    %3975 = vmatpush1.bf16.msra.mxu0 0
    %3976 = vmatprep.subr.bf16.mxu0 0
    %3977 = vmatpush1.bf16.msra.mxu0 0
    %3978 = vmatprep.subr.bf16.mxu0 0
    %3979 = vmatpush1.bf16.msra.mxu0 0
    %3980 = vmatprep.mubr.bf16.mxu0 0
    %3981 = vmatmul.mubr.bf16.gmra.mrb[0].mxu0 %v3569
    %v3982 = vpop.f32.mrb[0].mxu0
    %v3983 = vadd.f32 %v3940, %v3982
    %v3984 = vpop.f32.mrb[0].mxu0
    %v3985 = vadd.f32 %v3942, %v3984
    %v3986 = vpop.f32.mrb[0].mxu0
    %v3987 = vadd.f32 %v3944, %v3986
    %v3988 = vpop.f32.mrb[0].mxu0
    %v3989 = vadd.f32 %v3946, %v3988
    %3990 = vdwg.mxu0
    %3991 = vmatprep.subr.bf16.mxu0 %v2552
    %3992 = vmatpush1.bf16.msra.mxu0 %v2551
    %3993 = vmatprep.subr.bf16.mxu0 %v2577
    %3994 = vmatpush1.bf16.msra.mxu0 %v2576
    %3995 = vmatprep.subr.bf16.mxu0 %v2602
    %3996 = vmatpush1.bf16.msra.mxu0 %v2601
    %3997 = vmatprep.subr.bf16.mxu0 %v2627
    %3998 = vmatpush1.bf16.msra.mxu0 %v2626
    %3999 = vmatprep.subr.bf16.mxu0 %v2652
    %4000 = vmatpush1.bf16.msra.mxu0 %v2651
    %4001 = vmatprep.subr.bf16.mxu0 %v2677
    %4002 = vmatpush1.bf16.msra.mxu0 %v2676
    %4003 = vmatprep.subr.bf16.mxu0 %v2702
    %4004 = vmatpush1.bf16.msra.mxu0 %v2701
    %4005 = vmatprep.subr.bf16.mxu0 %v2727
    %4006 = vmatpush1.bf16.msra.mxu0 %v2726
    %4007 = vmatprep.subr.bf16.mxu0 %v2752
    %4008 = vmatpush1.bf16.msra.mxu0 %v2751
    %4009 = vmatprep.subr.bf16.mxu0 %v2777
    %4010 = vmatpush1.bf16.msra.mxu0 %v2776
    %4011 = vmatprep.subr.bf16.mxu0 %v2802
    %4012 = vmatpush1.bf16.msra.mxu0 %v2801
    %4013 = vmatprep.subr.bf16.mxu0 %v2827
    %4014 = vmatpush1.bf16.msra.mxu0 %v2826
    %4015 = vmatprep.subr.bf16.mxu0 %v2852
    %4016 = vmatpush1.bf16.msra.mxu0 %v2851
    %4017 = vmatprep.subr.bf16.mxu0 %v2877
    %4018 = vmatpush1.bf16.msra.mxu0 %v2876
    %4019 = vmatprep.subr.bf16.mxu0 %v2902
    %4020 = vmatpush1.bf16.msra.mxu0 %v2901
    %4021 = vmatprep.subr.bf16.mxu0 %v2927
    %4022 = vmatpush1.bf16.msra.mxu0 %v2926
    %4023 = vmatprep.mubr.bf16.mxu0 %v450
    %4024 = vmatmul.mubr.bf16.gmra.mrb[0].mxu0 %v449
    %v4025 = vpop.f32.mrb[0].mxu0
    %v4026 = vadd.f32 0.0, %v4025
    %v4027 = vpop.f32.mrb[0].mxu0
    %v4028 = vadd.f32 0.0, %v4027
    %v4029 = vpop.f32.mrb[0].mxu0
    %v4030 = vadd.f32 0.0, %v4029
    %v4031 = vpop.f32.mrb[0].mxu0
    %v4032 = vadd.f32 0.0, %v4031
    %4033 = vdwg.mxu0
    %4034 = vmatprep.subr.bf16.mxu0 %v2952
    %4035 = vmatpush1.bf16.msra.mxu0 %v2951
    %4036 = vmatprep.subr.bf16.mxu0 %v2977
    %4037 = vmatpush1.bf16.msra.mxu0 %v2976
    %4038 = vmatprep.subr.bf16.mxu0 %v3002
    %4039 = vmatpush1.bf16.msra.mxu0 %v3001
    %4040 = vmatprep.subr.bf16.mxu0 %v3027
    %4041 = vmatpush1.bf16.msra.mxu0 %v3026
    %4042 = vmatprep.subr.bf16.mxu0 %v3600
    %4043 = vmatpush1.bf16.msra.mxu0 %v3597
    %4044 = vmatprep.subr.bf16.mxu0 0
    %4045 = vmatpush1.bf16.msra.mxu0 0
    %4046 = vmatprep.subr.bf16.mxu0 0
    %4047 = vmatpush1.bf16.msra.mxu0 0
    %4048 = vmatprep.subr.bf16.mxu0 0
    %4049 = vmatpush1.bf16.msra.mxu0 0
    %4050 = vmatprep.subr.bf16.mxu0 0
    %4051 = vmatpush1.bf16.msra.mxu0 0
    %4052 = vmatprep.subr.bf16.mxu0 0
    %4053 = vmatpush1.bf16.msra.mxu0 0
    %4054 = vmatprep.subr.bf16.mxu0 0
    %4055 = vmatpush1.bf16.msra.mxu0 0
    %4056 = vmatprep.subr.bf16.mxu0 0
    %4057 = vmatpush1.bf16.msra.mxu0 0
    %4058 = vmatprep.subr.bf16.mxu0 0
    %4059 = vmatpush1.bf16.msra.mxu0 0
    %4060 = vmatprep.subr.bf16.mxu0 0
    %4061 = vmatpush1.bf16.msra.mxu0 0
    %4062 = vmatprep.subr.bf16.mxu0 0
    %4063 = vmatpush1.bf16.msra.mxu0 0
    %4064 = vmatprep.subr.bf16.mxu0 0
    %4065 = vmatpush1.bf16.msra.mxu0 0
    %4066 = vmatprep.mubr.bf16.mxu0 0
    %4067 = vmatmul.mubr.bf16.gmra.mrb[0].mxu0 %v3569
    %v4068 = vpop.f32.mrb[0].mxu0
    %v4069 = vadd.f32 %v4026, %v4068
    %v4070 = vpop.f32.mrb[0].mxu0
    %v4071 = vadd.f32 %v4028, %v4070
    %v4072 = vpop.f32.mrb[0].mxu0
    %v4073 = vadd.f32 %v4030, %v4072
    %v4074 = vpop.f32.mrb[0].mxu0
    %v4075 = vadd.f32 %v4032, %v4074
    %4076 = vdwg.mxu0
    %4077 = vmatprep.subr.bf16.mxu0 %v2554
    %4078 = vmatpush1.bf16.msra.mxu0 %v2553
    %4079 = vmatprep.subr.bf16.mxu0 %v2579
    %4080 = vmatpush1.bf16.msra.mxu0 %v2578
    %4081 = vmatprep.subr.bf16.mxu0 %v2604
    %4082 = vmatpush1.bf16.msra.mxu0 %v2603
    %4083 = vmatprep.subr.bf16.mxu0 %v2629
    %4084 = vmatpush1.bf16.msra.mxu0 %v2628
    %4085 = vmatprep.subr.bf16.mxu0 %v2654
    %4086 = vmatpush1.bf16.msra.mxu0 %v2653
    %4087 = vmatprep.subr.bf16.mxu0 %v2679
    %4088 = vmatpush1.bf16.msra.mxu0 %v2678
    %4089 = vmatprep.subr.bf16.mxu0 %v2704
    %4090 = vmatpush1.bf16.msra.mxu0 %v2703
    %4091 = vmatprep.subr.bf16.mxu0 %v2729
    %4092 = vmatpush1.bf16.msra.mxu0 %v2728
    %4093 = vmatprep.subr.bf16.mxu0 %v2754
    %4094 = vmatpush1.bf16.msra.mxu0 %v2753
    %4095 = vmatprep.subr.bf16.mxu0 %v2779
    %4096 = vmatpush1.bf16.msra.mxu0 %v2778
    %4097 = vmatprep.subr.bf16.mxu0 %v2804
    %4098 = vmatpush1.bf16.msra.mxu0 %v2803
    %4099 = vmatprep.subr.bf16.mxu0 %v2829
    %4100 = vmatpush1.bf16.msra.mxu0 %v2828
    %4101 = vmatprep.subr.bf16.mxu0 %v2854
    %4102 = vmatpush1.bf16.msra.mxu0 %v2853
    %4103 = vmatprep.subr.bf16.mxu0 %v2879
    %4104 = vmatpush1.bf16.msra.mxu0 %v2878
    %4105 = vmatprep.subr.bf16.mxu0 %v2904
    %4106 = vmatpush1.bf16.msra.mxu0 %v2903
    %4107 = vmatprep.subr.bf16.mxu0 %v2929
    %4108 = vmatpush1.bf16.msra.mxu0 %v2928
    %4109 = vmatprep.mubr.bf16.mxu0 %v450
    %4110 = vmatmul.mubr.bf16.gmra.mrb[0].mxu0 %v449
    %v4111 = vpop.f32.mrb[0].mxu0
    %v4112 = vadd.f32 0.0, %v4111
    %v4113 = vpop.f32.mrb[0].mxu0
    %v4114 = vadd.f32 0.0, %v4113
    %v4115 = vpop.f32.mrb[0].mxu0
    %v4116 = vadd.f32 0.0, %v4115
    %v4117 = vpop.f32.mrb[0].mxu0
    %v4118 = vadd.f32 0.0, %v4117
    %4119 = vdwg.mxu0
    %4120 = vmatprep.subr.bf16.mxu0 %v2954
    %4121 = vmatpush1.bf16.msra.mxu0 %v2953
    %4122 = vmatprep.subr.bf16.mxu0 %v2979
    %4123 = vmatpush1.bf16.msra.mxu0 %v2978
    %4124 = vmatprep.subr.bf16.mxu0 %v3004
    %4125 = vmatpush1.bf16.msra.mxu0 %v3003
    %4126 = vmatprep.subr.bf16.mxu0 %v3029
    %4127 = vmatpush1.bf16.msra.mxu0 %v3028
    %4128 = vmatprep.subr.bf16.mxu0 %v3606
    %4129 = vmatpush1.bf16.msra.mxu0 %v3603
    %4130 = vmatprep.subr.bf16.mxu0 0
    %4131 = vmatpush1.bf16.msra.mxu0 0
    %4132 = vmatprep.subr.bf16.mxu0 0
    %4133 = vmatpush1.bf16.msra.mxu0 0
    %4134 = vmatprep.subr.bf16.mxu0 0
    %4135 = vmatpush1.bf16.msra.mxu0 0
    %4136 = vmatprep.subr.bf16.mxu0 0
    %4137 = vmatpush1.bf16.msra.mxu0 0
    %4138 = vmatprep.subr.bf16.mxu0 0
    %4139 = vmatpush1.bf16.msra.mxu0 0
    %4140 = vmatprep.subr.bf16.mxu0 0
    %4141 = vmatpush1.bf16.msra.mxu0 0
    %4142 = vmatprep.subr.bf16.mxu0 0
    %4143 = vmatpush1.bf16.msra.mxu0 0
    %4144 = vmatprep.subr.bf16.mxu0 0
    %4145 = vmatpush1.bf16.msra.mxu0 0
    %4146 = vmatprep.subr.bf16.mxu0 0
    %4147 = vmatpush1.bf16.msra.mxu0 0
    %4148 = vmatprep.subr.bf16.mxu0 0
    %4149 = vmatpush1.bf16.msra.mxu0 0
    %4150 = vmatprep.subr.bf16.mxu0 0
    %4151 = vmatpush1.bf16.msra.mxu0 0
    %4152 = vmatprep.mubr.bf16.mxu0 0
    %4153 = vmatmul.mubr.bf16.gmra.mrb[0].mxu0 %v3569
    %v4154 = vpop.f32.mrb[0].mxu0
    %v4155 = vadd.f32 %v4112, %v4154
    %v4156 = vpop.f32.mrb[0].mxu0
    %v4157 = vadd.f32 %v4114, %v4156
    %v4158 = vpop.f32.mrb[0].mxu0
    %v4159 = vadd.f32 %v4116, %v4158
    %v4160 = vpop.f32.mrb[0].mxu0
    %v4161 = vadd.f32 %v4118, %v4160
    %4162 = vdwg.mxu0
    %4163 = vmatprep.subr.bf16.mxu0 %v2556
    %4164 = vmatpush1.bf16.msra.mxu0 %v2555
    %4165 = vmatprep.subr.bf16.mxu0 %v2581
    %4166 = vmatpush1.bf16.msra.mxu0 %v2580
    %4167 = vmatprep.subr.bf16.mxu0 %v2606
    %4168 = vmatpush1.bf16.msra.mxu0 %v2605
    %4169 = vmatprep.subr.bf16.mxu0 %v2631
    %4170 = vmatpush1.bf16.msra.mxu0 %v2630
    %4171 = vmatprep.subr.bf16.mxu0 %v2656
    %4172 = vmatpush1.bf16.msra.mxu0 %v2655
    %4173 = vmatprep.subr.bf16.mxu0 %v2681
    %4174 = vmatpush1.bf16.msra.mxu0 %v2680
    %4175 = vmatprep.subr.bf16.mxu0 %v2706
    %4176 = vmatpush1.bf16.msra.mxu0 %v2705
    %4177 = vmatprep.subr.bf16.mxu0 %v2731
    %4178 = vmatpush1.bf16.msra.mxu0 %v2730
    %4179 = vmatprep.subr.bf16.mxu0 %v2756
    %4180 = vmatpush1.bf16.msra.mxu0 %v2755
    %4181 = vmatprep.subr.bf16.mxu0 %v2781
    %4182 = vmatpush1.bf16.msra.mxu0 %v2780
    %4183 = vmatprep.subr.bf16.mxu0 %v2806
    %4184 = vmatpush1.bf16.msra.mxu0 %v2805
    %4185 = vmatprep.subr.bf16.mxu0 %v2831
    %4186 = vmatpush1.bf16.msra.mxu0 %v2830
    %4187 = vmatprep.subr.bf16.mxu0 %v2856
    %4188 = vmatpush1.bf16.msra.mxu0 %v2855
    %4189 = vmatprep.subr.bf16.mxu0 %v2881
    %4190 = vmatpush1.bf16.msra.mxu0 %v2880
    %4191 = vmatprep.subr.bf16.mxu0 %v2906
    %4192 = vmatpush1.bf16.msra.mxu0 %v2905
    %4193 = vmatprep.subr.bf16.mxu0 %v2931
    %4194 = vmatpush1.bf16.msra.mxu0 %v2930
    %4195 = vmatprep.mubr.bf16.mxu0 %v450
    %4196 = vmatmul.mubr.bf16.gmra.mrb[0].mxu0 %v449
    %v4197 = vpop.f32.mrb[0].mxu0
    %v4198 = vadd.f32 0.0, %v4197
    %v4199 = vpop.f32.mrb[0].mxu0
    %v4200 = vadd.f32 0.0, %v4199
    %v4201 = vpop.f32.mrb[0].mxu0
    %v4202 = vadd.f32 0.0, %v4201
    %v4203 = vpop.f32.mrb[0].mxu0
    %v4204 = vadd.f32 0.0, %v4203
    %4205 = vdwg.mxu0
    %4206 = vmatprep.subr.bf16.mxu0 %v2956
    %4207 = vmatpush1.bf16.msra.mxu0 %v2955
    %4208 = vmatprep.subr.bf16.mxu0 %v2981
    %4209 = vmatpush1.bf16.msra.mxu0 %v2980
    %4210 = vmatprep.subr.bf16.mxu0 %v3006
    %4211 = vmatpush1.bf16.msra.mxu0 %v3005
    %4212 = vmatprep.subr.bf16.mxu0 %v3031
    %4213 = vmatpush1.bf16.msra.mxu0 %v3030
    %4214 = vmatprep.subr.bf16.mxu0 %v3612
    %4215 = vmatpush1.bf16.msra.mxu0 %v3609
    %4216 = vmatprep.subr.bf16.mxu0 0
    %4217 = vmatpush1.bf16.msra.mxu0 0
    %4218 = vmatprep.subr.bf16.mxu0 0
    %4219 = vmatpush1.bf16.msra.mxu0 0
    %4220 = vmatprep.subr.bf16.mxu0 0
    %4221 = vmatpush1.bf16.msra.mxu0 0
    %4222 = vmatprep.subr.bf16.mxu0 0
    %4223 = vmatpush1.bf16.msra.mxu0 0
    %4224 = vmatprep.subr.bf16.mxu0 0
    %4225 = vmatpush1.bf16.msra.mxu0 0
    %4226 = vmatprep.subr.bf16.mxu0 0
    %4227 = vmatpush1.bf16.msra.mxu0 0
    %4228 = vmatprep.subr.bf16.mxu0 0
    %4229 = vmatpush1.bf16.msra.mxu0 0
    %4230 = vmatprep.subr.bf16.mxu0 0
    %4231 = vmatpush1.bf16.msra.mxu0 0
    %4232 = vmatprep.subr.bf16.mxu0 0
    %4233 = vmatpush1.bf16.msra.mxu0 0
    %4234 = vmatprep.subr.bf16.mxu0 0
    %4235 = vmatpush1.bf16.msra.mxu0 0
    %4236 = vmatprep.subr.bf16.mxu0 0
    %4237 = vmatpush1.bf16.msra.mxu0 0
    %4238 = vmatprep.mubr.bf16.mxu0 0
    %4239 = vmatmul.mubr.bf16.gmra.mrb[0].mxu0 %v3569
    %v4240 = vpop.f32.mrb[0].mxu0
    %v4241 = vadd.f32 %v4198, %v4240
    %v4242 = vpop.f32.mrb[0].mxu0
    %v4243 = vadd.f32 %v4200, %v4242
    %v4244 = vpop.f32.mrb[0].mxu0
    %v4245 = vadd.f32 %v4202, %v4244
    %v4246 = vpop.f32.mrb[0].mxu0
    %v4247 = vadd.f32 %v4204, %v4246
    %4248 = vdwg.mxu0
    %4249 = vmatprep.subr.bf16.mxu0 %v2558
    %4250 = vmatpush1.bf16.msra.mxu0 %v2557
    %4251 = vmatprep.subr.bf16.mxu0 %v2583
    %4252 = vmatpush1.bf16.msra.mxu0 %v2582
    %4253 = vmatprep.subr.bf16.mxu0 %v2608
    %4254 = vmatpush1.bf16.msra.mxu0 %v2607
    %4255 = vmatprep.subr.bf16.mxu0 %v2633
    %4256 = vmatpush1.bf16.msra.mxu0 %v2632
    %4257 = vmatprep.subr.bf16.mxu0 %v2658
    %4258 = vmatpush1.bf16.msra.mxu0 %v2657
    %4259 = vmatprep.subr.bf16.mxu0 %v2683
    %4260 = vmatpush1.bf16.msra.mxu0 %v2682
    %4261 = vmatprep.subr.bf16.mxu0 %v2708
    %4262 = vmatpush1.bf16.msra.mxu0 %v2707
    %4263 = vmatprep.subr.bf16.mxu0 %v2733
    %4264 = vmatpush1.bf16.msra.mxu0 %v2732
    %4265 = vmatprep.subr.bf16.mxu0 %v2758
    %4266 = vmatpush1.bf16.msra.mxu0 %v2757
    %4267 = vmatprep.subr.bf16.mxu0 %v2783
    %4268 = vmatpush1.bf16.msra.mxu0 %v2782
    %4269 = vmatprep.subr.bf16.mxu0 %v2808
    %4270 = vmatpush1.bf16.msra.mxu0 %v2807
    %4271 = vmatprep.subr.bf16.mxu0 %v2833
    %4272 = vmatpush1.bf16.msra.mxu0 %v2832
    %4273 = vmatprep.subr.bf16.mxu0 %v2858
    %4274 = vmatpush1.bf16.msra.mxu0 %v2857
    %4275 = vmatprep.subr.bf16.mxu0 %v2883
    %4276 = vmatpush1.bf16.msra.mxu0 %v2882
    %4277 = vmatprep.subr.bf16.mxu0 %v2908
    %4278 = vmatpush1.bf16.msra.mxu0 %v2907
    %4279 = vmatprep.subr.bf16.mxu0 %v2933
    %4280 = vmatpush1.bf16.msra.mxu0 %v2932
    %4281 = vmatprep.mubr.bf16.mxu0 %v450
    %4282 = vmatmul.mubr.bf16.gmra.mrb[0].mxu0 %v449
    %v4283 = vpop.f32.mrb[0].mxu0
    %v4284 = vadd.f32 0.0, %v4283
    %v4285 = vpop.f32.mrb[0].mxu0
    %v4286 = vadd.f32 0.0, %v4285
    %v4287 = vpop.f32.mrb[0].mxu0
    %v4288 = vadd.f32 0.0, %v4287
    %v4289 = vpop.f32.mrb[0].mxu0
    %v4290 = vadd.f32 0.0, %v4289
    %4291 = vdwg.mxu0
    %4292 = vmatprep.subr.bf16.mxu0 %v2958
    %4293 = vmatpush1.bf16.msra.mxu0 %v2957
    %4294 = vmatprep.subr.bf16.mxu0 %v2983
    %4295 = vmatpush1.bf16.msra.mxu0 %v2982
    %4296 = vmatprep.subr.bf16.mxu0 %v3008
    %4297 = vmatpush1.bf16.msra.mxu0 %v3007
    %4298 = vmatprep.subr.bf16.mxu0 %v3033
    %4299 = vmatpush1.bf16.msra.mxu0 %v3032
    %4300 = vmatprep.subr.bf16.mxu0 %v3618
    %4301 = vmatpush1.bf16.msra.mxu0 %v3615
    %4302 = vmatprep.subr.bf16.mxu0 0
    %4303 = vmatpush1.bf16.msra.mxu0 0
    %4304 = vmatprep.subr.bf16.mxu0 0
    %4305 = vmatpush1.bf16.msra.mxu0 0
    %4306 = vmatprep.subr.bf16.mxu0 0
    %4307 = vmatpush1.bf16.msra.mxu0 0
    %4308 = vmatprep.subr.bf16.mxu0 0
    %4309 = vmatpush1.bf16.msra.mxu0 0
    %4310 = vmatprep.subr.bf16.mxu0 0
    %4311 = vmatpush1.bf16.msra.mxu0 0
    %4312 = vmatprep.subr.bf16.mxu0 0
    %4313 = vmatpush1.bf16.msra.mxu0 0
    %4314 = vmatprep.subr.bf16.mxu0 0
    %4315 = vmatpush1.bf16.msra.mxu0 0
    %4316 = vmatprep.subr.bf16.mxu0 0
    %4317 = vmatpush1.bf16.msra.mxu0 0
    %4318 = vmatprep.subr.bf16.mxu0 0
    %4319 = vmatpush1.bf16.msra.mxu0 0
    %4320 = vmatprep.subr.bf16.mxu0 0
    %4321 = vmatpush1.bf16.msra.mxu0 0
    %4322 = vmatprep.subr.bf16.mxu0 0
    %4323 = vmatpush1.bf16.msra.mxu0 0
    %4324 = vmatprep.mubr.bf16.mxu0 0
    %4325 = vmatmul.mubr.bf16.gmra.mrb[0].mxu0 %v3569
    %v4326 = vpop.f32.mrb[0].mxu0
    %v4327 = vadd.f32 %v4284, %v4326
    %v4328 = vpop.f32.mrb[0].mxu0
    %v4329 = vadd.f32 %v4286, %v4328
    %v4330 = vpop.f32.mrb[0].mxu0
    %v4331 = vadd.f32 %v4288, %v4330
    %v4332 = vpop.f32.mrb[0].mxu0
    %v4333 = vadd.f32 %v4290, %v4332
    %4334 = vdwg.mxu0
    %4335 = vmatprep.subr.bf16.mxu0 %v2560
    %4336 = vmatpush1.bf16.msra.mxu0 %v2559
    %4337 = vmatprep.subr.bf16.mxu0 %v2585
    %4338 = vmatpush1.bf16.msra.mxu0 %v2584
    %4339 = vmatprep.subr.bf16.mxu0 %v2610
    %4340 = vmatpush1.bf16.msra.mxu0 %v2609
    %4341 = vmatprep.subr.bf16.mxu0 %v2635
    %4342 = vmatpush1.bf16.msra.mxu0 %v2634
    %4343 = vmatprep.subr.bf16.mxu0 %v2660
    %4344 = vmatpush1.bf16.msra.mxu0 %v2659
    %4345 = vmatprep.subr.bf16.mxu0 %v2685
    %4346 = vmatpush1.bf16.msra.mxu0 %v2684
    %4347 = vmatprep.subr.bf16.mxu0 %v2710
    %4348 = vmatpush1.bf16.msra.mxu0 %v2709
    %4349 = vmatprep.subr.bf16.mxu0 %v2735
    %4350 = vmatpush1.bf16.msra.mxu0 %v2734
    %4351 = vmatprep.subr.bf16.mxu0 %v2760
    %4352 = vmatpush1.bf16.msra.mxu0 %v2759
    %4353 = vmatprep.subr.bf16.mxu0 %v2785
    %4354 = vmatpush1.bf16.msra.mxu0 %v2784
    %4355 = vmatprep.subr.bf16.mxu0 %v2810
    %4356 = vmatpush1.bf16.msra.mxu0 %v2809
    %4357 = vmatprep.subr.bf16.mxu0 %v2835
    %4358 = vmatpush1.bf16.msra.mxu0 %v2834
    %4359 = vmatprep.subr.bf16.mxu0 %v2860
    %4360 = vmatpush1.bf16.msra.mxu0 %v2859
    %4361 = vmatprep.subr.bf16.mxu0 %v2885
    %4362 = vmatpush1.bf16.msra.mxu0 %v2884
    %4363 = vmatprep.subr.bf16.mxu0 %v2910
    %4364 = vmatpush1.bf16.msra.mxu0 %v2909
    %4365 = vmatprep.subr.bf16.mxu0 %v2935
    %4366 = vmatpush1.bf16.msra.mxu0 %v2934
    %4367 = vmatprep.mubr.bf16.mxu0 %v450
    %4368 = vmatmul.mubr.bf16.gmra.mrb[0].mxu0 %v449
    %v4369 = vpop.f32.mrb[0].mxu0
    %v4370 = vadd.f32 0.0, %v4369
    %v4371 = vpop.f32.mrb[0].mxu0
    %v4372 = vadd.f32 0.0, %v4371
    %v4373 = vpop.f32.mrb[0].mxu0
    %v4374 = vadd.f32 0.0, %v4373
    %v4375 = vpop.f32.mrb[0].mxu0
    %v4376 = vadd.f32 0.0, %v4375
    %4377 = vdwg.mxu0
    %4378 = vmatprep.subr.bf16.mxu0 %v2960
    %4379 = vmatpush1.bf16.msra.mxu0 %v2959
    %4380 = vmatprep.subr.bf16.mxu0 %v2985
    %4381 = vmatpush1.bf16.msra.mxu0 %v2984
    %4382 = vmatprep.subr.bf16.mxu0 %v3010
    %4383 = vmatpush1.bf16.msra.mxu0 %v3009
    %4384 = vmatprep.subr.bf16.mxu0 %v3035
    %4385 = vmatpush1.bf16.msra.mxu0 %v3034
    %4386 = vmatprep.subr.bf16.mxu0 %v3624
    %4387 = vmatpush1.bf16.msra.mxu0 %v3621
    %4388 = vmatprep.subr.bf16.mxu0 0
    %4389 = vmatpush1.bf16.msra.mxu0 0
    %4390 = vmatprep.subr.bf16.mxu0 0
    %4391 = vmatpush1.bf16.msra.mxu0 0
    %4392 = vmatprep.subr.bf16.mxu0 0
    %4393 = vmatpush1.bf16.msra.mxu0 0
    %4394 = vmatprep.subr.bf16.mxu0 0
    %4395 = vmatpush1.bf16.msra.mxu0 0
    %4396 = vmatprep.subr.bf16.mxu0 0
    %4397 = vmatpush1.bf16.msra.mxu0 0
    %4398 = vmatprep.subr.bf16.mxu0 0
    %4399 = vmatpush1.bf16.msra.mxu0 0
    %4400 = vmatprep.subr.bf16.mxu0 0
    %4401 = vmatpush1.bf16.msra.mxu0 0
    %4402 = vmatprep.subr.bf16.mxu0 0
    %4403 = vmatpush1.bf16.msra.mxu0 0
    %4404 = vmatprep.subr.bf16.mxu0 0
    %4405 = vmatpush1.bf16.msra.mxu0 0
    %4406 = vmatprep.subr.bf16.mxu0 0
    %4407 = vmatpush1.bf16.msra.mxu0 0
    %4408 = vmatprep.subr.bf16.mxu0 0
    %4409 = vmatpush1.bf16.msra.mxu0 0
    %4410 = vmatprep.mubr.bf16.mxu0 0
    %4411 = vmatmul.mubr.bf16.gmra.mrb[0].mxu0 %v3569
    %v4412 = vpop.f32.mrb[0].mxu0
    %v4413 = vadd.f32 %v4370, %v4412
    %v4414 = vpop.f32.mrb[0].mxu0
    %v4415 = vadd.f32 %v4372, %v4414
    %v4416 = vpop.f32.mrb[0].mxu0
    %v4417 = vadd.f32 %v4374, %v4416
    %v4418 = vpop.f32.mrb[0].mxu0
    %v4419 = vadd.f32 %v4376, %v4418
    %4420 = vdwg.mxu0
    %4421 = vmatprep.subr.bf16.mxu0 %v2562
    %4422 = vmatpush1.bf16.msra.mxu0 %v2561
    %4423 = vmatprep.subr.bf16.mxu0 %v2587
    %4424 = vmatpush1.bf16.msra.mxu0 %v2586
    %4425 = vmatprep.subr.bf16.mxu0 %v2612
    %4426 = vmatpush1.bf16.msra.mxu0 %v2611
    %4427 = vmatprep.subr.bf16.mxu0 %v2637
    %4428 = vmatpush1.bf16.msra.mxu0 %v2636
    %4429 = vmatprep.subr.bf16.mxu0 %v2662
    %4430 = vmatpush1.bf16.msra.mxu0 %v2661
    %4431 = vmatprep.subr.bf16.mxu0 %v2687
    %4432 = vmatpush1.bf16.msra.mxu0 %v2686
    %4433 = vmatprep.subr.bf16.mxu0 %v2712
    %4434 = vmatpush1.bf16.msra.mxu0 %v2711
    %4435 = vmatprep.subr.bf16.mxu0 %v2737
    %4436 = vmatpush1.bf16.msra.mxu0 %v2736
    %4437 = vmatprep.subr.bf16.mxu0 %v2762
    %4438 = vmatpush1.bf16.msra.mxu0 %v2761
    %4439 = vmatprep.subr.bf16.mxu0 %v2787
    %4440 = vmatpush1.bf16.msra.mxu0 %v2786
    %4441 = vmatprep.subr.bf16.mxu0 %v2812
    %4442 = vmatpush1.bf16.msra.mxu0 %v2811
    %4443 = vmatprep.subr.bf16.mxu0 %v2837
    %4444 = vmatpush1.bf16.msra.mxu0 %v2836
    %4445 = vmatprep.subr.bf16.mxu0 %v2862
    %4446 = vmatpush1.bf16.msra.mxu0 %v2861
    %4447 = vmatprep.subr.bf16.mxu0 %v2887
    %4448 = vmatpush1.bf16.msra.mxu0 %v2886
    %4449 = vmatprep.subr.bf16.mxu0 %v2912
    %4450 = vmatpush1.bf16.msra.mxu0 %v2911
    %4451 = vmatprep.subr.bf16.mxu0 %v2937
    %4452 = vmatpush1.bf16.msra.mxu0 %v2936
    %4453 = vmatprep.mubr.bf16.mxu0 %v450
    %4454 = vmatmul.mubr.bf16.gmra.mrb[0].mxu0 %v449
    %v4455 = vpop.f32.mrb[0].mxu0
    %v4456 = vadd.f32 0.0, %v4455
    %v4457 = vpop.f32.mrb[0].mxu0
    %v4458 = vadd.f32 0.0, %v4457
    %v4459 = vpop.f32.mrb[0].mxu0
    %v4460 = vadd.f32 0.0, %v4459
    %v4461 = vpop.f32.mrb[0].mxu0
    %v4462 = vadd.f32 0.0, %v4461
    %4463 = vdwg.mxu0
    %4464 = vmatprep.subr.bf16.mxu0 %v2962
    %4465 = vmatpush1.bf16.msra.mxu0 %v2961
    %4466 = vmatprep.subr.bf16.mxu0 %v2987
    %4467 = vmatpush1.bf16.msra.mxu0 %v2986
    %4468 = vmatprep.subr.bf16.mxu0 %v3012
    %4469 = vmatpush1.bf16.msra.mxu0 %v3011
    %4470 = vmatprep.subr.bf16.mxu0 %v3037
    %4471 = vmatpush1.bf16.msra.mxu0 %v3036
    %4472 = vmatprep.subr.bf16.mxu0 %v3630
    %4473 = vmatpush1.bf16.msra.mxu0 %v3627
    %4474 = vmatprep.subr.bf16.mxu0 0
    %4475 = vmatpush1.bf16.msra.mxu0 0
    %4476 = vmatprep.subr.bf16.mxu0 0
    %4477 = vmatpush1.bf16.msra.mxu0 0
    %4478 = vmatprep.subr.bf16.mxu0 0
    %4479 = vmatpush1.bf16.msra.mxu0 0
    %4480 = vmatprep.subr.bf16.mxu0 0
    %4481 = vmatpush1.bf16.msra.mxu0 0
    %4482 = vmatprep.subr.bf16.mxu0 0
    %4483 = vmatpush1.bf16.msra.mxu0 0
    %4484 = vmatprep.subr.bf16.mxu0 0
    %4485 = vmatpush1.bf16.msra.mxu0 0
    %4486 = vmatprep.subr.bf16.mxu0 0
    %4487 = vmatpush1.bf16.msra.mxu0 0
    %4488 = vmatprep.subr.bf16.mxu0 0
    %4489 = vmatpush1.bf16.msra.mxu0 0
    %4490 = vmatprep.subr.bf16.mxu0 0
    %4491 = vmatpush1.bf16.msra.mxu0 0
    %4492 = vmatprep.subr.bf16.mxu0 0
    %4493 = vmatpush1.bf16.msra.mxu0 0
    %4494 = vmatprep.subr.bf16.mxu0 0
    %4495 = vmatpush1.bf16.msra.mxu0 0
    %4496 = vmatprep.mubr.bf16.mxu0 0
    %4497 = vmatmul.mubr.bf16.gmra.mrb[0].mxu0 %v3569
    %v4498 = vpop.f32.mrb[0].mxu0
    %v4499 = vadd.f32 %v4456, %v4498
    %v4500 = vpop.f32.mrb[0].mxu0
    %v4501 = vadd.f32 %v4458, %v4500
    %v4502 = vpop.f32.mrb[0].mxu0
    %v4503 = vadd.f32 %v4460, %v4502
    %v4504 = vpop.f32.mrb[0].mxu0
    %v4505 = vadd.f32 %v4462, %v4504
    %4506 = vdwg.mxu0
    %4507 = vmatprep.subr.bf16.mxu0 %v2564
    %4508 = vmatpush1.bf16.msra.mxu0 %v2563
    %4509 = vmatprep.subr.bf16.mxu0 %v2589
    %4510 = vmatpush1.bf16.msra.mxu0 %v2588
    %4511 = vmatprep.subr.bf16.mxu0 %v2614
    %4512 = vmatpush1.bf16.msra.mxu0 %v2613
    %4513 = vmatprep.subr.bf16.mxu0 %v2639
    %4514 = vmatpush1.bf16.msra.mxu0 %v2638
    %4515 = vmatprep.subr.bf16.mxu0 %v2664
    %4516 = vmatpush1.bf16.msra.mxu0 %v2663
    %4517 = vmatprep.subr.bf16.mxu0 %v2689
    %4518 = vmatpush1.bf16.msra.mxu0 %v2688
    %4519 = vmatprep.subr.bf16.mxu0 %v2714
    %4520 = vmatpush1.bf16.msra.mxu0 %v2713
    %4521 = vmatprep.subr.bf16.mxu0 %v2739
    %4522 = vmatpush1.bf16.msra.mxu0 %v2738
    %4523 = vmatprep.subr.bf16.mxu0 %v2764
    %4524 = vmatpush1.bf16.msra.mxu0 %v2763
    %4525 = vmatprep.subr.bf16.mxu0 %v2789
    %4526 = vmatpush1.bf16.msra.mxu0 %v2788
    %4527 = vmatprep.subr.bf16.mxu0 %v2814
    %4528 = vmatpush1.bf16.msra.mxu0 %v2813
    %4529 = vmatprep.subr.bf16.mxu0 %v2839
    %4530 = vmatpush1.bf16.msra.mxu0 %v2838
    %4531 = vmatprep.subr.bf16.mxu0 %v2864
    %4532 = vmatpush1.bf16.msra.mxu0 %v2863
    %4533 = vmatprep.subr.bf16.mxu0 %v2889
    %4534 = vmatpush1.bf16.msra.mxu0 %v2888
    %4535 = vmatprep.subr.bf16.mxu0 %v2914
    %4536 = vmatpush1.bf16.msra.mxu0 %v2913
    %4537 = vmatprep.subr.bf16.mxu0 %v2939
    %4538 = vmatpush1.bf16.msra.mxu0 %v2938
    %4539 = vmatprep.mubr.bf16.mxu0 %v450
    %4540 = vmatmul.mubr.bf16.gmra.mrb[0].mxu0 %v449
    %v4541 = vpop.f32.mrb[0].mxu0
    %v4542 = vadd.f32 0.0, %v4541
    %v4543 = vpop.f32.mrb[0].mxu0
    %v4544 = vadd.f32 0.0, %v4543
    %v4545 = vpop.f32.mrb[0].mxu0
    %v4546 = vadd.f32 0.0, %v4545
    %v4547 = vpop.f32.mrb[0].mxu0
    %v4548 = vadd.f32 0.0, %v4547
    %4549 = vdwg.mxu0
    %4550 = vmatprep.subr.bf16.mxu0 %v2964
    %4551 = vmatpush1.bf16.msra.mxu0 %v2963
    %4552 = vmatprep.subr.bf16.mxu0 %v2989
    %4553 = vmatpush1.bf16.msra.mxu0 %v2988
    %4554 = vmatprep.subr.bf16.mxu0 %v3014
    %4555 = vmatpush1.bf16.msra.mxu0 %v3013
    %4556 = vmatprep.subr.bf16.mxu0 %v3039
    %4557 = vmatpush1.bf16.msra.mxu0 %v3038
    %4558 = vmatprep.subr.bf16.mxu0 %v3636
    %4559 = vmatpush1.bf16.msra.mxu0 %v3633
    %4560 = vmatprep.subr.bf16.mxu0 0
    %4561 = vmatpush1.bf16.msra.mxu0 0
    %4562 = vmatprep.subr.bf16.mxu0 0
    %4563 = vmatpush1.bf16.msra.mxu0 0
    %4564 = vmatprep.subr.bf16.mxu0 0
    %4565 = vmatpush1.bf16.msra.mxu0 0
    %4566 = vmatprep.subr.bf16.mxu0 0
    %4567 = vmatpush1.bf16.msra.mxu0 0
    %4568 = vmatprep.subr.bf16.mxu0 0
    %4569 = vmatpush1.bf16.msra.mxu0 0
    %4570 = vmatprep.subr.bf16.mxu0 0
    %4571 = vmatpush1.bf16.msra.mxu0 0
    %4572 = vmatprep.subr.bf16.mxu0 0
    %4573 = vmatpush1.bf16.msra.mxu0 0
    %4574 = vmatprep.subr.bf16.mxu0 0
    %4575 = vmatpush1.bf16.msra.mxu0 0
    %4576 = vmatprep.subr.bf16.mxu0 0
    %4577 = vmatpush1.bf16.msra.mxu0 0
    %4578 = vmatprep.subr.bf16.mxu0 0
    %4579 = vmatpush1.bf16.msra.mxu0 0
    %4580 = vmatprep.subr.bf16.mxu0 0
    %4581 = vmatpush1.bf16.msra.mxu0 0
    %4582 = vmatprep.mubr.bf16.mxu0 0
    %4583 = vmatmul.mubr.bf16.gmra.mrb[0].mxu0 %v3569
    %v4584 = vpop.f32.mrb[0].mxu0
    %v4585 = vadd.f32 %v4542, %v4584
    %v4586 = vpop.f32.mrb[0].mxu0
    %v4587 = vadd.f32 %v4544, %v4586
    %v4588 = vpop.f32.mrb[0].mxu0
    %v4589 = vadd.f32 %v4546, %v4588
    %v4590 = vpop.f32.mrb[0].mxu0
    %v4591 = vadd.f32 %v4548, %v4590
    %4592 = vdwg.mxu0
    %4593 = vmatprep.subr.bf16.mxu0 %v2566
    %4594 = vmatpush1.bf16.msra.mxu0 %v2565
    %4595 = vmatprep.subr.bf16.mxu0 %v2591
    %4596 = vmatpush1.bf16.msra.mxu0 %v2590
    %4597 = vmatprep.subr.bf16.mxu0 %v2616
    %4598 = vmatpush1.bf16.msra.mxu0 %v2615
    %4599 = vmatprep.subr.bf16.mxu0 %v2641
    %4600 = vmatpush1.bf16.msra.mxu0 %v2640
    %4601 = vmatprep.subr.bf16.mxu0 %v2666
    %4602 = vmatpush1.bf16.msra.mxu0 %v2665
    %4603 = vmatprep.subr.bf16.mxu0 %v2691
    %4604 = vmatpush1.bf16.msra.mxu0 %v2690
    %4605 = vmatprep.subr.bf16.mxu0 %v2716
    %4606 = vmatpush1.bf16.msra.mxu0 %v2715
    %4607 = vmatprep.subr.bf16.mxu0 %v2741
    %4608 = vmatpush1.bf16.msra.mxu0 %v2740
    %4609 = vmatprep.subr.bf16.mxu0 %v2766
    %4610 = vmatpush1.bf16.msra.mxu0 %v2765
    %4611 = vmatprep.subr.bf16.mxu0 %v2791
    %4612 = vmatpush1.bf16.msra.mxu0 %v2790
    %4613 = vmatprep.subr.bf16.mxu0 %v2816
    %4614 = vmatpush1.bf16.msra.mxu0 %v2815
    %4615 = vmatprep.subr.bf16.mxu0 %v2841
    %4616 = vmatpush1.bf16.msra.mxu0 %v2840
    %4617 = vmatprep.subr.bf16.mxu0 %v2866
    %4618 = vmatpush1.bf16.msra.mxu0 %v2865
    %4619 = vmatprep.subr.bf16.mxu0 %v2891
    %4620 = vmatpush1.bf16.msra.mxu0 %v2890
    %4621 = vmatprep.subr.bf16.mxu0 %v2916
    %4622 = vmatpush1.bf16.msra.mxu0 %v2915
    %4623 = vmatprep.subr.bf16.mxu0 %v2941
    %4624 = vmatpush1.bf16.msra.mxu0 %v2940
    %4625 = vmatprep.mubr.bf16.mxu0 %v450
    %4626 = vmatmul.mubr.bf16.gmra.mrb[0].mxu0 %v449
    %v4627 = vpop.f32.mrb[0].mxu0
    %v4628 = vadd.f32 0.0, %v4627
    %v4629 = vpop.f32.mrb[0].mxu0
    %v4630 = vadd.f32 0.0, %v4629
    %v4631 = vpop.f32.mrb[0].mxu0
    %v4632 = vadd.f32 0.0, %v4631
    %v4633 = vpop.f32.mrb[0].mxu0
    %v4634 = vadd.f32 0.0, %v4633
    %4635 = vdwg.mxu0
    %4636 = vmatprep.subr.bf16.mxu0 %v2966
    %4637 = vmatpush1.bf16.msra.mxu0 %v2965
    %4638 = vmatprep.subr.bf16.mxu0 %v2991
    %4639 = vmatpush1.bf16.msra.mxu0 %v2990
    %4640 = vmatprep.subr.bf16.mxu0 %v3016
    %4641 = vmatpush1.bf16.msra.mxu0 %v3015
    %4642 = vmatprep.subr.bf16.mxu0 %v3041
    %4643 = vmatpush1.bf16.msra.mxu0 %v3040
    %4644 = vmatprep.subr.bf16.mxu0 %v3642
    %4645 = vmatpush1.bf16.msra.mxu0 %v3639
    %4646 = vmatprep.subr.bf16.mxu0 0
    %4647 = vmatpush1.bf16.msra.mxu0 0
    %4648 = vmatprep.subr.bf16.mxu0 0
    %4649 = vmatpush1.bf16.msra.mxu0 0
    %4650 = vmatprep.subr.bf16.mxu0 0
    %4651 = vmatpush1.bf16.msra.mxu0 0
    %4652 = vmatprep.subr.bf16.mxu0 0
    %4653 = vmatpush1.bf16.msra.mxu0 0
    %4654 = vmatprep.subr.bf16.mxu0 0
    %4655 = vmatpush1.bf16.msra.mxu0 0
    %4656 = vmatprep.subr.bf16.mxu0 0
    %4657 = vmatpush1.bf16.msra.mxu0 0
    %4658 = vmatprep.subr.bf16.mxu0 0
    %4659 = vmatpush1.bf16.msra.mxu0 0
    %4660 = vmatprep.subr.bf16.mxu0 0
    %4661 = vmatpush1.bf16.msra.mxu0 0
    %4662 = vmatprep.subr.bf16.mxu0 0
    %4663 = vmatpush1.bf16.msra.mxu0 0
    %4664 = vmatprep.subr.bf16.mxu0 0
    %4665 = vmatpush1.bf16.msra.mxu0 0
    %4666 = vmatprep.subr.bf16.mxu0 0
    %4667 = vmatpush1.bf16.msra.mxu0 0
    %4668 = vmatprep.mubr.bf16.mxu0 0
    %4669 = vmatmul.mubr.bf16.gmra.mrb[0].mxu0 %v3569
    %v4670 = vpop.f32.mrb[0].mxu0
    %v4671 = vadd.f32 %v4628, %v4670
    %v4672 = vpop.f32.mrb[0].mxu0
    %v4673 = vadd.f32 %v4630, %v4672
    %v4674 = vpop.f32.mrb[0].mxu0
    %v4675 = vadd.f32 %v4632, %v4674
    %v4676 = vpop.f32.mrb[0].mxu0
    %v4677 = vadd.f32 %v4634, %v4676
    %4678 = vdwg.mxu0
    %4679 = vmatprep.subr.bf16.mxu0 0
    %4680 = vmatpush1.bf16.msra.mxu0 %v2567
    %4681 = vmatprep.subr.bf16.mxu0 0
    %4682 = vmatpush1.bf16.msra.mxu0 %v2592
    %4683 = vmatprep.subr.bf16.mxu0 0
    %4684 = vmatpush1.bf16.msra.mxu0 %v2617
    %4685 = vmatprep.subr.bf16.mxu0 0
    %4686 = vmatpush1.bf16.msra.mxu0 %v2642
    %4687 = vmatprep.subr.bf16.mxu0 0
    %4688 = vmatpush1.bf16.msra.mxu0 %v2667
    %4689 = vmatprep.subr.bf16.mxu0 0
    %4690 = vmatpush1.bf16.msra.mxu0 %v2692
    %4691 = vmatprep.subr.bf16.mxu0 0
    %4692 = vmatpush1.bf16.msra.mxu0 %v2717
    %4693 = vmatprep.subr.bf16.mxu0 0
    %4694 = vmatpush1.bf16.msra.mxu0 %v2742
    %4695 = vmatprep.subr.bf16.mxu0 0
    %4696 = vmatpush1.bf16.msra.mxu0 %v2767
    %4697 = vmatprep.subr.bf16.mxu0 0
    %4698 = vmatpush1.bf16.msra.mxu0 %v2792
    %4699 = vmatprep.subr.bf16.mxu0 0
    %4700 = vmatpush1.bf16.msra.mxu0 %v2817
    %4701 = vmatprep.subr.bf16.mxu0 0
    %4702 = vmatpush1.bf16.msra.mxu0 %v2842
    %4703 = vmatprep.subr.bf16.mxu0 0
    %4704 = vmatpush1.bf16.msra.mxu0 %v2867
    %4705 = vmatprep.subr.bf16.mxu0 0
    %4706 = vmatpush1.bf16.msra.mxu0 %v2892
    %4707 = vmatprep.subr.bf16.mxu0 0
    %4708 = vmatpush1.bf16.msra.mxu0 %v2917
    %4709 = vmatprep.subr.bf16.mxu0 0
    %4710 = vmatpush1.bf16.msra.mxu0 %v2942
    %4711 = vmatprep.mubr.bf16.mxu0 %v450
    %4712 = vmatmul.mubr.bf16.gmra.mrb[0].mxu0 %v449
    %v4713 = vpop.f32.mrb[0].mxu0
    %v4714 = vadd.f32 0.0, %v4713
    %v4715 = vpop.f32.mrb[0].mxu0
    %v4716 = vpop.f32.mrb[0].mxu0
    %v4717 = vadd.f32 0.0, %v4716
    %v4718 = vpop.f32.mrb[0].mxu0
    %4719 = vdwg.mxu0
    %4720 = vmatprep.subr.bf16.mxu0 0
    %4721 = vmatpush1.bf16.msra.mxu0 %v2967
    %4722 = vmatprep.subr.bf16.mxu0 0
    %4723 = vmatpush1.bf16.msra.mxu0 %v2992
    %4724 = vmatprep.subr.bf16.mxu0 0
    %4725 = vmatpush1.bf16.msra.mxu0 %v3017
    %4726 = vmatprep.subr.bf16.mxu0 0
    %4727 = vmatpush1.bf16.msra.mxu0 %v3042
    %4728 = vmatprep.subr.bf16.mxu0 0
    %4729 = vmatpush1.bf16.msra.mxu0 %v3645
    %4730 = vmatprep.subr.bf16.mxu0 0
    %4731 = vmatpush1.bf16.msra.mxu0 0
    %4732 = vmatprep.subr.bf16.mxu0 0
    %4733 = vmatpush1.bf16.msra.mxu0 0
    %4734 = vmatprep.subr.bf16.mxu0 0
    %4735 = vmatpush1.bf16.msra.mxu0 0
    %4736 = vmatprep.subr.bf16.mxu0 0
    %4737 = vmatpush1.bf16.msra.mxu0 0
    %4738 = vmatprep.subr.bf16.mxu0 0
    %4739 = vmatpush1.bf16.msra.mxu0 0
    %4740 = vmatprep.subr.bf16.mxu0 0
    %4741 = vmatpush1.bf16.msra.mxu0 0
    %4742 = vmatprep.subr.bf16.mxu0 0
    %4743 = vmatpush1.bf16.msra.mxu0 0
    %4744 = vmatprep.subr.bf16.mxu0 0
    %4745 = vmatpush1.bf16.msra.mxu0 0
    %4746 = vmatprep.subr.bf16.mxu0 0
    %4747 = vmatpush1.bf16.msra.mxu0 0
    %4748 = vmatprep.subr.bf16.mxu0 0
    %4749 = vmatpush1.bf16.msra.mxu0 0
    %4750 = vmatprep.subr.bf16.mxu0 0
    %4751 = vmatpush1.bf16.msra.mxu0 0
    %4752 = vmatprep.mubr.bf16.mxu0 0
    %4753 = vmatmul.mubr.bf16.gmra.mrb[0].mxu0 %v3569
    %v4754 = vpop.f32.mrb[0].mxu0
    %v4755 = vadd.f32 %v4714, %v4754
    %v4756 = vpop.f32.mrb[0].mxu0
    %v4757 = vpop.f32.mrb[0].mxu0
    %v4758 = vadd.f32 %v4717, %v4757
    %v4759 = vpop.f32.mrb[0].mxu0
    %4760 = vdwg.mxu0
    %v4761 = vpack.c.bf16 %v3729, %v3725
    %v4762 = vpack.c.bf16 %v3731, %v3727
    %v4763 = vpack.c.bf16 %v3815, %v3811
    %v4764 = vpack.c.bf16 %v3817, %v3813
    %v4765 = vpack.c.bf16 %v3901, %v3897
    %v4766 = vpack.c.bf16 %v3903, %v3899
    %v4767 = vpack.c.bf16 %v3987, %v3983
    %v4768 = vpack.c.bf16 %v3989, %v3985
    %v4769 = vpack.c.bf16 %v4073, %v4069
    %v4770 = vpack.c.bf16 %v4075, %v4071
    %v4771 = vpack.c.bf16 %v4159, %v4155
    %v4772 = vpack.c.bf16 %v4161, %v4157
    %v4773 = vpack.c.bf16 %v4245, %v4241
    %v4774 = vpack.c.bf16 %v4247, %v4243
    %v4775 = vpack.c.bf16 %v4331, %v4327
    %v4776 = vpack.c.bf16 %v4333, %v4329
    %v4777 = vpack.c.bf16 %v4417, %v4413
    %v4778 = vpack.c.bf16 %v4419, %v4415
    %v4779 = vpack.c.bf16 %v4503, %v4499
    %v4780 = vpack.c.bf16 %v4505, %v4501
    %v4781 = vpack.c.bf16 %v4589, %v4585
    %v4782 = vpack.c.bf16 %v4591, %v4587
    %v4783 = vpack.c.bf16 %v4675, %v4671
    %v4784 = vpack.c.bf16 %v4677, %v4673
    %v4785 = vpack.c.bf16 %v4758, %v4755
    %4786 = vst [vmem:[#allocation2] sm:$0xff] %v4761
    %4787 = vst [vmem:[#allocation2 + $0x8] sm:$0xff] %v4762
    %4788 = vst [vmem:[#allocation2 + $0x10] sm:$0xff] %v4763
    %4789 = vst [vmem:[#allocation2 + $0x18] sm:$0xff] %v4764
    %4790 = vst [vmem:[#allocation2 + $0x20] sm:$0xff] %v4765
    %4791 = vst [vmem:[#allocation2 + $0x28] sm:$0xff] %v4766
    %4792 = vst [vmem:[#allocation2 + $0x30] sm:$0xff] %v4767
    %4793 = vst [vmem:[#allocation2 + $0x38] sm:$0xff] %v4768
    %4794 = vst [vmem:[#allocation2 + $0x40] sm:$0xff] %v4769
    %4795 = vst [vmem:[#allocation2 + $0x48] sm:$0xff] %v4770
    %4796 = vst [vmem:[#allocation2 + $0x50] sm:$0xff] %v4771
    %4797 = vst [vmem:[#allocation2 + $0x58] sm:$0xff] %v4772
    %4798 = vst [vmem:[#allocation2 + $0x60] sm:$0xff] %v4773
    %4799 = vst [vmem:[#allocation2 + $0x68] sm:$0xff] %v4774
    %4800 = vst [vmem:[#allocation2 + $0x70] sm:$0xff] %v4775
    %4801 = vst [vmem:[#allocation2 + $0x78] sm:$0xff] %v4776
    %4802 = vst [vmem:[#allocation2 + $0x80] sm:$0xff] %v4777
    %4803 = vst [vmem:[#allocation2 + $0x88] sm:$0xff] %v4778
    %4804 = vst [vmem:[#allocation2 + $0x90] sm:$0xff] %v4779
    %4805 = vst [vmem:[#allocation2 + $0x98] sm:$0xff] %v4780
    %4806 = vst [vmem:[#allocation2 + $0xa0] sm:$0xff] %v4781
    %4807 = vst [vmem:[#allocation2 + $0xa8] sm:$0xff] %v4782
    %4808 = vst [vmem:[#allocation2 + $0xb0] sm:$0xff] %v4783
    %4809 = vst [vmem:[#allocation2 + $0xb8] sm:$0xff] %v4784
    %4810 = vst [vmem:[#allocation2 + $0xc0] sm:$0xff] %v4785
    %v4811 = vld [vmem:[#allocation9] sm:$0xff]
    %v4812 = vld [vmem:[#allocation9 + $0x8] sm:$0xff]
    %v4813 = vld [vmem:[#allocation9 + $0x10] sm:$0xff]
    %v4814 = vld [vmem:[#allocation9 + $0x18] sm:$0xff]
    %v4815 = vld [vmem:[#allocation9 + $0x20] sm:$0xff]
    %v4816 = vld [vmem:[#allocation9 + $0x28] sm:$0xff]
    %v4817 = vld [vmem:[#allocation9 + $0x30] sm:$0xff]
    %v4818 = vld [vmem:[#allocation9 + $0x38] sm:$0xff]
    %v4819 = vld [vmem:[#allocation2] sm:$0xff]
    %v4820 = vld [vmem:[#allocation2 + $0x8] sm:$0xff]
    %v4821 = vld [vmem:[#allocation2 + $0x10] sm:$0xff]
    %v4822 = vld [vmem:[#allocation2 + $0x18] sm:$0xff]
    %v4823 = vld [vmem:[#allocation2 + $0x20] sm:$0xff]
    %v4824 = vld [vmem:[#allocation2 + $0x28] sm:$0xff]
    %v4825 = vld [vmem:[#allocation2 + $0x30] sm:$0xff]
    %v4826 = vld [vmem:[#allocation2 + $0x38] sm:$0xff]
    %v4827 = vld [vmem:[#allocation2 + $0x40] sm:$0xff]
    %v4828 = vld [vmem:[#allocation2 + $0x48] sm:$0xff]
    %v4829 = vld [vmem:[#allocation2 + $0x50] sm:$0xff]
    %v4830 = vld [vmem:[#allocation2 + $0x58] sm:$0xff]
    %v4831 = vld [vmem:[#allocation2 + $0x60] sm:$0xff]
    %v4832 = vld [vmem:[#allocation2 + $0x68] sm:$0xff]
    %v4833 = vld [vmem:[#allocation2 + $0x70] sm:$0xff]
    %v4834 = vld [vmem:[#allocation2 + $0x78] sm:$0xff]
    %v4835 = vld [vmem:[#allocation2 + $0x80] sm:$0xff]
    %v4836 = vld [vmem:[#allocation2 + $0x88] sm:$0xff]
    %v4837 = vld [vmem:[#allocation2 + $0x90] sm:$0xff]
    %v4838 = vld [vmem:[#allocation2 + $0x98] sm:$0xff]
    %v4839 = vld [vmem:[#allocation2 + $0xa0] sm:$0xff]
    %v4840 = vld [vmem:[#allocation2 + $0xa8] sm:$0xff]
    %v4841 = vld [vmem:[#allocation2 + $0xb0] sm:$0xff]
    %v4842 = vld [vmem:[#allocation2 + $0xb8] sm:$0xff]
    %v4843 = vld [vmem:[#allocation2 + $0xc0] sm:$0xff]
    %v4852 = vunpack.c.l.b16 %v4811
    %v4853 = vunpack.c.h.b16 %v4811
    %v4854 = vunpack.c.l.b16 %v4812
    %v4855 = vunpack.c.h.b16 %v4812
    %v4856 = vunpack.c.l.b16 %v4813
    %v4857 = vunpack.c.h.b16 %v4813
    %v4858 = vunpack.c.l.b16 %v4814
    %v4859 = vunpack.c.h.b16 %v4814
    %v4860 = vunpack.c.l.b16 %v4815
    %v4861 = vunpack.c.h.b16 %v4815
    %v4862 = vunpack.c.l.b16 %v4816
    %v4863 = vunpack.c.h.b16 %v4816
    %v4864 = vunpack.c.l.b16 %v4817
    %v4865 = vunpack.c.h.b16 %v4817
    %v4866 = vunpack.c.l.b16 %v4818
    %v4867 = vunpack.c.h.b16 %v4818
    %v4868 = vpack.c.b16 %v4856, %v4852
    %v4869 = vpack.c.b16 %v4857, %v4853
    %v4870 = vpack.c.b16 %v4858, %v4854
    %v4871 = vpack.c.b16 %v4859, %v4855
    %v4872 = vpack.c.b16 %v4864, %v4860
    %v4873 = vpack.c.b16 %v4865, %v4861
    %v4874 = vpack.c.b16 %v4866, %v4862
    %v4875 = vpack.c.b16 %v4867, %v4863
    %vm4882 = vcmask 130048
    %v4884 = vsel %vm4882, %v4871, 0
    %v4887 = vsel %vm4882, %v4875, 0
    %4889 = vmatprep.subr.bf16.mxu0 0
    %4890 = vmatpush1.bf16.msra.mxu0 %v4819
    %4891 = vmatprep.subr.bf16.mxu0 0
    %4892 = vmatpush1.bf16.msra.mxu0 %v4820
    %4893 = vmatprep.subr.bf16.mxu0 0
    %4894 = vmatpush1.bf16.msra.mxu0 %v4821
    %4895 = vmatprep.subr.bf16.mxu0 0
    %4896 = vmatpush1.bf16.msra.mxu0 %v4822
    %4897 = vmatprep.subr.bf16.mxu0 0
    %4898 = vmatpush1.bf16.msra.mxu0 %v4823
    %4899 = vmatprep.subr.bf16.mxu0 0
    %4900 = vmatpush1.bf16.msra.mxu0 %v4824
    %4901 = vmatprep.subr.bf16.mxu0 0
    %4902 = vmatpush1.bf16.msra.mxu0 %v4825
    %4903 = vmatprep.subr.bf16.mxu0 0
    %4904 = vmatpush1.bf16.msra.mxu0 %v4826
    %4905 = vmatprep.subr.bf16.mxu0 0
    %4906 = vmatpush1.bf16.msra.mxu0 %v4827
    %4907 = vmatprep.subr.bf16.mxu0 0
    %4908 = vmatpush1.bf16.msra.mxu0 %v4828
    %4909 = vmatprep.subr.bf16.mxu0 0
    %4910 = vmatpush1.bf16.msra.mxu0 %v4829
    %4911 = vmatprep.subr.bf16.mxu0 0
    %4912 = vmatpush1.bf16.msra.mxu0 %v4830
    %4913 = vmatprep.subr.bf16.mxu0 0
    %4914 = vmatpush1.bf16.msra.mxu0 %v4831
    %4915 = vmatprep.subr.bf16.mxu0 0
    %4916 = vmatpush1.bf16.msra.mxu0 %v4832
    %4917 = vmatprep.subr.bf16.mxu0 0
    %4918 = vmatpush1.bf16.msra.mxu0 %v4833
    %4919 = vmatprep.subr.bf16.mxu0 0
    %4920 = vmatpush1.bf16.msra.mxu0 %v4834
    %4921 = vmatprep.mubr.bf16.mxu0 %v4869
    %4922 = vmatmul.mubr.bf16.gmra.mrb[0].mxu0 %v4868
    %v4923 = vpop.f32.mrb[0].mxu0
    %v4924 = vadd.f32 0.0, %v4923
    %v4925 = vpop.f32.mrb[0].mxu0
    %v4926 = vpop.f32.mrb[0].mxu0
    %v4927 = vadd.f32 0.0, %v4926
    %v4928 = vpop.f32.mrb[0].mxu0
    %4929 = vmatprep.mubr.bf16.mxu0 %v4873
    %4930 = vmatmul.mubr.bf16.gmra.mrb[0].mxu0 %v4872
    %v4931 = vpop.f32.mrb[0].mxu0
    %v4932 = vadd.f32 0.0, %v4931
    %v4933 = vpop.f32.mrb[0].mxu0
    %v4934 = vpop.f32.mrb[0].mxu0
    %v4935 = vadd.f32 0.0, %v4934
    %v4936 = vpop.f32.mrb[0].mxu0
    %4937 = vdwg.mxu0
    %4938 = vmatprep.subr.bf16.mxu0 0
    %4939 = vmatpush1.bf16.msra.mxu0 %v4835
    %4940 = vmatprep.subr.bf16.mxu0 0
    %4941 = vmatpush1.bf16.msra.mxu0 %v4836
    %4942 = vmatprep.subr.bf16.mxu0 0
    %4943 = vmatpush1.bf16.msra.mxu0 %v4837
    %4944 = vmatprep.subr.bf16.mxu0 0
    %4945 = vmatpush1.bf16.msra.mxu0 %v4838
    %4946 = vmatprep.subr.bf16.mxu0 0
    %4947 = vmatpush1.bf16.msra.mxu0 %v4839
    %4948 = vmatprep.subr.bf16.mxu0 0
    %4949 = vmatpush1.bf16.msra.mxu0 %v4840
    %4950 = vmatprep.subr.bf16.mxu0 0
    %4951 = vmatpush1.bf16.msra.mxu0 %v4841
    %4952 = vmatprep.subr.bf16.mxu0 0
    %4953 = vmatpush1.bf16.msra.mxu0 %v4842
    %4954 = vmatprep.subr.bf16.mxu0 0
    %4955 = vmatpush1.bf16.msra.mxu0 %v4843
    %4956 = vmatprep.subr.bf16.mxu0 0
    %4957 = vmatpush1.bf16.msra.mxu0 0
    %4958 = vmatprep.subr.bf16.mxu0 0
    %4959 = vmatpush1.bf16.msra.mxu0 0
    %4960 = vmatprep.subr.bf16.mxu0 0
    %4961 = vmatpush1.bf16.msra.mxu0 0
    %4962 = vmatprep.subr.bf16.mxu0 0
    %4963 = vmatpush1.bf16.msra.mxu0 0
    %4964 = vmatprep.subr.bf16.mxu0 0
    %4965 = vmatpush1.bf16.msra.mxu0 0
    %4966 = vmatprep.subr.bf16.mxu0 0
    %4967 = vmatpush1.bf16.msra.mxu0 0
    %4968 = vmatprep.subr.bf16.mxu0 0
    %4969 = vmatpush1.bf16.msra.mxu0 0
    %4970 = vmatprep.mubr.bf16.mxu0 %v4884
    %4971 = vmatmul.mubr.bf16.gmra.mrb[0].mxu0 %v4870
    %v4972 = vpop.f32.mrb[0].mxu0
    %v4973 = vadd.f32 %v4924, %v4972
    %v4974 = vpop.f32.mrb[0].mxu0
    %v4975 = vpop.f32.mrb[0].mxu0
    %v4976 = vadd.f32 %v4927, %v4975
    %v4977 = vpop.f32.mrb[0].mxu0
    %4978 = vmatprep.mubr.bf16.mxu0 %v4887
    %4979 = vmatmul.mubr.bf16.gmra.mrb[0].mxu0 %v4874
    %v4980 = vpop.f32.mrb[0].mxu0
    %v4981 = vadd.f32 %v4932, %v4980
    %v4982 = vpop.f32.mrb[0].mxu0
    %v4983 = vpop.f32.mrb[0].mxu0
    %v4984 = vadd.f32 %v4935, %v4983
    %v4985 = vpop.f32.mrb[0].mxu0
    %4986 = vdwg.mxu0
    %4987 = vadd.xlane.f32.xlu0 %v4973
    %v4988 = vpop.xlane.xlu0 %4987
    %4989 = vadd.xlane.f32.xlu0 %v4976
    %v4990 = vpop.xlane.xlu0 %4989
    %4991 = vadd.xlane.f32.xlu0 %v4981
    %v4992 = vpop.xlane.xlu0 %4991
    %4993 = vadd.xlane.f32.xlu0 %v4984
    %v4994 = vpop.xlane.xlu0 %4993
    %v4995 = vmul.f32 %v4973, %v4973
    %v4996 = vmul.f32 %v4976, %v4976
    %v4997 = vmul.f32 %v4981, %v4981
    %v4998 = vmul.f32 %v4984, %v4984
    %4999 = vadd.xlane.f32.xlu0 %v4995
    %v5000 = vpop.xlane.xlu0 %4999
    %5001 = vadd.xlane.f32.xlu0 %v4996
    %v5002 = vpop.xlane.xlu0 %5001
    %5003 = vadd.xlane.f32.xlu0 %v4997
    %v5004 = vpop.xlane.xlu0 %5003
    %5005 = vadd.xlane.f32.xlu0 %v4998
    %v5006 = vpop.xlane.xlu0 %5005
    %v5007 = vmul.f32 %v4988, 0.020408163
    %v5008 = vmul.f32 %v4990, 0.020408163
    %v5009 = vmul.f32 %v4992, 0.020408163
    %v5010 = vmul.f32 %v4994, 0.020408163
    %v5011 = vmul.f32 %v5000, 0.020408163
    %v5012 = vmul.f32 %v5002, 0.020408163
    %v5013 = vmul.f32 %v5004, 0.020408163
    %v5014 = vmul.f32 %v5006, 0.020408163
    %v5015 = vmul.f32 %v5007, %v5007
    %v5016 = vmul.f32 %v5008, %v5008
    %v5017 = vmul.f32 %v5009, %v5009
    %v5018 = vmul.f32 %v5010, %v5010
    %v5019 = vsub.f32 %v5011, %v5015
    %v5020 = vsub.f32 %v5012, %v5016
    %v5021 = vsub.f32 %v5013, %v5017
    %v5022 = vsub.f32 %v5014, %v5018
    %v5023 = vadd.f32 %v5019, 1e-05
    %v5024 = vadd.f32 %v5020, 1e-05
    %v5025 = vadd.f32 %v5021, 1e-05
    %v5026 = vadd.f32 %v5022, 1e-05
    %v5027 = vrsqrt.pop %v5023
    %v5028 = vrsqrt.pop %v5024
    %v5029 = vrsqrt.pop %v5025
    %v5030 = vrsqrt.pop %v5026
    %v5031 = vld [vmem:[%s6] sm:$0xff]
    %v5032 = vld [vmem:[%s6 + $0x8] sm:$0xff]
    %v5033 = vld [vmem:[%s6 + $0x10] sm:$0xff]
    %v5034 = vld [vmem:[%s6 + $0x18] sm:$0xff]
    %v5035 = vmul.f32 %v5027, %v5031
    %v5036 = vmul.f32 %v5028, %v5032
    %v5037 = vmul.f32 %v5029, %v5033
    %v5038 = vmul.f32 %v5030, %v5034
    %v5039 = vsub.f32 %v4973, %v5007
    %v5040 = vsub.f32 %v4976, %v5008
    %v5041 = vsub.f32 %v4981, %v5009
    %v5042 = vsub.f32 %v4984, %v5010
    %5044 = vset.pattern.permute.xlu0 0
    %5045 = vperm.xlu0 %5044, %v5035
    %v5046 = vpop.permute.xlu0 %5045
    %5049 = vset.pattern.permute.xlu0 0
    %5050 = vperm.xlu0 %5049, %v5036
    %v5051 = vpop.permute.xlu0 %5050
    %5054 = vset.pattern.permute.xlu0 0
    %5055 = vperm.xlu0 %5054, %v5037
    %v5056 = vpop.permute.xlu0 %5055
    %5059 = vset.pattern.permute.xlu0 0
    %5060 = vperm.xlu0 %5059, %v5038
    %v5061 = vpop.permute.xlu0 %5060
    %v5063 = vmul.f32 %v5039, %v5046
    %v5064 = vmul.f32 %v5040, %v5051
    %v5065 = vmul.f32 %v5041, %v5056
    %v5066 = vmul.f32 %v5042, %v5061
    %v5067 = vld [vmem:[%s7] sm:$0xff]
    %v5068 = vld [vmem:[%s7 + $0x8] sm:$0xff]
    %v5069 = vld [vmem:[%s7 + $0x10] sm:$0xff]
    %v5070 = vld [vmem:[%s7 + $0x18] sm:$0xff]
    %5072 = vset.pattern.permute.xlu0 0
    %5073 = vperm.xlu0 %5072, %v5067
    %v5074 = vpop.permute.xlu0 %5073
    %5077 = vset.pattern.permute.xlu0 0
    %5078 = vperm.xlu0 %5077, %v5068
    %v5079 = vpop.permute.xlu0 %5078
    %5082 = vset.pattern.permute.xlu0 0
    %5083 = vperm.xlu0 %5082, %v5069
    %v5084 = vpop.permute.xlu0 %5083
    %5087 = vset.pattern.permute.xlu0 0
    %5088 = vperm.xlu0 %5087, %v5070
    %v5089 = vpop.permute.xlu0 %5088
    %v5091 = vadd.f32 %v5063, %v5074
    %v5092 = vadd.f32 %v5064, %v5079
    %v5093 = vadd.f32 %v5065, %v5084
    %v5094 = vadd.f32 %v5066, %v5089
    %v5095 = vmax.f32 %v5091, 0.0
    %v5096 = vmax.f32 %v5092, 0.0
    %v5097 = vmax.f32 %v5093, 0.0
    %v5098 = vmax.f32 %v5094, 0.0
    %v5099 = vlaneseq
    %v5100 = vand.u32 %v5099, 127
    %vm5101 = vcmp.lt.s32.totalorder %v5100, 49
    %v5102 = vsel %vm5101, %v5095, 0.0
    %v5103 = vsel %vm5101, %v5096, 0.0
    %v5104 = vsel %vm5101, %v5097, 0.0
    %v5105 = vsel %vm5101, %v5098, 0.0
    %v5106 = vpack.c.bf16 %v5103, %v5102
    %v5107 = vpack.c.bf16 %v5105, %v5104
    %v5108 = vld [vmem:[#allocation10] sm:$0xff]
    %v5109 = vld [vmem:[#allocation10 + $0x8] sm:$0xff]
    %v5110 = vld [vmem:[#allocation10 + $0x10] sm:$0xff]
    %v5111 = vld [vmem:[#allocation10 + $0x18] sm:$0xff]
    %v5112 = vld [vmem:[#allocation10 + $0x20] sm:$0xff]
    %v5113 = vld [vmem:[#allocation10 + $0x28] sm:$0xff]
    %v5114 = vld [vmem:[#allocation10 + $0x30] sm:$0xff]
    %v5115 = vld [vmem:[#allocation10 + $0x38] sm:$0xff]
    %v5116 = vld [vmem:[#allocation10 + $0x40] sm:$0xff]
    %v5117 = vld [vmem:[#allocation10 + $0x48] sm:$0xff]
    %v5118 = vld [vmem:[#allocation10 + $0x50] sm:$0xff]
    %v5119 = vld [vmem:[#allocation10 + $0x58] sm:$0xff]
    %v5120 = vld [vmem:[#allocation10 + $0x60] sm:$0xf]
    %v5121 = vld [vmem:[#allocation10 + $0x64] sm:$0xff]
    %v5122 = vld [vmem:[#allocation10 + $0x6c] sm:$0xff]
    %v5123 = vld [vmem:[#allocation10 + $0x74] sm:$0xff]
    %v5124 = vld [vmem:[#allocation10 + $0x7c] sm:$0xff]
    %v5125 = vld [vmem:[#allocation10 + $0x84] sm:$0xff]
    %v5126 = vld [vmem:[#allocation10 + $0x8c] sm:$0xff]
    %v5127 = vld [vmem:[#allocation10 + $0x94] sm:$0xff]
    %v5128 = vld [vmem:[#allocation10 + $0x9c] sm:$0xff]
    %v5129 = vld [vmem:[#allocation10 + $0xa4] sm:$0xff]
    %v5130 = vld [vmem:[#allocation10 + $0xac] sm:$0xff]
    %v5131 = vld [vmem:[#allocation10 + $0xb4] sm:$0xff]
    %v5132 = vld [vmem:[#allocation10 + $0xbc] sm:$0xff]
    %v5133 = vld [vmem:[#allocation10 + $0xc4] sm:$0xf]
    %v5134 = vld [vmem:[#allocation10 + $0xc8] sm:$0xff]
    %v5135 = vld [vmem:[#allocation10 + $0xd0] sm:$0xff]
    %v5136 = vld [vmem:[#allocation10 + $0xd8] sm:$0xff]
    %v5137 = vld [vmem:[#allocation10 + $0xe0] sm:$0xff]
    %v5138 = vld [vmem:[#allocation10 + $0xe8] sm:$0xff]
    %v5139 = vld [vmem:[#allocation10 + $0xf0] sm:$0xff]
    %v5140 = vld [vmem:[#allocation10 + $0xf8] sm:$0xff]
    %v5141 = vld [vmem:[#allocation10 + $0x100] sm:$0xff]
    %v5142 = vld [vmem:[#allocation10 + $0x108] sm:$0xff]
    %v5143 = vld [vmem:[#allocation10 + $0x110] sm:$0xff]
    %v5144 = vld [vmem:[#allocation10 + $0x118] sm:$0xff]
    %v5145 = vld [vmem:[#allocation10 + $0x120] sm:$0xff]
    %v5146 = vld [vmem:[#allocation10 + $0x128] sm:$0xf]
    %v5147 = vld [vmem:[#allocation10 + $0x12c] sm:$0xff]
    %v5148 = vld [vmem:[#allocation10 + $0x134] sm:$0xff]
    %v5149 = vld [vmem:[#allocation10 + $0x13c] sm:$0xff]
    %v5150 = vld [vmem:[#allocation10 + $0x144] sm:$0xff]
    %v5151 = vld [vmem:[#allocation10 + $0x14c] sm:$0xff]
    %v5152 = vld [vmem:[#allocation10 + $0x154] sm:$0xff]
    %v5153 = vld [vmem:[#allocation10 + $0x15c] sm:$0xff]
    %v5154 = vld [vmem:[#allocation10 + $0x164] sm:$0xff]
    %v5155 = vld [vmem:[#allocation10 + $0x16c] sm:$0xff]
    %v5156 = vld [vmem:[#allocation10 + $0x174] sm:$0xff]
    %v5157 = vld [vmem:[#allocation10 + $0x17c] sm:$0xff]
    %v5158 = vld [vmem:[#allocation10 + $0x184] sm:$0xff]
    %v5159 = vld [vmem:[#allocation10 + $0x18c] sm:$0xf]
    %v5160 = vld [vmem:[#allocation10 + $0x190] sm:$0xff]
    %v5161 = vld [vmem:[#allocation10 + $0x198] sm:$0xff]
    %v5162 = vld [vmem:[#allocation10 + $0x1a0] sm:$0xff]
    %v5163 = vld [vmem:[#allocation10 + $0x1a8] sm:$0xff]
    %v5164 = vld [vmem:[#allocation10 + $0x1b0] sm:$0xff]
    %v5165 = vld [vmem:[#allocation10 + $0x1b8] sm:$0xff]
    %v5166 = vld [vmem:[#allocation10 + $0x1c0] sm:$0xff]
    %v5167 = vld [vmem:[#allocation10 + $0x1c8] sm:$0xff]
    %v5168 = vld [vmem:[#allocation10 + $0x1d0] sm:$0xff]
    %v5169 = vld [vmem:[#allocation10 + $0x1d8] sm:$0xff]
    %v5170 = vld [vmem:[#allocation10 + $0x1e0] sm:$0xff]
    %v5171 = vld [vmem:[#allocation10 + $0x1e8] sm:$0xff]
    %v5172 = vld [vmem:[#allocation10 + $0x1f0] sm:$0xf]
    %v5173 = vld [vmem:[#allocation10 + $0x1f4] sm:$0xff]
    %v5174 = vld [vmem:[#allocation10 + $0x1fc] sm:$0xff]
    %v5175 = vld [vmem:[#allocation10 + $0x204] sm:$0xff]
    %v5176 = vld [vmem:[#allocation10 + $0x20c] sm:$0xff]
    %v5177 = vld [vmem:[#allocation10 + $0x214] sm:$0xff]
    %v5178 = vld [vmem:[#allocation10 + $0x21c] sm:$0xff]
    %v5179 = vld [vmem:[#allocation10 + $0x224] sm:$0xff]
    %v5180 = vld [vmem:[#allocation10 + $0x22c] sm:$0xff]
    %v5181 = vld [vmem:[#allocation10 + $0x234] sm:$0xff]
    %v5182 = vld [vmem:[#allocation10 + $0x23c] sm:$0xff]
    %v5183 = vld [vmem:[#allocation10 + $0x244] sm:$0xff]
    %v5184 = vld [vmem:[#allocation10 + $0x24c] sm:$0xff]
    %v5185 = vld [vmem:[#allocation10 + $0x254] sm:$0xf]
    %v5186 = vld [vmem:[#allocation10 + $0x258] sm:$0xff]
    %v5187 = vld [vmem:[#allocation10 + $0x260] sm:$0xff]
    %v5188 = vld [vmem:[#allocation10 + $0x268] sm:$0xff]
    %v5189 = vld [vmem:[#allocation10 + $0x270] sm:$0xff]
    %v5190 = vld [vmem:[#allocation10 + $0x278] sm:$0xff]
    %v5191 = vld [vmem:[#allocation10 + $0x280] sm:$0xff]
    %v5192 = vld [vmem:[#allocation10 + $0x288] sm:$0xff]
    %v5193 = vld [vmem:[#allocation10 + $0x290] sm:$0xff]
    %v5194 = vld [vmem:[#allocation10 + $0x298] sm:$0xff]
    %v5195 = vld [vmem:[#allocation10 + $0x2a0] sm:$0xff]
    %v5196 = vld [vmem:[#allocation10 + $0x2a8] sm:$0xff]
    %v5197 = vld [vmem:[#allocation10 + $0x2b0] sm:$0xff]
    %v5198 = vld [vmem:[#allocation10 + $0x2b8] sm:$0xf]
    %v5199 = vld [vmem:[#allocation10 + $0x2bc] sm:$0xff]
    %v5200 = vld [vmem:[#allocation10 + $0x2c4] sm:$0xff]
    %v5201 = vld [vmem:[#allocation10 + $0x2cc] sm:$0xff]
    %v5202 = vld [vmem:[#allocation10 + $0x2d4] sm:$0xff]
    %v5203 = vld [vmem:[#allocation10 + $0x2dc] sm:$0xff]
    %v5204 = vld [vmem:[#allocation10 + $0x2e4] sm:$0xff]
    %v5205 = vld [vmem:[#allocation10 + $0x2ec] sm:$0xff]
    %v5206 = vld [vmem:[#allocation10 + $0x2f4] sm:$0xff]
    %v5207 = vld [vmem:[#allocation10 + $0x2fc] sm:$0xff]
    %v5208 = vld [vmem:[#allocation10 + $0x304] sm:$0xff]
    %v5209 = vld [vmem:[#allocation10 + $0x30c] sm:$0xff]
    %v5210 = vld [vmem:[#allocation10 + $0x314] sm:$0xff]
    %v5211 = vld [vmem:[#allocation10 + $0x31c] sm:$0xf]
    %v5212 = vld [vmem:[#allocation10 + $0x320] sm:$0xff]
    %v5213 = vld [vmem:[#allocation10 + $0x328] sm:$0xff]
    %v5214 = vld [vmem:[#allocation10 + $0x330] sm:$0xff]
    %v5215 = vld [vmem:[#allocation10 + $0x338] sm:$0xff]
    %v5216 = vld [vmem:[#allocation10 + $0x340] sm:$0xff]
    %v5217 = vld [vmem:[#allocation10 + $0x348] sm:$0xff]
    %v5218 = vld [vmem:[#allocation10 + $0x350] sm:$0xff]
    %v5219 = vld [vmem:[#allocation10 + $0x358] sm:$0xff]
    %v5220 = vld [vmem:[#allocation10 + $0x360] sm:$0xff]
    %v5221 = vld [vmem:[#allocation10 + $0x368] sm:$0xff]
    %v5222 = vld [vmem:[#allocation10 + $0x370] sm:$0xff]
    %v5223 = vld [vmem:[#allocation10 + $0x378] sm:$0xff]
    %v5224 = vld [vmem:[#allocation10 + $0x380] sm:$0xf]
    %v5225 = vld [vmem:[#allocation10 + $0x384] sm:$0xff]
    %v5226 = vld [vmem:[#allocation10 + $0x38c] sm:$0xff]
    %v5227 = vld [vmem:[#allocation10 + $0x394] sm:$0xff]
    %v5228 = vld [vmem:[#allocation10 + $0x39c] sm:$0xff]
    %v5229 = vld [vmem:[#allocation10 + $0x3a4] sm:$0xff]
    %v5230 = vld [vmem:[#allocation10 + $0x3ac] sm:$0xff]
    %v5231 = vld [vmem:[#allocation10 + $0x3b4] sm:$0xff]
    %v5232 = vld [vmem:[#allocation10 + $0x3bc] sm:$0xff]
    %v5233 = vld [vmem:[#allocation10 + $0x3c4] sm:$0xff]
    %v5234 = vld [vmem:[#allocation10 + $0x3cc] sm:$0xff]
    %v5235 = vld [vmem:[#allocation10 + $0x3d4] sm:$0xff]
    %v5236 = vld [vmem:[#allocation10 + $0x3dc] sm:$0xff]
    %v5237 = vld [vmem:[#allocation10 + $0x3e4] sm:$0xf]
    %v5238 = vld [vmem:[#allocation10 + $0x3e8] sm:$0xff]
    %v5239 = vld [vmem:[#allocation10 + $0x3f0] sm:$0xff]
    %v5240 = vld [vmem:[#allocation10 + $0x3f8] sm:$0xff]
    %v5241 = vld [vmem:[#allocation10 + $0x400] sm:$0xff]
    %v5242 = vld [vmem:[#allocation10 + $0x408] sm:$0xff]
    %v5243 = vld [vmem:[#allocation10 + $0x410] sm:$0xff]
    %v5244 = vld [vmem:[#allocation10 + $0x418] sm:$0xff]
    %v5245 = vld [vmem:[#allocation10 + $0x420] sm:$0xff]
    %v5246 = vld [vmem:[#allocation10 + $0x428] sm:$0xff]
    %v5247 = vld [vmem:[#allocation10 + $0x430] sm:$0xff]
    %v5248 = vld [vmem:[#allocation10 + $0x438] sm:$0xff]
    %v5249 = vld [vmem:[#allocation10 + $0x440] sm:$0xff]
    %v5250 = vld [vmem:[#allocation10 + $0x448] sm:$0xf]
    %v5251 = vld [vmem:[#allocation10 + $0x44c] sm:$0xff]
    %v5252 = vld [vmem:[#allocation10 + $0x454] sm:$0xff]
    %v5253 = vld [vmem:[#allocation10 + $0x45c] sm:$0xff]
    %v5254 = vld [vmem:[#allocation10 + $0x464] sm:$0xff]
    %v5255 = vld [vmem:[#allocation10 + $0x46c] sm:$0xff]
    %v5256 = vld [vmem:[#allocation10 + $0x474] sm:$0xff]
    %v5257 = vld [vmem:[#allocation10 + $0x47c] sm:$0xff]
    %v5258 = vld [vmem:[#allocation10 + $0x484] sm:$0xff]
    %v5259 = vld [vmem:[#allocation10 + $0x48c] sm:$0xff]
    %v5260 = vld [vmem:[#allocation10 + $0x494] sm:$0xff]
    %v5261 = vld [vmem:[#allocation10 + $0x49c] sm:$0xff]
    %v5262 = vld [vmem:[#allocation10 + $0x4a4] sm:$0xff]
    %v5263 = vld [vmem:[#allocation10 + $0x4ac] sm:$0xf]
    %v5264 = vld [vmem:[#allocation10 + $0x4b0] sm:$0xff]
    %v5265 = vld [vmem:[#allocation10 + $0x4b8] sm:$0xff]
    %v5266 = vld [vmem:[#allocation10 + $0x4c0] sm:$0xff]
    %v5267 = vld [vmem:[#allocation10 + $0x4c8] sm:$0xff]
    %v5268 = vld [vmem:[#allocation10 + $0x4d0] sm:$0xff]
    %v5269 = vld [vmem:[#allocation10 + $0x4d8] sm:$0xff]
    %v5270 = vld [vmem:[#allocation10 + $0x4e0] sm:$0xff]
    %v5271 = vld [vmem:[#allocation10 + $0x4e8] sm:$0xff]
    %v5272 = vld [vmem:[#allocation10 + $0x4f0] sm:$0xff]
    %v5273 = vld [vmem:[#allocation10 + $0x4f8] sm:$0xff]
    %v5274 = vld [vmem:[#allocation10 + $0x500] sm:$0xff]
    %v5275 = vld [vmem:[#allocation10 + $0x508] sm:$0xff]
    %v5276 = vld [vmem:[#allocation10 + $0x510] sm:$0xf]
    %v5277 = vld [vmem:[#allocation10 + $0x514] sm:$0xff]
    %v5278 = vld [vmem:[#allocation10 + $0x51c] sm:$0xff]
    %v5279 = vld [vmem:[#allocation10 + $0x524] sm:$0xff]
    %v5280 = vld [vmem:[#allocation10 + $0x52c] sm:$0xff]
    %v5281 = vld [vmem:[#allocation10 + $0x534] sm:$0xff]
    %v5282 = vld [vmem:[#allocation10 + $0x53c] sm:$0xff]
    %v5283 = vld [vmem:[#allocation10 + $0x544] sm:$0xff]
    %v5284 = vld [vmem:[#allocation10 + $0x54c] sm:$0xff]
    %v5285 = vld [vmem:[#allocation10 + $0x554] sm:$0xff]
    %v5286 = vld [vmem:[#allocation10 + $0x55c] sm:$0xff]
    %v5287 = vld [vmem:[#allocation10 + $0x564] sm:$0xff]
    %v5288 = vld [vmem:[#allocation10 + $0x56c] sm:$0xff]
    %v5289 = vld [vmem:[#allocation10 + $0x574] sm:$0xf]
    %v5290 = vld [vmem:[#allocation10 + $0x578] sm:$0xff]
    %v5291 = vld [vmem:[#allocation10 + $0x580] sm:$0xff]
    %v5292 = vld [vmem:[#allocation10 + $0x588] sm:$0xff]
    %v5293 = vld [vmem:[#allocation10 + $0x590] sm:$0xff]
    %v5294 = vld [vmem:[#allocation10 + $0x598] sm:$0xff]
    %v5295 = vld [vmem:[#allocation10 + $0x5a0] sm:$0xff]
    %v5296 = vld [vmem:[#allocation10 + $0x5a8] sm:$0xff]
    %v5297 = vld [vmem:[#allocation10 + $0x5b0] sm:$0xff]
    %v5298 = vld [vmem:[#allocation10 + $0x5b8] sm:$0xff]
    %v5299 = vld [vmem:[#allocation10 + $0x5c0] sm:$0xff]
    %v5300 = vld [vmem:[#allocation10 + $0x5c8] sm:$0xff]
    %v5301 = vld [vmem:[#allocation10 + $0x5d0] sm:$0xff]
    %v5302 = vld [vmem:[#allocation10 + $0x5d8] sm:$0xf]
    %v5303 = vld [vmem:[#allocation10 + $0x5dc] sm:$0xff]
    %v5304 = vld [vmem:[#allocation10 + $0x5e4] sm:$0xff]
    %v5305 = vld [vmem:[#allocation10 + $0x5ec] sm:$0xff]
    %v5306 = vld [vmem:[#allocation10 + $0x5f4] sm:$0xff]
    %v5307 = vld [vmem:[#allocation10 + $0x5fc] sm:$0xff]
    %v5308 = vld [vmem:[#allocation10 + $0x604] sm:$0xff]
    %v5309 = vld [vmem:[#allocation10 + $0x60c] sm:$0xff]
    %v5310 = vld [vmem:[#allocation10 + $0x614] sm:$0xff]
    %v5311 = vld [vmem:[#allocation10 + $0x61c] sm:$0xff]
    %v5312 = vld [vmem:[#allocation10 + $0x624] sm:$0xff]
    %v5313 = vld [vmem:[#allocation10 + $0x62c] sm:$0xff]
    %v5314 = vld [vmem:[#allocation10 + $0x634] sm:$0xff]
    %v5315 = vld [vmem:[#allocation10 + $0x63c] sm:$0xf]
    %v5524 = vunpack.c.l.b16 %v5108
    %v5525 = vunpack.c.h.b16 %v5108
    %v5526 = vunpack.c.l.b16 %v5109
    %v5527 = vunpack.c.h.b16 %v5109
    %v5528 = vunpack.c.l.b16 %v5110
    %v5529 = vunpack.c.h.b16 %v5110
    %v5530 = vunpack.c.l.b16 %v5111
    %v5531 = vunpack.c.h.b16 %v5111
    %v5532 = vunpack.c.l.b16 %v5112
    %v5533 = vunpack.c.h.b16 %v5112
    %v5534 = vunpack.c.l.b16 %v5113
    %v5535 = vunpack.c.h.b16 %v5113
    %v5536 = vunpack.c.l.b16 %v5114
    %v5537 = vunpack.c.h.b16 %v5114
    %v5538 = vunpack.c.l.b16 %v5115
    %v5539 = vunpack.c.h.b16 %v5115
    %v5540 = vunpack.c.l.b16 %v5116
    %v5541 = vunpack.c.h.b16 %v5116
    %v5542 = vunpack.c.l.b16 %v5117
    %v5543 = vunpack.c.h.b16 %v5117
    %v5544 = vunpack.c.l.b16 %v5118
    %v5545 = vunpack.c.h.b16 %v5118
    %v5546 = vunpack.c.l.b16 %v5119
    %v5547 = vunpack.c.h.b16 %v5119
    %v5548 = vunpack.c.l.b16 %v5120
    %v5549 = vunpack.c.l.b16 %v5121
    %v5550 = vunpack.c.h.b16 %v5121
    %v5551 = vunpack.c.l.b16 %v5122
    %v5552 = vunpack.c.h.b16 %v5122
    %v5553 = vunpack.c.l.b16 %v5123
    %v5554 = vunpack.c.h.b16 %v5123
    %v5555 = vunpack.c.l.b16 %v5124
    %v5556 = vunpack.c.h.b16 %v5124
    %v5557 = vunpack.c.l.b16 %v5125
    %v5558 = vunpack.c.h.b16 %v5125
    %v5559 = vunpack.c.l.b16 %v5126
    %v5560 = vunpack.c.h.b16 %v5126
    %v5561 = vunpack.c.l.b16 %v5127
    %v5562 = vunpack.c.h.b16 %v5127
    %v5563 = vunpack.c.l.b16 %v5128
    %v5564 = vunpack.c.h.b16 %v5128
    %v5565 = vunpack.c.l.b16 %v5129
    %v5566 = vunpack.c.h.b16 %v5129
    %v5567 = vunpack.c.l.b16 %v5130
    %v5568 = vunpack.c.h.b16 %v5130
    %v5569 = vunpack.c.l.b16 %v5131
    %v5570 = vunpack.c.h.b16 %v5131
    %v5571 = vunpack.c.l.b16 %v5132
    %v5572 = vunpack.c.h.b16 %v5132
    %v5573 = vunpack.c.l.b16 %v5133
    %v5574 = vunpack.c.l.b16 %v5134
    %v5575 = vunpack.c.h.b16 %v5134
    %v5576 = vunpack.c.l.b16 %v5135
    %v5577 = vunpack.c.h.b16 %v5135
    %v5578 = vunpack.c.l.b16 %v5136
    %v5579 = vunpack.c.h.b16 %v5136
    %v5580 = vunpack.c.l.b16 %v5137
    %v5581 = vunpack.c.h.b16 %v5137
    %v5582 = vunpack.c.l.b16 %v5138
    %v5583 = vunpack.c.h.b16 %v5138
    %v5584 = vunpack.c.l.b16 %v5139
    %v5585 = vunpack.c.h.b16 %v5139
    %v5586 = vunpack.c.l.b16 %v5140
    %v5587 = vunpack.c.h.b16 %v5140
    %v5588 = vunpack.c.l.b16 %v5141
    %v5589 = vunpack.c.h.b16 %v5141
    %v5590 = vunpack.c.l.b16 %v5142
    %v5591 = vunpack.c.h.b16 %v5142
    %v5592 = vunpack.c.l.b16 %v5143
    %v5593 = vunpack.c.h.b16 %v5143
    %v5594 = vunpack.c.l.b16 %v5144
    %v5595 = vunpack.c.h.b16 %v5144
    %v5596 = vunpack.c.l.b16 %v5145
    %v5597 = vunpack.c.h.b16 %v5145
    %v5598 = vunpack.c.l.b16 %v5146
    %v5599 = vunpack.c.l.b16 %v5147
    %v5600 = vunpack.c.h.b16 %v5147
    %v5601 = vunpack.c.l.b16 %v5148
    %v5602 = vunpack.c.h.b16 %v5148
    %v5603 = vunpack.c.l.b16 %v5149
    %v5604 = vunpack.c.h.b16 %v5149
    %v5605 = vunpack.c.l.b16 %v5150
    %v5606 = vunpack.c.h.b16 %v5150
    %v5607 = vunpack.c.l.b16 %v5151
    %v5608 = vunpack.c.h.b16 %v5151
    %v5609 = vunpack.c.l.b16 %v5152
    %v5610 = vunpack.c.h.b16 %v5152
    %v5611 = vunpack.c.l.b16 %v5153
    %v5612 = vunpack.c.h.b16 %v5153
    %v5613 = vunpack.c.l.b16 %v5154
    %v5614 = vunpack.c.h.b16 %v5154
    %v5615 = vunpack.c.l.b16 %v5155
    %v5616 = vunpack.c.h.b16 %v5155
    %v5617 = vunpack.c.l.b16 %v5156
    %v5618 = vunpack.c.h.b16 %v5156
    %v5619 = vunpack.c.l.b16 %v5157
    %v5620 = vunpack.c.h.b16 %v5157
    %v5621 = vunpack.c.l.b16 %v5158
    %v5622 = vunpack.c.h.b16 %v5158
    %v5623 = vunpack.c.l.b16 %v5159
    %v5624 = vunpack.c.l.b16 %v5160
    %v5625 = vunpack.c.h.b16 %v5160
    %v5626 = vunpack.c.l.b16 %v5161
    %v5627 = vunpack.c.h.b16 %v5161
    %v5628 = vunpack.c.l.b16 %v5162
    %v5629 = vunpack.c.h.b16 %v5162
    %v5630 = vunpack.c.l.b16 %v5163
    %v5631 = vunpack.c.h.b16 %v5163
    %v5632 = vunpack.c.l.b16 %v5164
    %v5633 = vunpack.c.h.b16 %v5164
    %v5634 = vunpack.c.l.b16 %v5165
    %v5635 = vunpack.c.h.b16 %v5165
    %v5636 = vunpack.c.l.b16 %v5166
    %v5637 = vunpack.c.h.b16 %v5166
    %v5638 = vunpack.c.l.b16 %v5167
    %v5639 = vunpack.c.h.b16 %v5167
    %v5640 = vunpack.c.l.b16 %v5168
    %v5641 = vunpack.c.h.b16 %v5168
    %v5642 = vunpack.c.l.b16 %v5169
    %v5643 = vunpack.c.h.b16 %v5169
    %v5644 = vunpack.c.l.b16 %v5170
    %v5645 = vunpack.c.h.b16 %v5170
    %v5646 = vunpack.c.l.b16 %v5171
    %v5647 = vunpack.c.h.b16 %v5171
    %v5648 = vunpack.c.l.b16 %v5172
    %v5649 = vunpack.c.l.b16 %v5173
    %v5650 = vunpack.c.h.b16 %v5173
    %v5651 = vunpack.c.l.b16 %v5174
    %v5652 = vunpack.c.h.b16 %v5174
    %v5653 = vunpack.c.l.b16 %v5175
    %v5654 = vunpack.c.h.b16 %v5175
    %v5655 = vunpack.c.l.b16 %v5176
    %v5656 = vunpack.c.h.b16 %v5176
    %v5657 = vunpack.c.l.b16 %v5177
    %v5658 = vunpack.c.h.b16 %v5177
    %v5659 = vunpack.c.l.b16 %v5178
    %v5660 = vunpack.c.h.b16 %v5178
    %v5661 = vunpack.c.l.b16 %v5179
    %v5662 = vunpack.c.h.b16 %v5179
    %v5663 = vunpack.c.l.b16 %v5180
    %v5664 = vunpack.c.h.b16 %v5180
    %v5665 = vunpack.c.l.b16 %v5181
    %v5666 = vunpack.c.h.b16 %v5181
    %v5667 = vunpack.c.l.b16 %v5182
    %v5668 = vunpack.c.h.b16 %v5182
    %v5669 = vunpack.c.l.b16 %v5183
    %v5670 = vunpack.c.h.b16 %v5183
    %v5671 = vunpack.c.l.b16 %v5184
    %v5672 = vunpack.c.h.b16 %v5184
    %v5673 = vunpack.c.l.b16 %v5185
    %v5674 = vunpack.c.l.b16 %v5186
    %v5675 = vunpack.c.h.b16 %v5186
    %v5676 = vunpack.c.l.b16 %v5187
    %v5677 = vunpack.c.h.b16 %v5187
    %v5678 = vunpack.c.l.b16 %v5188
    %v5679 = vunpack.c.h.b16 %v5188
    %v5680 = vunpack.c.l.b16 %v5189
    %v5681 = vunpack.c.h.b16 %v5189
    %v5682 = vunpack.c.l.b16 %v5190
    %v5683 = vunpack.c.h.b16 %v5190
    %v5684 = vunpack.c.l.b16 %v5191
    %v5685 = vunpack.c.h.b16 %v5191
    %v5686 = vunpack.c.l.b16 %v5192
    %v5687 = vunpack.c.h.b16 %v5192
    %v5688 = vunpack.c.l.b16 %v5193
    %v5689 = vunpack.c.h.b16 %v5193
    %v5690 = vunpack.c.l.b16 %v5194
    %v5691 = vunpack.c.h.b16 %v5194
    %v5692 = vunpack.c.l.b16 %v5195
    %v5693 = vunpack.c.h.b16 %v5195
    %v5694 = vunpack.c.l.b16 %v5196
    %v5695 = vunpack.c.h.b16 %v5196
    %v5696 = vunpack.c.l.b16 %v5197
    %v5697 = vunpack.c.h.b16 %v5197
    %v5698 = vunpack.c.l.b16 %v5198
    %v5699 = vunpack.c.l.b16 %v5199
    %v5700 = vunpack.c.h.b16 %v5199
    %v5701 = vunpack.c.l.b16 %v5200
    %v5702 = vunpack.c.h.b16 %v5200
    %v5703 = vunpack.c.l.b16 %v5201
    %v5704 = vunpack.c.h.b16 %v5201
    %v5705 = vunpack.c.l.b16 %v5202
    %v5706 = vunpack.c.h.b16 %v5202
    %v5707 = vunpack.c.l.b16 %v5203
    %v5708 = vunpack.c.h.b16 %v5203
    %v5709 = vunpack.c.l.b16 %v5204
    %v5710 = vunpack.c.h.b16 %v5204
    %v5711 = vunpack.c.l.b16 %v5205
    %v5712 = vunpack.c.h.b16 %v5205
    %v5713 = vunpack.c.l.b16 %v5206
    %v5714 = vunpack.c.h.b16 %v5206
    %v5715 = vunpack.c.l.b16 %v5207
    %v5716 = vunpack.c.h.b16 %v5207
    %v5717 = vunpack.c.l.b16 %v5208
    %v5718 = vunpack.c.h.b16 %v5208
    %v5719 = vunpack.c.l.b16 %v5209
    %v5720 = vunpack.c.h.b16 %v5209
    %v5721 = vunpack.c.l.b16 %v5210
    %v5722 = vunpack.c.h.b16 %v5210
    %v5723 = vunpack.c.l.b16 %v5211
    %v5724 = vunpack.c.l.b16 %v5212
    %v5725 = vunpack.c.h.b16 %v5212
    %v5726 = vunpack.c.l.b16 %v5213
    %v5727 = vunpack.c.h.b16 %v5213
    %v5728 = vunpack.c.l.b16 %v5214
    %v5729 = vunpack.c.h.b16 %v5214
    %v5730 = vunpack.c.l.b16 %v5215
    %v5731 = vunpack.c.h.b16 %v5215
    %v5732 = vunpack.c.l.b16 %v5216
    %v5733 = vunpack.c.h.b16 %v5216
    %v5734 = vunpack.c.l.b16 %v5217
    %v5735 = vunpack.c.h.b16 %v5217
    %v5736 = vunpack.c.l.b16 %v5218
    %v5737 = vunpack.c.h.b16 %v5218
    %v5738 = vunpack.c.l.b16 %v5219
    %v5739 = vunpack.c.h.b16 %v5219
    %v5740 = vunpack.c.l.b16 %v5220
    %v5741 = vunpack.c.h.b16 %v5220
    %v5742 = vunpack.c.l.b16 %v5221
    %v5743 = vunpack.c.h.b16 %v5221
    %v5744 = vunpack.c.l.b16 %v5222
    %v5745 = vunpack.c.h.b16 %v5222
    %v5746 = vunpack.c.l.b16 %v5223
    %v5747 = vunpack.c.h.b16 %v5223
    %v5748 = vunpack.c.l.b16 %v5224
    %v5749 = vunpack.c.l.b16 %v5225
    %v5750 = vunpack.c.h.b16 %v5225
    %v5751 = vunpack.c.l.b16 %v5226
    %v5752 = vunpack.c.h.b16 %v5226
    %v5753 = vunpack.c.l.b16 %v5227
    %v5754 = vunpack.c.h.b16 %v5227
    %v5755 = vunpack.c.l.b16 %v5228
    %v5756 = vunpack.c.h.b16 %v5228
    %v5757 = vunpack.c.l.b16 %v5229
    %v5758 = vunpack.c.h.b16 %v5229
    %v5759 = vunpack.c.l.b16 %v5230
    %v5760 = vunpack.c.h.b16 %v5230
    %v5761 = vunpack.c.l.b16 %v5231
    %v5762 = vunpack.c.h.b16 %v5231
    %v5763 = vunpack.c.l.b16 %v5232
    %v5764 = vunpack.c.h.b16 %v5232
    %v5765 = vunpack.c.l.b16 %v5233
    %v5766 = vunpack.c.h.b16 %v5233
    %v5767 = vunpack.c.l.b16 %v5234
    %v5768 = vunpack.c.h.b16 %v5234
    %v5769 = vunpack.c.l.b16 %v5235
    %v5770 = vunpack.c.h.b16 %v5235
    %v5771 = vunpack.c.l.b16 %v5236
    %v5772 = vunpack.c.h.b16 %v5236
    %v5773 = vunpack.c.l.b16 %v5237
    %v5774 = vunpack.c.l.b16 %v5238
    %v5775 = vunpack.c.h.b16 %v5238
    %v5776 = vunpack.c.l.b16 %v5239
    %v5777 = vunpack.c.h.b16 %v5239
    %v5778 = vunpack.c.l.b16 %v5240
    %v5779 = vunpack.c.h.b16 %v5240
    %v5780 = vunpack.c.l.b16 %v5241
    %v5781 = vunpack.c.h.b16 %v5241
    %v5782 = vunpack.c.l.b16 %v5242
    %v5783 = vunpack.c.h.b16 %v5242
    %v5784 = vunpack.c.l.b16 %v5243
    %v5785 = vunpack.c.h.b16 %v5243
    %v5786 = vunpack.c.l.b16 %v5244
    %v5787 = vunpack.c.h.b16 %v5244
    %v5788 = vunpack.c.l.b16 %v5245
    %v5789 = vunpack.c.h.b16 %v5245
    %v5790 = vunpack.c.l.b16 %v5246
    %v5791 = vunpack.c.h.b16 %v5246
    %v5792 = vunpack.c.l.b16 %v5247
    %v5793 = vunpack.c.h.b16 %v5247
    %v5794 = vunpack.c.l.b16 %v5248
    %v5795 = vunpack.c.h.b16 %v5248
    %v5796 = vunpack.c.l.b16 %v5249
    %v5797 = vunpack.c.h.b16 %v5249
    %v5798 = vunpack.c.l.b16 %v5250
    %v5799 = vunpack.c.l.b16 %v5251
    %v5800 = vunpack.c.h.b16 %v5251
    %v5801 = vunpack.c.l.b16 %v5252
    %v5802 = vunpack.c.h.b16 %v5252
    %v5803 = vunpack.c.l.b16 %v5253
    %v5804 = vunpack.c.h.b16 %v5253
    %v5805 = vunpack.c.l.b16 %v5254
    %v5806 = vunpack.c.h.b16 %v5254
    %v5807 = vunpack.c.l.b16 %v5255
    %v5808 = vunpack.c.h.b16 %v5255
    %v5809 = vunpack.c.l.b16 %v5256
    %v5810 = vunpack.c.h.b16 %v5256
    %v5811 = vunpack.c.l.b16 %v5257
    %v5812 = vunpack.c.h.b16 %v5257
    %v5813 = vunpack.c.l.b16 %v5258
    %v5814 = vunpack.c.h.b16 %v5258
    %v5815 = vunpack.c.l.b16 %v5259
    %v5816 = vunpack.c.h.b16 %v5259
    %v5817 = vunpack.c.l.b16 %v5260
    %v5818 = vunpack.c.h.b16 %v5260
    %v5819 = vunpack.c.l.b16 %v5261
    %v5820 = vunpack.c.h.b16 %v5261
    %v5821 = vunpack.c.l.b16 %v5262
    %v5822 = vunpack.c.h.b16 %v5262
    %v5823 = vunpack.c.l.b16 %v5263
    %v5824 = vunpack.c.l.b16 %v5264
    %v5825 = vunpack.c.h.b16 %v5264
    %v5826 = vunpack.c.l.b16 %v5265
    %v5827 = vunpack.c.h.b16 %v5265
    %v5828 = vunpack.c.l.b16 %v5266
    %v5829 = vunpack.c.h.b16 %v5266
    %v5830 = vunpack.c.l.b16 %v5267
    %v5831 = vunpack.c.h.b16 %v5267
    %v5832 = vunpack.c.l.b16 %v5268
    %v5833 = vunpack.c.h.b16 %v5268
    %v5834 = vunpack.c.l.b16 %v5269
    %v5835 = vunpack.c.h.b16 %v5269
    %v5836 = vunpack.c.l.b16 %v5270
    %v5837 = vunpack.c.h.b16 %v5270
    %v5838 = vunpack.c.l.b16 %v5271
    %v5839 = vunpack.c.h.b16 %v5271
    %v5840 = vunpack.c.l.b16 %v5272
    %v5841 = vunpack.c.h.b16 %v5272
    %v5842 = vunpack.c.l.b16 %v5273
    %v5843 = vunpack.c.h.b16 %v5273
    %v5844 = vunpack.c.l.b16 %v5274
    %v5845 = vunpack.c.h.b16 %v5274
    %v5846 = vunpack.c.l.b16 %v5275
    %v5847 = vunpack.c.h.b16 %v5275
    %v5848 = vunpack.c.l.b16 %v5276
    %v5849 = vunpack.c.l.b16 %v5277
    %v5850 = vunpack.c.h.b16 %v5277
    %v5851 = vunpack.c.l.b16 %v5278
    %v5852 = vunpack.c.h.b16 %v5278
    %v5853 = vunpack.c.l.b16 %v5279
    %v5854 = vunpack.c.h.b16 %v5279
    %v5855 = vunpack.c.l.b16 %v5280
    %v5856 = vunpack.c.h.b16 %v5280
    %v5857 = vunpack.c.l.b16 %v5281
    %v5858 = vunpack.c.h.b16 %v5281
    %v5859 = vunpack.c.l.b16 %v5282
    %v5860 = vunpack.c.h.b16 %v5282
    %v5861 = vunpack.c.l.b16 %v5283
    %v5862 = vunpack.c.h.b16 %v5283
    %v5863 = vunpack.c.l.b16 %v5284
    %v5864 = vunpack.c.h.b16 %v5284
    %v5865 = vunpack.c.l.b16 %v5285
    %v5866 = vunpack.c.h.b16 %v5285
    %v5867 = vunpack.c.l.b16 %v5286
    %v5868 = vunpack.c.h.b16 %v5286
    %v5869 = vunpack.c.l.b16 %v5287
    %v5870 = vunpack.c.h.b16 %v5287
    %v5871 = vunpack.c.l.b16 %v5288
    %v5872 = vunpack.c.h.b16 %v5288
    %v5873 = vunpack.c.l.b16 %v5289
    %v5874 = vunpack.c.l.b16 %v5290
    %v5875 = vunpack.c.h.b16 %v5290
    %v5876 = vunpack.c.l.b16 %v5291
    %v5877 = vunpack.c.h.b16 %v5291
    %v5878 = vunpack.c.l.b16 %v5292
    %v5879 = vunpack.c.h.b16 %v5292
    %v5880 = vunpack.c.l.b16 %v5293
    %v5881 = vunpack.c.h.b16 %v5293
    %v5882 = vunpack.c.l.b16 %v5294
    %v5883 = vunpack.c.h.b16 %v5294
    %v5884 = vunpack.c.l.b16 %v5295
    %v5885 = vunpack.c.h.b16 %v5295
    %v5886 = vunpack.c.l.b16 %v5296
    %v5887 = vunpack.c.h.b16 %v5296
    %v5888 = vunpack.c.l.b16 %v5297
    %v5889 = vunpack.c.h.b16 %v5297
    %v5890 = vunpack.c.l.b16 %v5298
    %v5891 = vunpack.c.h.b16 %v5298
    %v5892 = vunpack.c.l.b16 %v5299
    %v5893 = vunpack.c.h.b16 %v5299
    %v5894 = vunpack.c.l.b16 %v5300
    %v5895 = vunpack.c.h.b16 %v5300
    %v5896 = vunpack.c.l.b16 %v5301
    %v5897 = vunpack.c.h.b16 %v5301
    %v5898 = vunpack.c.l.b16 %v5302
    %v5899 = vunpack.c.l.b16 %v5303
    %v5900 = vunpack.c.h.b16 %v5303
    %v5901 = vunpack.c.l.b16 %v5304
    %v5902 = vunpack.c.h.b16 %v5304
    %v5903 = vunpack.c.l.b16 %v5305
    %v5904 = vunpack.c.h.b16 %v5305
    %v5905 = vunpack.c.l.b16 %v5306
    %v5906 = vunpack.c.h.b16 %v5306
    %v5907 = vunpack.c.l.b16 %v5307
    %v5908 = vunpack.c.h.b16 %v5307
    %v5909 = vunpack.c.l.b16 %v5308
    %v5910 = vunpack.c.h.b16 %v5308
    %v5911 = vunpack.c.l.b16 %v5309
    %v5912 = vunpack.c.h.b16 %v5309
    %v5913 = vunpack.c.l.b16 %v5310
    %v5914 = vunpack.c.h.b16 %v5310
    %v5915 = vunpack.c.l.b16 %v5311
    %v5916 = vunpack.c.h.b16 %v5311
    %v5917 = vunpack.c.l.b16 %v5312
    %v5918 = vunpack.c.h.b16 %v5312
    %v5919 = vunpack.c.l.b16 %v5313
    %v5920 = vunpack.c.h.b16 %v5313
    %v5921 = vunpack.c.l.b16 %v5314
    %v5922 = vunpack.c.h.b16 %v5314
    %v5923 = vunpack.c.l.b16 %v5315
    %v5924 = vpack.c.b16 %v5549, %v5524
    %v5925 = vpack.c.b16 %v5550, %v5525
    %v5926 = vpack.c.b16 %v5551, %v5526
    %v5927 = vpack.c.b16 %v5552, %v5527
    %v5928 = vpack.c.b16 %v5553, %v5528
    %v5929 = vpack.c.b16 %v5554, %v5529
    %v5930 = vpack.c.b16 %v5555, %v5530
    %v5931 = vpack.c.b16 %v5556, %v5531
    %v5932 = vpack.c.b16 %v5557, %v5532
    %v5933 = vpack.c.b16 %v5558, %v5533
    %v5934 = vpack.c.b16 %v5559, %v5534
    %v5935 = vpack.c.b16 %v5560, %v5535
    %v5936 = vpack.c.b16 %v5561, %v5536
    %v5937 = vpack.c.b16 %v5562, %v5537
    %v5938 = vpack.c.b16 %v5563, %v5538
    %v5939 = vpack.c.b16 %v5564, %v5539
    %v5940 = vpack.c.b16 %v5565, %v5540
    %v5941 = vpack.c.b16 %v5566, %v5541
    %v5942 = vpack.c.b16 %v5567, %v5542
    %v5943 = vpack.c.b16 %v5568, %v5543
    %v5944 = vpack.c.b16 %v5569, %v5544
    %v5945 = vpack.c.b16 %v5570, %v5545
    %v5946 = vpack.c.b16 %v5571, %v5546
    %v5947 = vpack.c.b16 %v5572, %v5547
    %v5948 = vpack.c.b16 %v5573, %v5548
    %v5949 = vpack.c.b16 %v5599, %v5574
    %v5950 = vpack.c.b16 %v5600, %v5575
    %v5951 = vpack.c.b16 %v5601, %v5576
    %v5952 = vpack.c.b16 %v5602, %v5577
    %v5953 = vpack.c.b16 %v5603, %v5578
    %v5954 = vpack.c.b16 %v5604, %v5579
    %v5955 = vpack.c.b16 %v5605, %v5580
    %v5956 = vpack.c.b16 %v5606, %v5581
    %v5957 = vpack.c.b16 %v5607, %v5582
    %v5958 = vpack.c.b16 %v5608, %v5583
    %v5959 = vpack.c.b16 %v5609, %v5584
    %v5960 = vpack.c.b16 %v5610, %v5585
    %v5961 = vpack.c.b16 %v5611, %v5586
    %v5962 = vpack.c.b16 %v5612, %v5587
    %v5963 = vpack.c.b16 %v5613, %v5588
    %v5964 = vpack.c.b16 %v5614, %v5589
    %v5965 = vpack.c.b16 %v5615, %v5590
    %v5966 = vpack.c.b16 %v5616, %v5591
    %v5967 = vpack.c.b16 %v5617, %v5592
    %v5968 = vpack.c.b16 %v5618, %v5593
    %v5969 = vpack.c.b16 %v5619, %v5594
    %v5970 = vpack.c.b16 %v5620, %v5595
    %v5971 = vpack.c.b16 %v5621, %v5596
    %v5972 = vpack.c.b16 %v5622, %v5597
    %v5973 = vpack.c.b16 %v5623, %v5598
    %v5974 = vpack.c.b16 %v5649, %v5624
    %v5975 = vpack.c.b16 %v5650, %v5625
    %v5976 = vpack.c.b16 %v5651, %v5626
    %v5977 = vpack.c.b16 %v5652, %v5627
    %v5978 = vpack.c.b16 %v5653, %v5628
    %v5979 = vpack.c.b16 %v5654, %v5629
    %v5980 = vpack.c.b16 %v5655, %v5630
    %v5981 = vpack.c.b16 %v5656, %v5631
    %v5982 = vpack.c.b16 %v5657, %v5632
    %v5983 = vpack.c.b16 %v5658, %v5633
    %v5984 = vpack.c.b16 %v5659, %v5634
    %v5985 = vpack.c.b16 %v5660, %v5635
    %v5986 = vpack.c.b16 %v5661, %v5636
    %v5987 = vpack.c.b16 %v5662, %v5637
    %v5988 = vpack.c.b16 %v5663, %v5638
    %v5989 = vpack.c.b16 %v5664, %v5639
    %v5990 = vpack.c.b16 %v5665, %v5640
    %v5991 = vpack.c.b16 %v5666, %v5641
    %v5992 = vpack.c.b16 %v5667, %v5642
    %v5993 = vpack.c.b16 %v5668, %v5643
    %v5994 = vpack.c.b16 %v5669, %v5644
    %v5995 = vpack.c.b16 %v5670, %v5645
    %v5996 = vpack.c.b16 %v5671, %v5646
    %v5997 = vpack.c.b16 %v5672, %v5647
    %v5998 = vpack.c.b16 %v5673, %v5648
    %v5999 = vpack.c.b16 %v5699, %v5674
    %v6000 = vpack.c.b16 %v5700, %v5675
    %v6001 = vpack.c.b16 %v5701, %v5676
    %v6002 = vpack.c.b16 %v5702, %v5677
    %v6003 = vpack.c.b16 %v5703, %v5678
    %v6004 = vpack.c.b16 %v5704, %v5679
    %v6005 = vpack.c.b16 %v5705, %v5680
    %v6006 = vpack.c.b16 %v5706, %v5681
    %v6007 = vpack.c.b16 %v5707, %v5682
    %v6008 = vpack.c.b16 %v5708, %v5683
    %v6009 = vpack.c.b16 %v5709, %v5684
    %v6010 = vpack.c.b16 %v5710, %v5685
    %v6011 = vpack.c.b16 %v5711, %v5686
    %v6012 = vpack.c.b16 %v5712, %v5687
    %v6013 = vpack.c.b16 %v5713, %v5688
    %v6014 = vpack.c.b16 %v5714, %v5689
    %v6015 = vpack.c.b16 %v5715, %v5690
    %v6016 = vpack.c.b16 %v5716, %v5691
    %v6017 = vpack.c.b16 %v5717, %v5692
    %v6018 = vpack.c.b16 %v5718, %v5693
    %v6019 = vpack.c.b16 %v5719, %v5694
    %v6020 = vpack.c.b16 %v5720, %v5695
    %v6021 = vpack.c.b16 %v5721, %v5696
    %v6022 = vpack.c.b16 %v5722, %v5697
    %v6023 = vpack.c.b16 %v5723, %v5698
    %v6024 = vpack.c.b16 %v5749, %v5724
    %v6025 = vpack.c.b16 %v5750, %v5725
    %v6026 = vpack.c.b16 %v5751, %v5726
    %v6027 = vpack.c.b16 %v5752, %v5727
    %v6028 = vpack.c.b16 %v5753, %v5728
    %v6029 = vpack.c.b16 %v5754, %v5729
    %v6030 = vpack.c.b16 %v5755, %v5730
    %v6031 = vpack.c.b16 %v5756, %v5731
    %v6032 = vpack.c.b16 %v5757, %v5732
    %v6033 = vpack.c.b16 %v5758, %v5733
    %v6034 = vpack.c.b16 %v5759, %v5734
    %v6035 = vpack.c.b16 %v5760, %v5735
    %v6036 = vpack.c.b16 %v5761, %v5736
    %v6037 = vpack.c.b16 %v5762, %v5737
    %v6038 = vpack.c.b16 %v5763, %v5738
    %v6039 = vpack.c.b16 %v5764, %v5739
    %v6040 = vpack.c.b16 %v5765, %v5740
    %v6041 = vpack.c.b16 %v5766, %v5741
    %v6042 = vpack.c.b16 %v5767, %v5742
    %v6043 = vpack.c.b16 %v5768, %v5743
    %v6044 = vpack.c.b16 %v5769, %v5744
    %v6045 = vpack.c.b16 %v5770, %v5745
    %v6046 = vpack.c.b16 %v5771, %v5746
    %v6047 = vpack.c.b16 %v5772, %v5747
    %v6048 = vpack.c.b16 %v5773, %v5748
    %v6049 = vpack.c.b16 %v5799, %v5774
    %v6050 = vpack.c.b16 %v5800, %v5775
    %v6051 = vpack.c.b16 %v5801, %v5776
    %v6052 = vpack.c.b16 %v5802, %v5777
    %v6053 = vpack.c.b16 %v5803, %v5778
    %v6054 = vpack.c.b16 %v5804, %v5779
    %v6055 = vpack.c.b16 %v5805, %v5780
    %v6056 = vpack.c.b16 %v5806, %v5781
    %v6057 = vpack.c.b16 %v5807, %v5782
    %v6058 = vpack.c.b16 %v5808, %v5783
    %v6059 = vpack.c.b16 %v5809, %v5784
    %v6060 = vpack.c.b16 %v5810, %v5785
    %v6061 = vpack.c.b16 %v5811, %v5786
    %v6062 = vpack.c.b16 %v5812, %v5787
    %v6063 = vpack.c.b16 %v5813, %v5788
    %v6064 = vpack.c.b16 %v5814, %v5789
    %v6065 = vpack.c.b16 %v5815, %v5790
    %v6066 = vpack.c.b16 %v5816, %v5791
    %v6067 = vpack.c.b16 %v5817, %v5792
    %v6068 = vpack.c.b16 %v5818, %v5793
    %v6069 = vpack.c.b16 %v5819, %v5794
    %v6070 = vpack.c.b16 %v5820, %v5795
    %v6071 = vpack.c.b16 %v5821, %v5796
    %v6072 = vpack.c.b16 %v5822, %v5797
    %v6073 = vpack.c.b16 %v5823, %v5798
    %v6074 = vpack.c.b16 %v5849, %v5824
    %v6075 = vpack.c.b16 %v5850, %v5825
    %v6076 = vpack.c.b16 %v5851, %v5826
    %v6077 = vpack.c.b16 %v5852, %v5827
    %v6078 = vpack.c.b16 %v5853, %v5828
    %v6079 = vpack.c.b16 %v5854, %v5829
    %v6080 = vpack.c.b16 %v5855, %v5830
    %v6081 = vpack.c.b16 %v5856, %v5831
    %v6082 = vpack.c.b16 %v5857, %v5832
    %v6083 = vpack.c.b16 %v5858, %v5833
    %v6084 = vpack.c.b16 %v5859, %v5834
    %v6085 = vpack.c.b16 %v5860, %v5835
    %v6086 = vpack.c.b16 %v5861, %v5836
    %v6087 = vpack.c.b16 %v5862, %v5837
    %v6088 = vpack.c.b16 %v5863, %v5838
    %v6089 = vpack.c.b16 %v5864, %v5839
    %v6090 = vpack.c.b16 %v5865, %v5840
    %v6091 = vpack.c.b16 %v5866, %v5841
    %v6092 = vpack.c.b16 %v5867, %v5842
    %v6093 = vpack.c.b16 %v5868, %v5843
    %v6094 = vpack.c.b16 %v5869, %v5844
    %v6095 = vpack.c.b16 %v5870, %v5845
    %v6096 = vpack.c.b16 %v5871, %v5846
    %v6097 = vpack.c.b16 %v5872, %v5847
    %v6098 = vpack.c.b16 %v5873, %v5848
    %v6099 = vpack.c.b16 %v5899, %v5874
    %v6100 = vpack.c.b16 %v5900, %v5875
    %v6101 = vpack.c.b16 %v5901, %v5876
    %v6102 = vpack.c.b16 %v5902, %v5877
    %v6103 = vpack.c.b16 %v5903, %v5878
    %v6104 = vpack.c.b16 %v5904, %v5879
    %v6105 = vpack.c.b16 %v5905, %v5880
    %v6106 = vpack.c.b16 %v5906, %v5881
    %v6107 = vpack.c.b16 %v5907, %v5882
    %v6108 = vpack.c.b16 %v5908, %v5883
    %v6109 = vpack.c.b16 %v5909, %v5884
    %v6110 = vpack.c.b16 %v5910, %v5885
    %v6111 = vpack.c.b16 %v5911, %v5886
    %v6112 = vpack.c.b16 %v5912, %v5887
    %v6113 = vpack.c.b16 %v5913, %v5888
    %v6114 = vpack.c.b16 %v5914, %v5889
    %v6115 = vpack.c.b16 %v5915, %v5890
    %v6116 = vpack.c.b16 %v5916, %v5891
    %v6117 = vpack.c.b16 %v5917, %v5892
    %v6118 = vpack.c.b16 %v5918, %v5893
    %v6119 = vpack.c.b16 %v5919, %v5894
    %v6120 = vpack.c.b16 %v5920, %v5895
    %v6121 = vpack.c.b16 %v5921, %v5896
    %v6122 = vpack.c.b16 %v5922, %v5897
    %v6123 = vpack.c.b16 %v5923, %v5898
    %6324 = vmatprep.subr.bf16.mxu0 %v5925
    %6325 = vmatpush1.bf16.msra.mxu0 %v5924
    %6326 = vmatprep.subr.bf16.mxu0 %v5950
    %6327 = vmatpush1.bf16.msra.mxu0 %v5949
    %6328 = vmatprep.subr.bf16.mxu0 %v5975
    %6329 = vmatpush1.bf16.msra.mxu0 %v5974
    %6330 = vmatprep.subr.bf16.mxu0 %v6000
    %6331 = vmatpush1.bf16.msra.mxu0 %v5999
    %6332 = vmatprep.subr.bf16.mxu0 %v6025
    %6333 = vmatpush1.bf16.msra.mxu0 %v6024
    %6334 = vmatprep.subr.bf16.mxu0 %v6050
    %6335 = vmatpush1.bf16.msra.mxu0 %v6049
    %6336 = vmatprep.subr.bf16.mxu0 %v6075
    %6337 = vmatpush1.bf16.msra.mxu0 %v6074
    %6338 = vmatprep.subr.bf16.mxu0 %v6100
    %6339 = vmatpush1.bf16.msra.mxu0 %v6099
    %6340 = vmatprep.subr.bf16.mxu0 0
    %6341 = vmatpush1.bf16.msra.mxu0 0
    %6342 = vmatprep.subr.bf16.mxu0 0
    %6343 = vmatpush1.bf16.msra.mxu0 0
    %6344 = vmatprep.subr.bf16.mxu0 0
    %6345 = vmatpush1.bf16.msra.mxu0 0
    %6346 = vmatprep.subr.bf16.mxu0 0
    %6347 = vmatpush1.bf16.msra.mxu0 0
    %6348 = vmatprep.subr.bf16.mxu0 0
    %6349 = vmatpush1.bf16.msra.mxu0 0
    %6350 = vmatprep.subr.bf16.mxu0 0
    %6351 = vmatpush1.bf16.msra.mxu0 0
    %6352 = vmatprep.subr.bf16.mxu0 0
    %6353 = vmatpush1.bf16.msra.mxu0 0
    %6354 = vmatprep.subr.bf16.mxu0 0
    %6355 = vmatpush1.bf16.msra.mxu0 0
    %6356 = vmatprep.mubr.bf16.mxu0 0
    %6357 = vmatmul.mubr.bf16.gmra.mrb[0].mxu0 %v5106
    %v6358 = vpop.f32.mrb[0].mxu0
    %v6359 = vadd.f32 0.0, %v6358
    %v6360 = vpop.f32.mrb[0].mxu0
    %v6361 = vadd.f32 0.0, %v6360
    %v6362 = vpop.f32.mrb[0].mxu0
    %v6363 = vadd.f32 0.0, %v6362
    %v6364 = vpop.f32.mrb[0].mxu0
    %v6365 = vadd.f32 0.0, %v6364
    %6366 = vmatprep.mubr.bf16.mxu0 0
    %6367 = vmatmul.mubr.bf16.gmra.mrb[0].mxu0 %v5107
    %v6368 = vpop.f32.mrb[0].mxu0
    %v6369 = vadd.f32 0.0, %v6368
    %v6370 = vpop.f32.mrb[0].mxu0
    %v6371 = vadd.f32 0.0, %v6370
    %v6372 = vpop.f32.mrb[0].mxu0
    %v6373 = vadd.f32 0.0, %v6372
    %v6374 = vpop.f32.mrb[0].mxu0
    %v6375 = vadd.f32 0.0, %v6374
    %6376 = vdwg.mxu0
    %6377 = vmatprep.subr.bf16.mxu0 %v5927
    %6378 = vmatpush1.bf16.msra.mxu0 %v5926
    %6379 = vmatprep.subr.bf16.mxu0 %v5952
    %6380 = vmatpush1.bf16.msra.mxu0 %v5951
    %6381 = vmatprep.subr.bf16.mxu0 %v5977
    %6382 = vmatpush1.bf16.msra.mxu0 %v5976
    %6383 = vmatprep.subr.bf16.mxu0 %v6002
    %6384 = vmatpush1.bf16.msra.mxu0 %v6001
    %6385 = vmatprep.subr.bf16.mxu0 %v6027
    %6386 = vmatpush1.bf16.msra.mxu0 %v6026
    %6387 = vmatprep.subr.bf16.mxu0 %v6052
    %6388 = vmatpush1.bf16.msra.mxu0 %v6051
    %6389 = vmatprep.subr.bf16.mxu0 %v6077
    %6390 = vmatpush1.bf16.msra.mxu0 %v6076
    %6391 = vmatprep.subr.bf16.mxu0 %v6102
    %6392 = vmatpush1.bf16.msra.mxu0 %v6101
    %6393 = vmatprep.subr.bf16.mxu0 0
    %6394 = vmatpush1.bf16.msra.mxu0 0
    %6395 = vmatprep.subr.bf16.mxu0 0
    %6396 = vmatpush1.bf16.msra.mxu0 0
    %6397 = vmatprep.subr.bf16.mxu0 0
    %6398 = vmatpush1.bf16.msra.mxu0 0
    %6399 = vmatprep.subr.bf16.mxu0 0
    %6400 = vmatpush1.bf16.msra.mxu0 0
    %6401 = vmatprep.subr.bf16.mxu0 0
    %6402 = vmatpush1.bf16.msra.mxu0 0
    %6403 = vmatprep.subr.bf16.mxu0 0
    %6404 = vmatpush1.bf16.msra.mxu0 0
    %6405 = vmatprep.subr.bf16.mxu0 0
    %6406 = vmatpush1.bf16.msra.mxu0 0
    %6407 = vmatprep.subr.bf16.mxu0 0
    %6408 = vmatpush1.bf16.msra.mxu0 0
    %6409 = vmatprep.mubr.bf16.mxu0 0
    %6410 = vmatmul.mubr.bf16.gmra.mrb[0].mxu0 %v5106
    %v6411 = vpop.f32.mrb[0].mxu0
    %v6412 = vadd.f32 0.0, %v6411
    %v6413 = vpop.f32.mrb[0].mxu0
    %v6414 = vadd.f32 0.0, %v6413
    %v6415 = vpop.f32.mrb[0].mxu0
    %v6416 = vadd.f32 0.0, %v6415
    %v6417 = vpop.f32.mrb[0].mxu0
    %v6418 = vadd.f32 0.0, %v6417
    %6419 = vmatprep.mubr.bf16.mxu0 0
    %6420 = vmatmul.mubr.bf16.gmra.mrb[0].mxu0 %v5107
    %v6421 = vpop.f32.mrb[0].mxu0
    %v6422 = vadd.f32 0.0, %v6421
    %v6423 = vpop.f32.mrb[0].mxu0
    %v6424 = vadd.f32 0.0, %v6423
    %v6425 = vpop.f32.mrb[0].mxu0
    %v6426 = vadd.f32 0.0, %v6425
    %v6427 = vpop.f32.mrb[0].mxu0
    %v6428 = vadd.f32 0.0, %v6427
    %6429 = vdwg.mxu0
    %6430 = vmatprep.subr.bf16.mxu0 %v5929
    %6431 = vmatpush1.bf16.msra.mxu0 %v5928
    %6432 = vmatprep.subr.bf16.mxu0 %v5954
    %6433 = vmatpush1.bf16.msra.mxu0 %v5953
    %6434 = vmatprep.subr.bf16.mxu0 %v5979
    %6435 = vmatpush1.bf16.msra.mxu0 %v5978
    %6436 = vmatprep.subr.bf16.mxu0 %v6004
    %6437 = vmatpush1.bf16.msra.mxu0 %v6003
    %6438 = vmatprep.subr.bf16.mxu0 %v6029
    %6439 = vmatpush1.bf16.msra.mxu0 %v6028
    %6440 = vmatprep.subr.bf16.mxu0 %v6054
    %6441 = vmatpush1.bf16.msra.mxu0 %v6053
    %6442 = vmatprep.subr.bf16.mxu0 %v6079
    %6443 = vmatpush1.bf16.msra.mxu0 %v6078
    %6444 = vmatprep.subr.bf16.mxu0 %v6104
    %6445 = vmatpush1.bf16.msra.mxu0 %v6103
    %6446 = vmatprep.subr.bf16.mxu0 0
    %6447 = vmatpush1.bf16.msra.mxu0 0
    %6448 = vmatprep.subr.bf16.mxu0 0
    %6449 = vmatpush1.bf16.msra.mxu0 0
    %6450 = vmatprep.subr.bf16.mxu0 0
    %6451 = vmatpush1.bf16.msra.mxu0 0
    %6452 = vmatprep.subr.bf16.mxu0 0
    %6453 = vmatpush1.bf16.msra.mxu0 0
    %6454 = vmatprep.subr.bf16.mxu0 0
    %6455 = vmatpush1.bf16.msra.mxu0 0
    %6456 = vmatprep.subr.bf16.mxu0 0
    %6457 = vmatpush1.bf16.msra.mxu0 0
    %6458 = vmatprep.subr.bf16.mxu0 0
    %6459 = vmatpush1.bf16.msra.mxu0 0
    %6460 = vmatprep.subr.bf16.mxu0 0
    %6461 = vmatpush1.bf16.msra.mxu0 0
    %6462 = vmatprep.mubr.bf16.mxu0 0
    %6463 = vmatmul.mubr.bf16.gmra.mrb[0].mxu0 %v5106
    %v6464 = vpop.f32.mrb[0].mxu0
    %v6465 = vadd.f32 0.0, %v6464
    %v6466 = vpop.f32.mrb[0].mxu0
    %v6467 = vadd.f32 0.0, %v6466
    %v6468 = vpop.f32.mrb[0].mxu0
    %v6469 = vadd.f32 0.0, %v6468
    %v6470 = vpop.f32.mrb[0].mxu0
    %v6471 = vadd.f32 0.0, %v6470
    %6472 = vmatprep.mubr.bf16.mxu0 0
    %6473 = vmatmul.mubr.bf16.gmra.mrb[0].mxu0 %v5107
    %v6474 = vpop.f32.mrb[0].mxu0
    %v6475 = vadd.f32 0.0, %v6474
    %v6476 = vpop.f32.mrb[0].mxu0
    %v6477 = vadd.f32 0.0, %v6476
    %v6478 = vpop.f32.mrb[0].mxu0
    %v6479 = vadd.f32 0.0, %v6478
    %v6480 = vpop.f32.mrb[0].mxu0
    %v6481 = vadd.f32 0.0, %v6480
    %6482 = vdwg.mxu0
    %6483 = vmatprep.subr.bf16.mxu0 %v5931
    %6484 = vmatpush1.bf16.msra.mxu0 %v5930
    %6485 = vmatprep.subr.bf16.mxu0 %v5956
    %6486 = vmatpush1.bf16.msra.mxu0 %v5955
    %6487 = vmatprep.subr.bf16.mxu0 %v5981
    %6488 = vmatpush1.bf16.msra.mxu0 %v5980
    %6489 = vmatprep.subr.bf16.mxu0 %v6006
    %6490 = vmatpush1.bf16.msra.mxu0 %v6005
    %6491 = vmatprep.subr.bf16.mxu0 %v6031
    %6492 = vmatpush1.bf16.msra.mxu0 %v6030
    %6493 = vmatprep.subr.bf16.mxu0 %v6056
    %6494 = vmatpush1.bf16.msra.mxu0 %v6055
    %6495 = vmatprep.subr.bf16.mxu0 %v6081
    %6496 = vmatpush1.bf16.msra.mxu0 %v6080
    %6497 = vmatprep.subr.bf16.mxu0 %v6106
    %6498 = vmatpush1.bf16.msra.mxu0 %v6105
    %6499 = vmatprep.subr.bf16.mxu0 0
    %6500 = vmatpush1.bf16.msra.mxu0 0
    %6501 = vmatprep.subr.bf16.mxu0 0
    %6502 = vmatpush1.bf16.msra.mxu0 0
    %6503 = vmatprep.subr.bf16.mxu0 0
    %6504 = vmatpush1.bf16.msra.mxu0 0
    %6505 = vmatprep.subr.bf16.mxu0 0
    %6506 = vmatpush1.bf16.msra.mxu0 0
    %6507 = vmatprep.subr.bf16.mxu0 0
    %6508 = vmatpush1.bf16.msra.mxu0 0
    %6509 = vmatprep.subr.bf16.mxu0 0
    %6510 = vmatpush1.bf16.msra.mxu0 0
    %6511 = vmatprep.subr.bf16.mxu0 0
    %6512 = vmatpush1.bf16.msra.mxu0 0
    %6513 = vmatprep.subr.bf16.mxu0 0
    %6514 = vmatpush1.bf16.msra.mxu0 0
    %6515 = vmatprep.mubr.bf16.mxu0 0
    %6516 = vmatmul.mubr.bf16.gmra.mrb[0].mxu0 %v5106
    %v6517 = vpop.f32.mrb[0].mxu0
    %v6518 = vadd.f32 0.0, %v6517
    %v6519 = vpop.f32.mrb[0].mxu0
    %v6520 = vadd.f32 0.0, %v6519
    %v6521 = vpop.f32.mrb[0].mxu0
    %v6522 = vadd.f32 0.0, %v6521
    %v6523 = vpop.f32.mrb[0].mxu0
    %v6524 = vadd.f32 0.0, %v6523
    %6525 = vmatprep.mubr.bf16.mxu0 0
    %6526 = vmatmul.mubr.bf16.gmra.mrb[0].mxu0 %v5107
    %v6527 = vpop.f32.mrb[0].mxu0
    %v6528 = vadd.f32 0.0, %v6527
    %v6529 = vpop.f32.mrb[0].mxu0
    %v6530 = vadd.f32 0.0, %v6529
    %v6531 = vpop.f32.mrb[0].mxu0
    %v6532 = vadd.f32 0.0, %v6531
    %v6533 = vpop.f32.mrb[0].mxu0
    %v6534 = vadd.f32 0.0, %v6533
    %6535 = vdwg.mxu0
    %6536 = vmatprep.subr.bf16.mxu0 %v5933
    %6537 = vmatpush1.bf16.msra.mxu0 %v5932
    %6538 = vmatprep.subr.bf16.mxu0 %v5958
    %6539 = vmatpush1.bf16.msra.mxu0 %v5957
    %6540 = vmatprep.subr.bf16.mxu0 %v5983
    %6541 = vmatpush1.bf16.msra.mxu0 %v5982
    %6542 = vmatprep.subr.bf16.mxu0 %v6008
    %6543 = vmatpush1.bf16.msra.mxu0 %v6007
    %6544 = vmatprep.subr.bf16.mxu0 %v6033
    %6545 = vmatpush1.bf16.msra.mxu0 %v6032
    %6546 = vmatprep.subr.bf16.mxu0 %v6058
    %6547 = vmatpush1.bf16.msra.mxu0 %v6057
    %6548 = vmatprep.subr.bf16.mxu0 %v6083
    %6549 = vmatpush1.bf16.msra.mxu0 %v6082
    %6550 = vmatprep.subr.bf16.mxu0 %v6108
    %6551 = vmatpush1.bf16.msra.mxu0 %v6107
    %6552 = vmatprep.subr.bf16.mxu0 0
    %6553 = vmatpush1.bf16.msra.mxu0 0
    %6554 = vmatprep.subr.bf16.mxu0 0
    %6555 = vmatpush1.bf16.msra.mxu0 0
    %6556 = vmatprep.subr.bf16.mxu0 0
    %6557 = vmatpush1.bf16.msra.mxu0 0
    %6558 = vmatprep.subr.bf16.mxu0 0
    %6559 = vmatpush1.bf16.msra.mxu0 0
    %6560 = vmatprep.subr.bf16.mxu0 0
    %6561 = vmatpush1.bf16.msra.mxu0 0
    %6562 = vmatprep.subr.bf16.mxu0 0
    %6563 = vmatpush1.bf16.msra.mxu0 0
    %6564 = vmatprep.subr.bf16.mxu0 0
    %6565 = vmatpush1.bf16.msra.mxu0 0
    %6566 = vmatprep.subr.bf16.mxu0 0
    %6567 = vmatpush1.bf16.msra.mxu0 0
    %6568 = vmatprep.mubr.bf16.mxu0 0
    %6569 = vmatmul.mubr.bf16.gmra.mrb[0].mxu0 %v5106
    %v6570 = vpop.f32.mrb[0].mxu0
    %v6571 = vadd.f32 0.0, %v6570
    %v6572 = vpop.f32.mrb[0].mxu0
    %v6573 = vadd.f32 0.0, %v6572
    %v6574 = vpop.f32.mrb[0].mxu0
    %v6575 = vadd.f32 0.0, %v6574
    %v6576 = vpop.f32.mrb[0].mxu0
    %v6577 = vadd.f32 0.0, %v6576
    %6578 = vmatprep.mubr.bf16.mxu0 0
    %6579 = vmatmul.mubr.bf16.gmra.mrb[0].mxu0 %v5107
    %v6580 = vpop.f32.mrb[0].mxu0
    %v6581 = vadd.f32 0.0, %v6580
    %v6582 = vpop.f32.mrb[0].mxu0
    %v6583 = vadd.f32 0.0, %v6582
    %v6584 = vpop.f32.mrb[0].mxu0
    %v6585 = vadd.f32 0.0, %v6584
    %v6586 = vpop.f32.mrb[0].mxu0
    %v6587 = vadd.f32 0.0, %v6586
    %6588 = vdwg.mxu0
    %6589 = vmatprep.subr.bf16.mxu0 %v5935
    %6590 = vmatpush1.bf16.msra.mxu0 %v5934
    %6591 = vmatprep.subr.bf16.mxu0 %v5960
    %6592 = vmatpush1.bf16.msra.mxu0 %v5959
    %6593 = vmatprep.subr.bf16.mxu0 %v5985
    %6594 = vmatpush1.bf16.msra.mxu0 %v5984
    %6595 = vmatprep.subr.bf16.mxu0 %v6010
    %6596 = vmatpush1.bf16.msra.mxu0 %v6009
    %6597 = vmatprep.subr.bf16.mxu0 %v6035
    %6598 = vmatpush1.bf16.msra.mxu0 %v6034
    %6599 = vmatprep.subr.bf16.mxu0 %v6060
    %6600 = vmatpush1.bf16.msra.mxu0 %v6059
    %6601 = vmatprep.subr.bf16.mxu0 %v6085
    %6602 = vmatpush1.bf16.msra.mxu0 %v6084
    %6603 = vmatprep.subr.bf16.mxu0 %v6110
    %6604 = vmatpush1.bf16.msra.mxu0 %v6109
    %6605 = vmatprep.subr.bf16.mxu0 0
    %6606 = vmatpush1.bf16.msra.mxu0 0
    %6607 = vmatprep.subr.bf16.mxu0 0
    %6608 = vmatpush1.bf16.msra.mxu0 0
    %6609 = vmatprep.subr.bf16.mxu0 0
    %6610 = vmatpush1.bf16.msra.mxu0 0
    %6611 = vmatprep.subr.bf16.mxu0 0
    %6612 = vmatpush1.bf16.msra.mxu0 0
    %6613 = vmatprep.subr.bf16.mxu0 0
    %6614 = vmatpush1.bf16.msra.mxu0 0
    %6615 = vmatprep.subr.bf16.mxu0 0
    %6616 = vmatpush1.bf16.msra.mxu0 0
    %6617 = vmatprep.subr.bf16.mxu0 0
    %6618 = vmatpush1.bf16.msra.mxu0 0
    %6619 = vmatprep.subr.bf16.mxu0 0
    %6620 = vmatpush1.bf16.msra.mxu0 0
    %6621 = vmatprep.mubr.bf16.mxu0 0
    %6622 = vmatmul.mubr.bf16.gmra.mrb[0].mxu0 %v5106
    %v6623 = vpop.f32.mrb[0].mxu0
    %v6624 = vadd.f32 0.0, %v6623
    %v6625 = vpop.f32.mrb[0].mxu0
    %v6626 = vadd.f32 0.0, %v6625
    %v6627 = vpop.f32.mrb[0].mxu0
    %v6628 = vadd.f32 0.0, %v6627
    %v6629 = vpop.f32.mrb[0].mxu0
    %v6630 = vadd.f32 0.0, %v6629
    %6631 = vmatprep.mubr.bf16.mxu0 0
    %6632 = vmatmul.mubr.bf16.gmra.mrb[0].mxu0 %v5107
    %v6633 = vpop.f32.mrb[0].mxu0
    %v6634 = vadd.f32 0.0, %v6633
    %v6635 = vpop.f32.mrb[0].mxu0
    %v6636 = vadd.f32 0.0, %v6635
    %v6637 = vpop.f32.mrb[0].mxu0
    %v6638 = vadd.f32 0.0, %v6637
    %v6639 = vpop.f32.mrb[0].mxu0
    %v6640 = vadd.f32 0.0, %v6639
    %6641 = vdwg.mxu0
    %6642 = vmatprep.subr.bf16.mxu0 %v5937
    %6643 = vmatpush1.bf16.msra.mxu0 %v5936
    %6644 = vmatprep.subr.bf16.mxu0 %v5962
    %6645 = vmatpush1.bf16.msra.mxu0 %v5961
    %6646 = vmatprep.subr.bf16.mxu0 %v5987
    %6647 = vmatpush1.bf16.msra.mxu0 %v5986
    %6648 = vmatprep.subr.bf16.mxu0 %v6012
    %6649 = vmatpush1.bf16.msra.mxu0 %v6011
    %6650 = vmatprep.subr.bf16.mxu0 %v6037
    %6651 = vmatpush1.bf16.msra.mxu0 %v6036
    %6652 = vmatprep.subr.bf16.mxu0 %v6062
    %6653 = vmatpush1.bf16.msra.mxu0 %v6061
    %6654 = vmatprep.subr.bf16.mxu0 %v6087
    %6655 = vmatpush1.bf16.msra.mxu0 %v6086
    %6656 = vmatprep.subr.bf16.mxu0 %v6112
    %6657 = vmatpush1.bf16.msra.mxu0 %v6111
    %6658 = vmatprep.subr.bf16.mxu0 0
    %6659 = vmatpush1.bf16.msra.mxu0 0
    %6660 = vmatprep.subr.bf16.mxu0 0
    %6661 = vmatpush1.bf16.msra.mxu0 0
    %6662 = vmatprep.subr.bf16.mxu0 0
    %6663 = vmatpush1.bf16.msra.mxu0 0
    %6664 = vmatprep.subr.bf16.mxu0 0
    %6665 = vmatpush1.bf16.msra.mxu0 0
    %6666 = vmatprep.subr.bf16.mxu0 0
    %6667 = vmatpush1.bf16.msra.mxu0 0
    %6668 = vmatprep.subr.bf16.mxu0 0
    %6669 = vmatpush1.bf16.msra.mxu0 0
    %6670 = vmatprep.subr.bf16.mxu0 0
    %6671 = vmatpush1.bf16.msra.mxu0 0
    %6672 = vmatprep.subr.bf16.mxu0 0
    %6673 = vmatpush1.bf16.msra.mxu0 0
    %6674 = vmatprep.mubr.bf16.mxu0 0
    %6675 = vmatmul.mubr.bf16.gmra.mrb[0].mxu0 %v5106
    %v6676 = vpop.f32.mrb[0].mxu0
    %v6677 = vadd.f32 0.0, %v6676
    %v6678 = vpop.f32.mrb[0].mxu0
    %v6679 = vadd.f32 0.0, %v6678
    %v6680 = vpop.f32.mrb[0].mxu0
    %v6681 = vadd.f32 0.0, %v6680
    %v6682 = vpop.f32.mrb[0].mxu0
    %v6683 = vadd.f32 0.0, %v6682
    %6684 = vmatprep.mubr.bf16.mxu0 0
    %6685 = vmatmul.mubr.bf16.gmra.mrb[0].mxu0 %v5107
    %v6686 = vpop.f32.mrb[0].mxu0
    %v6687 = vadd.f32 0.0, %v6686
    %v6688 = vpop.f32.mrb[0].mxu0
    %v6689 = vadd.f32 0.0, %v6688
    %v6690 = vpop.f32.mrb[0].mxu0
    %v6691 = vadd.f32 0.0, %v6690
    %v6692 = vpop.f32.mrb[0].mxu0
    %v6693 = vadd.f32 0.0, %v6692
    %6694 = vdwg.mxu0
    %6695 = vmatprep.subr.bf16.mxu0 %v5939
    %6696 = vmatpush1.bf16.msra.mxu0 %v5938
    %6697 = vmatprep.subr.bf16.mxu0 %v5964
    %6698 = vmatpush1.bf16.msra.mxu0 %v5963
    %6699 = vmatprep.subr.bf16.mxu0 %v5989
    %6700 = vmatpush1.bf16.msra.mxu0 %v5988
    %6701 = vmatprep.subr.bf16.mxu0 %v6014
    %6702 = vmatpush1.bf16.msra.mxu0 %v6013
    %6703 = vmatprep.subr.bf16.mxu0 %v6039
    %6704 = vmatpush1.bf16.msra.mxu0 %v6038
    %6705 = vmatprep.subr.bf16.mxu0 %v6064
    %6706 = vmatpush1.bf16.msra.mxu0 %v6063
    %6707 = vmatprep.subr.bf16.mxu0 %v6089
    %6708 = vmatpush1.bf16.msra.mxu0 %v6088
    %6709 = vmatprep.subr.bf16.mxu0 %v6114
    %6710 = vmatpush1.bf16.msra.mxu0 %v6113
    %6711 = vmatprep.subr.bf16.mxu0 0
    %6712 = vmatpush1.bf16.msra.mxu0 0
    %6713 = vmatprep.subr.bf16.mxu0 0
    %6714 = vmatpush1.bf16.msra.mxu0 0
    %6715 = vmatprep.subr.bf16.mxu0 0
    %6716 = vmatpush1.bf16.msra.mxu0 0
    %6717 = vmatprep.subr.bf16.mxu0 0
    %6718 = vmatpush1.bf16.msra.mxu0 0
    %6719 = vmatprep.subr.bf16.mxu0 0
    %6720 = vmatpush1.bf16.msra.mxu0 0
    %6721 = vmatprep.subr.bf16.mxu0 0
    %6722 = vmatpush1.bf16.msra.mxu0 0
    %6723 = vmatprep.subr.bf16.mxu0 0
    %6724 = vmatpush1.bf16.msra.mxu0 0
    %6725 = vmatprep.subr.bf16.mxu0 0
    %6726 = vmatpush1.bf16.msra.mxu0 0
    %6727 = vmatprep.mubr.bf16.mxu0 0
    %6728 = vmatmul.mubr.bf16.gmra.mrb[0].mxu0 %v5106
    %v6729 = vpop.f32.mrb[0].mxu0
    %v6730 = vadd.f32 0.0, %v6729
    %v6731 = vpop.f32.mrb[0].mxu0
    %v6732 = vadd.f32 0.0, %v6731
    %v6733 = vpop.f32.mrb[0].mxu0
    %v6734 = vadd.f32 0.0, %v6733
    %v6735 = vpop.f32.mrb[0].mxu0
    %v6736 = vadd.f32 0.0, %v6735
    %6737 = vmatprep.mubr.bf16.mxu0 0
    %6738 = vmatmul.mubr.bf16.gmra.mrb[0].mxu0 %v5107
    %v6739 = vpop.f32.mrb[0].mxu0
    %v6740 = vadd.f32 0.0, %v6739
    %v6741 = vpop.f32.mrb[0].mxu0
    %v6742 = vadd.f32 0.0, %v6741
    %v6743 = vpop.f32.mrb[0].mxu0
    %v6744 = vadd.f32 0.0, %v6743
    %v6745 = vpop.f32.mrb[0].mxu0
    %v6746 = vadd.f32 0.0, %v6745
    %6747 = vdwg.mxu0
    %6748 = vmatprep.subr.bf16.mxu0 %v5941
    %6749 = vmatpush1.bf16.msra.mxu0 %v5940
    %6750 = vmatprep.subr.bf16.mxu0 %v5966
    %6751 = vmatpush1.bf16.msra.mxu0 %v5965
    %6752 = vmatprep.subr.bf16.mxu0 %v5991
    %6753 = vmatpush1.bf16.msra.mxu0 %v5990
    %6754 = vmatprep.subr.bf16.mxu0 %v6016
    %6755 = vmatpush1.bf16.msra.mxu0 %v6015
    %6756 = vmatprep.subr.bf16.mxu0 %v6041
    %6757 = vmatpush1.bf16.msra.mxu0 %v6040
    %6758 = vmatprep.subr.bf16.mxu0 %v6066
    %6759 = vmatpush1.bf16.msra.mxu0 %v6065
    %6760 = vmatprep.subr.bf16.mxu0 %v6091
    %6761 = vmatpush1.bf16.msra.mxu0 %v6090
    %6762 = vmatprep.subr.bf16.mxu0 %v6116
    %6763 = vmatpush1.bf16.msra.mxu0 %v6115
    %6764 = vmatprep.subr.bf16.mxu0 0
    %6765 = vmatpush1.bf16.msra.mxu0 0
    %6766 = vmatprep.subr.bf16.mxu0 0
    %6767 = vmatpush1.bf16.msra.mxu0 0
    %6768 = vmatprep.subr.bf16.mxu0 0
    %6769 = vmatpush1.bf16.msra.mxu0 0
    %6770 = vmatprep.subr.bf16.mxu0 0
    %6771 = vmatpush1.bf16.msra.mxu0 0
    %6772 = vmatprep.subr.bf16.mxu0 0
    %6773 = vmatpush1.bf16.msra.mxu0 0
    %6774 = vmatprep.subr.bf16.mxu0 0
    %6775 = vmatpush1.bf16.msra.mxu0 0
    %6776 = vmatprep.subr.bf16.mxu0 0
    %6777 = vmatpush1.bf16.msra.mxu0 0
    %6778 = vmatprep.subr.bf16.mxu0 0
    %6779 = vmatpush1.bf16.msra.mxu0 0
    %6780 = vmatprep.mubr.bf16.mxu0 0
    %6781 = vmatmul.mubr.bf16.gmra.mrb[0].mxu0 %v5106
    %v6782 = vpop.f32.mrb[0].mxu0
    %v6783 = vadd.f32 0.0, %v6782
    %v6784 = vpop.f32.mrb[0].mxu0
    %v6785 = vadd.f32 0.0, %v6784
    %v6786 = vpop.f32.mrb[0].mxu0
    %v6787 = vadd.f32 0.0, %v6786
    %v6788 = vpop.f32.mrb[0].mxu0
    %v6789 = vadd.f32 0.0, %v6788
    %6790 = vmatprep.mubr.bf16.mxu0 0
    %6791 = vmatmul.mubr.bf16.gmra.mrb[0].mxu0 %v5107
    %v6792 = vpop.f32.mrb[0].mxu0
    %v6793 = vadd.f32 0.0, %v6792
    %v6794 = vpop.f32.mrb[0].mxu0
    %v6795 = vadd.f32 0.0, %v6794
    %v6796 = vpop.f32.mrb[0].mxu0
    %v6797 = vadd.f32 0.0, %v6796
    %v6798 = vpop.f32.mrb[0].mxu0
    %v6799 = vadd.f32 0.0, %v6798
    %6800 = vdwg.mxu0
    %6801 = vmatprep.subr.bf16.mxu0 %v5943
    %6802 = vmatpush1.bf16.msra.mxu0 %v5942
    %6803 = vmatprep.subr.bf16.mxu0 %v5968
    %6804 = vmatpush1.bf16.msra.mxu0 %v5967
    %6805 = vmatprep.subr.bf16.mxu0 %v5993
    %6806 = vmatpush1.bf16.msra.mxu0 %v5992
    %6807 = vmatprep.subr.bf16.mxu0 %v6018
    %6808 = vmatpush1.bf16.msra.mxu0 %v6017
    %6809 = vmatprep.subr.bf16.mxu0 %v6043
    %6810 = vmatpush1.bf16.msra.mxu0 %v6042
    %6811 = vmatprep.subr.bf16.mxu0 %v6068
    %6812 = vmatpush1.bf16.msra.mxu0 %v6067
    %6813 = vmatprep.subr.bf16.mxu0 %v6093
    %6814 = vmatpush1.bf16.msra.mxu0 %v6092
    %6815 = vmatprep.subr.bf16.mxu0 %v6118
    %6816 = vmatpush1.bf16.msra.mxu0 %v6117
    %6817 = vmatprep.subr.bf16.mxu0 0
    %6818 = vmatpush1.bf16.msra.mxu0 0
    %6819 = vmatprep.subr.bf16.mxu0 0
    %6820 = vmatpush1.bf16.msra.mxu0 0
    %6821 = vmatprep.subr.bf16.mxu0 0
    %6822 = vmatpush1.bf16.msra.mxu0 0
    %6823 = vmatprep.subr.bf16.mxu0 0
    %6824 = vmatpush1.bf16.msra.mxu0 0
    %6825 = vmatprep.subr.bf16.mxu0 0
    %6826 = vmatpush1.bf16.msra.mxu0 0
    %6827 = vmatprep.subr.bf16.mxu0 0
    %6828 = vmatpush1.bf16.msra.mxu0 0
    %6829 = vmatprep.subr.bf16.mxu0 0
    %6830 = vmatpush1.bf16.msra.mxu0 0
    %6831 = vmatprep.subr.bf16.mxu0 0
    %6832 = vmatpush1.bf16.msra.mxu0 0
    %6833 = vmatprep.mubr.bf16.mxu0 0
    %6834 = vmatmul.mubr.bf16.gmra.mrb[0].mxu0 %v5106
    %v6835 = vpop.f32.mrb[0].mxu0
    %v6836 = vadd.f32 0.0, %v6835
    %v6837 = vpop.f32.mrb[0].mxu0
    %v6838 = vadd.f32 0.0, %v6837
    %v6839 = vpop.f32.mrb[0].mxu0
    %v6840 = vadd.f32 0.0, %v6839
    %v6841 = vpop.f32.mrb[0].mxu0
    %v6842 = vadd.f32 0.0, %v6841
    %6843 = vmatprep.mubr.bf16.mxu0 0
    %6844 = vmatmul.mubr.bf16.gmra.mrb[0].mxu0 %v5107
    %v6845 = vpop.f32.mrb[0].mxu0
    %v6846 = vadd.f32 0.0, %v6845
    %v6847 = vpop.f32.mrb[0].mxu0
    %v6848 = vadd.f32 0.0, %v6847
    %v6849 = vpop.f32.mrb[0].mxu0
    %v6850 = vadd.f32 0.0, %v6849
    %v6851 = vpop.f32.mrb[0].mxu0
    %v6852 = vadd.f32 0.0, %v6851
    %6853 = vdwg.mxu0
    %6854 = vmatprep.subr.bf16.mxu0 %v5945
    %6855 = vmatpush1.bf16.msra.mxu0 %v5944
    %6856 = vmatprep.subr.bf16.mxu0 %v5970
    %6857 = vmatpush1.bf16.msra.mxu0 %v5969
    %6858 = vmatprep.subr.bf16.mxu0 %v5995
    %6859 = vmatpush1.bf16.msra.mxu0 %v5994
    %6860 = vmatprep.subr.bf16.mxu0 %v6020
    %6861 = vmatpush1.bf16.msra.mxu0 %v6019
    %6862 = vmatprep.subr.bf16.mxu0 %v6045
    %6863 = vmatpush1.bf16.msra.mxu0 %v6044
    %6864 = vmatprep.subr.bf16.mxu0 %v6070
    %6865 = vmatpush1.bf16.msra.mxu0 %v6069
    %6866 = vmatprep.subr.bf16.mxu0 %v6095
    %6867 = vmatpush1.bf16.msra.mxu0 %v6094
    %6868 = vmatprep.subr.bf16.mxu0 %v6120
    %6869 = vmatpush1.bf16.msra.mxu0 %v6119
    %6870 = vmatprep.subr.bf16.mxu0 0
    %6871 = vmatpush1.bf16.msra.mxu0 0
    %6872 = vmatprep.subr.bf16.mxu0 0
    %6873 = vmatpush1.bf16.msra.mxu0 0
    %6874 = vmatprep.subr.bf16.mxu0 0
    %6875 = vmatpush1.bf16.msra.mxu0 0
    %6876 = vmatprep.subr.bf16.mxu0 0
    %6877 = vmatpush1.bf16.msra.mxu0 0
    %6878 = vmatprep.subr.bf16.mxu0 0
    %6879 = vmatpush1.bf16.msra.mxu0 0
    %6880 = vmatprep.subr.bf16.mxu0 0
    %6881 = vmatpush1.bf16.msra.mxu0 0
    %6882 = vmatprep.subr.bf16.mxu0 0
    %6883 = vmatpush1.bf16.msra.mxu0 0
    %6884 = vmatprep.subr.bf16.mxu0 0
    %6885 = vmatpush1.bf16.msra.mxu0 0
    %6886 = vmatprep.mubr.bf16.mxu0 0
    %6887 = vmatmul.mubr.bf16.gmra.mrb[0].mxu0 %v5106
    %v6888 = vpop.f32.mrb[0].mxu0
    %v6889 = vadd.f32 0.0, %v6888
    %v6890 = vpop.f32.mrb[0].mxu0
    %v6891 = vadd.f32 0.0, %v6890
    %v6892 = vpop.f32.mrb[0].mxu0
    %v6893 = vadd.f32 0.0, %v6892
    %v6894 = vpop.f32.mrb[0].mxu0
    %v6895 = vadd.f32 0.0, %v6894
    %6896 = vmatprep.mubr.bf16.mxu0 0
    %6897 = vmatmul.mubr.bf16.gmra.mrb[0].mxu0 %v5107
    %v6898 = vpop.f32.mrb[0].mxu0
    %v6899 = vadd.f32 0.0, %v6898
    %v6900 = vpop.f32.mrb[0].mxu0
    %v6901 = vadd.f32 0.0, %v6900
    %v6902 = vpop.f32.mrb[0].mxu0
    %v6903 = vadd.f32 0.0, %v6902
    %v6904 = vpop.f32.mrb[0].mxu0
    %v6905 = vadd.f32 0.0, %v6904
    %6906 = vdwg.mxu0
    %6907 = vmatprep.subr.bf16.mxu0 %v5947
    %6908 = vmatpush1.bf16.msra.mxu0 %v5946
    %6909 = vmatprep.subr.bf16.mxu0 %v5972
    %6910 = vmatpush1.bf16.msra.mxu0 %v5971
    %6911 = vmatprep.subr.bf16.mxu0 %v5997
    %6912 = vmatpush1.bf16.msra.mxu0 %v5996
    %6913 = vmatprep.subr.bf16.mxu0 %v6022
    %6914 = vmatpush1.bf16.msra.mxu0 %v6021
    %6915 = vmatprep.subr.bf16.mxu0 %v6047
    %6916 = vmatpush1.bf16.msra.mxu0 %v6046
    %6917 = vmatprep.subr.bf16.mxu0 %v6072
    %6918 = vmatpush1.bf16.msra.mxu0 %v6071
    %6919 = vmatprep.subr.bf16.mxu0 %v6097
    %6920 = vmatpush1.bf16.msra.mxu0 %v6096
    %6921 = vmatprep.subr.bf16.mxu0 %v6122
    %6922 = vmatpush1.bf16.msra.mxu0 %v6121
    %6923 = vmatprep.subr.bf16.mxu0 0
    %6924 = vmatpush1.bf16.msra.mxu0 0
    %6925 = vmatprep.subr.bf16.mxu0 0
    %6926 = vmatpush1.bf16.msra.mxu0 0
    %6927 = vmatprep.subr.bf16.mxu0 0
    %6928 = vmatpush1.bf16.msra.mxu0 0
    %6929 = vmatprep.subr.bf16.mxu0 0
    %6930 = vmatpush1.bf16.msra.mxu0 0
    %6931 = vmatprep.subr.bf16.mxu0 0
    %6932 = vmatpush1.bf16.msra.mxu0 0
    %6933 = vmatprep.subr.bf16.mxu0 0
    %6934 = vmatpush1.bf16.msra.mxu0 0
    %6935 = vmatprep.subr.bf16.mxu0 0
    %6936 = vmatpush1.bf16.msra.mxu0 0
    %6937 = vmatprep.subr.bf16.mxu0 0
    %6938 = vmatpush1.bf16.msra.mxu0 0
    %6939 = vmatprep.mubr.bf16.mxu0 0
    %6940 = vmatmul.mubr.bf16.gmra.mrb[0].mxu0 %v5106
    %v6941 = vpop.f32.mrb[0].mxu0
    %v6942 = vadd.f32 0.0, %v6941
    %v6943 = vpop.f32.mrb[0].mxu0
    %v6944 = vadd.f32 0.0, %v6943
    %v6945 = vpop.f32.mrb[0].mxu0
    %v6946 = vadd.f32 0.0, %v6945
    %v6947 = vpop.f32.mrb[0].mxu0
    %v6948 = vadd.f32 0.0, %v6947
    %6949 = vmatprep.mubr.bf16.mxu0 0
    %6950 = vmatmul.mubr.bf16.gmra.mrb[0].mxu0 %v5107
    %v6951 = vpop.f32.mrb[0].mxu0
    %v6952 = vadd.f32 0.0, %v6951
    %v6953 = vpop.f32.mrb[0].mxu0
    %v6954 = vadd.f32 0.0, %v6953
    %v6955 = vpop.f32.mrb[0].mxu0
    %v6956 = vadd.f32 0.0, %v6955
    %v6957 = vpop.f32.mrb[0].mxu0
    %v6958 = vadd.f32 0.0, %v6957
    %6959 = vdwg.mxu0
    %6960 = vmatprep.subr.bf16.mxu0 0
    %6961 = vmatpush1.bf16.msra.mxu0 %v5948
    %6962 = vmatprep.subr.bf16.mxu0 0
    %6963 = vmatpush1.bf16.msra.mxu0 %v5973
    %6964 = vmatprep.subr.bf16.mxu0 0
    %6965 = vmatpush1.bf16.msra.mxu0 %v5998
    %6966 = vmatprep.subr.bf16.mxu0 0
    %6967 = vmatpush1.bf16.msra.mxu0 %v6023
    %6968 = vmatprep.subr.bf16.mxu0 0
    %6969 = vmatpush1.bf16.msra.mxu0 %v6048
    %6970 = vmatprep.subr.bf16.mxu0 0
    %6971 = vmatpush1.bf16.msra.mxu0 %v6073
    %6972 = vmatprep.subr.bf16.mxu0 0
    %6973 = vmatpush1.bf16.msra.mxu0 %v6098
    %6974 = vmatprep.subr.bf16.mxu0 0
    %6975 = vmatpush1.bf16.msra.mxu0 %v6123
    %6976 = vmatprep.subr.bf16.mxu0 0
    %6977 = vmatpush1.bf16.msra.mxu0 0
    %6978 = vmatprep.subr.bf16.mxu0 0
    %6979 = vmatpush1.bf16.msra.mxu0 0
    %6980 = vmatprep.subr.bf16.mxu0 0
    %6981 = vmatpush1.bf16.msra.mxu0 0
    %6982 = vmatprep.subr.bf16.mxu0 0
    %6983 = vmatpush1.bf16.msra.mxu0 0
    %6984 = vmatprep.subr.bf16.mxu0 0
    %6985 = vmatpush1.bf16.msra.mxu0 0
    %6986 = vmatprep.subr.bf16.mxu0 0
    %6987 = vmatpush1.bf16.msra.mxu0 0
    %6988 = vmatprep.subr.bf16.mxu0 0
    %6989 = vmatpush1.bf16.msra.mxu0 0
    %6990 = vmatprep.subr.bf16.mxu0 0
    %6991 = vmatpush1.bf16.msra.mxu0 0
    %6992 = vmatprep.mubr.bf16.mxu0 0
    %6993 = vmatmul.mubr.bf16.gmra.mrb[0].mxu0 %v5106
    %v6994 = vpop.f32.mrb[0].mxu0
    %v6995 = vadd.f32 0.0, %v6994
    %v6996 = vpop.f32.mrb[0].mxu0
    %v6997 = vpop.f32.mrb[0].mxu0
    %v6998 = vadd.f32 0.0, %v6997
    %v6999 = vpop.f32.mrb[0].mxu0
    %7000 = vmatprep.mubr.bf16.mxu0 0
    %7001 = vmatmul.mubr.bf16.gmra.mrb[0].mxu0 %v5107
    %v7002 = vpop.f32.mrb[0].mxu0
    %v7003 = vadd.f32 0.0, %v7002
    %v7004 = vpop.f32.mrb[0].mxu0
    %v7005 = vpop.f32.mrb[0].mxu0
    %v7006 = vadd.f32 0.0, %v7005
    %v7007 = vpop.f32.mrb[0].mxu0
    %7008 = vdwg.mxu0
    %v7009 = vpack.c.bf16 %v6363, %v6359
    %v7010 = vpack.c.bf16 %v6365, %v6361
    %v7011 = vpack.c.bf16 %v6416, %v6412
    %v7012 = vpack.c.bf16 %v6418, %v6414
    %v7013 = vpack.c.bf16 %v6469, %v6465
    %v7014 = vpack.c.bf16 %v6471, %v6467
    %v7015 = vpack.c.bf16 %v6522, %v6518
    %v7016 = vpack.c.bf16 %v6524, %v6520
    %v7017 = vpack.c.bf16 %v6575, %v6571
    %v7018 = vpack.c.bf16 %v6577, %v6573
    %v7019 = vpack.c.bf16 %v6628, %v6624
    %v7020 = vpack.c.bf16 %v6630, %v6626
    %v7021 = vpack.c.bf16 %v6681, %v6677
    %v7022 = vpack.c.bf16 %v6683, %v6679
    %v7023 = vpack.c.bf16 %v6734, %v6730
    %v7024 = vpack.c.bf16 %v6736, %v6732
    %v7025 = vpack.c.bf16 %v6787, %v6783
    %v7026 = vpack.c.bf16 %v6789, %v6785
    %v7027 = vpack.c.bf16 %v6840, %v6836
    %v7028 = vpack.c.bf16 %v6842, %v6838
    %v7029 = vpack.c.bf16 %v6893, %v6889
    %v7030 = vpack.c.bf16 %v6895, %v6891
    %v7031 = vpack.c.bf16 %v6946, %v6942
    %v7032 = vpack.c.bf16 %v6948, %v6944
    %v7033 = vpack.c.bf16 %v6998, %v6995
    %v7034 = vpack.c.bf16 %v6373, %v6369
    %v7035 = vpack.c.bf16 %v6375, %v6371
    %v7036 = vpack.c.bf16 %v6426, %v6422
    %v7037 = vpack.c.bf16 %v6428, %v6424
    %v7038 = vpack.c.bf16 %v6479, %v6475
    %v7039 = vpack.c.bf16 %v6481, %v6477
    %v7040 = vpack.c.bf16 %v6532, %v6528
    %v7041 = vpack.c.bf16 %v6534, %v6530
    %v7042 = vpack.c.bf16 %v6585, %v6581
    %v7043 = vpack.c.bf16 %v6587, %v6583
    %v7044 = vpack.c.bf16 %v6638, %v6634
    %v7045 = vpack.c.bf16 %v6640, %v6636
    %v7046 = vpack.c.bf16 %v6691, %v6687
    %v7047 = vpack.c.bf16 %v6693, %v6689
    %v7048 = vpack.c.bf16 %v6744, %v6740
    %v7049 = vpack.c.bf16 %v6746, %v6742
    %v7050 = vpack.c.bf16 %v6797, %v6793
    %v7051 = vpack.c.bf16 %v6799, %v6795
    %v7052 = vpack.c.bf16 %v6850, %v6846
    %v7053 = vpack.c.bf16 %v6852, %v6848
    %v7054 = vpack.c.bf16 %v6903, %v6899
    %v7055 = vpack.c.bf16 %v6905, %v6901
    %v7056 = vpack.c.bf16 %v6956, %v6952
    %v7057 = vpack.c.bf16 %v6958, %v6954
    %v7058 = vpack.c.bf16 %v7006, %v7003
    %7059 = vst [vmem:[#allocation3] sm:$0xff] %v7009
    %7060 = vst [vmem:[#allocation3 + $0x8] sm:$0xff] %v7034
    %7061 = vst [vmem:[#allocation3 + $0x10] sm:$0xff] %v7010
    %7062 = vst [vmem:[#allocation3 + $0x18] sm:$0xff] %v7035
    %7063 = vst [vmem:[#allocation3 + $0x20] sm:$0xff] %v7011
    %7064 = vst [vmem:[#allocation3 + $0x28] sm:$0xff] %v7036
    %7065 = vst [vmem:[#allocation3 + $0x30] sm:$0xff] %v7012
    %7066 = vst [vmem:[#allocation3 + $0x38] sm:$0xff] %v7037
    %7067 = vst [vmem:[#allocation3 + $0x40] sm:$0xff] %v7013
    %7068 = vst [vmem:[#allocation3 + $0x48] sm:$0xff] %v7038
    %7069 = vst [vmem:[#allocation3 + $0x50] sm:$0xff] %v7014
    %7070 = vst [vmem:[#allocation3 + $0x58] sm:$0xff] %v7039
    %7071 = vst [vmem:[#allocation3 + $0x60] sm:$0xff] %v7015
    %7072 = vst [vmem:[#allocation3 + $0x68] sm:$0xff] %v7040
    %7073 = vst [vmem:[#allocation3 + $0x70] sm:$0xff] %v7016
    %7074 = vst [vmem:[#allocation3 + $0x78] sm:$0xff] %v7041
    %7075 = vst [vmem:[#allocation3 + $0x80] sm:$0xff] %v7017
    %7076 = vst [vmem:[#allocation3 + $0x88] sm:$0xff] %v7042
    %7077 = vst [vmem:[#allocation3 + $0x90] sm:$0xff] %v7018
    %7078 = vst [vmem:[#allocation3 + $0x98] sm:$0xff] %v7043
    %7079 = vst [vmem:[#allocation3 + $0xa0] sm:$0xff] %v7019
    %7080 = vst [vmem:[#allocation3 + $0xa8] sm:$0xff] %v7044
    %7081 = vst [vmem:[#allocation3 + $0xb0] sm:$0xff] %v7020
    %7082 = vst [vmem:[#allocation3 + $0xb8] sm:$0xff] %v7045
    %7083 = vst [vmem:[#allocation3 + $0xc0] sm:$0xff] %v7021
    %7084 = vst [vmem:[#allocation3 + $0xc8] sm:$0xff] %v7046
    %7085 = vst [vmem:[#allocation3 + $0xd0] sm:$0xff] %v7022
    %7086 = vst [vmem:[#allocation3 + $0xd8] sm:$0xff] %v7047
    %7087 = vst [vmem:[#allocation3 + $0xe0] sm:$0xff] %v7023
    %7088 = vst [vmem:[#allocation3 + $0xe8] sm:$0xff] %v7048
    %7089 = vst [vmem:[#allocation3 + $0xf0] sm:$0xff] %v7024
    %7090 = vst [vmem:[#allocation3 + $0xf8] sm:$0xff] %v7049
    %7091 = vst [vmem:[#allocation3 + $0x100] sm:$0xff] %v7025
    %7092 = vst [vmem:[#allocation3 + $0x108] sm:$0xff] %v7050
    %7093 = vst [vmem:[#allocation3 + $0x110] sm:$0xff] %v7026
    %7094 = vst [vmem:[#allocation3 + $0x118] sm:$0xff] %v7051
    %7095 = vst [vmem:[#allocation3 + $0x120] sm:$0xff] %v7027
    %7096 = vst [vmem:[#allocation3 + $0x128] sm:$0xff] %v7052
    %7097 = vst [vmem:[#allocation3 + $0x130] sm:$0xff] %v7028
    %7098 = vst [vmem:[#allocation3 + $0x138] sm:$0xff] %v7053
    %7099 = vst [vmem:[#allocation3 + $0x140] sm:$0xff] %v7029
    %7100 = vst [vmem:[#allocation3 + $0x148] sm:$0xff] %v7054
    %7101 = vst [vmem:[#allocation3 + $0x150] sm:$0xff] %v7030
    %7102 = vst [vmem:[#allocation3 + $0x158] sm:$0xff] %v7055
    %7103 = vst [vmem:[#allocation3 + $0x160] sm:$0xff] %v7031
    %7104 = vst [vmem:[#allocation3 + $0x168] sm:$0xff] %v7056
    %7105 = vst [vmem:[#allocation3 + $0x170] sm:$0xff] %v7032
    %7106 = vst [vmem:[#allocation3 + $0x178] sm:$0xff] %v7057
    %7107 = vst [vmem:[#allocation3 + $0x180] sm:$0xff] %v7033
    %7108 = vst [vmem:[#allocation3 + $0x188] sm:$0xff] %v7058
    %v7109 = vld [vmem:[#allocation12] sm:$0xff]
    %v7110 = vld [vmem:[#allocation12 + $0x8] sm:$0xff]
    %v7111 = vld [vmem:[#allocation12 + $0x10] sm:$0xff]
    %v7112 = vld [vmem:[#allocation12 + $0x18] sm:$0xf]
    %v7113 = vld [vmem:[#allocation12 + $0x1c] sm:$0xff]
    %v7114 = vld [vmem:[#allocation12 + $0x24] sm:$0xff]
    %v7115 = vld [vmem:[#allocation12 + $0x2c] sm:$0xff]
    %v7116 = vld [vmem:[#allocation12 + $0x34] sm:$0xf]
    %v7117 = vld [vmem:[#allocation12 + $0x38] sm:$0xff]
    %v7118 = vld [vmem:[#allocation12 + $0x40] sm:$0xff]
    %v7119 = vld [vmem:[#allocation12 + $0x48] sm:$0xff]
    %v7120 = vld [vmem:[#allocation12 + $0x50] sm:$0xf]
    %v7121 = vld [vmem:[#allocation12 + $0x54] sm:$0xff]
    %v7122 = vld [vmem:[#allocation12 + $0x5c] sm:$0xff]
    %v7123 = vld [vmem:[#allocation12 + $0x64] sm:$0xff]
    %v7124 = vld [vmem:[#allocation12 + $0x6c] sm:$0xf]
    %v7125 = vld [vmem:[#allocation3] sm:$0xff]
    %v7126 = vld [vmem:[#allocation3 + $0x8] sm:$0xff]
    %v7127 = vld [vmem:[#allocation3 + $0x10] sm:$0xff]
    %v7128 = vld [vmem:[#allocation3 + $0x18] sm:$0xff]
    %v7129 = vld [vmem:[#allocation3 + $0x20] sm:$0xff]
    %v7130 = vld [vmem:[#allocation3 + $0x28] sm:$0xff]
    %v7131 = vld [vmem:[#allocation3 + $0x30] sm:$0xff]
    %v7132 = vld [vmem:[#allocation3 + $0x38] sm:$0xff]
    %v7133 = vld [vmem:[#allocation3 + $0x40] sm:$0xff]
    %v7134 = vld [vmem:[#allocation3 + $0x48] sm:$0xff]
    %v7135 = vld [vmem:[#allocation3 + $0x50] sm:$0xff]
    %v7136 = vld [vmem:[#allocation3 + $0x58] sm:$0xff]
    %v7137 = vld [vmem:[#allocation3 + $0x60] sm:$0xff]
    %v7138 = vld [vmem:[#allocation3 + $0x68] sm:$0xff]
    %v7139 = vld [vmem:[#allocation3 + $0x70] sm:$0xff]
    %v7140 = vld [vmem:[#allocation3 + $0x78] sm:$0xff]
    %v7141 = vld [vmem:[#allocation3 + $0x80] sm:$0xff]
    %v7142 = vld [vmem:[#allocation3 + $0x88] sm:$0xff]
    %v7143 = vld [vmem:[#allocation3 + $0x90] sm:$0xff]
    %v7144 = vld [vmem:[#allocation3 + $0x98] sm:$0xff]
    %v7145 = vld [vmem:[#allocation3 + $0xa0] sm:$0xff]
    %v7146 = vld [vmem:[#allocation3 + $0xa8] sm:$0xff]
    %v7147 = vld [vmem:[#allocation3 + $0xb0] sm:$0xff]
    %v7148 = vld [vmem:[#allocation3 + $0xb8] sm:$0xff]
    %v7149 = vld [vmem:[#allocation3 + $0xc0] sm:$0xff]
    %v7150 = vld [vmem:[#allocation3 + $0xc8] sm:$0xff]
    %v7151 = vld [vmem:[#allocation3 + $0xd0] sm:$0xff]
    %v7152 = vld [vmem:[#allocation3 + $0xd8] sm:$0xff]
    %v7153 = vld [vmem:[#allocation3 + $0xe0] sm:$0xff]
    %v7154 = vld [vmem:[#allocation3 + $0xe8] sm:$0xff]
    %v7155 = vld [vmem:[#allocation3 + $0xf0] sm:$0xff]
    %v7156 = vld [vmem:[#allocation3 + $0xf8] sm:$0xff]
    %v7157 = vld [vmem:[#allocation3 + $0x100] sm:$0xff]
    %v7158 = vld [vmem:[#allocation3 + $0x108] sm:$0xff]
    %v7159 = vld [vmem:[#allocation3 + $0x110] sm:$0xff]
    %v7160 = vld [vmem:[#allocation3 + $0x118] sm:$0xff]
    %v7161 = vld [vmem:[#allocation3 + $0x120] sm:$0xff]
    %v7162 = vld [vmem:[#allocation3 + $0x128] sm:$0xff]
    %v7163 = vld [vmem:[#allocation3 + $0x130] sm:$0xff]
    %v7164 = vld [vmem:[#allocation3 + $0x138] sm:$0xff]
    %v7165 = vld [vmem:[#allocation3 + $0x140] sm:$0xff]
    %v7166 = vld [vmem:[#allocation3 + $0x148] sm:$0xff]
    %v7167 = vld [vmem:[#allocation3 + $0x150] sm:$0xff]
    %v7168 = vld [vmem:[#allocation3 + $0x158] sm:$0xff]
    %v7169 = vld [vmem:[#allocation3 + $0x160] sm:$0xff]
    %v7170 = vld [vmem:[#allocation3 + $0x168] sm:$0xff]
    %v7171 = vld [vmem:[#allocation3 + $0x170] sm:$0xff]
    %v7172 = vld [vmem:[#allocation3 + $0x178] sm:$0xff]
    %v7173 = vld [vmem:[#allocation3 + $0x180] sm:$0xff]
    %v7174 = vld [vmem:[#allocation3 + $0x188] sm:$0xff]
    %v7191 = vunpack.c.l.b16 %v7109
    %v7192 = vunpack.c.h.b16 %v7109
    %v7193 = vunpack.c.l.b16 %v7110
    %v7194 = vunpack.c.h.b16 %v7110
    %v7195 = vunpack.c.l.b16 %v7111
    %v7196 = vunpack.c.h.b16 %v7111
    %v7197 = vunpack.c.l.b16 %v7112
    %v7198 = vunpack.c.l.b16 %v7113
    %v7199 = vunpack.c.h.b16 %v7113
    %v7200 = vunpack.c.l.b16 %v7114
    %v7201 = vunpack.c.h.b16 %v7114
    %v7202 = vunpack.c.l.b16 %v7115
    %v7203 = vunpack.c.h.b16 %v7115
    %v7204 = vunpack.c.l.b16 %v7116
    %v7205 = vunpack.c.l.b16 %v7117
    %v7206 = vunpack.c.h.b16 %v7117
    %v7207 = vunpack.c.l.b16 %v7118
    %v7208 = vunpack.c.h.b16 %v7118
    %v7209 = vunpack.c.l.b16 %v7119
    %v7210 = vunpack.c.h.b16 %v7119
    %v7211 = vunpack.c.l.b16 %v7120
    %v7212 = vunpack.c.l.b16 %v7121
    %v7213 = vunpack.c.h.b16 %v7121
    %v7214 = vunpack.c.l.b16 %v7122
    %v7215 = vunpack.c.h.b16 %v7122
    %v7216 = vunpack.c.l.b16 %v7123
    %v7217 = vunpack.c.h.b16 %v7123
    %v7218 = vunpack.c.l.b16 %v7124
    %v7219 = vpack.c.b16 %v7198, %v7191
    %v7220 = vpack.c.b16 %v7199, %v7192
    %v7221 = vpack.c.b16 %v7200, %v7193
    %v7222 = vpack.c.b16 %v7201, %v7194
    %v7223 = vpack.c.b16 %v7202, %v7195
    %v7224 = vpack.c.b16 %v7203, %v7196
    %v7225 = vpack.c.b16 %v7204, %v7197
    %v7226 = vpack.c.b16 %v7212, %v7205
    %v7227 = vpack.c.b16 %v7213, %v7206
    %v7228 = vpack.c.b16 %v7214, %v7207
    %v7229 = vpack.c.b16 %v7215, %v7208
    %v7230 = vpack.c.b16 %v7216, %v7209
    %v7231 = vpack.c.b16 %v7217, %v7210
    %v7232 = vpack.c.b16 %v7218, %v7211
    %vm7245 = vcmask 261120
    %v7247 = vsel %vm7245, %v7225, 0
    %v7250 = vsel %vm7245, %v7232, 0
    %7252 = vmatprep.subr.bf16.mxu0 0
    %7253 = vmatpush1.bf16.msra.mxu0 %v7125
    %7254 = vmatprep.subr.bf16.mxu0 0
    %7255 = vmatpush1.bf16.msra.mxu0 %v7126
    %7256 = vmatprep.subr.bf16.mxu0 0
    %7257 = vmatpush1.bf16.msra.mxu0 %v7127
    %7258 = vmatprep.subr.bf16.mxu0 0
    %7259 = vmatpush1.bf16.msra.mxu0 %v7128
    %7260 = vmatprep.subr.bf16.mxu0 0
    %7261 = vmatpush1.bf16.msra.mxu0 %v7129
    %7262 = vmatprep.subr.bf16.mxu0 0
    %7263 = vmatpush1.bf16.msra.mxu0 %v7130
    %7264 = vmatprep.subr.bf16.mxu0 0
    %7265 = vmatpush1.bf16.msra.mxu0 %v7131
    %7266 = vmatprep.subr.bf16.mxu0 0
    %7267 = vmatpush1.bf16.msra.mxu0 %v7132
    %7268 = vmatprep.subr.bf16.mxu0 0
    %7269 = vmatpush1.bf16.msra.mxu0 %v7133
    %7270 = vmatprep.subr.bf16.mxu0 0
    %7271 = vmatpush1.bf16.msra.mxu0 %v7134
    %7272 = vmatprep.subr.bf16.mxu0 0
    %7273 = vmatpush1.bf16.msra.mxu0 %v7135
    %7274 = vmatprep.subr.bf16.mxu0 0
    %7275 = vmatpush1.bf16.msra.mxu0 %v7136
    %7276 = vmatprep.subr.bf16.mxu0 0
    %7277 = vmatpush1.bf16.msra.mxu0 %v7137
    %7278 = vmatprep.subr.bf16.mxu0 0
    %7279 = vmatpush1.bf16.msra.mxu0 %v7138
    %7280 = vmatprep.subr.bf16.mxu0 0
    %7281 = vmatpush1.bf16.msra.mxu0 %v7139
    %7282 = vmatprep.subr.bf16.mxu0 0
    %7283 = vmatpush1.bf16.msra.mxu0 %v7140
    %7284 = vmatprep.mubr.bf16.mxu0 %v7220
    %7285 = vmatmul.mubr.bf16.gmra.mrb[0].mxu0 %v7219
    %v7286 = vpop.f32.mrb[0].mxu0
    %v7287 = vadd.f32 0.0, %v7286
    %v7288 = vpop.f32.mrb[0].mxu0
    %v7289 = vpop.f32.mrb[0].mxu0
    %v7290 = vadd.f32 0.0, %v7289
    %v7291 = vpop.f32.mrb[0].mxu0
    %7292 = vmatprep.mubr.bf16.mxu0 %v7227
    %7293 = vmatmul.mubr.bf16.gmra.mrb[0].mxu0 %v7226
    %v7294 = vpop.f32.mrb[0].mxu0
    %v7295 = vadd.f32 0.0, %v7294
    %v7296 = vpop.f32.mrb[0].mxu0
    %v7297 = vpop.f32.mrb[0].mxu0
    %v7298 = vadd.f32 0.0, %v7297
    %v7299 = vpop.f32.mrb[0].mxu0
    %7300 = vdwg.mxu0
    %7301 = vmatprep.subr.bf16.mxu0 0
    %7302 = vmatpush1.bf16.msra.mxu0 %v7141
    %7303 = vmatprep.subr.bf16.mxu0 0
    %7304 = vmatpush1.bf16.msra.mxu0 %v7142
    %7305 = vmatprep.subr.bf16.mxu0 0
    %7306 = vmatpush1.bf16.msra.mxu0 %v7143
    %7307 = vmatprep.subr.bf16.mxu0 0
    %7308 = vmatpush1.bf16.msra.mxu0 %v7144
    %7309 = vmatprep.subr.bf16.mxu0 0
    %7310 = vmatpush1.bf16.msra.mxu0 %v7145
    %7311 = vmatprep.subr.bf16.mxu0 0
    %7312 = vmatpush1.bf16.msra.mxu0 %v7146
    %7313 = vmatprep.subr.bf16.mxu0 0
    %7314 = vmatpush1.bf16.msra.mxu0 %v7147
    %7315 = vmatprep.subr.bf16.mxu0 0
    %7316 = vmatpush1.bf16.msra.mxu0 %v7148
    %7317 = vmatprep.subr.bf16.mxu0 0
    %7318 = vmatpush1.bf16.msra.mxu0 %v7149
    %7319 = vmatprep.subr.bf16.mxu0 0
    %7320 = vmatpush1.bf16.msra.mxu0 %v7150
    %7321 = vmatprep.subr.bf16.mxu0 0
    %7322 = vmatpush1.bf16.msra.mxu0 %v7151
    %7323 = vmatprep.subr.bf16.mxu0 0
    %7324 = vmatpush1.bf16.msra.mxu0 %v7152
    %7325 = vmatprep.subr.bf16.mxu0 0
    %7326 = vmatpush1.bf16.msra.mxu0 %v7153
    %7327 = vmatprep.subr.bf16.mxu0 0
    %7328 = vmatpush1.bf16.msra.mxu0 %v7154
    %7329 = vmatprep.subr.bf16.mxu0 0
    %7330 = vmatpush1.bf16.msra.mxu0 %v7155
    %7331 = vmatprep.subr.bf16.mxu0 0
    %7332 = vmatpush1.bf16.msra.mxu0 %v7156
    %7333 = vmatprep.mubr.bf16.mxu0 %v7222
    %7334 = vmatmul.mubr.bf16.gmra.mrb[0].mxu0 %v7221
    %v7335 = vpop.f32.mrb[0].mxu0
    %v7336 = vadd.f32 %v7287, %v7335
    %v7337 = vpop.f32.mrb[0].mxu0
    %v7338 = vpop.f32.mrb[0].mxu0
    %v7339 = vadd.f32 %v7290, %v7338
    %v7340 = vpop.f32.mrb[0].mxu0
    %7341 = vmatprep.mubr.bf16.mxu0 %v7229
    %7342 = vmatmul.mubr.bf16.gmra.mrb[0].mxu0 %v7228
    %v7343 = vpop.f32.mrb[0].mxu0
    %v7344 = vadd.f32 %v7295, %v7343
    %v7345 = vpop.f32.mrb[0].mxu0
    %v7346 = vpop.f32.mrb[0].mxu0
    %v7347 = vadd.f32 %v7298, %v7346
    %v7348 = vpop.f32.mrb[0].mxu0
    %7349 = vdwg.mxu0
    %7350 = vmatprep.subr.bf16.mxu0 0
    %7351 = vmatpush1.bf16.msra.mxu0 %v7157
    %7352 = vmatprep.subr.bf16.mxu0 0
    %7353 = vmatpush1.bf16.msra.mxu0 %v7158
    %7354 = vmatprep.subr.bf16.mxu0 0
    %7355 = vmatpush1.bf16.msra.mxu0 %v7159
    %7356 = vmatprep.subr.bf16.mxu0 0
    %7357 = vmatpush1.bf16.msra.mxu0 %v7160
    %7358 = vmatprep.subr.bf16.mxu0 0
    %7359 = vmatpush1.bf16.msra.mxu0 %v7161
    %7360 = vmatprep.subr.bf16.mxu0 0
    %7361 = vmatpush1.bf16.msra.mxu0 %v7162
    %7362 = vmatprep.subr.bf16.mxu0 0
    %7363 = vmatpush1.bf16.msra.mxu0 %v7163
    %7364 = vmatprep.subr.bf16.mxu0 0
    %7365 = vmatpush1.bf16.msra.mxu0 %v7164
    %7366 = vmatprep.subr.bf16.mxu0 0
    %7367 = vmatpush1.bf16.msra.mxu0 %v7165
    %7368 = vmatprep.subr.bf16.mxu0 0
    %7369 = vmatpush1.bf16.msra.mxu0 %v7166
    %7370 = vmatprep.subr.bf16.mxu0 0
    %7371 = vmatpush1.bf16.msra.mxu0 %v7167
    %7372 = vmatprep.subr.bf16.mxu0 0
    %7373 = vmatpush1.bf16.msra.mxu0 %v7168
    %7374 = vmatprep.subr.bf16.mxu0 0
    %7375 = vmatpush1.bf16.msra.mxu0 %v7169
    %7376 = vmatprep.subr.bf16.mxu0 0
    %7377 = vmatpush1.bf16.msra.mxu0 %v7170
    %7378 = vmatprep.subr.bf16.mxu0 0
    %7379 = vmatpush1.bf16.msra.mxu0 %v7171
    %7380 = vmatprep.subr.bf16.mxu0 0
    %7381 = vmatpush1.bf16.msra.mxu0 %v7172
    %7382 = vmatprep.mubr.bf16.mxu0 %v7224
    %7383 = vmatmul.mubr.bf16.gmra.mrb[0].mxu0 %v7223
    %v7384 = vpop.f32.mrb[0].mxu0
    %v7385 = vadd.f32 %v7336, %v7384
    %v7386 = vpop.f32.mrb[0].mxu0
    %v7387 = vpop.f32.mrb[0].mxu0
    %v7388 = vadd.f32 %v7339, %v7387
    %v7389 = vpop.f32.mrb[0].mxu0
    %7390 = vmatprep.mubr.bf16.mxu0 %v7231
    %7391 = vmatmul.mubr.bf16.gmra.mrb[0].mxu0 %v7230
    %v7392 = vpop.f32.mrb[0].mxu0
    %v7393 = vadd.f32 %v7344, %v7392
    %v7394 = vpop.f32.mrb[0].mxu0
    %v7395 = vpop.f32.mrb[0].mxu0
    %v7396 = vadd.f32 %v7347, %v7395
    %v7397 = vpop.f32.mrb[0].mxu0
    %7398 = vdwg.mxu0
    %7399 = vmatprep.subr.bf16.mxu0 0
    %7400 = vmatpush1.bf16.msra.mxu0 %v7173
    %7401 = vmatprep.subr.bf16.mxu0 0
    %7402 = vmatpush1.bf16.msra.mxu0 %v7174
    %7403 = vmatprep.subr.bf16.mxu0 0
    %7404 = vmatpush1.bf16.msra.mxu0 0
    %7405 = vmatprep.subr.bf16.mxu0 0
    %7406 = vmatpush1.bf16.msra.mxu0 0
    %7407 = vmatprep.subr.bf16.mxu0 0
    %7408 = vmatpush1.bf16.msra.mxu0 0
    %7409 = vmatprep.subr.bf16.mxu0 0
    %7410 = vmatpush1.bf16.msra.mxu0 0
    %7411 = vmatprep.subr.bf16.mxu0 0
    %7412 = vmatpush1.bf16.msra.mxu0 0
    %7413 = vmatprep.subr.bf16.mxu0 0
    %7414 = vmatpush1.bf16.msra.mxu0 0
    %7415 = vmatprep.subr.bf16.mxu0 0
    %7416 = vmatpush1.bf16.msra.mxu0 0
    %7417 = vmatprep.subr.bf16.mxu0 0
    %7418 = vmatpush1.bf16.msra.mxu0 0
    %7419 = vmatprep.subr.bf16.mxu0 0
    %7420 = vmatpush1.bf16.msra.mxu0 0
    %7421 = vmatprep.subr.bf16.mxu0 0
    %7422 = vmatpush1.bf16.msra.mxu0 0
    %7423 = vmatprep.subr.bf16.mxu0 0
    %7424 = vmatpush1.bf16.msra.mxu0 0
    %7425 = vmatprep.subr.bf16.mxu0 0
    %7426 = vmatpush1.bf16.msra.mxu0 0
    %7427 = vmatprep.subr.bf16.mxu0 0
    %7428 = vmatpush1.bf16.msra.mxu0 0
    %7429 = vmatprep.subr.bf16.mxu0 0
    %7430 = vmatpush1.bf16.msra.mxu0 0
    %7431 = vmatprep.mubr.bf16.mxu0 0
    %7432 = vmatmul.mubr.bf16.gmra.mrb[0].mxu0 %v7247
    %v7433 = vpop.f32.mrb[0].mxu0
    %v7434 = vadd.f32 %v7385, %v7433
    %v7435 = vpop.f32.mrb[0].mxu0
    %v7436 = vpop.f32.mrb[0].mxu0
    %v7437 = vadd.f32 %v7388, %v7436
    %v7438 = vpop.f32.mrb[0].mxu0
    %7439 = vmatprep.mubr.bf16.mxu0 0
    %7440 = vmatmul.mubr.bf16.gmra.mrb[0].mxu0 %v7250
    %v7441 = vpop.f32.mrb[0].mxu0
    %v7442 = vadd.f32 %v7393, %v7441
    %v7443 = vpop.f32.mrb[0].mxu0
    %v7444 = vpop.f32.mrb[0].mxu0
    %v7445 = vadd.f32 %v7396, %v7444
    %v7446 = vpop.f32.mrb[0].mxu0
    %7447 = vdwg.mxu0
    %7448 = vadd.xlane.f32.xlu0 %v7434
    %v7449 = vpop.xlane.xlu0 %7448
    %7450 = vadd.xlane.f32.xlu0 %v7437
    %v7451 = vpop.xlane.xlu0 %7450
    %7452 = vadd.xlane.f32.xlu0 %v7442
    %v7453 = vpop.xlane.xlu0 %7452
    %7454 = vadd.xlane.f32.xlu0 %v7445
    %v7455 = vpop.xlane.xlu0 %7454
    %v7456 = vmul.f32 %v7434, %v7434
    %v7457 = vmul.f32 %v7437, %v7437
    %v7458 = vmul.f32 %v7442, %v7442
    %v7459 = vmul.f32 %v7445, %v7445
    %7460 = vadd.xlane.f32.xlu0 %v7456
    %v7461 = vpop.xlane.xlu0 %7460
    %7462 = vadd.xlane.f32.xlu0 %v7457
    %v7463 = vpop.xlane.xlu0 %7462
    %7464 = vadd.xlane.f32.xlu0 %v7458
    %v7465 = vpop.xlane.xlu0 %7464
    %7466 = vadd.xlane.f32.xlu0 %v7459
    %v7467 = vpop.xlane.xlu0 %7466
    %v7468 = vmul.f32 %v7449, 0.25
    %v7469 = vmul.f32 %v7451, 0.25
    %v7470 = vmul.f32 %v7453, 0.25
    %v7471 = vmul.f32 %v7455, 0.25
    %v7472 = vmul.f32 %v7461, 0.25
    %v7473 = vmul.f32 %v7463, 0.25
    %v7474 = vmul.f32 %v7465, 0.25
    %v7475 = vmul.f32 %v7467, 0.25
    %v7476 = vmul.f32 %v7468, %v7468
    %v7477 = vmul.f32 %v7469, %v7469
    %v7478 = vmul.f32 %v7470, %v7470
    %v7479 = vmul.f32 %v7471, %v7471
    %v7480 = vsub.f32 %v7472, %v7476
    %v7481 = vsub.f32 %v7473, %v7477
    %v7482 = vsub.f32 %v7474, %v7478
    %v7483 = vsub.f32 %v7475, %v7479
    %v7484 = vadd.f32 %v7480, 1e-05
    %v7485 = vadd.f32 %v7481, 1e-05
    %v7486 = vadd.f32 %v7482, 1e-05
    %v7487 = vadd.f32 %v7483, 1e-05
    %v7488 = vrsqrt.pop %v7484
    %v7489 = vrsqrt.pop %v7485
    %v7490 = vrsqrt.pop %v7486
    %v7491 = vrsqrt.pop %v7487
    %v7492 = vld [vmem:[%s10] sm:$0xff]
    %v7493 = vld [vmem:[%s10 + $0x8] sm:$0xff]
    %v7494 = vld [vmem:[%s10 + $0x10] sm:$0xff]
    %v7495 = vld [vmem:[%s10 + $0x18] sm:$0xff]
    %v7496 = vmul.f32 %v7488, %v7492
    %v7497 = vmul.f32 %v7489, %v7493
    %v7498 = vmul.f32 %v7490, %v7494
    %v7499 = vmul.f32 %v7491, %v7495
    %v7500 = vsub.f32 %v7434, %v7468
    %v7501 = vsub.f32 %v7437, %v7469
    %v7502 = vsub.f32 %v7442, %v7470
    %v7503 = vsub.f32 %v7445, %v7471
    %7505 = vset.pattern.permute.xlu0 0
    %7506 = vperm.xlu0 %7505, %v7496
    %v7507 = vpop.permute.xlu0 %7506
    %7510 = vset.pattern.permute.xlu0 0
    %7511 = vperm.xlu0 %7510, %v7497
    %v7512 = vpop.permute.xlu0 %7511
    %7515 = vset.pattern.permute.xlu0 0
    %7516 = vperm.xlu0 %7515, %v7498
    %v7517 = vpop.permute.xlu0 %7516
    %7520 = vset.pattern.permute.xlu0 0
    %7521 = vperm.xlu0 %7520, %v7499
    %v7522 = vpop.permute.xlu0 %7521
    %v7524 = vmul.f32 %v7500, %v7507
    %v7525 = vmul.f32 %v7501, %v7512
    %v7526 = vmul.f32 %v7502, %v7517
    %v7527 = vmul.f32 %v7503, %v7522
    %v7528 = vld [vmem:[%s11] sm:$0xff]
    %v7529 = vld [vmem:[%s11 + $0x8] sm:$0xff]
    %v7530 = vld [vmem:[%s11 + $0x10] sm:$0xff]
    %v7531 = vld [vmem:[%s11 + $0x18] sm:$0xff]
    %7533 = vset.pattern.permute.xlu0 0
    %7534 = vperm.xlu0 %7533, %v7528
    %v7535 = vpop.permute.xlu0 %7534
    %7538 = vset.pattern.permute.xlu0 0
    %7539 = vperm.xlu0 %7538, %v7529
    %v7540 = vpop.permute.xlu0 %7539
    %7543 = vset.pattern.permute.xlu0 0
    %7544 = vperm.xlu0 %7543, %v7530
    %v7545 = vpop.permute.xlu0 %7544
    %7548 = vset.pattern.permute.xlu0 0
    %7549 = vperm.xlu0 %7548, %v7531
    %v7550 = vpop.permute.xlu0 %7549
    %v7552 = vadd.f32 %v7524, %v7535
    %v7553 = vadd.f32 %v7525, %v7540
    %v7554 = vadd.f32 %v7526, %v7545
    %v7555 = vadd.f32 %v7527, %v7550
    %v7556 = vmax.f32 %v7552, 0.0
    %v7557 = vmax.f32 %v7553, 0.0
    %v7558 = vmax.f32 %v7554, 0.0
    %v7559 = vmax.f32 %v7555, 0.0
    %vm7560 = vcmp.lt.s32.totalorder %v5100, 4
    %v7561 = vsel %vm7560, %v7556, 0.0
    %v7562 = vsel %vm7560, %v7557, 0.0
    %v7563 = vsel %vm7560, %v7558, 0.0
    %v7564 = vsel %vm7560, %v7559, 0.0
    %v7565 = vld [vmem:[#allocation13] sm:$0xff]
    %v7566 = vld [vmem:[#allocation13 + $0x8] sm:$0xff]
    %v7567 = vld [vmem:[#allocation13 + $0x10] sm:$0xff]
    %v7568 = vld [vmem:[#allocation13 + $0x18] sm:$0xff]
    %7570 = vset.pattern.permute.xlu0 0
    %7571 = vperm.xlu0 %7570, %v7561
    %v7572 = vpop.permute.xlu0 %7571
    %7575 = vset.pattern.permute.xlu0 0
    %7576 = vperm.xlu0 %7575, %v7562
    %v7577 = vpop.permute.xlu0 %7576
    %7580 = vset.pattern.permute.xlu0 0
    %7581 = vperm.xlu0 %7580, %v7563
    %v7582 = vpop.permute.xlu0 %7581
    %7585 = vset.pattern.permute.xlu0 0
    %7586 = vperm.xlu0 %7585, %v7564
    %v7587 = vpop.permute.xlu0 %7586
    %v7589 = vmul.f32 %v7572, %v7565
    %v7590 = vmul.f32 %v7577, %v7566
    %v7591 = vmul.f32 %v7582, %v7567
    %v7592 = vmul.f32 %v7587, %v7568
    %s7593 = scalar_lea.vmem [#allocation13], 32
    %v7594 = vld [vmem:[%s7593] sm:$0xff]
    %v7595 = vld [vmem:[%s7593 + $0x8] sm:$0xff]
    %v7596 = vld [vmem:[%s7593 + $0x10] sm:$0xff]
    %v7597 = vld [vmem:[%s7593 + $0x18] sm:$0xff]
    %7598 = vset.pattern.permute.xlu0 1
    %7599 = vperm.xlu0 %7598, %v7561
    %v7600 = vpop.permute.xlu0 %7599
    %7602 = vset.pattern.permute.xlu0 1
    %7603 = vperm.xlu0 %7602, %v7562
    %v7604 = vpop.permute.xlu0 %7603
    %7606 = vset.pattern.permute.xlu0 1
    %7607 = vperm.xlu0 %7606, %v7563
    %v7608 = vpop.permute.xlu0 %7607
    %7610 = vset.pattern.permute.xlu0 1
    %7611 = vperm.xlu0 %7610, %v7564
    %v7612 = vpop.permute.xlu0 %7611
    %v7614 = vmul.f32 %v7600, %v7594
    %v7615 = vmul.f32 %v7604, %v7595
    %v7616 = vmul.f32 %v7608, %v7596
    %v7617 = vmul.f32 %v7612, %v7597
    %v7618 = vadd.f32 %v7589, %v7614
    %v7619 = vadd.f32 %v7590, %v7615
    %v7620 = vadd.f32 %v7591, %v7616
    %v7621 = vadd.f32 %v7592, %v7617
    %s7622 = scalar_lea.vmem [#allocation13], 64
    %v7623 = vld [vmem:[%s7622] sm:$0xff]
    %v7624 = vld [vmem:[%s7622 + $0x8] sm:$0xff]
    %v7625 = vld [vmem:[%s7622 + $0x10] sm:$0xff]
    %v7626 = vld [vmem:[%s7622 + $0x18] sm:$0xff]
    %7627 = vset.pattern.permute.xlu0 2
    %7628 = vperm.xlu0 %7627, %v7561
    %v7629 = vpop.permute.xlu0 %7628
    %7631 = vset.pattern.permute.xlu0 2
    %7632 = vperm.xlu0 %7631, %v7562
    %v7633 = vpop.permute.xlu0 %7632
    %7635 = vset.pattern.permute.xlu0 2
    %7636 = vperm.xlu0 %7635, %v7563
    %v7637 = vpop.permute.xlu0 %7636
    %7639 = vset.pattern.permute.xlu0 2
    %7640 = vperm.xlu0 %7639, %v7564
    %v7641 = vpop.permute.xlu0 %7640
    %v7643 = vmul.f32 %v7629, %v7623
    %v7644 = vmul.f32 %v7633, %v7624
    %v7645 = vmul.f32 %v7637, %v7625
    %v7646 = vmul.f32 %v7641, %v7626
    %v7647 = vadd.f32 %v7618, %v7643
    %v7648 = vadd.f32 %v7619, %v7644
    %v7649 = vadd.f32 %v7620, %v7645
    %v7650 = vadd.f32 %v7621, %v7646
    %s7651 = scalar_lea.vmem [#allocation13], 96
    %v7652 = vld [vmem:[%s7651] sm:$0xff]
    %v7653 = vld [vmem:[%s7651 + $0x8] sm:$0xff]
    %v7654 = vld [vmem:[%s7651 + $0x10] sm:$0xff]
    %v7655 = vld [vmem:[%s7651 + $0x18] sm:$0xff]
    %7656 = vset.pattern.permute.xlu0 3
    %7657 = vperm.xlu0 %7656, %v7561
    %v7658 = vpop.permute.xlu0 %7657
    %7660 = vset.pattern.permute.xlu0 3
    %7661 = vperm.xlu0 %7660, %v7562
    %v7662 = vpop.permute.xlu0 %7661
    %7664 = vset.pattern.permute.xlu0 3
    %7665 = vperm.xlu0 %7664, %v7563
    %v7666 = vpop.permute.xlu0 %7665
    %7668 = vset.pattern.permute.xlu0 3
    %7669 = vperm.xlu0 %7668, %v7564
    %v7670 = vpop.permute.xlu0 %7669
    %v7672 = vmul.f32 %v7658, %v7652
    %v7673 = vmul.f32 %v7662, %v7653
    %v7674 = vmul.f32 %v7666, %v7654
    %v7675 = vmul.f32 %v7670, %v7655
    %v7676 = vadd.f32 %v7647, %v7672
    %v7677 = vadd.f32 %v7648, %v7673
    %v7678 = vadd.f32 %v7649, %v7674
    %v7679 = vadd.f32 %v7650, %v7675
    %v7680 = vadd.f32 %v7676, %v7677
    %v7681 = vadd.f32 %v7680, %v7678
    %v7682 = vadd.f32 %v7681, %v7679
    %v7683 = vrot.slane %v7682, 4
    %v7684 = vadd.f32 %v7682, %v7683
    %v7685 = vrot.slane %v7684, 2
    %v7686 = vadd.f32 %v7684, %v7685
    %v7687 = vrot.slane %v7686, 1
    %v7688 = vadd.f32 %v7686, %v7687
    %v7689 = vld [vmem:[#allocation15] sm:$0x1]
    %v7690 = vadd.f32 %v7688, %v7689
    %v7691 = vmax.f32 %v7690, 0.0
    %v7692 = vld [vmem:[%s14] sm:$0xff]
    %v7693 = vld [vmem:[%s14 + $0x8] sm:$0xff]
    %v7694 = vld [vmem:[%s14 + $0x10] sm:$0xff]
    %v7695 = vld [vmem:[%s14 + $0x18] sm:$0xff]
    %v7696 = vld [vmem:[%s14 + $0x20] sm:$0xff]
    %v7697 = vld [vmem:[%s14 + $0x28] sm:$0xff]
    %v7698 = vld [vmem:[%s14 + $0x30] sm:$0xff]
    %v7699 = vld [vmem:[%s14 + $0x38] sm:$0xff]
    %v7700 = vld [vmem:[%s14 + $0x40] sm:$0xff]
    %v7701 = vld [vmem:[%s14 + $0x48] sm:$0xff]
    %v7702 = vld [vmem:[%s14 + $0x50] sm:$0xff]
    %v7703 = vld [vmem:[%s14 + $0x58] sm:$0xff]
    %v7704 = vld [vmem:[%s14 + $0x60] sm:$0xff]
    %v7705 = vld [vmem:[%s14 + $0x68] sm:$0xff]
    %v7706 = vld [vmem:[%s14 + $0x70] sm:$0xff]
    %v7707 = vld [vmem:[%s14 + $0x78] sm:$0xff]
    %v7708 = vld [vmem:[#allocation16] sm:$0x1]
    %7709 = vmatprep.subr.mxu0 0.0
    %7710 = vmatpush1.msra.mxu0 %v7692
    %7711 = vmatprep.subr.mxu0 0.0
    %7712 = vmatpush1.msra.mxu0 %v7693
    %7713 = vmatprep.subr.mxu0 0.0
    %7714 = vmatpush1.msra.mxu0 %v7694
    %7715 = vmatprep.subr.mxu0 0.0
    %7716 = vmatpush1.msra.mxu0 %v7695
    %7717 = vmatprep.subr.mxu0 0.0
    %7718 = vmatpush1.msra.mxu0 %v7696
    %7719 = vmatprep.subr.mxu0 0.0
    %7720 = vmatpush1.msra.mxu0 %v7697
    %7721 = vmatprep.subr.mxu0 0.0
    %7722 = vmatpush1.msra.mxu0 %v7698
    %7723 = vmatprep.subr.mxu0 0.0
    %7724 = vmatpush1.msra.mxu0 %v7699
    %7725 = vmatprep.subr.mxu0 0.0
    %7726 = vmatpush1.msra.mxu0 %v7700
    %7727 = vmatprep.subr.mxu0 0.0
    %7728 = vmatpush1.msra.mxu0 %v7701
    %7729 = vmatprep.subr.mxu0 0.0
    %7730 = vmatpush1.msra.mxu0 %v7702
    %7731 = vmatprep.subr.mxu0 0.0
    %7732 = vmatpush1.msra.mxu0 %v7703
    %7733 = vmatprep.subr.mxu0 0.0
    %7734 = vmatpush1.msra.mxu0 %v7704
    %7735 = vmatprep.subr.mxu0 0.0
    %7736 = vmatpush1.msra.mxu0 %v7705
    %7737 = vmatprep.subr.mxu0 0.0
    %7738 = vmatpush1.msra.mxu0 %v7706
    %7739 = vmatprep.subr.mxu0 0.0
    %7740 = vmatpush1.msra.mxu0 %v7707
    %7741 = vmatprep.subr.mxu0 0.0
    %7742 = vmatpush1.msra.mxu0 0.0
    %7743 = vmatprep.subr.mxu0 0.0
    %7744 = vmatpush1.msra.mxu0 0.0
    %7745 = vmatprep.subr.mxu0 0.0
    %7746 = vmatpush1.msra.mxu0 0.0
    %7747 = vmatprep.subr.mxu0 0.0
    %7748 = vmatpush1.msra.mxu0 0.0
    %7749 = vmatprep.subr.mxu0 0.0
    %7750 = vmatpush1.msra.mxu0 0.0
    %7751 = vmatprep.subr.mxu0 0.0
    %7752 = vmatpush1.msra.mxu0 0.0
    %7753 = vmatprep.subr.mxu0 0.0
    %7754 = vmatpush1.msra.mxu0 0.0
    %7755 = vmatprep.subr.mxu0 0.0
    %7756 = vmatpush1.msra.mxu0 0.0
    %7757 = vmatprep.subr.mxu0 0.0
    %7758 = vmatpush1.msra.mxu0 0.0
    %7759 = vmatprep.subr.mxu0 0.0
    %7760 = vmatpush1.msra.mxu0 0.0
    %7761 = vmatprep.subr.mxu0 0.0
    %7762 = vmatpush1.msra.mxu0 0.0
    %7763 = vmatprep.subr.mxu0 0.0
    %7764 = vmatpush1.msra.mxu0 0.0
    %7765 = vmatprep.subr.mxu0 0.0
    %7766 = vmatpush1.msra.mxu0 0.0
    %7767 = vmatprep.subr.mxu0 0.0
    %7768 = vmatpush1.msra.mxu0 0.0
    %7769 = vmatprep.subr.mxu0 0.0
    %7770 = vmatpush1.msra.mxu0 0.0
    %7771 = vmatprep.subr.mxu0 0.0
    %7772 = vmatpush1.msra.mxu0 0.0
    %7773 = vmatprep.mubr.f32.mxu0 0.0
    %7774 = vmatmul.mubr.f32.gmra.mrb[0].mxu0 %v7691
    %v7775 = vpop.f32.mrb[0].mxu0
    %v7776 = vadd.f32 %v7708, %v7775
    %v7777 = vpop.f32.mrb[0].mxu0
    %7778 = vdwg.mxu0
    %v7779 = vxor.u32 %v7776, 2147483648
    %v7780 = vmul.f32 %v7779, 1.442695
    %v7781 = vpow.pop %v7780
    %v7782 = vadd.f32 %v7781, 1.0
    %v7783 = vrcp.pop %v7782
    %v7784 = vmul.f32 1.0, %v7783
    %v7785 = vtanh.pop %v7776
    %7787 = vrot.lane.b32.xlu0 %v7785, 96
    %v7788 = vpop.permute.xlu0 %7787
    %v7790 = vmul.f32 %v7784, %v7788
    %v7791 = vtanh.pop %v7790
    %7793 = vrot.lane.b32.xlu0 %v7791, 64
    %v7794 = vpop.permute.xlu0 %7793
    %v7796 = vmul.f32 %v7784, %v7794
    %v7797 = vld [vmem:[%s16] sm:$0xff]
    %v7798 = vld [vmem:[%s16 + $0x8] sm:$0xff]
    %v7799 = vld [vmem:[%s16 + $0x10] sm:$0xff]
    %v7800 = vld [vmem:[%s16 + $0x18] sm:$0xff]
    %v7801 = vld [vmem:[#allocation18] sm:$0x1]
    %7803 = vrot.lane.b32.xlu0 %v7796, 64
    %v7804 = vpop.permute.xlu0 %7803
    %v7805 = vsel %vm7245, %v7804, 0
    %7807 = vmatprep.subr.mxu0 0.0
    %7808 = vmatpush1.msra.mxu0 %v7797
    %7809 = vmatprep.subr.mxu0 0.0
    %7810 = vmatpush1.msra.mxu0 %v7798
    %7811 = vmatprep.subr.mxu0 0.0
    %7812 = vmatpush1.msra.mxu0 %v7799
    %7813 = vmatprep.subr.mxu0 0.0
    %7814 = vmatpush1.msra.mxu0 %v7800
    %7815 = vmatprep.subr.mxu0 0.0
    %7816 = vmatpush1.msra.mxu0 0.0
    %7817 = vmatprep.subr.mxu0 0.0
    %7818 = vmatpush1.msra.mxu0 0.0
    %7819 = vmatprep.subr.mxu0 0.0
    %7820 = vmatpush1.msra.mxu0 0.0
    %7821 = vmatprep.subr.mxu0 0.0
    %7822 = vmatpush1.msra.mxu0 0.0
    %7823 = vmatprep.subr.mxu0 0.0
    %7824 = vmatpush1.msra.mxu0 0.0
    %7825 = vmatprep.subr.mxu0 0.0
    %7826 = vmatpush1.msra.mxu0 0.0
    %7827 = vmatprep.subr.mxu0 0.0
    %7828 = vmatpush1.msra.mxu0 0.0
    %7829 = vmatprep.subr.mxu0 0.0
    %7830 = vmatpush1.msra.mxu0 0.0
    %7831 = vmatprep.subr.mxu0 0.0
    %7832 = vmatpush1.msra.mxu0 0.0
    %7833 = vmatprep.subr.mxu0 0.0
    %7834 = vmatpush1.msra.mxu0 0.0
    %7835 = vmatprep.subr.mxu0 0.0
    %7836 = vmatpush1.msra.mxu0 0.0
    %7837 = vmatprep.subr.mxu0 0.0
    %7838 = vmatpush1.msra.mxu0 0.0
    %7839 = vmatprep.subr.mxu0 0.0
    %7840 = vmatpush1.msra.mxu0 0.0
    %7841 = vmatprep.subr.mxu0 0.0
    %7842 = vmatpush1.msra.mxu0 0.0
    %7843 = vmatprep.subr.mxu0 0.0
    %7844 = vmatpush1.msra.mxu0 0.0
    %7845 = vmatprep.subr.mxu0 0.0
    %7846 = vmatpush1.msra.mxu0 0.0
    %7847 = vmatprep.subr.mxu0 0.0
    %7848 = vmatpush1.msra.mxu0 0.0
    %7849 = vmatprep.subr.mxu0 0.0
    %7850 = vmatpush1.msra.mxu0 0.0
    %7851 = vmatprep.subr.mxu0 0.0
    %7852 = vmatpush1.msra.mxu0 0.0
    %7853 = vmatprep.subr.mxu0 0.0
    %7854 = vmatpush1.msra.mxu0 0.0
    %7855 = vmatprep.subr.mxu0 0.0
    %7856 = vmatpush1.msra.mxu0 0.0
    %7857 = vmatprep.subr.mxu0 0.0
    %7858 = vmatpush1.msra.mxu0 0.0
    %7859 = vmatprep.subr.mxu0 0.0
    %7860 = vmatpush1.msra.mxu0 0.0
    %7861 = vmatprep.subr.mxu0 0.0
    %7862 = vmatpush1.msra.mxu0 0.0
    %7863 = vmatprep.subr.mxu0 0.0
    %7864 = vmatpush1.msra.mxu0 0.0
    %7865 = vmatprep.subr.mxu0 0.0
    %7866 = vmatpush1.msra.mxu0 0.0
    %7867 = vmatprep.subr.mxu0 0.0
    %7868 = vmatpush1.msra.mxu0 0.0
    %7869 = vmatprep.subr.mxu0 0.0
    %7870 = vmatpush1.msra.mxu0 0.0
    %7871 = vmatprep.mubr.f32.mxu0 0.0
    %7872 = vmatmul.mubr.f32.gmra.mrb[0].mxu0 %v7805
    %v7873 = vpop.f32.mrb[0].mxu0
    %v7874 = vadd.f32 %v7801, %v7873
    %v7875 = vpop.f32.mrb[0].mxu0
    %7876 = vdwg.mxu0
    %vm7877 = vcmask 24576
    %7878 = vst.msk [vmem:[#allocation19] sm:$0x1] %vm7877, %v7874
    // Predicated region
    $region110: #{dqn_forward.1} parent=1 // pred_check
      _
    $region111: #{dqn_forward.1} parent=1 // pred_check_branch
      %7880 = sbr.rel (0) target = $region113
    $region112: #{dqn_forward.1} parent=1 // pred_region
      %s7882 = ssub.s32 16, 16
      %7883 = vsyncadd [#allocation6], %s7882
      %s7885 = sshll.u32 [#allocation19], 4
      %s7886 = int_to_ptr.vmem [resolvable:$true] %s7885
      %7888 = dma.vmem_to_hbm [thread:$0]  %s7886, 16, %s18, [#allocation6]
    $region113: #{dqn_forward.1} parent=1 // pred_fallthru
      _
    // Predicated region
    $region114: #{dqn_forward.1} parent=1 // pred_check
      _
    $region115: #{dqn_forward.1} parent=1 // pred_check_branch
      %7890 = sbr.rel (0) target = $region117
    $region116: #{dqn_forward.1} parent=1 // pred_region
      %7891 = dma.done [#allocation6], 16
    $region117: #{dqn_forward.1} parent=1 // pred_fallthru
      _
    %7892 = vsyncpa [#allocation5], 1
    %7893 = vsyncpa [#allocation8], 1
    %7894 = vsyncpa [#allocation11], 1
    %7895 = vsyncpa [#allocation14], 1
    %7896 = vsyncpa [#allocation17], 1
    %7897 = vsyncpa [#allocation6], 1

</llo_original>
